<compile_context>
chip_gen: v7x
topology: tpu7x:2x2x1
jax: 0.10.0
libtpu: 0.0.40
codegen_flags: <defaults>
</compile_context>

<pallas_src>
import functools

import jax
import jax.numpy as jnp
import numpy as np
from jax.experimental import pallas as pl
from jax.experimental.pallas import tpu as pltpu


def _round_up(a, b):
    return (a + b - 1) // b * b


def _pick_tile_d(D, K, Bp, itemsize, budget_bytes=24 * 1024 * 1024):
    """Largest D-reduction tile whose double-buffered input tiles + accumulators fit
    the VMEM budget (kept conservative so it also fits v7x's 64 MiB physical VMEM)."""
    acc_bytes = (Bp + 8) * _round_up(K, 128) * 4          # acc_dot + acc_sq (f32)
    for tD in (8192, 4096, 2048, 1024, 512, 256, 128):
        if D % tD:
            continue
        tile_bytes = 2 * tD * (_round_up(K, 8) + Bp) * itemsize   # 2x = double buffer
        if acc_bytes + tile_bytes <= budget_bytes:
            return tD
    return 128


def _dist_argmin_kernel(x_ref, e_ref, idx_ref, acc_dot, acc_sq):
    """Grid axis 0 = D reduction. Accumulate x @ E^T and ||E_k||^2, finalize argmin."""
    d = pl.program_id(0)

    @pl.when(d == 0)
    def _init():
        acc_dot[...] = jnp.zeros_like(acc_dot)
        acc_sq[...] = jnp.zeros_like(acc_sq)

    x = x_ref[...]                                          # (Bp, tD)
    e = e_ref[...]                                          # (K, tD) native layout
    # x @ E^T on the MXU; the RHS transpose happens in VMEM and hides under DMA.
    acc_dot[...] += jax.lax.dot_general(
        x, e, (((1,), (1,)), ((), ())), preferred_element_type=jnp.float32)
    # Running ||E_k||^2, lane-dense (1, K), from the already-resident tile.
    ef = e.astype(jnp.float32)                              # f32 for VPU square (v5e-safe)
    ones_row = jnp.ones((1, ef.shape[1]), jnp.float32)
    acc_sq[...] += jax.lax.dot_general(
        ones_row, ef * ef, (((1,), (1,)), ((), ())), preferred_element_type=jnp.float32)

    @pl.when(d == pl.num_programs(0) - 1)
    def _finalize():
        # Squared-distance proxy (||x||^2 dropped: per-row constant; sqrt monotone).
        dist = acc_sq[...] - 2.0 * acc_dot[...]             # (Bp, K)
        kk = jax.lax.broadcasted_iota(jnp.int32, dist.shape, 1)
        minv = jnp.min(dist, axis=1, keepdims=True)         # (Bp, 1)
        # First index achieving the min (matches torch.argmin tie-break).
        idx = jnp.min(jnp.where(dist == minv, kk, dist.shape[1]), axis=1, keepdims=True)
        idx_ref[...] = idx.astype(jnp.int32)


def _gather_loss_kernel(idx_sref, x_ref, e_ref, q_ref, loss_ref, acc_ref, *, scale):
    """Grid axis 0 = batch row. e_ref is already the selected codebook row (scalar
    prefetch drives its index_map). Copies it to `quantized` and accumulates MSE."""
    del idx_sref  # consumed by the index_map, not needed in the body
    b = pl.program_id(0)

    @pl.when(b == 0)
    def _init():
        acc_ref[...] = jnp.zeros_like(acc_ref)

    q = e_ref[...]                                          # (D0, 128)
    q_ref[...] = q.astype(q_ref.dtype)
    diff = q.astype(jnp.float32) - x_ref[...].astype(jnp.float32)
    sq = diff * diff
    acc_ref[...] += jnp.sum(jnp.sum(sq, axis=0, keepdims=True), axis=1, keepdims=True)

    @pl.when(b == pl.num_programs(0) - 1)
    def _finalize():
        loss_ref[...] = acc_ref[...] * scale


def vector_quantizer_gt(inputs, codebook, commitment_cost):
    """Forward pass of VectorQuantizerGT.

    inputs:   (B, 256, 8, 8)  (any (B, ...) with prod(...) == embedding_dim works)
    codebook: (num_embeddings, embedding_dim)  -- the nn.Embedding weight
    returns:  (quantized (B, 256, 8, 8), loss scalar, encoding_indices (B, 1) int32)
    """
    B = inputs.shape[0]
    D = int(np.prod(inputs.shape[1:]))
    K, Dw = codebook.shape
    assert Dw == D, "embedding_dim must equal the flattened input size"
    assert D % 128 == 0, "embedding_dim must be a multiple of 128"

    out_dtype = inputs.dtype
    x = inputs.reshape(B, D)
    if x.dtype != codebook.dtype:
        # Keep the matmul operands uniform; casting x is cheap (x << codebook bytes).
        x = x.astype(codebook.dtype)

    # ---------------- stage 1: fused distance matmul + argmin ----------------
    Bp = _round_up(B, 8)                       # sublane-aligned batch rows
    tD = _pick_tile_d(D, K, Bp, jnp.dtype(codebook.dtype).itemsize)
    x_p = x if Bp == B else jnp.pad(x, ((0, Bp - B), (0, 0)))

    idx_full = pl.pallas_call(
        _dist_argmin_kernel,
        out_shape=jax.ShapeDtypeStruct((Bp, 1), jnp.int32),
        grid_spec=pltpu.PrefetchScalarGridSpec(
            num_scalar_prefetch=0,
            grid=(D // tD,),
            in_specs=[
                pl.BlockSpec((Bp, tD), lambda d: (0, d)),   # x tile
                pl.BlockSpec((K, tD), lambda d: (0, d)),    # codebook tile, native (K, D)
            ],
            out_specs=pl.BlockSpec((Bp, 1), lambda d: (0, 0)),
            scratch_shapes=[
                pltpu.VMEM((Bp, K), jnp.float32),   # x @ E^T accumulator
                pltpu.VMEM((1, K), jnp.float32),    # ||E_k||^2 accumulator
            ],
        ),
        compiler_params=pltpu.CompilerParams(
            dimension_semantics=("arbitrary",),
            vmem_limit_bytes=32 * 1024 * 1024,      # v5e default scoped VMEM is 16 MiB
        ),
        cost_estimate=pl.CostEstimate(
            flops=2 * Bp * D * K + 3 * D * K,
            transcendentals=0,
            bytes_accessed=4 * (Bp * D + K * D + Bp),
        ),
    )(x_p, codebook)

    encoding_indices = idx_full[:B]        # (B, 1) int32 (torch returns int64)
    idx_flat = encoding_indices[:, 0]      # (B,) int32 -> SMEM scalar prefetch

    # -------- stage 2: index-driven gather + fused quantized / loss ----------
    D0 = D // 128
    x3 = x.reshape(B, D0, 128)             # free (trailing-split) reshapes
    e3 = codebook.reshape(K, D0, 128)
    scale = float(1.0 + commitment_cost) / float(B * D)

    q3, loss11 = pl.pallas_call(
        functools.partial(_gather_loss_kernel, scale=scale),
        out_shape=(
            jax.ShapeDtypeStruct((B, D0, 128), out_dtype),
            jax.ShapeDtypeStruct((1, 1), jnp.float32),
        ),
        grid_spec=pltpu.PrefetchScalarGridSpec(
            num_scalar_prefetch=1,
            grid=(B,),
            in_specs=[
                pl.BlockSpec((None, D0, 128), lambda b, idx: (b, 0, 0)),
                pl.BlockSpec((None, D0, 128), lambda b, idx: (idx[b], 0, 0)),
            ],
            out_specs=[
                pl.BlockSpec((None, D0, 128), lambda b, idx: (b, 0, 0)),
                pl.BlockSpec((1, 1), lambda b, idx: (0, 0)),
            ],
            scratch_shapes=[pltpu.VMEM((1, 1), jnp.float32)],
        ),
        compiler_params=pltpu.CompilerParams(dimension_semantics=("arbitrary",)),
        cost_estimate=pl.CostEstimate(
            flops=3 * B * D,
            transcendentals=0,
            bytes_accessed=4 * 3 * B * D + 4 * B,
        ),
    )(idx_flat, x3, e3)

    quantized = q3.reshape(inputs.shape)   # module hard-codes (B, 256, 8, 8)
    loss = loss11[0, 0]
    return quantized, loss, encoding_indices


if __name__ == "__main__":
    key = jax.random.PRNGKey(0)
    k_x, k_e = jax.random.split(key)

    B = 2
    num_embeddings = 128               # codebook size K
    embedding_dim = 256 * 8 * 8        # fixed by the module's .view(B, 256, 8, 8)
    commitment_cost = 0.25

    inputs = jax.random.normal(k_x, (B, 256, 8, 8), jnp.float32)
    codebook = jax.random.normal(k_e, (num_embeddings, embedding_dim), jnp.float32)

    fwd = jax.jit(functools.partial(vector_quantizer_gt, commitment_cost=commitment_cost))
    quantized, loss, enc_idx = fwd(inputs, codebook)
    (quantized, loss, enc_idx) = jax.block_until_ready((quantized, loss, enc_idx))

    assert quantized.shape == (B, 256, 8, 8)
    assert enc_idx.shape == (B, 1)

    # Pure-JAX reference mirroring the torch semantics.
    x_flat = inputs.reshape(B, -1)
    d2 = jnp.sum((x_flat[:, None, :] - codebook[None, :, :]) ** 2, axis=-1)   # (B, K)
    ref_idx = jnp.argmin(d2, axis=1)
    ref_q = codebook[ref_idx].reshape(B, 256, 8, 8)
    ref_loss = (1.0 + commitment_cost) * jnp.mean((ref_q - inputs) ** 2)

    np.testing.assert_array_equal(np.asarray(enc_idx[:, 0]), np.asarray(ref_idx))
    np.testing.assert_allclose(np.asarray(quantized), np.asarray(ref_q), atol=1e-6, rtol=0)
    np.testing.assert_allclose(np.asarray(loss), np.asarray(ref_loss), atol=1e-4, rtol=1e-4)

    print("KERNEL_OK")
</pallas_src>

<mosaic_0001>
module attributes {stable_mosaic.version = 11 : i64} {
  func.func @_dist_argmin_kernel(%arg0: i32, %arg1: memref<8x8192xf32, #tpu.memory_space<vmem>>, %arg2: memref<128x8192xf32, #tpu.memory_space<vmem>>, %arg3: memref<8x1xi32, #tpu.memory_space<vmem>>, %arg4: memref<8x128xf32, #tpu.memory_space<vmem>>, %arg5: memref<1x128xf32, #tpu.memory_space<vmem>>) attributes {dimension_semantics = [#tpu.dimension_semantics<arbitrary>], iteration_bounds = array<i64: 2>, scalar_prefetch = 0 : i64, scratch_operands = 2 : i64, tpu.core_type = #tpu.core_type<tc>, window_params = [{transform_indices = @transform_0, window_bounds = array<i64: 8, 8192>}, {transform_indices = @transform_1, window_bounds = array<i64: 128, 8192>}, {pipeline_mode = #tpu.pipeline_mode<synchronous>, transform_indices = @transform_2, window_bounds = array<i64: 8, 1>}]} {
    %c0_i32 = arith.constant 0 : i32
    %0 = arith.cmpi eq, %arg0, %c0_i32 : i32
    %1 = arith.extui %0 : i1 to i32
    %c0_i32_0 = arith.constant 0 : i32
    %2 = arith.cmpi ne, %1, %c0_i32_0 : i32
    scf.if %2 {
      %cst_15 = arith.constant 0.000000e+00 : f32
      %18 = vector.broadcast %cst_15 : f32 to vector<8x128xf32>
      %c0_16 = arith.constant 0 : index
      %c0_17 = arith.constant 0 : index
      %19 = vector.load %arg4[%c0_16, %c0_17] : memref<8x128xf32, #tpu.memory_space<vmem>>, vector<8x128xf32>
      tpu.vector_store %arg4[%c0_16, %c0_17], %18 {strides = array<i32>} : memref<8x128xf32, #tpu.memory_space<vmem>>, vector<8x128xf32>,
      %cst_18 = arith.constant 0.000000e+00 : f32
      %20 = vector.broadcast %cst_18 : f32 to vector<1x128xf32>
      %c0_19 = arith.constant 0 : index
      %c0_20 = arith.constant 0 : index
      %21 = vector.load %arg5[%c0_19, %c0_20] : memref<1x128xf32, #tpu.memory_space<vmem>>, vector<1x128xf32>
      tpu.vector_store %arg5[%c0_19, %c0_20], %20 {strides = array<i32>} : memref<1x128xf32, #tpu.memory_space<vmem>>, vector<1x128xf32>,
    } else {
    }
    %c0 = arith.constant 0 : index
    %c0_1 = arith.constant 0 : index
    %3 = vector.load %arg1[%c0, %c0_1] : memref<8x8192xf32, #tpu.memory_space<vmem>>, vector<8x8192xf32>
    %c0_2 = arith.constant 0 : index
    %c0_3 = arith.constant 0 : index
    %4 = vector.load %arg2[%c0_2, %c0_3] : memref<128x8192xf32, #tpu.memory_space<vmem>>, vector<128x8192xf32>
    %c0_4 = arith.constant 0 : index
    %c0_5 = arith.constant 0 : index
    %5 = vector.load %arg4[%c0_4, %c0_5] : memref<8x128xf32, #tpu.memory_space<vmem>>, vector<8x128xf32>
    %cst = arith.constant dense<0.000000e+00> : vector<8x128xf32>
    %6 = tpu.matmul %3, %4, %cst {dimension_numbers = #tpu.dot_dimension_numbers<[1], [1], [0], [0], [0, 0, 1, 0], [], []>} : vector<8x8192xf32>, vector<128x8192xf32>, vector<8x128xf32> -> vector<8x128xf32>
    %7 = arith.addf %5, %6 : vector<8x128xf32>
    %c0_6 = arith.constant 0 : index
    %c0_7 = arith.constant 0 : index
    %8 = vector.load %arg4[%c0_6, %c0_7] : memref<8x128xf32, #tpu.memory_space<vmem>>, vector<8x128xf32>
    tpu.vector_store %arg4[%c0_6, %c0_7], %7 {strides = array<i32>} : memref<8x128xf32, #tpu.memory_space<vmem>>, vector<8x128xf32>,
    %cst_8 = arith.constant 1.000000e+00 : f32
    %9 = vector.broadcast %cst_8 : f32 to vector<1x8192xf32>
    %c0_9 = arith.constant 0 : index
    %c0_10 = arith.constant 0 : index
    %10 = vector.load %arg5[%c0_9, %c0_10] : memref<1x128xf32, #tpu.memory_space<vmem>>, vector<1x128xf32>
    %11 = arith.mulf %4, %4 : vector<128x8192xf32>
    %cst_11 = arith.constant dense<0.000000e+00> : vector<1x128xf32>
    %12 = tpu.matmul %9, %11, %cst_11 {dimension_numbers = #tpu.dot_dimension_numbers<[1], [1], [0], [0], [0, 0, 1, 0], [], []>} : vector<1x8192xf32>, vector<128x8192xf32>, vector<1x128xf32> -> vector<1x128xf32>
    %13 = arith.addf %10, %12 : vector<1x128xf32>
    %c0_12 = arith.constant 0 : index
    %c0_13 = arith.constant 0 : index
    %14 = vector.load %arg5[%c0_12, %c0_13] : memref<1x128xf32, #tpu.memory_space<vmem>>, vector<1x128xf32>
    tpu.vector_store %arg5[%c0_12, %c0_13], %13 {strides = array<i32>} : memref<1x128xf32, #tpu.memory_space<vmem>>, vector<1x128xf32>,
    %c1_i32 = arith.constant 1 : i32
    %15 = arith.cmpi eq, %arg0, %c1_i32 : i32
    %16 = arith.extui %15 : i1 to i32
    %c0_i32_14 = arith.constant 0 : i32
    %17 = arith.cmpi ne, %16, %c0_i32_14 : i32
    scf.if %17 {
      %c0_15 = arith.constant 0 : index
      %c0_16 = arith.constant 0 : index
      %18 = vector.load %arg5[%c0_15, %c0_16] : memref<1x128xf32, #tpu.memory_space<vmem>>, vector<1x128xf32>
      %c0_17 = arith.constant 0 : index
      %c0_18 = arith.constant 0 : index
      %19 = vector.load %arg4[%c0_17, %c0_18] : memref<8x128xf32, #tpu.memory_space<vmem>>, vector<8x128xf32>
      %cst_19 = arith.constant 2.000000e+00 : f32
      %20 = vector.broadcast %cst_19 : f32 to vector<8x128xf32>
      %21 = arith.mulf %20, %19 : vector<8x128xf32>
      %22 = vector.broadcast %18 : vector<1x128xf32> to vector<8x128xf32>
      %23 = arith.subf %22, %21 : vector<8x128xf32>
      %24 = tpu.iota {dimensions = array<i32: 1>} : vector<8x128xi32>
      %cst_20 = arith.constant dense<0x7F800000> : vector<8xf32>
      %25 = vector.multi_reduction <minimumf>, %23, %cst_20 [1] : vector<8x128xf32> to vector<8xf32>
      %26 = vector.shape_cast %25 : vector<8xf32> to vector<8x1xf32>
      %27 = vector.broadcast %26 : vector<8x1xf32> to vector<8x128xf32>
      %28 = arith.cmpf oeq, %23, %27 : vector<8x128xf32>
      %c128_i32 = arith.constant 128 : i32
      %29 = vector.broadcast %c128_i32 : i32 to vector<8x128xi32>
      %30 = arith.select %28, %24, %29 : vector<8x128xi1>, vector<8x128xi32>
      %cst_21 = arith.constant dense<2147483647> : vector<8xi32>
      %31 = vector.multi_reduction <minsi>, %30, %cst_21 [1] : vector<8x128xi32> to vector<8xi32>
      %32 = vector.shape_cast %31 : vector<8xi32> to vector<8x1xi32>
      %c0_22 = arith.constant 0 : index
      %c0_23 = arith.constant 0 : index
      %33 = vector.load %arg3[%c0_22, %c0_23] : memref<8x1xi32, #tpu.memory_space<vmem>>, vector<8x1xi32>
      tpu.vector_store %arg3[%c0_22, %c0_23], %32 {strides = array<i32>} : memref<8x1xi32, #tpu.memory_space<vmem>>, vector<8x1xi32>,
    } else {
    }
    return
  }
  func.func @transform_0(%arg0: i32) -> (i32, i32) {
    %c0_i32 = arith.constant 0 : i32
    %c0_i32_0 = arith.constant 0 : i32
    return %c0_i32, %arg0 : i32, i32
  }
  func.func @transform_1(%arg0: i32) -> (i32, i32) {
    %c0_i32 = arith.constant 0 : i32
    %c0_i32_0 = arith.constant 0 : i32
    return %c0_i32, %arg0 : i32, i32
  }
  func.func @transform_2(%arg0: i32) -> (i32, i32) {
    %c0_i32 = arith.constant 0 : i32
    %c0_i32_0 = arith.constant 0 : i32
    %c0_i32_1 = arith.constant 0 : i32
    return %c0_i32, %c0_i32_0 : i32, i32
  }
}

module attributes {stable_mosaic.version = 11 : i64} {
  func.func @_gather_loss_kernel(%arg0: i32, %arg1: memref<2xi32, #tpu.memory_space<smem>>, %arg2: memref<1x128x128xf32, #tpu.memory_space<vmem>>, %arg3: memref<1x128x128xf32, #tpu.memory_space<vmem>>, %arg4: memref<1x128x128xf32, #tpu.memory_space<vmem>>, %arg5: memref<1x1xf32, #tpu.memory_space<vmem>>, %arg6: memref<1x1xf32, #tpu.memory_space<vmem>>) attributes {dimension_semantics = [#tpu.dimension_semantics<arbitrary>], iteration_bounds = array<i64: 2>, scalar_prefetch = 1 : i64, scratch_operands = 1 : i64, tpu.core_type = #tpu.core_type<tc>, window_params = [{transform_indices = @transform_0, window_bounds = array<i64: 1, 128, 128>}, {transform_indices = @transform_1, window_bounds = array<i64: 1, 128, 128>}, {transform_indices = @transform_2, window_bounds = array<i64: 1, 128, 128>}, {pipeline_mode = #tpu.pipeline_mode<synchronous>, transform_indices = @transform_3, window_bounds = array<i64: 1, 1>}]} {
    %c0_i32 = arith.constant 0 : i32
    %0 = arith.cmpi eq, %arg0, %c0_i32 : i32
    %1 = arith.extui %0 : i1 to i32
    %c0_i32_0 = arith.constant 0 : i32
    %2 = arith.cmpi ne, %1, %c0_i32_0 : i32
    scf.if %2 {
      %cst_15 = arith.constant 0.000000e+00 : f32
      %22 = vector.broadcast %cst_15 : f32 to vector<1x1xf32>
      %c0_16 = arith.constant 0 : index
      %c0_17 = arith.constant 0 : index
      %23 = vector.load %arg6[%c0_16, %c0_17] : memref<1x1xf32, #tpu.memory_space<vmem>>, vector<1x1xf32>
      tpu.vector_store %arg6[%c0_16, %c0_17], %22 {strides = array<i32>} : memref<1x1xf32, #tpu.memory_space<vmem>>, vector<1x1xf32>,
    } else {
    }
    %c0 = arith.constant 0 : index
    %c0_1 = arith.constant 0 : index
    %c0_2 = arith.constant 0 : index
    %3 = vector.load %arg3[%c0, %c0_1, %c0_2] : memref<1x128x128xf32, #tpu.memory_space<vmem>>, vector<1x128x128xf32>
    %4 = vector.shape_cast %3 : vector<1x128x128xf32> to vector<128x128xf32>
    %c0_3 = arith.constant 0 : index
    %c0_4 = arith.constant 0 : index
    %c0_5 = arith.constant 0 : index
    %5 = vector.load %arg4[%c0_3, %c0_4, %c0_5] : memref<1x128x128xf32, #tpu.memory_space<vmem>>, vector<1x128x128xf32>
    %6 = vector.shape_cast %5 : vector<1x128x128xf32> to vector<128x128xf32>
    %7 = vector.shape_cast %4 : vector<128x128xf32> to vector<1x128x128xf32>
    tpu.vector_store %arg4[%c0_3, %c0_4, %c0_5], %7 {strides = array<i32>} : memref<1x128x128xf32, #tpu.memory_space<vmem>>, vector<1x128x128xf32>,
    %c0_6 = arith.constant 0 : index
    %c0_7 = arith.constant 0 : index
    %c0_8 = arith.constant 0 : index
    %8 = vector.load %arg2[%c0_6, %c0_7, %c0_8] : memref<1x128x128xf32, #tpu.memory_space<vmem>>, vector<1x128x128xf32>
    %9 = vector.shape_cast %8 : vector<1x128x128xf32> to vector<128x128xf32>
    %10 = arith.subf %4, %9 : vector<128x128xf32>
    %11 = arith.mulf %10, %10 : vector<128x128xf32>
    %c0_9 = arith.constant 0 : index
    %c0_10 = arith.constant 0 : index
    %12 = vector.load %arg6[%c0_9, %c0_10] : memref<1x1xf32, #tpu.memory_space<vmem>>, vector<1x1xf32>
    %cst = arith.constant dense<0.000000e+00> : vector<128xf32>
    %13 = vector.multi_reduction <add>, %11, %cst [0] : vector<128x128xf32> to vector<128xf32>
    %14 = vector.shape_cast %13 : vector<128xf32> to vector<1x128xf32>
    %cst_11 = arith.constant dense<0.000000e+00> : vector<1xf32>
    %15 = vector.multi_reduction <add>, %14, %cst_11 [1] : vector<1x128xf32> to vector<1xf32>
    %16 = vector.shape_cast %15 : vector<1xf32> to vector<1x1xf32>
    %17 = arith.addf %12, %16 : vector<1x1xf32>
    %c0_12 = arith.constant 0 : index
    %c0_13 = arith.constant 0 : index
    %18 = vector.load %arg6[%c0_12, %c0_13] : memref<1x1xf32, #tpu.memory_space<vmem>>, vector<1x1xf32>
    tpu.vector_store %arg6[%c0_12, %c0_13], %17 {strides = array<i32>} : memref<1x1xf32, #tpu.memory_space<vmem>>, vector<1x1xf32>,
    %c1_i32 = arith.constant 1 : i32
    %19 = arith.cmpi eq, %arg0, %c1_i32 : i32
    %20 = arith.extui %19 : i1 to i32
    %c0_i32_14 = arith.constant 0 : i32
    %21 = arith.cmpi ne, %20, %c0_i32_14 : i32
    scf.if %21 {
      %c0_15 = arith.constant 0 : index
      %c0_16 = arith.constant 0 : index
      %22 = vector.load %arg6[%c0_15, %c0_16] : memref<1x1xf32, #tpu.memory_space<vmem>>, vector<1x1xf32>
      %cst_17 = arith.constant 3.81469727E-5 : f32
      %23 = vector.broadcast %cst_17 : f32 to vector<1x1xf32>
      %24 = arith.mulf %22, %23 : vector<1x1xf32>
      %c0_18 = arith.constant 0 : index
      %c0_19 = arith.constant 0 : index
      %25 = vector.load %arg5[%c0_18, %c0_19] : memref<1x1xf32, #tpu.memory_space<vmem>>, vector<1x1xf32>
      tpu.vector_store %arg5[%c0_18, %c0_19], %24 {strides = array<i32>} : memref<1x1xf32, #tpu.memory_space<vmem>>, vector<1x1xf32>,
    } else {
    }
    return
  }
  func.func @transform_0(%arg0: i32, %arg1: memref<2xi32, #tpu.memory_space<smem>>) -> (i32, i32, i32) {
    %c0_i32 = arith.constant 0 : i32
    %c0_i32_0 = arith.constant 0 : i32
    %c0_i32_1 = arith.constant 0 : i32
    return %arg0, %c0_i32, %c0_i32_0 : i32, i32, i32
  }
  func.func @transform_1(%arg0: i32, %arg1: memref<2xi32, #tpu.memory_space<smem>>) -> (i32, i32, i32) {
    %0 = arith.index_cast %arg0 : i32 to index
    %1 = memref.load %arg1[%0] : memref<2xi32, #tpu.memory_space<smem>>
    %c0_i32 = arith.constant 0 : i32
    %c0_i32_0 = arith.constant 0 : i32
    %c0_i32_1 = arith.constant 0 : i32
    return %1, %c0_i32, %c0_i32_0 : i32, i32, i32
  }
  func.func @transform_2(%arg0: i32, %arg1: memref<2xi32, #tpu.memory_space<smem>>) -> (i32, i32, i32) {
    %c0_i32 = arith.constant 0 : i32
    %c0_i32_0 = arith.constant 0 : i32
    %c0_i32_1 = arith.constant 0 : i32
    return %arg0, %c0_i32, %c0_i32_0 : i32, i32, i32
  }
  func.func @transform_3(%arg0: i32, %arg1: memref<2xi32, #tpu.memory_space<smem>>) -> (i32, i32) {
    %c0_i32 = arith.constant 0 : i32
    %c0_i32_0 = arith.constant 0 : i32
    %c0_i32_1 = arith.constant 0 : i32
    return %c0_i32, %c0_i32_0 : i32, i32
  }
}

</mosaic_0001>

<llo_original>
// kernel: vector_quantizer_gt.2
$region0: #{vector_quantizer_gt.2}
  #allocation0 [shape = 'u32[]', space=smem, size = 0x4, offset = 0x4, fixed_abs, tag = 'smem constant byte address 0x4 - core index']
  #allocation1 [shape = 'u32[144,128]{1,0:T(1,128)}', space=vmem, size = 0x12000, scoped, tag = 'internal scratch']
  #allocation2 [shape = 'f32[8,128]{1,0:T(8,128)}', space=vmem, size = 0x1000, scoped, tag = 'scratch operand']
  #allocation3 [shape = 'f32[1,128]{1,0:T(1,128)}', space=vmem, size = 0x200, scoped, tag = 'scratch operand']
  %s0 = inlined_call_operand.vmem [shape: f32[8,16384], index: 0, kind: input, shape index: {}]
  %s1 = inlined_call_operand.hbm [shape: f32[128,16384], index: 1, kind: input, shape index: {}]
  %s2 = inlined_call_operand.vmem [shape: s32[8,1], index: 2, kind: output, shape index: {}]
  %s3 = sld [smem:[#allocation0]]
  $region53: #{vector_quantizer_gt.2} parent=0
    _
  %s5 = ssub.s32 1, %s3
  %s6 = scalar_select 0, %s5, %s3
  $region1: #{vector_quantizer_gt.2} parent=0
    #allocation4 [shape = 'u8[8388608]{0}', space=vmem, size = 0x800000, scoped, tag = 'input window, operand 1']
    #allocation5 [shape = 's32[2]{0}', space=sflag, size = 0x8, scoped, tag = 'scoped memory for vector_quantizer_gt.2']
    %7 = vsyncpa [#allocation5], 0
    %s8 = scalar_lea.sflag [#allocation5], 1
    %9 = vsyncpa %s8, 0
    loop: start=0, step=1, limit=4
    $region2: #{vector_quantizer_gt.2} parent=1 // loop_pre_header
      _
    $region3: #{vector_quantizer_gt.2} parent=1 // loop_header
      %s11 = sphi 0, %s15
      %p12 = scmp.ge.s32.totalorder %s11, 4
      %s21 = sphi 0, %s23
      %s24 = sphi 0, %s21
      %s25 = sphi 0, %s24
      %s41 = sphi 0, %s25
      %s47 = sphi 0, %s49
      %s50 = sphi 0, %s47
      %s51 = sphi 0, %s50
      %s67 = sphi 0, %s51
      %s71 = sphi 0, %s71
      %s73 = sphi 0, %s71
      %s74 = sphi 0, %s73
      %s88 = sphi 0, %s74
    $region4: #{vector_quantizer_gt.2} parent=1 // loop_header_branch
      %14 = sbr.rel (%p12) target = $region8
    $region5: #{vector_quantizer_gt.2} parent=1 // loop_body
      %s16 = ssub.s32 %s11, 1
      %s17 = ssub.s32 %s11, 2
      %s18 = sadd.s32 %s11, 1
      %s19 = ssub.s32 %s11, %s18
      %p20 = scmp.eq.s32.totalorder %s19, 0
      %s22 = sadd.s32 %s21, 1
      %s23 = scalar_select %p20, %s21, %s22
      %p26 = pneg %p20
      %p27 = scmp.eq.s32.totalorder %s11, 1
      %p28 = por %p26, %p27
      %p29 = scmp.ne.s32.totalorder %s21, %s24
      %p30 = scmp.eq.s32.totalorder %s11, 0
      %p31 = por %p29, %p30
      %p32 = scmp.ne.s32.totalorder %s21, %s24
      %p33 = scmp.eq.s32.totalorder %s16, 1
      %p34 = por %p32, %p33
      %p35 = scmp.ne.s32.totalorder %s24, %s25
      %p36 = scmp.eq.s32.totalorder %s16, 0
      %p37 = por %p35, %p36
      %p38 = scmp.ne.s32.totalorder %s24, %s25
      %p39 = scmp.eq.s32.totalorder %s17, 1
      %p40 = por %p38, %p39
      %p42 = scmp.ne.s32.totalorder %s25, %s41
      %p43 = scmp.eq.s32.totalorder %s17, 0
      %p44 = por %p42, %p43
      %s45 = ssub.s32 %s11, %s18
      %p46 = scmp.eq.s32.totalorder %s45, 0
      %s48 = sadd.s32 %s47, 1
      %s49 = scalar_select %p46, %s47, %s48
      %p52 = pneg %p46
      %p53 = scmp.eq.s32.totalorder %s11, 1
      %p54 = por %p52, %p53
      %p55 = scmp.ne.s32.totalorder %s47, %s50
      %p56 = scmp.eq.s32.totalorder %s11, 0
      %p57 = por %p55, %p56
      %p58 = scmp.ne.s32.totalorder %s47, %s50
      %p59 = scmp.eq.s32.totalorder %s16, 1
      %p60 = por %p58, %p59
      %p61 = scmp.ne.s32.totalorder %s50, %s51
      %p62 = scmp.eq.s32.totalorder %s16, 0
      %p63 = por %p61, %p62
      %p64 = scmp.ne.s32.totalorder %s50, %s51
      %p65 = scmp.eq.s32.totalorder %s17, 1
      %p66 = por %p64, %p65
      %p68 = scmp.ne.s32.totalorder %s51, %s67
      %p69 = scmp.eq.s32.totalorder %s17, 0
      %p70 = por %p68, %p69
      %s72 = sadd.s32 %s71, 1
      %p75 = scmp.eq.s32.totalorder %s11, 1
      %p76 = scmp.ne.s32.totalorder %s71, %s73
      %p77 = scmp.eq.s32.totalorder %s11, 0
      %p78 = por %p76, %p77
      %p79 = scmp.ne.s32.totalorder %s71, %s73
      %p80 = scmp.eq.s32.totalorder %s16, 1
      %p81 = por %p79, %p80
      %p82 = scmp.ne.s32.totalorder %s73, %s74
      %p83 = scmp.eq.s32.totalorder %s16, 0
      %p84 = por %p82, %p83
      %p85 = scmp.ne.s32.totalorder %s73, %s74
      %p86 = scmp.eq.s32.totalorder %s17, 1
      %p87 = por %p85, %p86
      %p89 = scmp.ne.s32.totalorder %s74, %s88
      %p90 = scmp.eq.s32.totalorder %s17, 0
      %p91 = por %p89, %p90
      %p92 = scmp.le.s32.totalorder 1, %s11
      %p93 = scmp.lt.s32.totalorder %s11, 3
      %p94 = pnand %p92, %p93
      %p95 = pneg %p94
      // Predicated region
      $region9: #{vector_quantizer_gt.2} parent=5 // pred_check
        _
      $region10: #{vector_quantizer_gt.2} parent=5 // pred_check_branch
        %97 = sbr.rel (%p94) target = $region12
      $region11: #{vector_quantizer_gt.2} parent=5 // pred_region
        %s98 = ssub.s32 %s11, 1
      $region12: #{vector_quantizer_gt.2} parent=5 // pred_fallthru
        _
      %p99 = scmp.lt.s32.totalorder %s11, 2
      // Predicated region
      $region13: #{vector_quantizer_gt.2} parent=5 // pred_check
        %p100 = pneg %p99
      $region14: #{vector_quantizer_gt.2} parent=5 // pred_check_branch
        %102 = sbr.rel (%p100) target = $region16
      $region15: #{vector_quantizer_gt.2} parent=5 // pred_region
        // Predicated region
        $region17: #{vector_quantizer_gt.2} parent=15 // pred_check
          %p103 = pneg %p31
        $region18: #{vector_quantizer_gt.2} parent=15 // pred_check_branch
          %105 = sbr.rel (%p103) target = $region20
        $region19: #{vector_quantizer_gt.2} parent=15 // pred_region
          %s106 = smul.u32 64, %s11
          %p107 = scmp.lt.s32.totalorder %s106, 127
          %s108 = scalar_select %p107, %s106, 127
          %s109 = smul.addr %s108, 8
          %s110 = scalar_lea.vmem %s0, %s109
          %s111 = smul.u32 64, %s11
        $region20: #{vector_quantizer_gt.2} parent=15 // pred_fallthru
          _
        // Predicated region
        $region21: #{vector_quantizer_gt.2} parent=15 // pred_check
          %p112 = pneg %p57
        $region22: #{vector_quantizer_gt.2} parent=15 // pred_check_branch
          %114 = sbr.rel (%p112) target = $region24
        $region23: #{vector_quantizer_gt.2} parent=15 // pred_region
          %s115 = sand.u32 %s47, 1
          %s116 = scalar_lea.sflag [#allocation5], %s115
          %s117 = sand.u32 %s47, 1
          %s118 = smul.addr %s117, 8192
          %s119 = scalar_lea.vmem [#allocation4], %s118
          %s120 = smul.u32 64, %s11
          %s122 = ssub.s32 131072, 131072
          %123 = vsyncadd %s116, %s122
          %s124 = smul.addr %s120, 128
          %s125 = scalar_lea.hbm %s1, %s124
          %s126 = sshll.u32 %s119, 4
          %s127 = int_to_ptr.vmem [resolvable:$true] %s126
          %132 = dma.hbm_to_vmem [thread:$0]  %s125, 131072, %s127, %s116, 16384, 8192, 512
        $region24: #{vector_quantizer_gt.2} parent=15 // pred_fallthru
          _
      $region16: #{vector_quantizer_gt.2} parent=5 // pred_fallthru
        _
      %p133 = scmp.le.s32.totalorder 1, %s11
      %p134 = scmp.lt.s32.totalorder %s11, 3
      %p135 = pnand %p133, %p134
      %p136 = pneg %p135
      // Predicated region
      $region25: #{vector_quantizer_gt.2} parent=5 // pred_check
        _
      $region26: #{vector_quantizer_gt.2} parent=5 // pred_check_branch
        %138 = sbr.rel (%p135) target = $region28
      $region27: #{vector_quantizer_gt.2} parent=5 // pred_region
        %s139 = ssub.s32 %s11, 1
        %s140 = sand.u32 %s50, 1
        %s141 = scalar_lea.sflag [#allocation5], %s140
        %s142 = sand.u32 %s50, 1
        %s143 = smul.addr %s142, 8192
        %s144 = scalar_lea.vmem [#allocation4], %s143
        // Predicated region
        $region29: #{vector_quantizer_gt.2} parent=27 // pred_check
          %p145 = pneg %p63
        $region30: #{vector_quantizer_gt.2} parent=27 // pred_check_branch
          %147 = sbr.rel (%p145) target = $region32
        $region31: #{vector_quantizer_gt.2} parent=27 // pred_region
          %148 = dma.done %s141, 131072
        $region32: #{vector_quantizer_gt.2} parent=27 // pred_fallthru
          _
        %s149 = smul.u32 64, %s16
        %p150 = scmp.lt.s32.totalorder %s149, 127
        %s151 = scalar_select %p150, %s149, 127
        %s152 = smul.addr %s151, 8
        %s153 = scalar_lea.vmem %s0, %s152
        %p154 = pneg %p37
        %p155 = pneg %p34
        %s156 = sand.u32 %s50, 1
        %s157 = scalar_lea.sflag [#allocation5], %s156
        %s158 = sand.u32 %s50, 1
        %s159 = smul.addr %s158, 8192
        %s160 = scalar_lea.vmem [#allocation4], %s159
        %p161 = pneg %p63
        %p162 = pneg %p60
        %p163 = pneg %p84
        %p164 = pneg %p81
        %s165 = smul.u32 64, %s16
        %p166 = scmp.lt.s32.totalorder %s165, 127
        %s167 = scalar_select %p166, %s165, 127
        %s168 = smul.addr %s167, 8
        %s169 = scalar_lea.vmem %s0, %s168
        %s170 = smul.u32 64, %s16
        %s171 = smul.u32 64, %s16
        %p172 = scmp.eq.s32.totalorder %s16, 0
        // Predicated region
        $region33: #{vector_quantizer_gt.2} parent=27 // pred_check
          %p173 = pneg %p172
        $region34: #{vector_quantizer_gt.2} parent=27 // pred_check_branch
          %175 = sbr.rel (%p173) target = $region36
        $region35: #{vector_quantizer_gt.2} parent=27 // pred_region
          %176 = vst [vmem:[#allocation2] sm:$0xff] 0.0
          %177 = vst [vmem:[#allocation3] sm:$0x1] 0.0
        $region36: #{vector_quantizer_gt.2} parent=27 // pred_fallthru
          _
        %v178 = vld [vmem:[%s169] sm:$0xff]
        %v179 = vld [vmem:[%s169 + $0x8] sm:$0xff]
        %v180 = vld [vmem:[%s169 + $0x10] sm:$0xff]
        %v181 = vld [vmem:[%s169 + $0x18] sm:$0xff]
        %v182 = vld [vmem:[%s169 + $0x20] sm:$0xff]
        %v183 = vld [vmem:[%s169 + $0x28] sm:$0xff]
        %v184 = vld [vmem:[%s169 + $0x30] sm:$0xff]
        %v185 = vld [vmem:[%s169 + $0x38] sm:$0xff]
        %v186 = vld [vmem:[%s169 + $0x40] sm:$0xff]
        %v187 = vld [vmem:[%s169 + $0x48] sm:$0xff]
        %v188 = vld [vmem:[%s169 + $0x50] sm:$0xff]
        %v189 = vld [vmem:[%s169 + $0x58] sm:$0xff]
        %v190 = vld [vmem:[%s169 + $0x60] sm:$0xff]
        %v191 = vld [vmem:[%s169 + $0x68] sm:$0xff]
        %v192 = vld [vmem:[%s169 + $0x70] sm:$0xff]
        %v193 = vld [vmem:[%s169 + $0x78] sm:$0xff]
        %v194 = vld [vmem:[%s169 + $0x80] sm:$0xff]
        %v195 = vld [vmem:[%s169 + $0x88] sm:$0xff]
        %v196 = vld [vmem:[%s169 + $0x90] sm:$0xff]
        %v197 = vld [vmem:[%s169 + $0x98] sm:$0xff]
        %v198 = vld [vmem:[%s169 + $0xa0] sm:$0xff]
        %v199 = vld [vmem:[%s169 + $0xa8] sm:$0xff]
        %v200 = vld [vmem:[%s169 + $0xb0] sm:$0xff]
        %v201 = vld [vmem:[%s169 + $0xb8] sm:$0xff]
        %v202 = vld [vmem:[%s169 + $0xc0] sm:$0xff]
        %v203 = vld [vmem:[%s169 + $0xc8] sm:$0xff]
        %v204 = vld [vmem:[%s169 + $0xd0] sm:$0xff]
        %v205 = vld [vmem:[%s169 + $0xd8] sm:$0xff]
        %v206 = vld [vmem:[%s169 + $0xe0] sm:$0xff]
        %v207 = vld [vmem:[%s169 + $0xe8] sm:$0xff]
        %v208 = vld [vmem:[%s169 + $0xf0] sm:$0xff]
        %v209 = vld [vmem:[%s169 + $0xf8] sm:$0xff]
        %v210 = vld [vmem:[%s169 + $0x100] sm:$0xff]
        %v211 = vld [vmem:[%s169 + $0x108] sm:$0xff]
        %v212 = vld [vmem:[%s169 + $0x110] sm:$0xff]
        %v213 = vld [vmem:[%s169 + $0x118] sm:$0xff]
        %v214 = vld [vmem:[%s169 + $0x120] sm:$0xff]
        %v215 = vld [vmem:[%s169 + $0x128] sm:$0xff]
        %v216 = vld [vmem:[%s169 + $0x130] sm:$0xff]
        %v217 = vld [vmem:[%s169 + $0x138] sm:$0xff]
        %v218 = vld [vmem:[%s169 + $0x140] sm:$0xff]
        %v219 = vld [vmem:[%s169 + $0x148] sm:$0xff]
        %v220 = vld [vmem:[%s169 + $0x150] sm:$0xff]
        %v221 = vld [vmem:[%s169 + $0x158] sm:$0xff]
        %v222 = vld [vmem:[%s169 + $0x160] sm:$0xff]
        %v223 = vld [vmem:[%s169 + $0x168] sm:$0xff]
        %v224 = vld [vmem:[%s169 + $0x170] sm:$0xff]
        %v225 = vld [vmem:[%s169 + $0x178] sm:$0xff]
        %v226 = vld [vmem:[%s169 + $0x180] sm:$0xff]
        %v227 = vld [vmem:[%s169 + $0x188] sm:$0xff]
        %v228 = vld [vmem:[%s169 + $0x190] sm:$0xff]
        %v229 = vld [vmem:[%s169 + $0x198] sm:$0xff]
        %v230 = vld [vmem:[%s169 + $0x1a0] sm:$0xff]
        %v231 = vld [vmem:[%s169 + $0x1a8] sm:$0xff]
        %v232 = vld [vmem:[%s169 + $0x1b0] sm:$0xff]
        %v233 = vld [vmem:[%s169 + $0x1b8] sm:$0xff]
        %v234 = vld [vmem:[%s169 + $0x1c0] sm:$0xff]
        %v235 = vld [vmem:[%s169 + $0x1c8] sm:$0xff]
        %v236 = vld [vmem:[%s169 + $0x1d0] sm:$0xff]
        %v237 = vld [vmem:[%s169 + $0x1d8] sm:$0xff]
        %v238 = vld [vmem:[%s169 + $0x1e0] sm:$0xff]
        %v239 = vld [vmem:[%s169 + $0x1e8] sm:$0xff]
        %v240 = vld [vmem:[%s169 + $0x1f0] sm:$0xff]
        %v241 = vld [vmem:[%s169 + $0x1f8] sm:$0xff]
        %v242 = vld [vmem:[%s144] sm:$0xff]
        %v243 = vld [vmem:[%s144 + $0x8] sm:$0xff]
        %v244 = vld [vmem:[%s144 + $0x10] sm:$0xff]
        %v245 = vld [vmem:[%s144 + $0x18] sm:$0xff]
        %v246 = vld [vmem:[%s144 + $0x20] sm:$0xff]
        %v247 = vld [vmem:[%s144 + $0x28] sm:$0xff]
        %v248 = vld [vmem:[%s144 + $0x30] sm:$0xff]
        %v249 = vld [vmem:[%s144 + $0x38] sm:$0xff]
        %v250 = vld [vmem:[%s144 + $0x40] sm:$0xff]
        %v251 = vld [vmem:[%s144 + $0x48] sm:$0xff]
        %v252 = vld [vmem:[%s144 + $0x50] sm:$0xff]
        %v253 = vld [vmem:[%s144 + $0x58] sm:$0xff]
        %v254 = vld [vmem:[%s144 + $0x60] sm:$0xff]
        %v255 = vld [vmem:[%s144 + $0x68] sm:$0xff]
        %v256 = vld [vmem:[%s144 + $0x70] sm:$0xff]
        %v257 = vld [vmem:[%s144 + $0x78] sm:$0xff]
        %v258 = vld [vmem:[%s144 + $0x80] sm:$0xff]
        %v259 = vld [vmem:[%s144 + $0x88] sm:$0xff]
        %v260 = vld [vmem:[%s144 + $0x90] sm:$0xff]
        %v261 = vld [vmem:[%s144 + $0x98] sm:$0xff]
        %v262 = vld [vmem:[%s144 + $0xa0] sm:$0xff]
        %v263 = vld [vmem:[%s144 + $0xa8] sm:$0xff]
        %v264 = vld [vmem:[%s144 + $0xb0] sm:$0xff]
        %v265 = vld [vmem:[%s144 + $0xb8] sm:$0xff]
        %v266 = vld [vmem:[%s144 + $0xc0] sm:$0xff]
        %v267 = vld [vmem:[%s144 + $0xc8] sm:$0xff]
        %v268 = vld [vmem:[%s144 + $0xd0] sm:$0xff]
        %v269 = vld [vmem:[%s144 + $0xd8] sm:$0xff]
        %v270 = vld [vmem:[%s144 + $0xe0] sm:$0xff]
        %v271 = vld [vmem:[%s144 + $0xe8] sm:$0xff]
        %v272 = vld [vmem:[%s144 + $0xf0] sm:$0xff]
        %v273 = vld [vmem:[%s144 + $0xf8] sm:$0xff]
        %v274 = vld [vmem:[%s144 + $0x100] sm:$0xff]
        %v275 = vld [vmem:[%s144 + $0x108] sm:$0xff]
        %v276 = vld [vmem:[%s144 + $0x110] sm:$0xff]
        %v277 = vld [vmem:[%s144 + $0x118] sm:$0xff]
        %v278 = vld [vmem:[%s144 + $0x120] sm:$0xff]
        %v279 = vld [vmem:[%s144 + $0x128] sm:$0xff]
        %v280 = vld [vmem:[%s144 + $0x130] sm:$0xff]
        %v281 = vld [vmem:[%s144 + $0x138] sm:$0xff]
        %v282 = vld [vmem:[%s144 + $0x140] sm:$0xff]
        %v283 = vld [vmem:[%s144 + $0x148] sm:$0xff]
        %v284 = vld [vmem:[%s144 + $0x150] sm:$0xff]
        %v285 = vld [vmem:[%s144 + $0x158] sm:$0xff]
        %v286 = vld [vmem:[%s144 + $0x160] sm:$0xff]
        %v287 = vld [vmem:[%s144 + $0x168] sm:$0xff]
        %v288 = vld [vmem:[%s144 + $0x170] sm:$0xff]
        %v289 = vld [vmem:[%s144 + $0x178] sm:$0xff]
        %v290 = vld [vmem:[%s144 + $0x180] sm:$0xff]
        %v291 = vld [vmem:[%s144 + $0x188] sm:$0xff]
        %v292 = vld [vmem:[%s144 + $0x190] sm:$0xff]
        %v293 = vld [vmem:[%s144 + $0x198] sm:$0xff]
        %v294 = vld [vmem:[%s144 + $0x1a0] sm:$0xff]
        %v295 = vld [vmem:[%s144 + $0x1a8] sm:$0xff]
        %v296 = vld [vmem:[%s144 + $0x1b0] sm:$0xff]
        %v297 = vld [vmem:[%s144 + $0x1b8] sm:$0xff]
        %v298 = vld [vmem:[%s144 + $0x1c0] sm:$0xff]
        %v299 = vld [vmem:[%s144 + $0x1c8] sm:$0xff]
        %v300 = vld [vmem:[%s144 + $0x1d0] sm:$0xff]
        %v301 = vld [vmem:[%s144 + $0x1d8] sm:$0xff]
        %v302 = vld [vmem:[%s144 + $0x1e0] sm:$0xff]
        %v303 = vld [vmem:[%s144 + $0x1e8] sm:$0xff]
        %v304 = vld [vmem:[%s144 + $0x1f0] sm:$0xff]
        %v305 = vld [vmem:[%s144 + $0x1f8] sm:$0xff]
        %v306 = vld [vmem:[%s144 + $0x200] sm:$0xff]
        %v307 = vld [vmem:[%s144 + $0x208] sm:$0xff]
        %v308 = vld [vmem:[%s144 + $0x210] sm:$0xff]
        %v309 = vld [vmem:[%s144 + $0x218] sm:$0xff]
        %v310 = vld [vmem:[%s144 + $0x220] sm:$0xff]
        %v311 = vld [vmem:[%s144 + $0x228] sm:$0xff]
        %v312 = vld [vmem:[%s144 + $0x230] sm:$0xff]
        %v313 = vld [vmem:[%s144 + $0x238] sm:$0xff]
        %v314 = vld [vmem:[%s144 + $0x240] sm:$0xff]
        %v315 = vld [vmem:[%s144 + $0x248] sm:$0xff]
        %v316 = vld [vmem:[%s144 + $0x250] sm:$0xff]
        %v317 = vld [vmem:[%s144 + $0x258] sm:$0xff]
        %v318 = vld [vmem:[%s144 + $0x260] sm:$0xff]
        %v319 = vld [vmem:[%s144 + $0x268] sm:$0xff]
        %v320 = vld [vmem:[%s144 + $0x270] sm:$0xff]
        %v321 = vld [vmem:[%s144 + $0x278] sm:$0xff]
        %v322 = vld [vmem:[%s144 + $0x280] sm:$0xff]
        %v323 = vld [vmem:[%s144 + $0x288] sm:$0xff]
        %v324 = vld [vmem:[%s144 + $0x290] sm:$0xff]
        %v325 = vld [vmem:[%s144 + $0x298] sm:$0xff]
        %v326 = vld [vmem:[%s144 + $0x2a0] sm:$0xff]
        %v327 = vld [vmem:[%s144 + $0x2a8] sm:$0xff]
        %v328 = vld [vmem:[%s144 + $0x2b0] sm:$0xff]
        %v329 = vld [vmem:[%s144 + $0x2b8] sm:$0xff]
        %v330 = vld [vmem:[%s144 + $0x2c0] sm:$0xff]
        %v331 = vld [vmem:[%s144 + $0x2c8] sm:$0xff]
        %v332 = vld [vmem:[%s144 + $0x2d0] sm:$0xff]
        %v333 = vld [vmem:[%s144 + $0x2d8] sm:$0xff]
        %v334 = vld [vmem:[%s144 + $0x2e0] sm:$0xff]
        %v335 = vld [vmem:[%s144 + $0x2e8] sm:$0xff]
        %v336 = vld [vmem:[%s144 + $0x2f0] sm:$0xff]
        %v337 = vld [vmem:[%s144 + $0x2f8] sm:$0xff]
        %v338 = vld [vmem:[%s144 + $0x300] sm:$0xff]
        %v339 = vld [vmem:[%s144 + $0x308] sm:$0xff]
        %v340 = vld [vmem:[%s144 + $0x310] sm:$0xff]
        %v341 = vld [vmem:[%s144 + $0x318] sm:$0xff]
        %v342 = vld [vmem:[%s144 + $0x320] sm:$0xff]
        %v343 = vld [vmem:[%s144 + $0x328] sm:$0xff]
        %v344 = vld [vmem:[%s144 + $0x330] sm:$0xff]
        %v345 = vld [vmem:[%s144 + $0x338] sm:$0xff]
        %v346 = vld [vmem:[%s144 + $0x340] sm:$0xff]
        %v347 = vld [vmem:[%s144 + $0x348] sm:$0xff]
        %v348 = vld [vmem:[%s144 + $0x350] sm:$0xff]
        %v349 = vld [vmem:[%s144 + $0x358] sm:$0xff]
        %v350 = vld [vmem:[%s144 + $0x360] sm:$0xff]
        %v351 = vld [vmem:[%s144 + $0x368] sm:$0xff]
        %v352 = vld [vmem:[%s144 + $0x370] sm:$0xff]
        %v353 = vld [vmem:[%s144 + $0x378] sm:$0xff]
        %v354 = vld [vmem:[%s144 + $0x380] sm:$0xff]
        %v355 = vld [vmem:[%s144 + $0x388] sm:$0xff]
        %v356 = vld [vmem:[%s144 + $0x390] sm:$0xff]
        %v357 = vld [vmem:[%s144 + $0x398] sm:$0xff]
        %v358 = vld [vmem:[%s144 + $0x3a0] sm:$0xff]
        %v359 = vld [vmem:[%s144 + $0x3a8] sm:$0xff]
        %v360 = vld [vmem:[%s144 + $0x3b0] sm:$0xff]
        %v361 = vld [vmem:[%s144 + $0x3b8] sm:$0xff]
        %v362 = vld [vmem:[%s144 + $0x3c0] sm:$0xff]
        %v363 = vld [vmem:[%s144 + $0x3c8] sm:$0xff]
        %v364 = vld [vmem:[%s144 + $0x3d0] sm:$0xff]
        %v365 = vld [vmem:[%s144 + $0x3d8] sm:$0xff]
        %v366 = vld [vmem:[%s144 + $0x3e0] sm:$0xff]
        %v367 = vld [vmem:[%s144 + $0x3e8] sm:$0xff]
        %v368 = vld [vmem:[%s144 + $0x3f0] sm:$0xff]
        %v369 = vld [vmem:[%s144 + $0x3f8] sm:$0xff]
        %v370 = vld [vmem:[%s144 + $0x400] sm:$0xff]
        %v371 = vld [vmem:[%s144 + $0x408] sm:$0xff]
        %v372 = vld [vmem:[%s144 + $0x410] sm:$0xff]
        %v373 = vld [vmem:[%s144 + $0x418] sm:$0xff]
        %v374 = vld [vmem:[%s144 + $0x420] sm:$0xff]
        %v375 = vld [vmem:[%s144 + $0x428] sm:$0xff]
        %v376 = vld [vmem:[%s144 + $0x430] sm:$0xff]
        %v377 = vld [vmem:[%s144 + $0x438] sm:$0xff]
        %v378 = vld [vmem:[%s144 + $0x440] sm:$0xff]
        %v379 = vld [vmem:[%s144 + $0x448] sm:$0xff]
        %v380 = vld [vmem:[%s144 + $0x450] sm:$0xff]
        %v381 = vld [vmem:[%s144 + $0x458] sm:$0xff]
        %v382 = vld [vmem:[%s144 + $0x460] sm:$0xff]
        %v383 = vld [vmem:[%s144 + $0x468] sm:$0xff]
        %v384 = vld [vmem:[%s144 + $0x470] sm:$0xff]
        %v385 = vld [vmem:[%s144 + $0x478] sm:$0xff]
        %v386 = vld [vmem:[%s144 + $0x480] sm:$0xff]
        %v387 = vld [vmem:[%s144 + $0x488] sm:$0xff]
        %v388 = vld [vmem:[%s144 + $0x490] sm:$0xff]
        %v389 = vld [vmem:[%s144 + $0x498] sm:$0xff]
        %v390 = vld [vmem:[%s144 + $0x4a0] sm:$0xff]
        %v391 = vld [vmem:[%s144 + $0x4a8] sm:$0xff]
        %v392 = vld [vmem:[%s144 + $0x4b0] sm:$0xff]
        %v393 = vld [vmem:[%s144 + $0x4b8] sm:$0xff]
        %v394 = vld [vmem:[%s144 + $0x4c0] sm:$0xff]
        %v395 = vld [vmem:[%s144 + $0x4c8] sm:$0xff]
        %v396 = vld [vmem:[%s144 + $0x4d0] sm:$0xff]
        %v397 = vld [vmem:[%s144 + $0x4d8] sm:$0xff]
        %v398 = vld [vmem:[%s144 + $0x4e0] sm:$0xff]
        %v399 = vld [vmem:[%s144 + $0x4e8] sm:$0xff]
        %v400 = vld [vmem:[%s144 + $0x4f0] sm:$0xff]
        %v401 = vld [vmem:[%s144 + $0x4f8] sm:$0xff]
        %v402 = vld [vmem:[%s144 + $0x500] sm:$0xff]
        %v403 = vld [vmem:[%s144 + $0x508] sm:$0xff]
        %v404 = vld [vmem:[%s144 + $0x510] sm:$0xff]
        %v405 = vld [vmem:[%s144 + $0x518] sm:$0xff]
        %v406 = vld [vmem:[%s144 + $0x520] sm:$0xff]
        %v407 = vld [vmem:[%s144 + $0x528] sm:$0xff]
        %v408 = vld [vmem:[%s144 + $0x530] sm:$0xff]
        %v409 = vld [vmem:[%s144 + $0x538] sm:$0xff]
        %v410 = vld [vmem:[%s144 + $0x540] sm:$0xff]
        %v411 = vld [vmem:[%s144 + $0x548] sm:$0xff]
        %v412 = vld [vmem:[%s144 + $0x550] sm:$0xff]
        %v413 = vld [vmem:[%s144 + $0x558] sm:$0xff]
        %v414 = vld [vmem:[%s144 + $0x560] sm:$0xff]
        %v415 = vld [vmem:[%s144 + $0x568] sm:$0xff]
        %v416 = vld [vmem:[%s144 + $0x570] sm:$0xff]
        %v417 = vld [vmem:[%s144 + $0x578] sm:$0xff]
        %v418 = vld [vmem:[%s144 + $0x580] sm:$0xff]
        %v419 = vld [vmem:[%s144 + $0x588] sm:$0xff]
        %v420 = vld [vmem:[%s144 + $0x590] sm:$0xff]
        %v421 = vld [vmem:[%s144 + $0x598] sm:$0xff]
        %v422 = vld [vmem:[%s144 + $0x5a0] sm:$0xff]
        %v423 = vld [vmem:[%s144 + $0x5a8] sm:$0xff]
        %v424 = vld [vmem:[%s144 + $0x5b0] sm:$0xff]
        %v425 = vld [vmem:[%s144 + $0x5b8] sm:$0xff]
        %v426 = vld [vmem:[%s144 + $0x5c0] sm:$0xff]
        %v427 = vld [vmem:[%s144 + $0x5c8] sm:$0xff]
        %v428 = vld [vmem:[%s144 + $0x5d0] sm:$0xff]
        %v429 = vld [vmem:[%s144 + $0x5d8] sm:$0xff]
        %v430 = vld [vmem:[%s144 + $0x5e0] sm:$0xff]
        %v431 = vld [vmem:[%s144 + $0x5e8] sm:$0xff]
        %v432 = vld [vmem:[%s144 + $0x5f0] sm:$0xff]
        %v433 = vld [vmem:[%s144 + $0x5f8] sm:$0xff]
        %v434 = vld [vmem:[%s144 + $0x600] sm:$0xff]
        %v435 = vld [vmem:[%s144 + $0x608] sm:$0xff]
        %v436 = vld [vmem:[%s144 + $0x610] sm:$0xff]
        %v437 = vld [vmem:[%s144 + $0x618] sm:$0xff]
        %v438 = vld [vmem:[%s144 + $0x620] sm:$0xff]
        %v439 = vld [vmem:[%s144 + $0x628] sm:$0xff]
        %v440 = vld [vmem:[%s144 + $0x630] sm:$0xff]
        %v441 = vld [vmem:[%s144 + $0x638] sm:$0xff]
        %v442 = vld [vmem:[%s144 + $0x640] sm:$0xff]
        %v443 = vld [vmem:[%s144 + $0x648] sm:$0xff]
        %v444 = vld [vmem:[%s144 + $0x650] sm:$0xff]
        %v445 = vld [vmem:[%s144 + $0x658] sm:$0xff]
        %v446 = vld [vmem:[%s144 + $0x660] sm:$0xff]
        %v447 = vld [vmem:[%s144 + $0x668] sm:$0xff]
        %v448 = vld [vmem:[%s144 + $0x670] sm:$0xff]
        %v449 = vld [vmem:[%s144 + $0x678] sm:$0xff]
        %v450 = vld [vmem:[%s144 + $0x680] sm:$0xff]
        %v451 = vld [vmem:[%s144 + $0x688] sm:$0xff]
        %v452 = vld [vmem:[%s144 + $0x690] sm:$0xff]
        %v453 = vld [vmem:[%s144 + $0x698] sm:$0xff]
        %v454 = vld [vmem:[%s144 + $0x6a0] sm:$0xff]
        %v455 = vld [vmem:[%s144 + $0x6a8] sm:$0xff]
        %v456 = vld [vmem:[%s144 + $0x6b0] sm:$0xff]
        %v457 = vld [vmem:[%s144 + $0x6b8] sm:$0xff]
        %v458 = vld [vmem:[%s144 + $0x6c0] sm:$0xff]
        %v459 = vld [vmem:[%s144 + $0x6c8] sm:$0xff]
        %v460 = vld [vmem:[%s144 + $0x6d0] sm:$0xff]
        %v461 = vld [vmem:[%s144 + $0x6d8] sm:$0xff]
        %v462 = vld [vmem:[%s144 + $0x6e0] sm:$0xff]
        %v463 = vld [vmem:[%s144 + $0x6e8] sm:$0xff]
        %v464 = vld [vmem:[%s144 + $0x6f0] sm:$0xff]
        %v465 = vld [vmem:[%s144 + $0x6f8] sm:$0xff]
        %v466 = vld [vmem:[%s144 + $0x700] sm:$0xff]
        %v467 = vld [vmem:[%s144 + $0x708] sm:$0xff]
        %v468 = vld [vmem:[%s144 + $0x710] sm:$0xff]
        %v469 = vld [vmem:[%s144 + $0x718] sm:$0xff]
        %v470 = vld [vmem:[%s144 + $0x720] sm:$0xff]
        %v471 = vld [vmem:[%s144 + $0x728] sm:$0xff]
        %v472 = vld [vmem:[%s144 + $0x730] sm:$0xff]
        %v473 = vld [vmem:[%s144 + $0x738] sm:$0xff]
        %v474 = vld [vmem:[%s144 + $0x740] sm:$0xff]
        %v475 = vld [vmem:[%s144 + $0x748] sm:$0xff]
        %v476 = vld [vmem:[%s144 + $0x750] sm:$0xff]
        %v477 = vld [vmem:[%s144 + $0x758] sm:$0xff]
        %v478 = vld [vmem:[%s144 + $0x760] sm:$0xff]
        %v479 = vld [vmem:[%s144 + $0x768] sm:$0xff]
        %v480 = vld [vmem:[%s144 + $0x770] sm:$0xff]
        %v481 = vld [vmem:[%s144 + $0x778] sm:$0xff]
        %v482 = vld [vmem:[%s144 + $0x780] sm:$0xff]
        %v483 = vld [vmem:[%s144 + $0x788] sm:$0xff]
        %v484 = vld [vmem:[%s144 + $0x790] sm:$0xff]
        %v485 = vld [vmem:[%s144 + $0x798] sm:$0xff]
        %v486 = vld [vmem:[%s144 + $0x7a0] sm:$0xff]
        %v487 = vld [vmem:[%s144 + $0x7a8] sm:$0xff]
        %v488 = vld [vmem:[%s144 + $0x7b0] sm:$0xff]
        %v489 = vld [vmem:[%s144 + $0x7b8] sm:$0xff]
        %v490 = vld [vmem:[%s144 + $0x7c0] sm:$0xff]
        %v491 = vld [vmem:[%s144 + $0x7c8] sm:$0xff]
        %v492 = vld [vmem:[%s144 + $0x7d0] sm:$0xff]
        %v493 = vld [vmem:[%s144 + $0x7d8] sm:$0xff]
        %v494 = vld [vmem:[%s144 + $0x7e0] sm:$0xff]
        %v495 = vld [vmem:[%s144 + $0x7e8] sm:$0xff]
        %v496 = vld [vmem:[%s144 + $0x7f0] sm:$0xff]
        %v497 = vld [vmem:[%s144 + $0x7f8] sm:$0xff]
        %v498 = vld [vmem:[%s144 + $0x800] sm:$0xff]
        %v499 = vld [vmem:[%s144 + $0x808] sm:$0xff]
        %v500 = vld [vmem:[%s144 + $0x810] sm:$0xff]
        %v501 = vld [vmem:[%s144 + $0x818] sm:$0xff]
        %v502 = vld [vmem:[%s144 + $0x820] sm:$0xff]
        %v503 = vld [vmem:[%s144 + $0x828] sm:$0xff]
        %v504 = vld [vmem:[%s144 + $0x830] sm:$0xff]
        %v505 = vld [vmem:[%s144 + $0x838] sm:$0xff]
        %v506 = vld [vmem:[%s144 + $0x840] sm:$0xff]
        %v507 = vld [vmem:[%s144 + $0x848] sm:$0xff]
        %v508 = vld [vmem:[%s144 + $0x850] sm:$0xff]
        %v509 = vld [vmem:[%s144 + $0x858] sm:$0xff]
        %v510 = vld [vmem:[%s144 + $0x860] sm:$0xff]
        %v511 = vld [vmem:[%s144 + $0x868] sm:$0xff]
        %v512 = vld [vmem:[%s144 + $0x870] sm:$0xff]
        %v513 = vld [vmem:[%s144 + $0x878] sm:$0xff]
        %v514 = vld [vmem:[%s144 + $0x880] sm:$0xff]
        %v515 = vld [vmem:[%s144 + $0x888] sm:$0xff]
        %v516 = vld [vmem:[%s144 + $0x890] sm:$0xff]
        %v517 = vld [vmem:[%s144 + $0x898] sm:$0xff]
        %v518 = vld [vmem:[%s144 + $0x8a0] sm:$0xff]
        %v519 = vld [vmem:[%s144 + $0x8a8] sm:$0xff]
        %v520 = vld [vmem:[%s144 + $0x8b0] sm:$0xff]
        %v521 = vld [vmem:[%s144 + $0x8b8] sm:$0xff]
        %v522 = vld [vmem:[%s144 + $0x8c0] sm:$0xff]
        %v523 = vld [vmem:[%s144 + $0x8c8] sm:$0xff]
        %v524 = vld [vmem:[%s144 + $0x8d0] sm:$0xff]
        %v525 = vld [vmem:[%s144 + $0x8d8] sm:$0xff]
        %v526 = vld [vmem:[%s144 + $0x8e0] sm:$0xff]
        %v527 = vld [vmem:[%s144 + $0x8e8] sm:$0xff]
        %v528 = vld [vmem:[%s144 + $0x8f0] sm:$0xff]
        %v529 = vld [vmem:[%s144 + $0x8f8] sm:$0xff]
        %v530 = vld [vmem:[%s144 + $0x900] sm:$0xff]
        %v531 = vld [vmem:[%s144 + $0x908] sm:$0xff]
        %v532 = vld [vmem:[%s144 + $0x910] sm:$0xff]
        %v533 = vld [vmem:[%s144 + $0x918] sm:$0xff]
        %v534 = vld [vmem:[%s144 + $0x920] sm:$0xff]
        %v535 = vld [vmem:[%s144 + $0x928] sm:$0xff]
        %v536 = vld [vmem:[%s144 + $0x930] sm:$0xff]
        %v537 = vld [vmem:[%s144 + $0x938] sm:$0xff]
        %v538 = vld [vmem:[%s144 + $0x940] sm:$0xff]
        %v539 = vld [vmem:[%s144 + $0x948] sm:$0xff]
        %v540 = vld [vmem:[%s144 + $0x950] sm:$0xff]
        %v541 = vld [vmem:[%s144 + $0x958] sm:$0xff]
        %v542 = vld [vmem:[%s144 + $0x960] sm:$0xff]
        %v543 = vld [vmem:[%s144 + $0x968] sm:$0xff]
        %v544 = vld [vmem:[%s144 + $0x970] sm:$0xff]
        %v545 = vld [vmem:[%s144 + $0x978] sm:$0xff]
        %v546 = vld [vmem:[%s144 + $0x980] sm:$0xff]
        %v547 = vld [vmem:[%s144 + $0x988] sm:$0xff]
        %v548 = vld [vmem:[%s144 + $0x990] sm:$0xff]
        %v549 = vld [vmem:[%s144 + $0x998] sm:$0xff]
        %v550 = vld [vmem:[%s144 + $0x9a0] sm:$0xff]
        %v551 = vld [vmem:[%s144 + $0x9a8] sm:$0xff]
        %v552 = vld [vmem:[%s144 + $0x9b0] sm:$0xff]
        %v553 = vld [vmem:[%s144 + $0x9b8] sm:$0xff]
        %v554 = vld [vmem:[%s144 + $0x9c0] sm:$0xff]
        %v555 = vld [vmem:[%s144 + $0x9c8] sm:$0xff]
        %v556 = vld [vmem:[%s144 + $0x9d0] sm:$0xff]
        %v557 = vld [vmem:[%s144 + $0x9d8] sm:$0xff]
        %v558 = vld [vmem:[%s144 + $0x9e0] sm:$0xff]
        %v559 = vld [vmem:[%s144 + $0x9e8] sm:$0xff]
        %v560 = vld [vmem:[%s144 + $0x9f0] sm:$0xff]
        %v561 = vld [vmem:[%s144 + $0x9f8] sm:$0xff]
        %v562 = vld [vmem:[%s144 + $0xa00] sm:$0xff]
        %v563 = vld [vmem:[%s144 + $0xa08] sm:$0xff]
        %v564 = vld [vmem:[%s144 + $0xa10] sm:$0xff]
        %v565 = vld [vmem:[%s144 + $0xa18] sm:$0xff]
        %v566 = vld [vmem:[%s144 + $0xa20] sm:$0xff]
        %v567 = vld [vmem:[%s144 + $0xa28] sm:$0xff]
        %v568 = vld [vmem:[%s144 + $0xa30] sm:$0xff]
        %v569 = vld [vmem:[%s144 + $0xa38] sm:$0xff]
        %v570 = vld [vmem:[%s144 + $0xa40] sm:$0xff]
        %v571 = vld [vmem:[%s144 + $0xa48] sm:$0xff]
        %v572 = vld [vmem:[%s144 + $0xa50] sm:$0xff]
        %v573 = vld [vmem:[%s144 + $0xa58] sm:$0xff]
        %v574 = vld [vmem:[%s144 + $0xa60] sm:$0xff]
        %v575 = vld [vmem:[%s144 + $0xa68] sm:$0xff]
        %v576 = vld [vmem:[%s144 + $0xa70] sm:$0xff]
        %v577 = vld [vmem:[%s144 + $0xa78] sm:$0xff]
        %v578 = vld [vmem:[%s144 + $0xa80] sm:$0xff]
        %v579 = vld [vmem:[%s144 + $0xa88] sm:$0xff]
        %v580 = vld [vmem:[%s144 + $0xa90] sm:$0xff]
        %v581 = vld [vmem:[%s144 + $0xa98] sm:$0xff]
        %v582 = vld [vmem:[%s144 + $0xaa0] sm:$0xff]
        %v583 = vld [vmem:[%s144 + $0xaa8] sm:$0xff]
        %v584 = vld [vmem:[%s144 + $0xab0] sm:$0xff]
        %v585 = vld [vmem:[%s144 + $0xab8] sm:$0xff]
        %v586 = vld [vmem:[%s144 + $0xac0] sm:$0xff]
        %v587 = vld [vmem:[%s144 + $0xac8] sm:$0xff]
        %v588 = vld [vmem:[%s144 + $0xad0] sm:$0xff]
        %v589 = vld [vmem:[%s144 + $0xad8] sm:$0xff]
        %v590 = vld [vmem:[%s144 + $0xae0] sm:$0xff]
        %v591 = vld [vmem:[%s144 + $0xae8] sm:$0xff]
        %v592 = vld [vmem:[%s144 + $0xaf0] sm:$0xff]
        %v593 = vld [vmem:[%s144 + $0xaf8] sm:$0xff]
        %v594 = vld [vmem:[%s144 + $0xb00] sm:$0xff]
        %v595 = vld [vmem:[%s144 + $0xb08] sm:$0xff]
        %v596 = vld [vmem:[%s144 + $0xb10] sm:$0xff]
        %v597 = vld [vmem:[%s144 + $0xb18] sm:$0xff]
        %v598 = vld [vmem:[%s144 + $0xb20] sm:$0xff]
        %v599 = vld [vmem:[%s144 + $0xb28] sm:$0xff]
        %v600 = vld [vmem:[%s144 + $0xb30] sm:$0xff]
        %v601 = vld [vmem:[%s144 + $0xb38] sm:$0xff]
        %v602 = vld [vmem:[%s144 + $0xb40] sm:$0xff]
        %v603 = vld [vmem:[%s144 + $0xb48] sm:$0xff]
        %v604 = vld [vmem:[%s144 + $0xb50] sm:$0xff]
        %v605 = vld [vmem:[%s144 + $0xb58] sm:$0xff]
        %v606 = vld [vmem:[%s144 + $0xb60] sm:$0xff]
        %v607 = vld [vmem:[%s144 + $0xb68] sm:$0xff]
        %v608 = vld [vmem:[%s144 + $0xb70] sm:$0xff]
        %v609 = vld [vmem:[%s144 + $0xb78] sm:$0xff]
        %v610 = vld [vmem:[%s144 + $0xb80] sm:$0xff]
        %v611 = vld [vmem:[%s144 + $0xb88] sm:$0xff]
        %v612 = vld [vmem:[%s144 + $0xb90] sm:$0xff]
        %v613 = vld [vmem:[%s144 + $0xb98] sm:$0xff]
        %v614 = vld [vmem:[%s144 + $0xba0] sm:$0xff]
        %v615 = vld [vmem:[%s144 + $0xba8] sm:$0xff]
        %v616 = vld [vmem:[%s144 + $0xbb0] sm:$0xff]
        %v617 = vld [vmem:[%s144 + $0xbb8] sm:$0xff]
        %v618 = vld [vmem:[%s144 + $0xbc0] sm:$0xff]
        %v619 = vld [vmem:[%s144 + $0xbc8] sm:$0xff]
        %v620 = vld [vmem:[%s144 + $0xbd0] sm:$0xff]
        %v621 = vld [vmem:[%s144 + $0xbd8] sm:$0xff]
        %v622 = vld [vmem:[%s144 + $0xbe0] sm:$0xff]
        %v623 = vld [vmem:[%s144 + $0xbe8] sm:$0xff]
        %v624 = vld [vmem:[%s144 + $0xbf0] sm:$0xff]
        %v625 = vld [vmem:[%s144 + $0xbf8] sm:$0xff]
        %v626 = vld [vmem:[%s144 + $0xc00] sm:$0xff]
        %v627 = vld [vmem:[%s144 + $0xc08] sm:$0xff]
        %v628 = vld [vmem:[%s144 + $0xc10] sm:$0xff]
        %v629 = vld [vmem:[%s144 + $0xc18] sm:$0xff]
        %v630 = vld [vmem:[%s144 + $0xc20] sm:$0xff]
        %v631 = vld [vmem:[%s144 + $0xc28] sm:$0xff]
        %v632 = vld [vmem:[%s144 + $0xc30] sm:$0xff]
        %v633 = vld [vmem:[%s144 + $0xc38] sm:$0xff]
        %v634 = vld [vmem:[%s144 + $0xc40] sm:$0xff]
        %v635 = vld [vmem:[%s144 + $0xc48] sm:$0xff]
        %v636 = vld [vmem:[%s144 + $0xc50] sm:$0xff]
        %v637 = vld [vmem:[%s144 + $0xc58] sm:$0xff]
        %v638 = vld [vmem:[%s144 + $0xc60] sm:$0xff]
        %v639 = vld [vmem:[%s144 + $0xc68] sm:$0xff]
        %v640 = vld [vmem:[%s144 + $0xc70] sm:$0xff]
        %v641 = vld [vmem:[%s144 + $0xc78] sm:$0xff]
        %v642 = vld [vmem:[%s144 + $0xc80] sm:$0xff]
        %v643 = vld [vmem:[%s144 + $0xc88] sm:$0xff]
        %v644 = vld [vmem:[%s144 + $0xc90] sm:$0xff]
        %v645 = vld [vmem:[%s144 + $0xc98] sm:$0xff]
        %v646 = vld [vmem:[%s144 + $0xca0] sm:$0xff]
        %v647 = vld [vmem:[%s144 + $0xca8] sm:$0xff]
        %v648 = vld [vmem:[%s144 + $0xcb0] sm:$0xff]
        %v649 = vld [vmem:[%s144 + $0xcb8] sm:$0xff]
        %v650 = vld [vmem:[%s144 + $0xcc0] sm:$0xff]
        %v651 = vld [vmem:[%s144 + $0xcc8] sm:$0xff]
        %v652 = vld [vmem:[%s144 + $0xcd0] sm:$0xff]
        %v653 = vld [vmem:[%s144 + $0xcd8] sm:$0xff]
        %v654 = vld [vmem:[%s144 + $0xce0] sm:$0xff]
        %v655 = vld [vmem:[%s144 + $0xce8] sm:$0xff]
        %v656 = vld [vmem:[%s144 + $0xcf0] sm:$0xff]
        %v657 = vld [vmem:[%s144 + $0xcf8] sm:$0xff]
        %v658 = vld [vmem:[%s144 + $0xd00] sm:$0xff]
        %v659 = vld [vmem:[%s144 + $0xd08] sm:$0xff]
        %v660 = vld [vmem:[%s144 + $0xd10] sm:$0xff]
        %v661 = vld [vmem:[%s144 + $0xd18] sm:$0xff]
        %v662 = vld [vmem:[%s144 + $0xd20] sm:$0xff]
        %v663 = vld [vmem:[%s144 + $0xd28] sm:$0xff]
        %v664 = vld [vmem:[%s144 + $0xd30] sm:$0xff]
        %v665 = vld [vmem:[%s144 + $0xd38] sm:$0xff]
        %v666 = vld [vmem:[%s144 + $0xd40] sm:$0xff]
        %v667 = vld [vmem:[%s144 + $0xd48] sm:$0xff]
        %v668 = vld [vmem:[%s144 + $0xd50] sm:$0xff]
        %v669 = vld [vmem:[%s144 + $0xd58] sm:$0xff]
        %v670 = vld [vmem:[%s144 + $0xd60] sm:$0xff]
        %v671 = vld [vmem:[%s144 + $0xd68] sm:$0xff]
        %v672 = vld [vmem:[%s144 + $0xd70] sm:$0xff]
        %v673 = vld [vmem:[%s144 + $0xd78] sm:$0xff]
        %v674 = vld [vmem:[%s144 + $0xd80] sm:$0xff]
        %v675 = vld [vmem:[%s144 + $0xd88] sm:$0xff]
        %v676 = vld [vmem:[%s144 + $0xd90] sm:$0xff]
        %v677 = vld [vmem:[%s144 + $0xd98] sm:$0xff]
        %v678 = vld [vmem:[%s144 + $0xda0] sm:$0xff]
        %v679 = vld [vmem:[%s144 + $0xda8] sm:$0xff]
        %v680 = vld [vmem:[%s144 + $0xdb0] sm:$0xff]
        %v681 = vld [vmem:[%s144 + $0xdb8] sm:$0xff]
        %v682 = vld [vmem:[%s144 + $0xdc0] sm:$0xff]
        %v683 = vld [vmem:[%s144 + $0xdc8] sm:$0xff]
        %v684 = vld [vmem:[%s144 + $0xdd0] sm:$0xff]
        %v685 = vld [vmem:[%s144 + $0xdd8] sm:$0xff]
        %v686 = vld [vmem:[%s144 + $0xde0] sm:$0xff]
        %v687 = vld [vmem:[%s144 + $0xde8] sm:$0xff]
        %v688 = vld [vmem:[%s144 + $0xdf0] sm:$0xff]
        %v689 = vld [vmem:[%s144 + $0xdf8] sm:$0xff]
        %v690 = vld [vmem:[%s144 + $0xe00] sm:$0xff]
        %v691 = vld [vmem:[%s144 + $0xe08] sm:$0xff]
        %v692 = vld [vmem:[%s144 + $0xe10] sm:$0xff]
        %v693 = vld [vmem:[%s144 + $0xe18] sm:$0xff]
        %v694 = vld [vmem:[%s144 + $0xe20] sm:$0xff]
        %v695 = vld [vmem:[%s144 + $0xe28] sm:$0xff]
        %v696 = vld [vmem:[%s144 + $0xe30] sm:$0xff]
        %v697 = vld [vmem:[%s144 + $0xe38] sm:$0xff]
        %v698 = vld [vmem:[%s144 + $0xe40] sm:$0xff]
        %v699 = vld [vmem:[%s144 + $0xe48] sm:$0xff]
        %v700 = vld [vmem:[%s144 + $0xe50] sm:$0xff]
        %v701 = vld [vmem:[%s144 + $0xe58] sm:$0xff]
        %v702 = vld [vmem:[%s144 + $0xe60] sm:$0xff]
        %v703 = vld [vmem:[%s144 + $0xe68] sm:$0xff]
        %v704 = vld [vmem:[%s144 + $0xe70] sm:$0xff]
        %v705 = vld [vmem:[%s144 + $0xe78] sm:$0xff]
        %v706 = vld [vmem:[%s144 + $0xe80] sm:$0xff]
        %v707 = vld [vmem:[%s144 + $0xe88] sm:$0xff]
        %v708 = vld [vmem:[%s144 + $0xe90] sm:$0xff]
        %v709 = vld [vmem:[%s144 + $0xe98] sm:$0xff]
        %v710 = vld [vmem:[%s144 + $0xea0] sm:$0xff]
        %v711 = vld [vmem:[%s144 + $0xea8] sm:$0xff]
        %v712 = vld [vmem:[%s144 + $0xeb0] sm:$0xff]
        %v713 = vld [vmem:[%s144 + $0xeb8] sm:$0xff]
        %v714 = vld [vmem:[%s144 + $0xec0] sm:$0xff]
        %v715 = vld [vmem:[%s144 + $0xec8] sm:$0xff]
        %v716 = vld [vmem:[%s144 + $0xed0] sm:$0xff]
        %v717 = vld [vmem:[%s144 + $0xed8] sm:$0xff]
        %v718 = vld [vmem:[%s144 + $0xee0] sm:$0xff]
        %v719 = vld [vmem:[%s144 + $0xee8] sm:$0xff]
        %v720 = vld [vmem:[%s144 + $0xef0] sm:$0xff]
        %v721 = vld [vmem:[%s144 + $0xef8] sm:$0xff]
        %v722 = vld [vmem:[%s144 + $0xf00] sm:$0xff]
        %v723 = vld [vmem:[%s144 + $0xf08] sm:$0xff]
        %v724 = vld [vmem:[%s144 + $0xf10] sm:$0xff]
        %v725 = vld [vmem:[%s144 + $0xf18] sm:$0xff]
        %v726 = vld [vmem:[%s144 + $0xf20] sm:$0xff]
        %v727 = vld [vmem:[%s144 + $0xf28] sm:$0xff]
        %v728 = vld [vmem:[%s144 + $0xf30] sm:$0xff]
        %v729 = vld [vmem:[%s144 + $0xf38] sm:$0xff]
        %v730 = vld [vmem:[%s144 + $0xf40] sm:$0xff]
        %v731 = vld [vmem:[%s144 + $0xf48] sm:$0xff]
        %v732 = vld [vmem:[%s144 + $0xf50] sm:$0xff]
        %v733 = vld [vmem:[%s144 + $0xf58] sm:$0xff]
        %v734 = vld [vmem:[%s144 + $0xf60] sm:$0xff]
        %v735 = vld [vmem:[%s144 + $0xf68] sm:$0xff]
        %v736 = vld [vmem:[%s144 + $0xf70] sm:$0xff]
        %v737 = vld [vmem:[%s144 + $0xf78] sm:$0xff]
        %v738 = vld [vmem:[%s144 + $0xf80] sm:$0xff]
        %v739 = vld [vmem:[%s144 + $0xf88] sm:$0xff]
        %v740 = vld [vmem:[%s144 + $0xf90] sm:$0xff]
        %v741 = vld [vmem:[%s144 + $0xf98] sm:$0xff]
        %v742 = vld [vmem:[%s144 + $0xfa0] sm:$0xff]
        %v743 = vld [vmem:[%s144 + $0xfa8] sm:$0xff]
        %v744 = vld [vmem:[%s144 + $0xfb0] sm:$0xff]
        %v745 = vld [vmem:[%s144 + $0xfb8] sm:$0xff]
        %v746 = vld [vmem:[%s144 + $0xfc0] sm:$0xff]
        %v747 = vld [vmem:[%s144 + $0xfc8] sm:$0xff]
        %v748 = vld [vmem:[%s144 + $0xfd0] sm:$0xff]
        %v749 = vld [vmem:[%s144 + $0xfd8] sm:$0xff]
        %v750 = vld [vmem:[%s144 + $0xfe0] sm:$0xff]
        %v751 = vld [vmem:[%s144 + $0xfe8] sm:$0xff]
        %v752 = vld [vmem:[%s144 + $0xff0] sm:$0xff]
        %v753 = vld [vmem:[%s144 + $0xff8] sm:$0xff]
        %v754 = vld [vmem:[%s144 + $0x1000] sm:$0xff]
        %v755 = vld [vmem:[%s144 + $0x1008] sm:$0xff]
        %v756 = vld [vmem:[%s144 + $0x1010] sm:$0xff]
        %v757 = vld [vmem:[%s144 + $0x1018] sm:$0xff]
        %v758 = vld [vmem:[%s144 + $0x1020] sm:$0xff]
        %v759 = vld [vmem:[%s144 + $0x1028] sm:$0xff]
        %v760 = vld [vmem:[%s144 + $0x1030] sm:$0xff]
        %v761 = vld [vmem:[%s144 + $0x1038] sm:$0xff]
        %v762 = vld [vmem:[%s144 + $0x1040] sm:$0xff]
        %v763 = vld [vmem:[%s144 + $0x1048] sm:$0xff]
        %v764 = vld [vmem:[%s144 + $0x1050] sm:$0xff]
        %v765 = vld [vmem:[%s144 + $0x1058] sm:$0xff]
        %v766 = vld [vmem:[%s144 + $0x1060] sm:$0xff]
        %v767 = vld [vmem:[%s144 + $0x1068] sm:$0xff]
        %v768 = vld [vmem:[%s144 + $0x1070] sm:$0xff]
        %v769 = vld [vmem:[%s144 + $0x1078] sm:$0xff]
        %v770 = vld [vmem:[%s144 + $0x1080] sm:$0xff]
        %v771 = vld [vmem:[%s144 + $0x1088] sm:$0xff]
        %v772 = vld [vmem:[%s144 + $0x1090] sm:$0xff]
        %v773 = vld [vmem:[%s144 + $0x1098] sm:$0xff]
        %v774 = vld [vmem:[%s144 + $0x10a0] sm:$0xff]
        %v775 = vld [vmem:[%s144 + $0x10a8] sm:$0xff]
        %v776 = vld [vmem:[%s144 + $0x10b0] sm:$0xff]
        %v777 = vld [vmem:[%s144 + $0x10b8] sm:$0xff]
        %v778 = vld [vmem:[%s144 + $0x10c0] sm:$0xff]
        %v779 = vld [vmem:[%s144 + $0x10c8] sm:$0xff]
        %v780 = vld [vmem:[%s144 + $0x10d0] sm:$0xff]
        %v781 = vld [vmem:[%s144 + $0x10d8] sm:$0xff]
        %v782 = vld [vmem:[%s144 + $0x10e0] sm:$0xff]
        %v783 = vld [vmem:[%s144 + $0x10e8] sm:$0xff]
        %v784 = vld [vmem:[%s144 + $0x10f0] sm:$0xff]
        %v785 = vld [vmem:[%s144 + $0x10f8] sm:$0xff]
        %v786 = vld [vmem:[%s144 + $0x1100] sm:$0xff]
        %v787 = vld [vmem:[%s144 + $0x1108] sm:$0xff]
        %v788 = vld [vmem:[%s144 + $0x1110] sm:$0xff]
        %v789 = vld [vmem:[%s144 + $0x1118] sm:$0xff]
        %v790 = vld [vmem:[%s144 + $0x1120] sm:$0xff]
        %v791 = vld [vmem:[%s144 + $0x1128] sm:$0xff]
        %v792 = vld [vmem:[%s144 + $0x1130] sm:$0xff]
        %v793 = vld [vmem:[%s144 + $0x1138] sm:$0xff]
        %v794 = vld [vmem:[%s144 + $0x1140] sm:$0xff]
        %v795 = vld [vmem:[%s144 + $0x1148] sm:$0xff]
        %v796 = vld [vmem:[%s144 + $0x1150] sm:$0xff]
        %v797 = vld [vmem:[%s144 + $0x1158] sm:$0xff]
        %v798 = vld [vmem:[%s144 + $0x1160] sm:$0xff]
        %v799 = vld [vmem:[%s144 + $0x1168] sm:$0xff]
        %v800 = vld [vmem:[%s144 + $0x1170] sm:$0xff]
        %v801 = vld [vmem:[%s144 + $0x1178] sm:$0xff]
        %v802 = vld [vmem:[%s144 + $0x1180] sm:$0xff]
        %v803 = vld [vmem:[%s144 + $0x1188] sm:$0xff]
        %v804 = vld [vmem:[%s144 + $0x1190] sm:$0xff]
        %v805 = vld [vmem:[%s144 + $0x1198] sm:$0xff]
        %v806 = vld [vmem:[%s144 + $0x11a0] sm:$0xff]
        %v807 = vld [vmem:[%s144 + $0x11a8] sm:$0xff]
        %v808 = vld [vmem:[%s144 + $0x11b0] sm:$0xff]
        %v809 = vld [vmem:[%s144 + $0x11b8] sm:$0xff]
        %v810 = vld [vmem:[%s144 + $0x11c0] sm:$0xff]
        %v811 = vld [vmem:[%s144 + $0x11c8] sm:$0xff]
        %v812 = vld [vmem:[%s144 + $0x11d0] sm:$0xff]
        %v813 = vld [vmem:[%s144 + $0x11d8] sm:$0xff]
        %v814 = vld [vmem:[%s144 + $0x11e0] sm:$0xff]
        %v815 = vld [vmem:[%s144 + $0x11e8] sm:$0xff]
        %v816 = vld [vmem:[%s144 + $0x11f0] sm:$0xff]
        %v817 = vld [vmem:[%s144 + $0x11f8] sm:$0xff]
        %v818 = vld [vmem:[%s144 + $0x1200] sm:$0xff]
        %v819 = vld [vmem:[%s144 + $0x1208] sm:$0xff]
        %v820 = vld [vmem:[%s144 + $0x1210] sm:$0xff]
        %v821 = vld [vmem:[%s144 + $0x1218] sm:$0xff]
        %v822 = vld [vmem:[%s144 + $0x1220] sm:$0xff]
        %v823 = vld [vmem:[%s144 + $0x1228] sm:$0xff]
        %v824 = vld [vmem:[%s144 + $0x1230] sm:$0xff]
        %v825 = vld [vmem:[%s144 + $0x1238] sm:$0xff]
        %v826 = vld [vmem:[%s144 + $0x1240] sm:$0xff]
        %v827 = vld [vmem:[%s144 + $0x1248] sm:$0xff]
        %v828 = vld [vmem:[%s144 + $0x1250] sm:$0xff]
        %v829 = vld [vmem:[%s144 + $0x1258] sm:$0xff]
        %v830 = vld [vmem:[%s144 + $0x1260] sm:$0xff]
        %v831 = vld [vmem:[%s144 + $0x1268] sm:$0xff]
        %v832 = vld [vmem:[%s144 + $0x1270] sm:$0xff]
        %v833 = vld [vmem:[%s144 + $0x1278] sm:$0xff]
        %v834 = vld [vmem:[%s144 + $0x1280] sm:$0xff]
        %v835 = vld [vmem:[%s144 + $0x1288] sm:$0xff]
        %v836 = vld [vmem:[%s144 + $0x1290] sm:$0xff]
        %v837 = vld [vmem:[%s144 + $0x1298] sm:$0xff]
        %v838 = vld [vmem:[%s144 + $0x12a0] sm:$0xff]
        %v839 = vld [vmem:[%s144 + $0x12a8] sm:$0xff]
        %v840 = vld [vmem:[%s144 + $0x12b0] sm:$0xff]
        %v841 = vld [vmem:[%s144 + $0x12b8] sm:$0xff]
        %v842 = vld [vmem:[%s144 + $0x12c0] sm:$0xff]
        %v843 = vld [vmem:[%s144 + $0x12c8] sm:$0xff]
        %v844 = vld [vmem:[%s144 + $0x12d0] sm:$0xff]
        %v845 = vld [vmem:[%s144 + $0x12d8] sm:$0xff]
        %v846 = vld [vmem:[%s144 + $0x12e0] sm:$0xff]
        %v847 = vld [vmem:[%s144 + $0x12e8] sm:$0xff]
        %v848 = vld [vmem:[%s144 + $0x12f0] sm:$0xff]
        %v849 = vld [vmem:[%s144 + $0x12f8] sm:$0xff]
        %v850 = vld [vmem:[%s144 + $0x1300] sm:$0xff]
        %v851 = vld [vmem:[%s144 + $0x1308] sm:$0xff]
        %v852 = vld [vmem:[%s144 + $0x1310] sm:$0xff]
        %v853 = vld [vmem:[%s144 + $0x1318] sm:$0xff]
        %v854 = vld [vmem:[%s144 + $0x1320] sm:$0xff]
        %v855 = vld [vmem:[%s144 + $0x1328] sm:$0xff]
        %v856 = vld [vmem:[%s144 + $0x1330] sm:$0xff]
        %v857 = vld [vmem:[%s144 + $0x1338] sm:$0xff]
        %v858 = vld [vmem:[%s144 + $0x1340] sm:$0xff]
        %v859 = vld [vmem:[%s144 + $0x1348] sm:$0xff]
        %v860 = vld [vmem:[%s144 + $0x1350] sm:$0xff]
        %v861 = vld [vmem:[%s144 + $0x1358] sm:$0xff]
        %v862 = vld [vmem:[%s144 + $0x1360] sm:$0xff]
        %v863 = vld [vmem:[%s144 + $0x1368] sm:$0xff]
        %v864 = vld [vmem:[%s144 + $0x1370] sm:$0xff]
        %v865 = vld [vmem:[%s144 + $0x1378] sm:$0xff]
        %v866 = vld [vmem:[%s144 + $0x1380] sm:$0xff]
        %v867 = vld [vmem:[%s144 + $0x1388] sm:$0xff]
        %v868 = vld [vmem:[%s144 + $0x1390] sm:$0xff]
        %v869 = vld [vmem:[%s144 + $0x1398] sm:$0xff]
        %v870 = vld [vmem:[%s144 + $0x13a0] sm:$0xff]
        %v871 = vld [vmem:[%s144 + $0x13a8] sm:$0xff]
        %v872 = vld [vmem:[%s144 + $0x13b0] sm:$0xff]
        %v873 = vld [vmem:[%s144 + $0x13b8] sm:$0xff]
        %v874 = vld [vmem:[%s144 + $0x13c0] sm:$0xff]
        %v875 = vld [vmem:[%s144 + $0x13c8] sm:$0xff]
        %v876 = vld [vmem:[%s144 + $0x13d0] sm:$0xff]
        %v877 = vld [vmem:[%s144 + $0x13d8] sm:$0xff]
        %v878 = vld [vmem:[%s144 + $0x13e0] sm:$0xff]
        %v879 = vld [vmem:[%s144 + $0x13e8] sm:$0xff]
        %v880 = vld [vmem:[%s144 + $0x13f0] sm:$0xff]
        %v881 = vld [vmem:[%s144 + $0x13f8] sm:$0xff]
        %v882 = vld [vmem:[%s144 + $0x1400] sm:$0xff]
        %v883 = vld [vmem:[%s144 + $0x1408] sm:$0xff]
        %v884 = vld [vmem:[%s144 + $0x1410] sm:$0xff]
        %v885 = vld [vmem:[%s144 + $0x1418] sm:$0xff]
        %v886 = vld [vmem:[%s144 + $0x1420] sm:$0xff]
        %v887 = vld [vmem:[%s144 + $0x1428] sm:$0xff]
        %v888 = vld [vmem:[%s144 + $0x1430] sm:$0xff]
        %v889 = vld [vmem:[%s144 + $0x1438] sm:$0xff]
        %v890 = vld [vmem:[%s144 + $0x1440] sm:$0xff]
        %v891 = vld [vmem:[%s144 + $0x1448] sm:$0xff]
        %v892 = vld [vmem:[%s144 + $0x1450] sm:$0xff]
        %v893 = vld [vmem:[%s144 + $0x1458] sm:$0xff]
        %v894 = vld [vmem:[%s144 + $0x1460] sm:$0xff]
        %v895 = vld [vmem:[%s144 + $0x1468] sm:$0xff]
        %v896 = vld [vmem:[%s144 + $0x1470] sm:$0xff]
        %v897 = vld [vmem:[%s144 + $0x1478] sm:$0xff]
        %v898 = vld [vmem:[%s144 + $0x1480] sm:$0xff]
        %v899 = vld [vmem:[%s144 + $0x1488] sm:$0xff]
        %v900 = vld [vmem:[%s144 + $0x1490] sm:$0xff]
        %v901 = vld [vmem:[%s144 + $0x1498] sm:$0xff]
        %v902 = vld [vmem:[%s144 + $0x14a0] sm:$0xff]
        %v903 = vld [vmem:[%s144 + $0x14a8] sm:$0xff]
        %v904 = vld [vmem:[%s144 + $0x14b0] sm:$0xff]
        %v905 = vld [vmem:[%s144 + $0x14b8] sm:$0xff]
        %v906 = vld [vmem:[%s144 + $0x14c0] sm:$0xff]
        %v907 = vld [vmem:[%s144 + $0x14c8] sm:$0xff]
        %v908 = vld [vmem:[%s144 + $0x14d0] sm:$0xff]
        %v909 = vld [vmem:[%s144 + $0x14d8] sm:$0xff]
        %v910 = vld [vmem:[%s144 + $0x14e0] sm:$0xff]
        %v911 = vld [vmem:[%s144 + $0x14e8] sm:$0xff]
        %v912 = vld [vmem:[%s144 + $0x14f0] sm:$0xff]
        %v913 = vld [vmem:[%s144 + $0x14f8] sm:$0xff]
        %v914 = vld [vmem:[%s144 + $0x1500] sm:$0xff]
        %v915 = vld [vmem:[%s144 + $0x1508] sm:$0xff]
        %v916 = vld [vmem:[%s144 + $0x1510] sm:$0xff]
        %v917 = vld [vmem:[%s144 + $0x1518] sm:$0xff]
        %v918 = vld [vmem:[%s144 + $0x1520] sm:$0xff]
        %v919 = vld [vmem:[%s144 + $0x1528] sm:$0xff]
        %v920 = vld [vmem:[%s144 + $0x1530] sm:$0xff]
        %v921 = vld [vmem:[%s144 + $0x1538] sm:$0xff]
        %v922 = vld [vmem:[%s144 + $0x1540] sm:$0xff]
        %v923 = vld [vmem:[%s144 + $0x1548] sm:$0xff]
        %v924 = vld [vmem:[%s144 + $0x1550] sm:$0xff]
        %v925 = vld [vmem:[%s144 + $0x1558] sm:$0xff]
        %v926 = vld [vmem:[%s144 + $0x1560] sm:$0xff]
        %v927 = vld [vmem:[%s144 + $0x1568] sm:$0xff]
        %v928 = vld [vmem:[%s144 + $0x1570] sm:$0xff]
        %v929 = vld [vmem:[%s144 + $0x1578] sm:$0xff]
        %v930 = vld [vmem:[%s144 + $0x1580] sm:$0xff]
        %v931 = vld [vmem:[%s144 + $0x1588] sm:$0xff]
        %v932 = vld [vmem:[%s144 + $0x1590] sm:$0xff]
        %v933 = vld [vmem:[%s144 + $0x1598] sm:$0xff]
        %v934 = vld [vmem:[%s144 + $0x15a0] sm:$0xff]
        %v935 = vld [vmem:[%s144 + $0x15a8] sm:$0xff]
        %v936 = vld [vmem:[%s144 + $0x15b0] sm:$0xff]
        %v937 = vld [vmem:[%s144 + $0x15b8] sm:$0xff]
        %v938 = vld [vmem:[%s144 + $0x15c0] sm:$0xff]
        %v939 = vld [vmem:[%s144 + $0x15c8] sm:$0xff]
        %v940 = vld [vmem:[%s144 + $0x15d0] sm:$0xff]
        %v941 = vld [vmem:[%s144 + $0x15d8] sm:$0xff]
        %v942 = vld [vmem:[%s144 + $0x15e0] sm:$0xff]
        %v943 = vld [vmem:[%s144 + $0x15e8] sm:$0xff]
        %v944 = vld [vmem:[%s144 + $0x15f0] sm:$0xff]
        %v945 = vld [vmem:[%s144 + $0x15f8] sm:$0xff]
        %v946 = vld [vmem:[%s144 + $0x1600] sm:$0xff]
        %v947 = vld [vmem:[%s144 + $0x1608] sm:$0xff]
        %v948 = vld [vmem:[%s144 + $0x1610] sm:$0xff]
        %v949 = vld [vmem:[%s144 + $0x1618] sm:$0xff]
        %v950 = vld [vmem:[%s144 + $0x1620] sm:$0xff]
        %v951 = vld [vmem:[%s144 + $0x1628] sm:$0xff]
        %v952 = vld [vmem:[%s144 + $0x1630] sm:$0xff]
        %v953 = vld [vmem:[%s144 + $0x1638] sm:$0xff]
        %v954 = vld [vmem:[%s144 + $0x1640] sm:$0xff]
        %v955 = vld [vmem:[%s144 + $0x1648] sm:$0xff]
        %v956 = vld [vmem:[%s144 + $0x1650] sm:$0xff]
        %v957 = vld [vmem:[%s144 + $0x1658] sm:$0xff]
        %v958 = vld [vmem:[%s144 + $0x1660] sm:$0xff]
        %v959 = vld [vmem:[%s144 + $0x1668] sm:$0xff]
        %v960 = vld [vmem:[%s144 + $0x1670] sm:$0xff]
        %v961 = vld [vmem:[%s144 + $0x1678] sm:$0xff]
        %v962 = vld [vmem:[%s144 + $0x1680] sm:$0xff]
        %v963 = vld [vmem:[%s144 + $0x1688] sm:$0xff]
        %v964 = vld [vmem:[%s144 + $0x1690] sm:$0xff]
        %v965 = vld [vmem:[%s144 + $0x1698] sm:$0xff]
        %v966 = vld [vmem:[%s144 + $0x16a0] sm:$0xff]
        %v967 = vld [vmem:[%s144 + $0x16a8] sm:$0xff]
        %v968 = vld [vmem:[%s144 + $0x16b0] sm:$0xff]
        %v969 = vld [vmem:[%s144 + $0x16b8] sm:$0xff]
        %v970 = vld [vmem:[%s144 + $0x16c0] sm:$0xff]
        %v971 = vld [vmem:[%s144 + $0x16c8] sm:$0xff]
        %v972 = vld [vmem:[%s144 + $0x16d0] sm:$0xff]
        %v973 = vld [vmem:[%s144 + $0x16d8] sm:$0xff]
        %v974 = vld [vmem:[%s144 + $0x16e0] sm:$0xff]
        %v975 = vld [vmem:[%s144 + $0x16e8] sm:$0xff]
        %v976 = vld [vmem:[%s144 + $0x16f0] sm:$0xff]
        %v977 = vld [vmem:[%s144 + $0x16f8] sm:$0xff]
        %v978 = vld [vmem:[%s144 + $0x1700] sm:$0xff]
        %v979 = vld [vmem:[%s144 + $0x1708] sm:$0xff]
        %v980 = vld [vmem:[%s144 + $0x1710] sm:$0xff]
        %v981 = vld [vmem:[%s144 + $0x1718] sm:$0xff]
        %v982 = vld [vmem:[%s144 + $0x1720] sm:$0xff]
        %v983 = vld [vmem:[%s144 + $0x1728] sm:$0xff]
        %v984 = vld [vmem:[%s144 + $0x1730] sm:$0xff]
        %v985 = vld [vmem:[%s144 + $0x1738] sm:$0xff]
        %v986 = vld [vmem:[%s144 + $0x1740] sm:$0xff]
        %v987 = vld [vmem:[%s144 + $0x1748] sm:$0xff]
        %v988 = vld [vmem:[%s144 + $0x1750] sm:$0xff]
        %v989 = vld [vmem:[%s144 + $0x1758] sm:$0xff]
        %v990 = vld [vmem:[%s144 + $0x1760] sm:$0xff]
        %v991 = vld [vmem:[%s144 + $0x1768] sm:$0xff]
        %v992 = vld [vmem:[%s144 + $0x1770] sm:$0xff]
        %v993 = vld [vmem:[%s144 + $0x1778] sm:$0xff]
        %v994 = vld [vmem:[%s144 + $0x1780] sm:$0xff]
        %v995 = vld [vmem:[%s144 + $0x1788] sm:$0xff]
        %v996 = vld [vmem:[%s144 + $0x1790] sm:$0xff]
        %v997 = vld [vmem:[%s144 + $0x1798] sm:$0xff]
        %v998 = vld [vmem:[%s144 + $0x17a0] sm:$0xff]
        %v999 = vld [vmem:[%s144 + $0x17a8] sm:$0xff]
        %v1000 = vld [vmem:[%s144 + $0x17b0] sm:$0xff]
        %v1001 = vld [vmem:[%s144 + $0x17b8] sm:$0xff]
        %v1002 = vld [vmem:[%s144 + $0x17c0] sm:$0xff]
        %v1003 = vld [vmem:[%s144 + $0x17c8] sm:$0xff]
        %v1004 = vld [vmem:[%s144 + $0x17d0] sm:$0xff]
        %v1005 = vld [vmem:[%s144 + $0x17d8] sm:$0xff]
        %v1006 = vld [vmem:[%s144 + $0x17e0] sm:$0xff]
        %v1007 = vld [vmem:[%s144 + $0x17e8] sm:$0xff]
        %v1008 = vld [vmem:[%s144 + $0x17f0] sm:$0xff]
        %v1009 = vld [vmem:[%s144 + $0x17f8] sm:$0xff]
        %v1010 = vld [vmem:[%s144 + $0x1800] sm:$0xff]
        %v1011 = vld [vmem:[%s144 + $0x1808] sm:$0xff]
        %v1012 = vld [vmem:[%s144 + $0x1810] sm:$0xff]
        %v1013 = vld [vmem:[%s144 + $0x1818] sm:$0xff]
        %v1014 = vld [vmem:[%s144 + $0x1820] sm:$0xff]
        %v1015 = vld [vmem:[%s144 + $0x1828] sm:$0xff]
        %v1016 = vld [vmem:[%s144 + $0x1830] sm:$0xff]
        %v1017 = vld [vmem:[%s144 + $0x1838] sm:$0xff]
        %v1018 = vld [vmem:[%s144 + $0x1840] sm:$0xff]
        %v1019 = vld [vmem:[%s144 + $0x1848] sm:$0xff]
        %v1020 = vld [vmem:[%s144 + $0x1850] sm:$0xff]
        %v1021 = vld [vmem:[%s144 + $0x1858] sm:$0xff]
        %v1022 = vld [vmem:[%s144 + $0x1860] sm:$0xff]
        %v1023 = vld [vmem:[%s144 + $0x1868] sm:$0xff]
        %v1024 = vld [vmem:[%s144 + $0x1870] sm:$0xff]
        %v1025 = vld [vmem:[%s144 + $0x1878] sm:$0xff]
        %v1026 = vld [vmem:[%s144 + $0x1880] sm:$0xff]
        %v1027 = vld [vmem:[%s144 + $0x1888] sm:$0xff]
        %v1028 = vld [vmem:[%s144 + $0x1890] sm:$0xff]
        %v1029 = vld [vmem:[%s144 + $0x1898] sm:$0xff]
        %v1030 = vld [vmem:[%s144 + $0x18a0] sm:$0xff]
        %v1031 = vld [vmem:[%s144 + $0x18a8] sm:$0xff]
        %v1032 = vld [vmem:[%s144 + $0x18b0] sm:$0xff]
        %v1033 = vld [vmem:[%s144 + $0x18b8] sm:$0xff]
        %v1034 = vld [vmem:[%s144 + $0x18c0] sm:$0xff]
        %v1035 = vld [vmem:[%s144 + $0x18c8] sm:$0xff]
        %v1036 = vld [vmem:[%s144 + $0x18d0] sm:$0xff]
        %v1037 = vld [vmem:[%s144 + $0x18d8] sm:$0xff]
        %v1038 = vld [vmem:[%s144 + $0x18e0] sm:$0xff]
        %v1039 = vld [vmem:[%s144 + $0x18e8] sm:$0xff]
        %v1040 = vld [vmem:[%s144 + $0x18f0] sm:$0xff]
        %v1041 = vld [vmem:[%s144 + $0x18f8] sm:$0xff]
        %v1042 = vld [vmem:[%s144 + $0x1900] sm:$0xff]
        %v1043 = vld [vmem:[%s144 + $0x1908] sm:$0xff]
        %v1044 = vld [vmem:[%s144 + $0x1910] sm:$0xff]
        %v1045 = vld [vmem:[%s144 + $0x1918] sm:$0xff]
        %v1046 = vld [vmem:[%s144 + $0x1920] sm:$0xff]
        %v1047 = vld [vmem:[%s144 + $0x1928] sm:$0xff]
        %v1048 = vld [vmem:[%s144 + $0x1930] sm:$0xff]
        %v1049 = vld [vmem:[%s144 + $0x1938] sm:$0xff]
        %v1050 = vld [vmem:[%s144 + $0x1940] sm:$0xff]
        %v1051 = vld [vmem:[%s144 + $0x1948] sm:$0xff]
        %v1052 = vld [vmem:[%s144 + $0x1950] sm:$0xff]
        %v1053 = vld [vmem:[%s144 + $0x1958] sm:$0xff]
        %v1054 = vld [vmem:[%s144 + $0x1960] sm:$0xff]
        %v1055 = vld [vmem:[%s144 + $0x1968] sm:$0xff]
        %v1056 = vld [vmem:[%s144 + $0x1970] sm:$0xff]
        %v1057 = vld [vmem:[%s144 + $0x1978] sm:$0xff]
        %v1058 = vld [vmem:[%s144 + $0x1980] sm:$0xff]
        %v1059 = vld [vmem:[%s144 + $0x1988] sm:$0xff]
        %v1060 = vld [vmem:[%s144 + $0x1990] sm:$0xff]
        %v1061 = vld [vmem:[%s144 + $0x1998] sm:$0xff]
        %v1062 = vld [vmem:[%s144 + $0x19a0] sm:$0xff]
        %v1063 = vld [vmem:[%s144 + $0x19a8] sm:$0xff]
        %v1064 = vld [vmem:[%s144 + $0x19b0] sm:$0xff]
        %v1065 = vld [vmem:[%s144 + $0x19b8] sm:$0xff]
        %v1066 = vld [vmem:[%s144 + $0x19c0] sm:$0xff]
        %v1067 = vld [vmem:[%s144 + $0x19c8] sm:$0xff]
        %v1068 = vld [vmem:[%s144 + $0x19d0] sm:$0xff]
        %v1069 = vld [vmem:[%s144 + $0x19d8] sm:$0xff]
        %v1070 = vld [vmem:[%s144 + $0x19e0] sm:$0xff]
        %v1071 = vld [vmem:[%s144 + $0x19e8] sm:$0xff]
        %v1072 = vld [vmem:[%s144 + $0x19f0] sm:$0xff]
        %v1073 = vld [vmem:[%s144 + $0x19f8] sm:$0xff]
        %v1074 = vld [vmem:[%s144 + $0x1a00] sm:$0xff]
        %v1075 = vld [vmem:[%s144 + $0x1a08] sm:$0xff]
        %v1076 = vld [vmem:[%s144 + $0x1a10] sm:$0xff]
        %v1077 = vld [vmem:[%s144 + $0x1a18] sm:$0xff]
        %v1078 = vld [vmem:[%s144 + $0x1a20] sm:$0xff]
        %v1079 = vld [vmem:[%s144 + $0x1a28] sm:$0xff]
        %v1080 = vld [vmem:[%s144 + $0x1a30] sm:$0xff]
        %v1081 = vld [vmem:[%s144 + $0x1a38] sm:$0xff]
        %v1082 = vld [vmem:[%s144 + $0x1a40] sm:$0xff]
        %v1083 = vld [vmem:[%s144 + $0x1a48] sm:$0xff]
        %v1084 = vld [vmem:[%s144 + $0x1a50] sm:$0xff]
        %v1085 = vld [vmem:[%s144 + $0x1a58] sm:$0xff]
        %v1086 = vld [vmem:[%s144 + $0x1a60] sm:$0xff]
        %v1087 = vld [vmem:[%s144 + $0x1a68] sm:$0xff]
        %v1088 = vld [vmem:[%s144 + $0x1a70] sm:$0xff]
        %v1089 = vld [vmem:[%s144 + $0x1a78] sm:$0xff]
        %v1090 = vld [vmem:[%s144 + $0x1a80] sm:$0xff]
        %v1091 = vld [vmem:[%s144 + $0x1a88] sm:$0xff]
        %v1092 = vld [vmem:[%s144 + $0x1a90] sm:$0xff]
        %v1093 = vld [vmem:[%s144 + $0x1a98] sm:$0xff]
        %v1094 = vld [vmem:[%s144 + $0x1aa0] sm:$0xff]
        %v1095 = vld [vmem:[%s144 + $0x1aa8] sm:$0xff]
        %v1096 = vld [vmem:[%s144 + $0x1ab0] sm:$0xff]
        %v1097 = vld [vmem:[%s144 + $0x1ab8] sm:$0xff]
        %v1098 = vld [vmem:[%s144 + $0x1ac0] sm:$0xff]
        %v1099 = vld [vmem:[%s144 + $0x1ac8] sm:$0xff]
        %v1100 = vld [vmem:[%s144 + $0x1ad0] sm:$0xff]
        %v1101 = vld [vmem:[%s144 + $0x1ad8] sm:$0xff]
        %v1102 = vld [vmem:[%s144 + $0x1ae0] sm:$0xff]
        %v1103 = vld [vmem:[%s144 + $0x1ae8] sm:$0xff]
        %v1104 = vld [vmem:[%s144 + $0x1af0] sm:$0xff]
        %v1105 = vld [vmem:[%s144 + $0x1af8] sm:$0xff]
        %v1106 = vld [vmem:[%s144 + $0x1b00] sm:$0xff]
        %v1107 = vld [vmem:[%s144 + $0x1b08] sm:$0xff]
        %v1108 = vld [vmem:[%s144 + $0x1b10] sm:$0xff]
        %v1109 = vld [vmem:[%s144 + $0x1b18] sm:$0xff]
        %v1110 = vld [vmem:[%s144 + $0x1b20] sm:$0xff]
        %v1111 = vld [vmem:[%s144 + $0x1b28] sm:$0xff]
        %v1112 = vld [vmem:[%s144 + $0x1b30] sm:$0xff]
        %v1113 = vld [vmem:[%s144 + $0x1b38] sm:$0xff]
        %v1114 = vld [vmem:[%s144 + $0x1b40] sm:$0xff]
        %v1115 = vld [vmem:[%s144 + $0x1b48] sm:$0xff]
        %v1116 = vld [vmem:[%s144 + $0x1b50] sm:$0xff]
        %v1117 = vld [vmem:[%s144 + $0x1b58] sm:$0xff]
        %v1118 = vld [vmem:[%s144 + $0x1b60] sm:$0xff]
        %v1119 = vld [vmem:[%s144 + $0x1b68] sm:$0xff]
        %v1120 = vld [vmem:[%s144 + $0x1b70] sm:$0xff]
        %v1121 = vld [vmem:[%s144 + $0x1b78] sm:$0xff]
        %v1122 = vld [vmem:[%s144 + $0x1b80] sm:$0xff]
        %v1123 = vld [vmem:[%s144 + $0x1b88] sm:$0xff]
        %v1124 = vld [vmem:[%s144 + $0x1b90] sm:$0xff]
        %v1125 = vld [vmem:[%s144 + $0x1b98] sm:$0xff]
        %v1126 = vld [vmem:[%s144 + $0x1ba0] sm:$0xff]
        %v1127 = vld [vmem:[%s144 + $0x1ba8] sm:$0xff]
        %v1128 = vld [vmem:[%s144 + $0x1bb0] sm:$0xff]
        %v1129 = vld [vmem:[%s144 + $0x1bb8] sm:$0xff]
        %v1130 = vld [vmem:[%s144 + $0x1bc0] sm:$0xff]
        %v1131 = vld [vmem:[%s144 + $0x1bc8] sm:$0xff]
        %v1132 = vld [vmem:[%s144 + $0x1bd0] sm:$0xff]
        %v1133 = vld [vmem:[%s144 + $0x1bd8] sm:$0xff]
        %v1134 = vld [vmem:[%s144 + $0x1be0] sm:$0xff]
        %v1135 = vld [vmem:[%s144 + $0x1be8] sm:$0xff]
        %v1136 = vld [vmem:[%s144 + $0x1bf0] sm:$0xff]
        %v1137 = vld [vmem:[%s144 + $0x1bf8] sm:$0xff]
        %v1138 = vld [vmem:[%s144 + $0x1c00] sm:$0xff]
        %v1139 = vld [vmem:[%s144 + $0x1c08] sm:$0xff]
        %v1140 = vld [vmem:[%s144 + $0x1c10] sm:$0xff]
        %v1141 = vld [vmem:[%s144 + $0x1c18] sm:$0xff]
        %v1142 = vld [vmem:[%s144 + $0x1c20] sm:$0xff]
        %v1143 = vld [vmem:[%s144 + $0x1c28] sm:$0xff]
        %v1144 = vld [vmem:[%s144 + $0x1c30] sm:$0xff]
        %v1145 = vld [vmem:[%s144 + $0x1c38] sm:$0xff]
        %v1146 = vld [vmem:[%s144 + $0x1c40] sm:$0xff]
        %v1147 = vld [vmem:[%s144 + $0x1c48] sm:$0xff]
        %v1148 = vld [vmem:[%s144 + $0x1c50] sm:$0xff]
        %v1149 = vld [vmem:[%s144 + $0x1c58] sm:$0xff]
        %v1150 = vld [vmem:[%s144 + $0x1c60] sm:$0xff]
        %v1151 = vld [vmem:[%s144 + $0x1c68] sm:$0xff]
        %v1152 = vld [vmem:[%s144 + $0x1c70] sm:$0xff]
        %v1153 = vld [vmem:[%s144 + $0x1c78] sm:$0xff]
        %v1154 = vld [vmem:[%s144 + $0x1c80] sm:$0xff]
        %v1155 = vld [vmem:[%s144 + $0x1c88] sm:$0xff]
        %v1156 = vld [vmem:[%s144 + $0x1c90] sm:$0xff]
        %v1157 = vld [vmem:[%s144 + $0x1c98] sm:$0xff]
        %v1158 = vld [vmem:[%s144 + $0x1ca0] sm:$0xff]
        %v1159 = vld [vmem:[%s144 + $0x1ca8] sm:$0xff]
        %v1160 = vld [vmem:[%s144 + $0x1cb0] sm:$0xff]
        %v1161 = vld [vmem:[%s144 + $0x1cb8] sm:$0xff]
        %v1162 = vld [vmem:[%s144 + $0x1cc0] sm:$0xff]
        %v1163 = vld [vmem:[%s144 + $0x1cc8] sm:$0xff]
        %v1164 = vld [vmem:[%s144 + $0x1cd0] sm:$0xff]
        %v1165 = vld [vmem:[%s144 + $0x1cd8] sm:$0xff]
        %v1166 = vld [vmem:[%s144 + $0x1ce0] sm:$0xff]
        %v1167 = vld [vmem:[%s144 + $0x1ce8] sm:$0xff]
        %v1168 = vld [vmem:[%s144 + $0x1cf0] sm:$0xff]
        %v1169 = vld [vmem:[%s144 + $0x1cf8] sm:$0xff]
        %v1170 = vld [vmem:[%s144 + $0x1d00] sm:$0xff]
        %v1171 = vld [vmem:[%s144 + $0x1d08] sm:$0xff]
        %v1172 = vld [vmem:[%s144 + $0x1d10] sm:$0xff]
        %v1173 = vld [vmem:[%s144 + $0x1d18] sm:$0xff]
        %v1174 = vld [vmem:[%s144 + $0x1d20] sm:$0xff]
        %v1175 = vld [vmem:[%s144 + $0x1d28] sm:$0xff]
        %v1176 = vld [vmem:[%s144 + $0x1d30] sm:$0xff]
        %v1177 = vld [vmem:[%s144 + $0x1d38] sm:$0xff]
        %v1178 = vld [vmem:[%s144 + $0x1d40] sm:$0xff]
        %v1179 = vld [vmem:[%s144 + $0x1d48] sm:$0xff]
        %v1180 = vld [vmem:[%s144 + $0x1d50] sm:$0xff]
        %v1181 = vld [vmem:[%s144 + $0x1d58] sm:$0xff]
        %v1182 = vld [vmem:[%s144 + $0x1d60] sm:$0xff]
        %v1183 = vld [vmem:[%s144 + $0x1d68] sm:$0xff]
        %v1184 = vld [vmem:[%s144 + $0x1d70] sm:$0xff]
        %v1185 = vld [vmem:[%s144 + $0x1d78] sm:$0xff]
        %v1186 = vld [vmem:[%s144 + $0x1d80] sm:$0xff]
        %v1187 = vld [vmem:[%s144 + $0x1d88] sm:$0xff]
        %v1188 = vld [vmem:[%s144 + $0x1d90] sm:$0xff]
        %v1189 = vld [vmem:[%s144 + $0x1d98] sm:$0xff]
        %v1190 = vld [vmem:[%s144 + $0x1da0] sm:$0xff]
        %v1191 = vld [vmem:[%s144 + $0x1da8] sm:$0xff]
        %v1192 = vld [vmem:[%s144 + $0x1db0] sm:$0xff]
        %v1193 = vld [vmem:[%s144 + $0x1db8] sm:$0xff]
        %v1194 = vld [vmem:[%s144 + $0x1dc0] sm:$0xff]
        %v1195 = vld [vmem:[%s144 + $0x1dc8] sm:$0xff]
        %v1196 = vld [vmem:[%s144 + $0x1dd0] sm:$0xff]
        %v1197 = vld [vmem:[%s144 + $0x1dd8] sm:$0xff]
        %v1198 = vld [vmem:[%s144 + $0x1de0] sm:$0xff]
        %v1199 = vld [vmem:[%s144 + $0x1de8] sm:$0xff]
        %v1200 = vld [vmem:[%s144 + $0x1df0] sm:$0xff]
        %v1201 = vld [vmem:[%s144 + $0x1df8] sm:$0xff]
        %v1202 = vld [vmem:[%s144 + $0x1e00] sm:$0xff]
        %v1203 = vld [vmem:[%s144 + $0x1e08] sm:$0xff]
        %v1204 = vld [vmem:[%s144 + $0x1e10] sm:$0xff]
        %v1205 = vld [vmem:[%s144 + $0x1e18] sm:$0xff]
        %v1206 = vld [vmem:[%s144 + $0x1e20] sm:$0xff]
        %v1207 = vld [vmem:[%s144 + $0x1e28] sm:$0xff]
        %v1208 = vld [vmem:[%s144 + $0x1e30] sm:$0xff]
        %v1209 = vld [vmem:[%s144 + $0x1e38] sm:$0xff]
        %v1210 = vld [vmem:[%s144 + $0x1e40] sm:$0xff]
        %v1211 = vld [vmem:[%s144 + $0x1e48] sm:$0xff]
        %v1212 = vld [vmem:[%s144 + $0x1e50] sm:$0xff]
        %v1213 = vld [vmem:[%s144 + $0x1e58] sm:$0xff]
        %v1214 = vld [vmem:[%s144 + $0x1e60] sm:$0xff]
        %v1215 = vld [vmem:[%s144 + $0x1e68] sm:$0xff]
        %v1216 = vld [vmem:[%s144 + $0x1e70] sm:$0xff]
        %v1217 = vld [vmem:[%s144 + $0x1e78] sm:$0xff]
        %v1218 = vld [vmem:[%s144 + $0x1e80] sm:$0xff]
        %v1219 = vld [vmem:[%s144 + $0x1e88] sm:$0xff]
        %v1220 = vld [vmem:[%s144 + $0x1e90] sm:$0xff]
        %v1221 = vld [vmem:[%s144 + $0x1e98] sm:$0xff]
        %v1222 = vld [vmem:[%s144 + $0x1ea0] sm:$0xff]
        %v1223 = vld [vmem:[%s144 + $0x1ea8] sm:$0xff]
        %v1224 = vld [vmem:[%s144 + $0x1eb0] sm:$0xff]
        %v1225 = vld [vmem:[%s144 + $0x1eb8] sm:$0xff]
        %v1226 = vld [vmem:[%s144 + $0x1ec0] sm:$0xff]
        %v1227 = vld [vmem:[%s144 + $0x1ec8] sm:$0xff]
        %v1228 = vld [vmem:[%s144 + $0x1ed0] sm:$0xff]
        %v1229 = vld [vmem:[%s144 + $0x1ed8] sm:$0xff]
        %v1230 = vld [vmem:[%s144 + $0x1ee0] sm:$0xff]
        %v1231 = vld [vmem:[%s144 + $0x1ee8] sm:$0xff]
        %v1232 = vld [vmem:[%s144 + $0x1ef0] sm:$0xff]
        %v1233 = vld [vmem:[%s144 + $0x1ef8] sm:$0xff]
        %v1234 = vld [vmem:[%s144 + $0x1f00] sm:$0xff]
        %v1235 = vld [vmem:[%s144 + $0x1f08] sm:$0xff]
        %v1236 = vld [vmem:[%s144 + $0x1f10] sm:$0xff]
        %v1237 = vld [vmem:[%s144 + $0x1f18] sm:$0xff]
        %v1238 = vld [vmem:[%s144 + $0x1f20] sm:$0xff]
        %v1239 = vld [vmem:[%s144 + $0x1f28] sm:$0xff]
        %v1240 = vld [vmem:[%s144 + $0x1f30] sm:$0xff]
        %v1241 = vld [vmem:[%s144 + $0x1f38] sm:$0xff]
        %v1242 = vld [vmem:[%s144 + $0x1f40] sm:$0xff]
        %v1243 = vld [vmem:[%s144 + $0x1f48] sm:$0xff]
        %v1244 = vld [vmem:[%s144 + $0x1f50] sm:$0xff]
        %v1245 = vld [vmem:[%s144 + $0x1f58] sm:$0xff]
        %v1246 = vld [vmem:[%s144 + $0x1f60] sm:$0xff]
        %v1247 = vld [vmem:[%s144 + $0x1f68] sm:$0xff]
        %v1248 = vld [vmem:[%s144 + $0x1f70] sm:$0xff]
        %v1249 = vld [vmem:[%s144 + $0x1f78] sm:$0xff]
        %v1250 = vld [vmem:[%s144 + $0x1f80] sm:$0xff]
        %v1251 = vld [vmem:[%s144 + $0x1f88] sm:$0xff]
        %v1252 = vld [vmem:[%s144 + $0x1f90] sm:$0xff]
        %v1253 = vld [vmem:[%s144 + $0x1f98] sm:$0xff]
        %v1254 = vld [vmem:[%s144 + $0x1fa0] sm:$0xff]
        %v1255 = vld [vmem:[%s144 + $0x1fa8] sm:$0xff]
        %v1256 = vld [vmem:[%s144 + $0x1fb0] sm:$0xff]
        %v1257 = vld [vmem:[%s144 + $0x1fb8] sm:$0xff]
        %v1258 = vld [vmem:[%s144 + $0x1fc0] sm:$0xff]
        %v1259 = vld [vmem:[%s144 + $0x1fc8] sm:$0xff]
        %v1260 = vld [vmem:[%s144 + $0x1fd0] sm:$0xff]
        %v1261 = vld [vmem:[%s144 + $0x1fd8] sm:$0xff]
        %v1262 = vld [vmem:[%s144 + $0x1fe0] sm:$0xff]
        %v1263 = vld [vmem:[%s144 + $0x1fe8] sm:$0xff]
        %v1264 = vld [vmem:[%s144 + $0x1ff0] sm:$0xff]
        %v1265 = vld [vmem:[%s144 + $0x1ff8] sm:$0xff]
        %v1266 = vld [vmem:[#allocation2] sm:$0xff]
        %1267 = vmatprep.subr.mxu0 %v243
        %1268 = vmatpush1.xpose.msra.mxu0 %v242
        %1269 = vmatprep.subr.mxu0 %v307
        %1270 = vmatpush1.xpose.msra.mxu0 %v306
        %1271 = vmatprep.subr.mxu0 %v371
        %1272 = vmatpush1.xpose.msra.mxu0 %v370
        %1273 = vmatprep.subr.mxu0 %v435
        %1274 = vmatpush1.xpose.msra.mxu0 %v434
        %1275 = vmatprep.subr.mxu0 %v499
        %1276 = vmatpush1.xpose.msra.mxu0 %v498
        %1277 = vmatprep.subr.mxu0 %v563
        %1278 = vmatpush1.xpose.msra.mxu0 %v562
        %1279 = vmatprep.subr.mxu0 %v627
        %1280 = vmatpush1.xpose.msra.mxu0 %v626
        %1281 = vmatprep.subr.mxu0 %v691
        %1282 = vmatpush1.xpose.msra.mxu0 %v690
        %1283 = vmatprep.subr.mxu0 %v755
        %1284 = vmatpush1.xpose.msra.mxu0 %v754
        %1285 = vmatprep.subr.mxu0 %v819
        %1286 = vmatpush1.xpose.msra.mxu0 %v818
        %1287 = vmatprep.subr.mxu0 %v883
        %1288 = vmatpush1.xpose.msra.mxu0 %v882
        %1289 = vmatprep.subr.mxu0 %v947
        %1290 = vmatpush1.xpose.msra.mxu0 %v946
        %1291 = vmatprep.subr.mxu0 %v1011
        %1292 = vmatpush1.xpose.msra.mxu0 %v1010
        %1293 = vmatprep.subr.mxu0 %v1075
        %1294 = vmatpush1.xpose.msra.mxu0 %v1074
        %1295 = vmatprep.subr.mxu0 %v1139
        %1296 = vmatpush1.xpose.msra.mxu0 %v1138
        %1297 = vmatprep.subr.mxu0 %v1203
        %1298 = vmatpush1.xpose.msra.mxu0 %v1202
        %1299 = vmatprep.subr.mxu0 0.0
        %1300 = vmatpush1.xpose.msra.mxu0 0.0
        %1301 = vmatprep.subr.mxu0 0.0
        %1302 = vmatpush1.xpose.msra.mxu0 0.0
        %1303 = vmatprep.subr.mxu0 0.0
        %1304 = vmatpush1.xpose.msra.mxu0 0.0
        %1305 = vmatprep.subr.mxu0 0.0
        %1306 = vmatpush1.xpose.msra.mxu0 0.0
        %1307 = vmatprep.subr.mxu0 0.0
        %1308 = vmatpush1.xpose.msra.mxu0 0.0
        %1309 = vmatprep.subr.mxu0 0.0
        %1310 = vmatpush1.xpose.msra.mxu0 0.0
        %1311 = vmatprep.subr.mxu0 0.0
        %1312 = vmatpush1.xpose.msra.mxu0 0.0
        %1313 = vmatprep.subr.mxu0 0.0
        %1314 = vmatpush1.xpose.msra.mxu0 0.0
        %1315 = vmatprep.subr.mxu0 0.0
        %1316 = vmatpush1.xpose.msra.mxu0 0.0
        %1317 = vmatprep.subr.mxu0 0.0
        %1318 = vmatpush1.xpose.msra.mxu0 0.0
        %1319 = vmatprep.subr.mxu0 0.0
        %1320 = vmatpush1.xpose.msra.mxu0 0.0
        %1321 = vmatprep.subr.mxu0 0.0
        %1322 = vmatpush1.xpose.msra.mxu0 0.0
        %1323 = vmatprep.subr.mxu0 0.0
        %1324 = vmatpush1.xpose.msra.mxu0 0.0
        %1325 = vmatprep.subr.mxu0 0.0
        %1326 = vmatpush1.xpose.msra.mxu0 0.0
        %1327 = vmatprep.subr.mxu0 0.0
        %1328 = vmatpush1.xpose.msra.mxu0 0.0
        %1329 = vmatprep.subr.mxu0 0.0
        %1330 = vmatpush1.xpose.msra.mxu0 0.0
        %1331 = vmatprep.mubr.f32.mxu0 %v179
        %1332 = vmatmul.mubr.f32.gmra.mrb[0].mxu0 %v178
        %v1333 = vpop.f32.mrb[0].mxu0
        %v1334 = vadd.f32 0.0, %v1333
        %v1335 = vpop.f32.mrb[0].mxu0
        %1336 = vdwg.mxu0
        %1337 = vmatprep.subr.mxu0 %v245
        %1338 = vmatpush1.xpose.msra.mxu0 %v244
        %1339 = vmatprep.subr.mxu0 %v309
        %1340 = vmatpush1.xpose.msra.mxu0 %v308
        %1341 = vmatprep.subr.mxu0 %v373
        %1342 = vmatpush1.xpose.msra.mxu0 %v372
        %1343 = vmatprep.subr.mxu0 %v437
        %1344 = vmatpush1.xpose.msra.mxu0 %v436
        %1345 = vmatprep.subr.mxu0 %v501
        %1346 = vmatpush1.xpose.msra.mxu0 %v500
        %1347 = vmatprep.subr.mxu0 %v565
        %1348 = vmatpush1.xpose.msra.mxu0 %v564
        %1349 = vmatprep.subr.mxu0 %v629
        %1350 = vmatpush1.xpose.msra.mxu0 %v628
        %1351 = vmatprep.subr.mxu0 %v693
        %1352 = vmatpush1.xpose.msra.mxu0 %v692
        %1353 = vmatprep.subr.mxu0 %v757
        %1354 = vmatpush1.xpose.msra.mxu0 %v756
        %1355 = vmatprep.subr.mxu0 %v821
        %1356 = vmatpush1.xpose.msra.mxu0 %v820
        %1357 = vmatprep.subr.mxu0 %v885
        %1358 = vmatpush1.xpose.msra.mxu0 %v884
        %1359 = vmatprep.subr.mxu0 %v949
        %1360 = vmatpush1.xpose.msra.mxu0 %v948
        %1361 = vmatprep.subr.mxu0 %v1013
        %1362 = vmatpush1.xpose.msra.mxu0 %v1012
        %1363 = vmatprep.subr.mxu0 %v1077
        %1364 = vmatpush1.xpose.msra.mxu0 %v1076
        %1365 = vmatprep.subr.mxu0 %v1141
        %1366 = vmatpush1.xpose.msra.mxu0 %v1140
        %1367 = vmatprep.subr.mxu0 %v1205
        %1368 = vmatpush1.xpose.msra.mxu0 %v1204
        %1369 = vmatprep.subr.mxu0 0.0
        %1370 = vmatpush1.xpose.msra.mxu0 0.0
        %1371 = vmatprep.subr.mxu0 0.0
        %1372 = vmatpush1.xpose.msra.mxu0 0.0
        %1373 = vmatprep.subr.mxu0 0.0
        %1374 = vmatpush1.xpose.msra.mxu0 0.0
        %1375 = vmatprep.subr.mxu0 0.0
        %1376 = vmatpush1.xpose.msra.mxu0 0.0
        %1377 = vmatprep.subr.mxu0 0.0
        %1378 = vmatpush1.xpose.msra.mxu0 0.0
        %1379 = vmatprep.subr.mxu0 0.0
        %1380 = vmatpush1.xpose.msra.mxu0 0.0
        %1381 = vmatprep.subr.mxu0 0.0
        %1382 = vmatpush1.xpose.msra.mxu0 0.0
        %1383 = vmatprep.subr.mxu0 0.0
        %1384 = vmatpush1.xpose.msra.mxu0 0.0
        %1385 = vmatprep.subr.mxu0 0.0
        %1386 = vmatpush1.xpose.msra.mxu0 0.0
        %1387 = vmatprep.subr.mxu0 0.0
        %1388 = vmatpush1.xpose.msra.mxu0 0.0
        %1389 = vmatprep.subr.mxu0 0.0
        %1390 = vmatpush1.xpose.msra.mxu0 0.0
        %1391 = vmatprep.subr.mxu0 0.0
        %1392 = vmatpush1.xpose.msra.mxu0 0.0
        %1393 = vmatprep.subr.mxu0 0.0
        %1394 = vmatpush1.xpose.msra.mxu0 0.0
        %1395 = vmatprep.subr.mxu0 0.0
        %1396 = vmatpush1.xpose.msra.mxu0 0.0
        %1397 = vmatprep.subr.mxu0 0.0
        %1398 = vmatpush1.xpose.msra.mxu0 0.0
        %1399 = vmatprep.subr.mxu0 0.0
        %1400 = vmatpush1.xpose.msra.mxu0 0.0
        %1401 = vmatprep.mubr.f32.mxu0 %v181
        %1402 = vmatmul.mubr.f32.gmra.mrb[0].mxu0 %v180
        %v1403 = vpop.f32.mrb[0].mxu0
        %v1404 = vadd.f32 %v1334, %v1403
        %v1405 = vpop.f32.mrb[0].mxu0
        %1406 = vdwg.mxu0
        %1407 = vmatprep.subr.mxu0 %v247
        %1408 = vmatpush1.xpose.msra.mxu0 %v246
        %1409 = vmatprep.subr.mxu0 %v311
        %1410 = vmatpush1.xpose.msra.mxu0 %v310
        %1411 = vmatprep.subr.mxu0 %v375
        %1412 = vmatpush1.xpose.msra.mxu0 %v374
        %1413 = vmatprep.subr.mxu0 %v439
        %1414 = vmatpush1.xpose.msra.mxu0 %v438
        %1415 = vmatprep.subr.mxu0 %v503
        %1416 = vmatpush1.xpose.msra.mxu0 %v502
        %1417 = vmatprep.subr.mxu0 %v567
        %1418 = vmatpush1.xpose.msra.mxu0 %v566
        %1419 = vmatprep.subr.mxu0 %v631
        %1420 = vmatpush1.xpose.msra.mxu0 %v630
        %1421 = vmatprep.subr.mxu0 %v695
        %1422 = vmatpush1.xpose.msra.mxu0 %v694
        %1423 = vmatprep.subr.mxu0 %v759
        %1424 = vmatpush1.xpose.msra.mxu0 %v758
        %1425 = vmatprep.subr.mxu0 %v823
        %1426 = vmatpush1.xpose.msra.mxu0 %v822
        %1427 = vmatprep.subr.mxu0 %v887
        %1428 = vmatpush1.xpose.msra.mxu0 %v886
        %1429 = vmatprep.subr.mxu0 %v951
        %1430 = vmatpush1.xpose.msra.mxu0 %v950
        %1431 = vmatprep.subr.mxu0 %v1015
        %1432 = vmatpush1.xpose.msra.mxu0 %v1014
        %1433 = vmatprep.subr.mxu0 %v1079
        %1434 = vmatpush1.xpose.msra.mxu0 %v1078
        %1435 = vmatprep.subr.mxu0 %v1143
        %1436 = vmatpush1.xpose.msra.mxu0 %v1142
        %1437 = vmatprep.subr.mxu0 %v1207
        %1438 = vmatpush1.xpose.msra.mxu0 %v1206
        %1439 = vmatprep.subr.mxu0 0.0
        %1440 = vmatpush1.xpose.msra.mxu0 0.0
        %1441 = vmatprep.subr.mxu0 0.0
        %1442 = vmatpush1.xpose.msra.mxu0 0.0
        %1443 = vmatprep.subr.mxu0 0.0
        %1444 = vmatpush1.xpose.msra.mxu0 0.0
        %1445 = vmatprep.subr.mxu0 0.0
        %1446 = vmatpush1.xpose.msra.mxu0 0.0
        %1447 = vmatprep.subr.mxu0 0.0
        %1448 = vmatpush1.xpose.msra.mxu0 0.0
        %1449 = vmatprep.subr.mxu0 0.0
        %1450 = vmatpush1.xpose.msra.mxu0 0.0
        %1451 = vmatprep.subr.mxu0 0.0
        %1452 = vmatpush1.xpose.msra.mxu0 0.0
        %1453 = vmatprep.subr.mxu0 0.0
        %1454 = vmatpush1.xpose.msra.mxu0 0.0
        %1455 = vmatprep.subr.mxu0 0.0
        %1456 = vmatpush1.xpose.msra.mxu0 0.0
        %1457 = vmatprep.subr.mxu0 0.0
        %1458 = vmatpush1.xpose.msra.mxu0 0.0
        %1459 = vmatprep.subr.mxu0 0.0
        %1460 = vmatpush1.xpose.msra.mxu0 0.0
        %1461 = vmatprep.subr.mxu0 0.0
        %1462 = vmatpush1.xpose.msra.mxu0 0.0
        %1463 = vmatprep.subr.mxu0 0.0
        %1464 = vmatpush1.xpose.msra.mxu0 0.0
        %1465 = vmatprep.subr.mxu0 0.0
        %1466 = vmatpush1.xpose.msra.mxu0 0.0
        %1467 = vmatprep.subr.mxu0 0.0
        %1468 = vmatpush1.xpose.msra.mxu0 0.0
        %1469 = vmatprep.subr.mxu0 0.0
        %1470 = vmatpush1.xpose.msra.mxu0 0.0
        %1471 = vmatprep.mubr.f32.mxu0 %v183
        %1472 = vmatmul.mubr.f32.gmra.mrb[0].mxu0 %v182
        %v1473 = vpop.f32.mrb[0].mxu0
        %v1474 = vadd.f32 %v1404, %v1473
        %v1475 = vpop.f32.mrb[0].mxu0
        %1476 = vdwg.mxu0
        %1477 = vmatprep.subr.mxu0 %v249
        %1478 = vmatpush1.xpose.msra.mxu0 %v248
        %1479 = vmatprep.subr.mxu0 %v313
        %1480 = vmatpush1.xpose.msra.mxu0 %v312
        %1481 = vmatprep.subr.mxu0 %v377
        %1482 = vmatpush1.xpose.msra.mxu0 %v376
        %1483 = vmatprep.subr.mxu0 %v441
        %1484 = vmatpush1.xpose.msra.mxu0 %v440
        %1485 = vmatprep.subr.mxu0 %v505
        %1486 = vmatpush1.xpose.msra.mxu0 %v504
        %1487 = vmatprep.subr.mxu0 %v569
        %1488 = vmatpush1.xpose.msra.mxu0 %v568
        %1489 = vmatprep.subr.mxu0 %v633
        %1490 = vmatpush1.xpose.msra.mxu0 %v632
        %1491 = vmatprep.subr.mxu0 %v697
        %1492 = vmatpush1.xpose.msra.mxu0 %v696
        %1493 = vmatprep.subr.mxu0 %v761
        %1494 = vmatpush1.xpose.msra.mxu0 %v760
        %1495 = vmatprep.subr.mxu0 %v825
        %1496 = vmatpush1.xpose.msra.mxu0 %v824
        %1497 = vmatprep.subr.mxu0 %v889
        %1498 = vmatpush1.xpose.msra.mxu0 %v888
        %1499 = vmatprep.subr.mxu0 %v953
        %1500 = vmatpush1.xpose.msra.mxu0 %v952
        %1501 = vmatprep.subr.mxu0 %v1017
        %1502 = vmatpush1.xpose.msra.mxu0 %v1016
        %1503 = vmatprep.subr.mxu0 %v1081
        %1504 = vmatpush1.xpose.msra.mxu0 %v1080
        %1505 = vmatprep.subr.mxu0 %v1145
        %1506 = vmatpush1.xpose.msra.mxu0 %v1144
        %1507 = vmatprep.subr.mxu0 %v1209
        %1508 = vmatpush1.xpose.msra.mxu0 %v1208
        %1509 = vmatprep.subr.mxu0 0.0
        %1510 = vmatpush1.xpose.msra.mxu0 0.0
        %1511 = vmatprep.subr.mxu0 0.0
        %1512 = vmatpush1.xpose.msra.mxu0 0.0
        %1513 = vmatprep.subr.mxu0 0.0
        %1514 = vmatpush1.xpose.msra.mxu0 0.0
        %1515 = vmatprep.subr.mxu0 0.0
        %1516 = vmatpush1.xpose.msra.mxu0 0.0
        %1517 = vmatprep.subr.mxu0 0.0
        %1518 = vmatpush1.xpose.msra.mxu0 0.0
        %1519 = vmatprep.subr.mxu0 0.0
        %1520 = vmatpush1.xpose.msra.mxu0 0.0
        %1521 = vmatprep.subr.mxu0 0.0
        %1522 = vmatpush1.xpose.msra.mxu0 0.0
        %1523 = vmatprep.subr.mxu0 0.0
        %1524 = vmatpush1.xpose.msra.mxu0 0.0
        %1525 = vmatprep.subr.mxu0 0.0
        %1526 = vmatpush1.xpose.msra.mxu0 0.0
        %1527 = vmatprep.subr.mxu0 0.0
        %1528 = vmatpush1.xpose.msra.mxu0 0.0
        %1529 = vmatprep.subr.mxu0 0.0
        %1530 = vmatpush1.xpose.msra.mxu0 0.0
        %1531 = vmatprep.subr.mxu0 0.0
        %1532 = vmatpush1.xpose.msra.mxu0 0.0
        %1533 = vmatprep.subr.mxu0 0.0
        %1534 = vmatpush1.xpose.msra.mxu0 0.0
        %1535 = vmatprep.subr.mxu0 0.0
        %1536 = vmatpush1.xpose.msra.mxu0 0.0
        %1537 = vmatprep.subr.mxu0 0.0
        %1538 = vmatpush1.xpose.msra.mxu0 0.0
        %1539 = vmatprep.subr.mxu0 0.0
        %1540 = vmatpush1.xpose.msra.mxu0 0.0
        %1541 = vmatprep.mubr.f32.mxu0 %v185
        %1542 = vmatmul.mubr.f32.gmra.mrb[0].mxu0 %v184
        %v1543 = vpop.f32.mrb[0].mxu0
        %v1544 = vadd.f32 %v1474, %v1543
        %v1545 = vpop.f32.mrb[0].mxu0
        %1546 = vdwg.mxu0
        %1547 = vmatprep.subr.mxu0 %v251
        %1548 = vmatpush1.xpose.msra.mxu0 %v250
        %1549 = vmatprep.subr.mxu0 %v315
        %1550 = vmatpush1.xpose.msra.mxu0 %v314
        %1551 = vmatprep.subr.mxu0 %v379
        %1552 = vmatpush1.xpose.msra.mxu0 %v378
        %1553 = vmatprep.subr.mxu0 %v443
        %1554 = vmatpush1.xpose.msra.mxu0 %v442
        %1555 = vmatprep.subr.mxu0 %v507
        %1556 = vmatpush1.xpose.msra.mxu0 %v506
        %1557 = vmatprep.subr.mxu0 %v571
        %1558 = vmatpush1.xpose.msra.mxu0 %v570
        %1559 = vmatprep.subr.mxu0 %v635
        %1560 = vmatpush1.xpose.msra.mxu0 %v634
        %1561 = vmatprep.subr.mxu0 %v699
        %1562 = vmatpush1.xpose.msra.mxu0 %v698
        %1563 = vmatprep.subr.mxu0 %v763
        %1564 = vmatpush1.xpose.msra.mxu0 %v762
        %1565 = vmatprep.subr.mxu0 %v827
        %1566 = vmatpush1.xpose.msra.mxu0 %v826
        %1567 = vmatprep.subr.mxu0 %v891
        %1568 = vmatpush1.xpose.msra.mxu0 %v890
        %1569 = vmatprep.subr.mxu0 %v955
        %1570 = vmatpush1.xpose.msra.mxu0 %v954
        %1571 = vmatprep.subr.mxu0 %v1019
        %1572 = vmatpush1.xpose.msra.mxu0 %v1018
        %1573 = vmatprep.subr.mxu0 %v1083
        %1574 = vmatpush1.xpose.msra.mxu0 %v1082
        %1575 = vmatprep.subr.mxu0 %v1147
        %1576 = vmatpush1.xpose.msra.mxu0 %v1146
        %1577 = vmatprep.subr.mxu0 %v1211
        %1578 = vmatpush1.xpose.msra.mxu0 %v1210
        %1579 = vmatprep.subr.mxu0 0.0
        %1580 = vmatpush1.xpose.msra.mxu0 0.0
        %1581 = vmatprep.subr.mxu0 0.0
        %1582 = vmatpush1.xpose.msra.mxu0 0.0
        %1583 = vmatprep.subr.mxu0 0.0
        %1584 = vmatpush1.xpose.msra.mxu0 0.0
        %1585 = vmatprep.subr.mxu0 0.0
        %1586 = vmatpush1.xpose.msra.mxu0 0.0
        %1587 = vmatprep.subr.mxu0 0.0
        %1588 = vmatpush1.xpose.msra.mxu0 0.0
        %1589 = vmatprep.subr.mxu0 0.0
        %1590 = vmatpush1.xpose.msra.mxu0 0.0
        %1591 = vmatprep.subr.mxu0 0.0
        %1592 = vmatpush1.xpose.msra.mxu0 0.0
        %1593 = vmatprep.subr.mxu0 0.0
        %1594 = vmatpush1.xpose.msra.mxu0 0.0
        %1595 = vmatprep.subr.mxu0 0.0
        %1596 = vmatpush1.xpose.msra.mxu0 0.0
        %1597 = vmatprep.subr.mxu0 0.0
        %1598 = vmatpush1.xpose.msra.mxu0 0.0
        %1599 = vmatprep.subr.mxu0 0.0
        %1600 = vmatpush1.xpose.msra.mxu0 0.0
        %1601 = vmatprep.subr.mxu0 0.0
        %1602 = vmatpush1.xpose.msra.mxu0 0.0
        %1603 = vmatprep.subr.mxu0 0.0
        %1604 = vmatpush1.xpose.msra.mxu0 0.0
        %1605 = vmatprep.subr.mxu0 0.0
        %1606 = vmatpush1.xpose.msra.mxu0 0.0
        %1607 = vmatprep.subr.mxu0 0.0
        %1608 = vmatpush1.xpose.msra.mxu0 0.0
        %1609 = vmatprep.subr.mxu0 0.0
        %1610 = vmatpush1.xpose.msra.mxu0 0.0
        %1611 = vmatprep.mubr.f32.mxu0 %v187
        %1612 = vmatmul.mubr.f32.gmra.mrb[0].mxu0 %v186
        %v1613 = vpop.f32.mrb[0].mxu0
        %v1614 = vadd.f32 %v1544, %v1613
        %v1615 = vpop.f32.mrb[0].mxu0
        %1616 = vdwg.mxu0
        %1617 = vmatprep.subr.mxu0 %v253
        %1618 = vmatpush1.xpose.msra.mxu0 %v252
        %1619 = vmatprep.subr.mxu0 %v317
        %1620 = vmatpush1.xpose.msra.mxu0 %v316
        %1621 = vmatprep.subr.mxu0 %v381
        %1622 = vmatpush1.xpose.msra.mxu0 %v380
        %1623 = vmatprep.subr.mxu0 %v445
        %1624 = vmatpush1.xpose.msra.mxu0 %v444
        %1625 = vmatprep.subr.mxu0 %v509
        %1626 = vmatpush1.xpose.msra.mxu0 %v508
        %1627 = vmatprep.subr.mxu0 %v573
        %1628 = vmatpush1.xpose.msra.mxu0 %v572
        %1629 = vmatprep.subr.mxu0 %v637
        %1630 = vmatpush1.xpose.msra.mxu0 %v636
        %1631 = vmatprep.subr.mxu0 %v701
        %1632 = vmatpush1.xpose.msra.mxu0 %v700
        %1633 = vmatprep.subr.mxu0 %v765
        %1634 = vmatpush1.xpose.msra.mxu0 %v764
        %1635 = vmatprep.subr.mxu0 %v829
        %1636 = vmatpush1.xpose.msra.mxu0 %v828
        %1637 = vmatprep.subr.mxu0 %v893
        %1638 = vmatpush1.xpose.msra.mxu0 %v892
        %1639 = vmatprep.subr.mxu0 %v957
        %1640 = vmatpush1.xpose.msra.mxu0 %v956
        %1641 = vmatprep.subr.mxu0 %v1021
        %1642 = vmatpush1.xpose.msra.mxu0 %v1020
        %1643 = vmatprep.subr.mxu0 %v1085
        %1644 = vmatpush1.xpose.msra.mxu0 %v1084
        %1645 = vmatprep.subr.mxu0 %v1149
        %1646 = vmatpush1.xpose.msra.mxu0 %v1148
        %1647 = vmatprep.subr.mxu0 %v1213
        %1648 = vmatpush1.xpose.msra.mxu0 %v1212
        %1649 = vmatprep.subr.mxu0 0.0
        %1650 = vmatpush1.xpose.msra.mxu0 0.0
        %1651 = vmatprep.subr.mxu0 0.0
        %1652 = vmatpush1.xpose.msra.mxu0 0.0
        %1653 = vmatprep.subr.mxu0 0.0
        %1654 = vmatpush1.xpose.msra.mxu0 0.0
        %1655 = vmatprep.subr.mxu0 0.0
        %1656 = vmatpush1.xpose.msra.mxu0 0.0
        %1657 = vmatprep.subr.mxu0 0.0
        %1658 = vmatpush1.xpose.msra.mxu0 0.0
        %1659 = vmatprep.subr.mxu0 0.0
        %1660 = vmatpush1.xpose.msra.mxu0 0.0
        %1661 = vmatprep.subr.mxu0 0.0
        %1662 = vmatpush1.xpose.msra.mxu0 0.0
        %1663 = vmatprep.subr.mxu0 0.0
        %1664 = vmatpush1.xpose.msra.mxu0 0.0
        %1665 = vmatprep.subr.mxu0 0.0
        %1666 = vmatpush1.xpose.msra.mxu0 0.0
        %1667 = vmatprep.subr.mxu0 0.0
        %1668 = vmatpush1.xpose.msra.mxu0 0.0
        %1669 = vmatprep.subr.mxu0 0.0
        %1670 = vmatpush1.xpose.msra.mxu0 0.0
        %1671 = vmatprep.subr.mxu0 0.0
        %1672 = vmatpush1.xpose.msra.mxu0 0.0
        %1673 = vmatprep.subr.mxu0 0.0
        %1674 = vmatpush1.xpose.msra.mxu0 0.0
        %1675 = vmatprep.subr.mxu0 0.0
        %1676 = vmatpush1.xpose.msra.mxu0 0.0
        %1677 = vmatprep.subr.mxu0 0.0
        %1678 = vmatpush1.xpose.msra.mxu0 0.0
        %1679 = vmatprep.subr.mxu0 0.0
        %1680 = vmatpush1.xpose.msra.mxu0 0.0
        %1681 = vmatprep.mubr.f32.mxu0 %v189
        %1682 = vmatmul.mubr.f32.gmra.mrb[0].mxu0 %v188
        %v1683 = vpop.f32.mrb[0].mxu0
        %v1684 = vadd.f32 %v1614, %v1683
        %v1685 = vpop.f32.mrb[0].mxu0
        %1686 = vdwg.mxu0
        %1687 = vmatprep.subr.mxu0 %v255
        %1688 = vmatpush1.xpose.msra.mxu0 %v254
        %1689 = vmatprep.subr.mxu0 %v319
        %1690 = vmatpush1.xpose.msra.mxu0 %v318
        %1691 = vmatprep.subr.mxu0 %v383
        %1692 = vmatpush1.xpose.msra.mxu0 %v382
        %1693 = vmatprep.subr.mxu0 %v447
        %1694 = vmatpush1.xpose.msra.mxu0 %v446
        %1695 = vmatprep.subr.mxu0 %v511
        %1696 = vmatpush1.xpose.msra.mxu0 %v510
        %1697 = vmatprep.subr.mxu0 %v575
        %1698 = vmatpush1.xpose.msra.mxu0 %v574
        %1699 = vmatprep.subr.mxu0 %v639
        %1700 = vmatpush1.xpose.msra.mxu0 %v638
        %1701 = vmatprep.subr.mxu0 %v703
        %1702 = vmatpush1.xpose.msra.mxu0 %v702
        %1703 = vmatprep.subr.mxu0 %v767
        %1704 = vmatpush1.xpose.msra.mxu0 %v766
        %1705 = vmatprep.subr.mxu0 %v831
        %1706 = vmatpush1.xpose.msra.mxu0 %v830
        %1707 = vmatprep.subr.mxu0 %v895
        %1708 = vmatpush1.xpose.msra.mxu0 %v894
        %1709 = vmatprep.subr.mxu0 %v959
        %1710 = vmatpush1.xpose.msra.mxu0 %v958
        %1711 = vmatprep.subr.mxu0 %v1023
        %1712 = vmatpush1.xpose.msra.mxu0 %v1022
        %1713 = vmatprep.subr.mxu0 %v1087
        %1714 = vmatpush1.xpose.msra.mxu0 %v1086
        %1715 = vmatprep.subr.mxu0 %v1151
        %1716 = vmatpush1.xpose.msra.mxu0 %v1150
        %1717 = vmatprep.subr.mxu0 %v1215
        %1718 = vmatpush1.xpose.msra.mxu0 %v1214
        %1719 = vmatprep.subr.mxu0 0.0
        %1720 = vmatpush1.xpose.msra.mxu0 0.0
        %1721 = vmatprep.subr.mxu0 0.0
        %1722 = vmatpush1.xpose.msra.mxu0 0.0
        %1723 = vmatprep.subr.mxu0 0.0
        %1724 = vmatpush1.xpose.msra.mxu0 0.0
        %1725 = vmatprep.subr.mxu0 0.0
        %1726 = vmatpush1.xpose.msra.mxu0 0.0
        %1727 = vmatprep.subr.mxu0 0.0
        %1728 = vmatpush1.xpose.msra.mxu0 0.0
        %1729 = vmatprep.subr.mxu0 0.0
        %1730 = vmatpush1.xpose.msra.mxu0 0.0
        %1731 = vmatprep.subr.mxu0 0.0
        %1732 = vmatpush1.xpose.msra.mxu0 0.0
        %1733 = vmatprep.subr.mxu0 0.0
        %1734 = vmatpush1.xpose.msra.mxu0 0.0
        %1735 = vmatprep.subr.mxu0 0.0
        %1736 = vmatpush1.xpose.msra.mxu0 0.0
        %1737 = vmatprep.subr.mxu0 0.0
        %1738 = vmatpush1.xpose.msra.mxu0 0.0
        %1739 = vmatprep.subr.mxu0 0.0
        %1740 = vmatpush1.xpose.msra.mxu0 0.0
        %1741 = vmatprep.subr.mxu0 0.0
        %1742 = vmatpush1.xpose.msra.mxu0 0.0
        %1743 = vmatprep.subr.mxu0 0.0
        %1744 = vmatpush1.xpose.msra.mxu0 0.0
        %1745 = vmatprep.subr.mxu0 0.0
        %1746 = vmatpush1.xpose.msra.mxu0 0.0
        %1747 = vmatprep.subr.mxu0 0.0
        %1748 = vmatpush1.xpose.msra.mxu0 0.0
        %1749 = vmatprep.subr.mxu0 0.0
        %1750 = vmatpush1.xpose.msra.mxu0 0.0
        %1751 = vmatprep.mubr.f32.mxu0 %v191
        %1752 = vmatmul.mubr.f32.gmra.mrb[0].mxu0 %v190
        %v1753 = vpop.f32.mrb[0].mxu0
        %v1754 = vadd.f32 %v1684, %v1753
        %v1755 = vpop.f32.mrb[0].mxu0
        %1756 = vdwg.mxu0
        %1757 = vmatprep.subr.mxu0 %v257
        %1758 = vmatpush1.xpose.msra.mxu0 %v256
        %1759 = vmatprep.subr.mxu0 %v321
        %1760 = vmatpush1.xpose.msra.mxu0 %v320
        %1761 = vmatprep.subr.mxu0 %v385
        %1762 = vmatpush1.xpose.msra.mxu0 %v384
        %1763 = vmatprep.subr.mxu0 %v449
        %1764 = vmatpush1.xpose.msra.mxu0 %v448
        %1765 = vmatprep.subr.mxu0 %v513
        %1766 = vmatpush1.xpose.msra.mxu0 %v512
        %1767 = vmatprep.subr.mxu0 %v577
        %1768 = vmatpush1.xpose.msra.mxu0 %v576
        %1769 = vmatprep.subr.mxu0 %v641
        %1770 = vmatpush1.xpose.msra.mxu0 %v640
        %1771 = vmatprep.subr.mxu0 %v705
        %1772 = vmatpush1.xpose.msra.mxu0 %v704
        %1773 = vmatprep.subr.mxu0 %v769
        %1774 = vmatpush1.xpose.msra.mxu0 %v768
        %1775 = vmatprep.subr.mxu0 %v833
        %1776 = vmatpush1.xpose.msra.mxu0 %v832
        %1777 = vmatprep.subr.mxu0 %v897
        %1778 = vmatpush1.xpose.msra.mxu0 %v896
        %1779 = vmatprep.subr.mxu0 %v961
        %1780 = vmatpush1.xpose.msra.mxu0 %v960
        %1781 = vmatprep.subr.mxu0 %v1025
        %1782 = vmatpush1.xpose.msra.mxu0 %v1024
        %1783 = vmatprep.subr.mxu0 %v1089
        %1784 = vmatpush1.xpose.msra.mxu0 %v1088
        %1785 = vmatprep.subr.mxu0 %v1153
        %1786 = vmatpush1.xpose.msra.mxu0 %v1152
        %1787 = vmatprep.subr.mxu0 %v1217
        %1788 = vmatpush1.xpose.msra.mxu0 %v1216
        %1789 = vmatprep.subr.mxu0 0.0
        %1790 = vmatpush1.xpose.msra.mxu0 0.0
        %1791 = vmatprep.subr.mxu0 0.0
        %1792 = vmatpush1.xpose.msra.mxu0 0.0
        %1793 = vmatprep.subr.mxu0 0.0
        %1794 = vmatpush1.xpose.msra.mxu0 0.0
        %1795 = vmatprep.subr.mxu0 0.0
        %1796 = vmatpush1.xpose.msra.mxu0 0.0
        %1797 = vmatprep.subr.mxu0 0.0
        %1798 = vmatpush1.xpose.msra.mxu0 0.0
        %1799 = vmatprep.subr.mxu0 0.0
        %1800 = vmatpush1.xpose.msra.mxu0 0.0
        %1801 = vmatprep.subr.mxu0 0.0
        %1802 = vmatpush1.xpose.msra.mxu0 0.0
        %1803 = vmatprep.subr.mxu0 0.0
        %1804 = vmatpush1.xpose.msra.mxu0 0.0
        %1805 = vmatprep.subr.mxu0 0.0
        %1806 = vmatpush1.xpose.msra.mxu0 0.0
        %1807 = vmatprep.subr.mxu0 0.0
        %1808 = vmatpush1.xpose.msra.mxu0 0.0
        %1809 = vmatprep.subr.mxu0 0.0
        %1810 = vmatpush1.xpose.msra.mxu0 0.0
        %1811 = vmatprep.subr.mxu0 0.0
        %1812 = vmatpush1.xpose.msra.mxu0 0.0
        %1813 = vmatprep.subr.mxu0 0.0
        %1814 = vmatpush1.xpose.msra.mxu0 0.0
        %1815 = vmatprep.subr.mxu0 0.0
        %1816 = vmatpush1.xpose.msra.mxu0 0.0
        %1817 = vmatprep.subr.mxu0 0.0
        %1818 = vmatpush1.xpose.msra.mxu0 0.0
        %1819 = vmatprep.subr.mxu0 0.0
        %1820 = vmatpush1.xpose.msra.mxu0 0.0
        %1821 = vmatprep.mubr.f32.mxu0 %v193
        %1822 = vmatmul.mubr.f32.gmra.mrb[0].mxu0 %v192
        %v1823 = vpop.f32.mrb[0].mxu0
        %v1824 = vadd.f32 %v1754, %v1823
        %v1825 = vpop.f32.mrb[0].mxu0
        %1826 = vdwg.mxu0
        %1827 = vmatprep.subr.mxu0 %v259
        %1828 = vmatpush1.xpose.msra.mxu0 %v258
        %1829 = vmatprep.subr.mxu0 %v323
        %1830 = vmatpush1.xpose.msra.mxu0 %v322
        %1831 = vmatprep.subr.mxu0 %v387
        %1832 = vmatpush1.xpose.msra.mxu0 %v386
        %1833 = vmatprep.subr.mxu0 %v451
        %1834 = vmatpush1.xpose.msra.mxu0 %v450
        %1835 = vmatprep.subr.mxu0 %v515
        %1836 = vmatpush1.xpose.msra.mxu0 %v514
        %1837 = vmatprep.subr.mxu0 %v579
        %1838 = vmatpush1.xpose.msra.mxu0 %v578
        %1839 = vmatprep.subr.mxu0 %v643
        %1840 = vmatpush1.xpose.msra.mxu0 %v642
        %1841 = vmatprep.subr.mxu0 %v707
        %1842 = vmatpush1.xpose.msra.mxu0 %v706
        %1843 = vmatprep.subr.mxu0 %v771
        %1844 = vmatpush1.xpose.msra.mxu0 %v770
        %1845 = vmatprep.subr.mxu0 %v835
        %1846 = vmatpush1.xpose.msra.mxu0 %v834
        %1847 = vmatprep.subr.mxu0 %v899
        %1848 = vmatpush1.xpose.msra.mxu0 %v898
        %1849 = vmatprep.subr.mxu0 %v963
        %1850 = vmatpush1.xpose.msra.mxu0 %v962
        %1851 = vmatprep.subr.mxu0 %v1027
        %1852 = vmatpush1.xpose.msra.mxu0 %v1026
        %1853 = vmatprep.subr.mxu0 %v1091
        %1854 = vmatpush1.xpose.msra.mxu0 %v1090
        %1855 = vmatprep.subr.mxu0 %v1155
        %1856 = vmatpush1.xpose.msra.mxu0 %v1154
        %1857 = vmatprep.subr.mxu0 %v1219
        %1858 = vmatpush1.xpose.msra.mxu0 %v1218
        %1859 = vmatprep.subr.mxu0 0.0
        %1860 = vmatpush1.xpose.msra.mxu0 0.0
        %1861 = vmatprep.subr.mxu0 0.0
        %1862 = vmatpush1.xpose.msra.mxu0 0.0
        %1863 = vmatprep.subr.mxu0 0.0
        %1864 = vmatpush1.xpose.msra.mxu0 0.0
        %1865 = vmatprep.subr.mxu0 0.0
        %1866 = vmatpush1.xpose.msra.mxu0 0.0
        %1867 = vmatprep.subr.mxu0 0.0
        %1868 = vmatpush1.xpose.msra.mxu0 0.0
        %1869 = vmatprep.subr.mxu0 0.0
        %1870 = vmatpush1.xpose.msra.mxu0 0.0
        %1871 = vmatprep.subr.mxu0 0.0
        %1872 = vmatpush1.xpose.msra.mxu0 0.0
        %1873 = vmatprep.subr.mxu0 0.0
        %1874 = vmatpush1.xpose.msra.mxu0 0.0
        %1875 = vmatprep.subr.mxu0 0.0
        %1876 = vmatpush1.xpose.msra.mxu0 0.0
        %1877 = vmatprep.subr.mxu0 0.0
        %1878 = vmatpush1.xpose.msra.mxu0 0.0
        %1879 = vmatprep.subr.mxu0 0.0
        %1880 = vmatpush1.xpose.msra.mxu0 0.0
        %1881 = vmatprep.subr.mxu0 0.0
        %1882 = vmatpush1.xpose.msra.mxu0 0.0
        %1883 = vmatprep.subr.mxu0 0.0
        %1884 = vmatpush1.xpose.msra.mxu0 0.0
        %1885 = vmatprep.subr.mxu0 0.0
        %1886 = vmatpush1.xpose.msra.mxu0 0.0
        %1887 = vmatprep.subr.mxu0 0.0
        %1888 = vmatpush1.xpose.msra.mxu0 0.0
        %1889 = vmatprep.subr.mxu0 0.0
        %1890 = vmatpush1.xpose.msra.mxu0 0.0
        %1891 = vmatprep.mubr.f32.mxu0 %v195
        %1892 = vmatmul.mubr.f32.gmra.mrb[0].mxu0 %v194
        %v1893 = vpop.f32.mrb[0].mxu0
        %v1894 = vadd.f32 %v1824, %v1893
        %v1895 = vpop.f32.mrb[0].mxu0
        %1896 = vdwg.mxu0
        %1897 = vmatprep.subr.mxu0 %v261
        %1898 = vmatpush1.xpose.msra.mxu0 %v260
        %1899 = vmatprep.subr.mxu0 %v325
        %1900 = vmatpush1.xpose.msra.mxu0 %v324
        %1901 = vmatprep.subr.mxu0 %v389
        %1902 = vmatpush1.xpose.msra.mxu0 %v388
        %1903 = vmatprep.subr.mxu0 %v453
        %1904 = vmatpush1.xpose.msra.mxu0 %v452
        %1905 = vmatprep.subr.mxu0 %v517
        %1906 = vmatpush1.xpose.msra.mxu0 %v516
        %1907 = vmatprep.subr.mxu0 %v581
        %1908 = vmatpush1.xpose.msra.mxu0 %v580
        %1909 = vmatprep.subr.mxu0 %v645
        %1910 = vmatpush1.xpose.msra.mxu0 %v644
        %1911 = vmatprep.subr.mxu0 %v709
        %1912 = vmatpush1.xpose.msra.mxu0 %v708
        %1913 = vmatprep.subr.mxu0 %v773
        %1914 = vmatpush1.xpose.msra.mxu0 %v772
        %1915 = vmatprep.subr.mxu0 %v837
        %1916 = vmatpush1.xpose.msra.mxu0 %v836
        %1917 = vmatprep.subr.mxu0 %v901
        %1918 = vmatpush1.xpose.msra.mxu0 %v900
        %1919 = vmatprep.subr.mxu0 %v965
        %1920 = vmatpush1.xpose.msra.mxu0 %v964
        %1921 = vmatprep.subr.mxu0 %v1029
        %1922 = vmatpush1.xpose.msra.mxu0 %v1028
        %1923 = vmatprep.subr.mxu0 %v1093
        %1924 = vmatpush1.xpose.msra.mxu0 %v1092
        %1925 = vmatprep.subr.mxu0 %v1157
        %1926 = vmatpush1.xpose.msra.mxu0 %v1156
        %1927 = vmatprep.subr.mxu0 %v1221
        %1928 = vmatpush1.xpose.msra.mxu0 %v1220
        %1929 = vmatprep.subr.mxu0 0.0
        %1930 = vmatpush1.xpose.msra.mxu0 0.0
        %1931 = vmatprep.subr.mxu0 0.0
        %1932 = vmatpush1.xpose.msra.mxu0 0.0
        %1933 = vmatprep.subr.mxu0 0.0
        %1934 = vmatpush1.xpose.msra.mxu0 0.0
        %1935 = vmatprep.subr.mxu0 0.0
        %1936 = vmatpush1.xpose.msra.mxu0 0.0
        %1937 = vmatprep.subr.mxu0 0.0
        %1938 = vmatpush1.xpose.msra.mxu0 0.0
        %1939 = vmatprep.subr.mxu0 0.0
        %1940 = vmatpush1.xpose.msra.mxu0 0.0
        %1941 = vmatprep.subr.mxu0 0.0
        %1942 = vmatpush1.xpose.msra.mxu0 0.0
        %1943 = vmatprep.subr.mxu0 0.0
        %1944 = vmatpush1.xpose.msra.mxu0 0.0
        %1945 = vmatprep.subr.mxu0 0.0
        %1946 = vmatpush1.xpose.msra.mxu0 0.0
        %1947 = vmatprep.subr.mxu0 0.0
        %1948 = vmatpush1.xpose.msra.mxu0 0.0
        %1949 = vmatprep.subr.mxu0 0.0
        %1950 = vmatpush1.xpose.msra.mxu0 0.0
        %1951 = vmatprep.subr.mxu0 0.0
        %1952 = vmatpush1.xpose.msra.mxu0 0.0
        %1953 = vmatprep.subr.mxu0 0.0
        %1954 = vmatpush1.xpose.msra.mxu0 0.0
        %1955 = vmatprep.subr.mxu0 0.0
        %1956 = vmatpush1.xpose.msra.mxu0 0.0
        %1957 = vmatprep.subr.mxu0 0.0
        %1958 = vmatpush1.xpose.msra.mxu0 0.0
        %1959 = vmatprep.subr.mxu0 0.0
        %1960 = vmatpush1.xpose.msra.mxu0 0.0
        %1961 = vmatprep.mubr.f32.mxu0 %v197
        %1962 = vmatmul.mubr.f32.gmra.mrb[0].mxu0 %v196
        %v1963 = vpop.f32.mrb[0].mxu0
        %v1964 = vadd.f32 %v1894, %v1963
        %v1965 = vpop.f32.mrb[0].mxu0
        %1966 = vdwg.mxu0
        %1967 = vmatprep.subr.mxu0 %v263
        %1968 = vmatpush1.xpose.msra.mxu0 %v262
        %1969 = vmatprep.subr.mxu0 %v327
        %1970 = vmatpush1.xpose.msra.mxu0 %v326
        %1971 = vmatprep.subr.mxu0 %v391
        %1972 = vmatpush1.xpose.msra.mxu0 %v390
        %1973 = vmatprep.subr.mxu0 %v455
        %1974 = vmatpush1.xpose.msra.mxu0 %v454
        %1975 = vmatprep.subr.mxu0 %v519
        %1976 = vmatpush1.xpose.msra.mxu0 %v518
        %1977 = vmatprep.subr.mxu0 %v583
        %1978 = vmatpush1.xpose.msra.mxu0 %v582
        %1979 = vmatprep.subr.mxu0 %v647
        %1980 = vmatpush1.xpose.msra.mxu0 %v646
        %1981 = vmatprep.subr.mxu0 %v711
        %1982 = vmatpush1.xpose.msra.mxu0 %v710
        %1983 = vmatprep.subr.mxu0 %v775
        %1984 = vmatpush1.xpose.msra.mxu0 %v774
        %1985 = vmatprep.subr.mxu0 %v839
        %1986 = vmatpush1.xpose.msra.mxu0 %v838
        %1987 = vmatprep.subr.mxu0 %v903
        %1988 = vmatpush1.xpose.msra.mxu0 %v902
        %1989 = vmatprep.subr.mxu0 %v967
        %1990 = vmatpush1.xpose.msra.mxu0 %v966
        %1991 = vmatprep.subr.mxu0 %v1031
        %1992 = vmatpush1.xpose.msra.mxu0 %v1030
        %1993 = vmatprep.subr.mxu0 %v1095
        %1994 = vmatpush1.xpose.msra.mxu0 %v1094
        %1995 = vmatprep.subr.mxu0 %v1159
        %1996 = vmatpush1.xpose.msra.mxu0 %v1158
        %1997 = vmatprep.subr.mxu0 %v1223
        %1998 = vmatpush1.xpose.msra.mxu0 %v1222
        %1999 = vmatprep.subr.mxu0 0.0
        %2000 = vmatpush1.xpose.msra.mxu0 0.0
        %2001 = vmatprep.subr.mxu0 0.0
        %2002 = vmatpush1.xpose.msra.mxu0 0.0
        %2003 = vmatprep.subr.mxu0 0.0
        %2004 = vmatpush1.xpose.msra.mxu0 0.0
        %2005 = vmatprep.subr.mxu0 0.0
        %2006 = vmatpush1.xpose.msra.mxu0 0.0
        %2007 = vmatprep.subr.mxu0 0.0
        %2008 = vmatpush1.xpose.msra.mxu0 0.0
        %2009 = vmatprep.subr.mxu0 0.0
        %2010 = vmatpush1.xpose.msra.mxu0 0.0
        %2011 = vmatprep.subr.mxu0 0.0
        %2012 = vmatpush1.xpose.msra.mxu0 0.0
        %2013 = vmatprep.subr.mxu0 0.0
        %2014 = vmatpush1.xpose.msra.mxu0 0.0
        %2015 = vmatprep.subr.mxu0 0.0
        %2016 = vmatpush1.xpose.msra.mxu0 0.0
        %2017 = vmatprep.subr.mxu0 0.0
        %2018 = vmatpush1.xpose.msra.mxu0 0.0
        %2019 = vmatprep.subr.mxu0 0.0
        %2020 = vmatpush1.xpose.msra.mxu0 0.0
        %2021 = vmatprep.subr.mxu0 0.0
        %2022 = vmatpush1.xpose.msra.mxu0 0.0
        %2023 = vmatprep.subr.mxu0 0.0
        %2024 = vmatpush1.xpose.msra.mxu0 0.0
        %2025 = vmatprep.subr.mxu0 0.0
        %2026 = vmatpush1.xpose.msra.mxu0 0.0
        %2027 = vmatprep.subr.mxu0 0.0
        %2028 = vmatpush1.xpose.msra.mxu0 0.0
        %2029 = vmatprep.subr.mxu0 0.0
        %2030 = vmatpush1.xpose.msra.mxu0 0.0
        %2031 = vmatprep.mubr.f32.mxu0 %v199
        %2032 = vmatmul.mubr.f32.gmra.mrb[0].mxu0 %v198
        %v2033 = vpop.f32.mrb[0].mxu0
        %v2034 = vadd.f32 %v1964, %v2033
        %v2035 = vpop.f32.mrb[0].mxu0
        %2036 = vdwg.mxu0
        %2037 = vmatprep.subr.mxu0 %v265
        %2038 = vmatpush1.xpose.msra.mxu0 %v264
        %2039 = vmatprep.subr.mxu0 %v329
        %2040 = vmatpush1.xpose.msra.mxu0 %v328
        %2041 = vmatprep.subr.mxu0 %v393
        %2042 = vmatpush1.xpose.msra.mxu0 %v392
        %2043 = vmatprep.subr.mxu0 %v457
        %2044 = vmatpush1.xpose.msra.mxu0 %v456
        %2045 = vmatprep.subr.mxu0 %v521
        %2046 = vmatpush1.xpose.msra.mxu0 %v520
        %2047 = vmatprep.subr.mxu0 %v585
        %2048 = vmatpush1.xpose.msra.mxu0 %v584
        %2049 = vmatprep.subr.mxu0 %v649
        %2050 = vmatpush1.xpose.msra.mxu0 %v648
        %2051 = vmatprep.subr.mxu0 %v713
        %2052 = vmatpush1.xpose.msra.mxu0 %v712
        %2053 = vmatprep.subr.mxu0 %v777
        %2054 = vmatpush1.xpose.msra.mxu0 %v776
        %2055 = vmatprep.subr.mxu0 %v841
        %2056 = vmatpush1.xpose.msra.mxu0 %v840
        %2057 = vmatprep.subr.mxu0 %v905
        %2058 = vmatpush1.xpose.msra.mxu0 %v904
        %2059 = vmatprep.subr.mxu0 %v969
        %2060 = vmatpush1.xpose.msra.mxu0 %v968
        %2061 = vmatprep.subr.mxu0 %v1033
        %2062 = vmatpush1.xpose.msra.mxu0 %v1032
        %2063 = vmatprep.subr.mxu0 %v1097
        %2064 = vmatpush1.xpose.msra.mxu0 %v1096
        %2065 = vmatprep.subr.mxu0 %v1161
        %2066 = vmatpush1.xpose.msra.mxu0 %v1160
        %2067 = vmatprep.subr.mxu0 %v1225
        %2068 = vmatpush1.xpose.msra.mxu0 %v1224
        %2069 = vmatprep.subr.mxu0 0.0
        %2070 = vmatpush1.xpose.msra.mxu0 0.0
        %2071 = vmatprep.subr.mxu0 0.0
        %2072 = vmatpush1.xpose.msra.mxu0 0.0
        %2073 = vmatprep.subr.mxu0 0.0
        %2074 = vmatpush1.xpose.msra.mxu0 0.0
        %2075 = vmatprep.subr.mxu0 0.0
        %2076 = vmatpush1.xpose.msra.mxu0 0.0
        %2077 = vmatprep.subr.mxu0 0.0
        %2078 = vmatpush1.xpose.msra.mxu0 0.0
        %2079 = vmatprep.subr.mxu0 0.0
        %2080 = vmatpush1.xpose.msra.mxu0 0.0
        %2081 = vmatprep.subr.mxu0 0.0
        %2082 = vmatpush1.xpose.msra.mxu0 0.0
        %2083 = vmatprep.subr.mxu0 0.0
        %2084 = vmatpush1.xpose.msra.mxu0 0.0
        %2085 = vmatprep.subr.mxu0 0.0
        %2086 = vmatpush1.xpose.msra.mxu0 0.0
        %2087 = vmatprep.subr.mxu0 0.0
        %2088 = vmatpush1.xpose.msra.mxu0 0.0
        %2089 = vmatprep.subr.mxu0 0.0
        %2090 = vmatpush1.xpose.msra.mxu0 0.0
        %2091 = vmatprep.subr.mxu0 0.0
        %2092 = vmatpush1.xpose.msra.mxu0 0.0
        %2093 = vmatprep.subr.mxu0 0.0
        %2094 = vmatpush1.xpose.msra.mxu0 0.0
        %2095 = vmatprep.subr.mxu0 0.0
        %2096 = vmatpush1.xpose.msra.mxu0 0.0
        %2097 = vmatprep.subr.mxu0 0.0
        %2098 = vmatpush1.xpose.msra.mxu0 0.0
        %2099 = vmatprep.subr.mxu0 0.0
        %2100 = vmatpush1.xpose.msra.mxu0 0.0
        %2101 = vmatprep.mubr.f32.mxu0 %v201
        %2102 = vmatmul.mubr.f32.gmra.mrb[0].mxu0 %v200
        %v2103 = vpop.f32.mrb[0].mxu0
        %v2104 = vadd.f32 %v2034, %v2103
        %v2105 = vpop.f32.mrb[0].mxu0
        %2106 = vdwg.mxu0
        %2107 = vmatprep.subr.mxu0 %v267
        %2108 = vmatpush1.xpose.msra.mxu0 %v266
        %2109 = vmatprep.subr.mxu0 %v331
        %2110 = vmatpush1.xpose.msra.mxu0 %v330
        %2111 = vmatprep.subr.mxu0 %v395
        %2112 = vmatpush1.xpose.msra.mxu0 %v394
        %2113 = vmatprep.subr.mxu0 %v459
        %2114 = vmatpush1.xpose.msra.mxu0 %v458
        %2115 = vmatprep.subr.mxu0 %v523
        %2116 = vmatpush1.xpose.msra.mxu0 %v522
        %2117 = vmatprep.subr.mxu0 %v587
        %2118 = vmatpush1.xpose.msra.mxu0 %v586
        %2119 = vmatprep.subr.mxu0 %v651
        %2120 = vmatpush1.xpose.msra.mxu0 %v650
        %2121 = vmatprep.subr.mxu0 %v715
        %2122 = vmatpush1.xpose.msra.mxu0 %v714
        %2123 = vmatprep.subr.mxu0 %v779
        %2124 = vmatpush1.xpose.msra.mxu0 %v778
        %2125 = vmatprep.subr.mxu0 %v843
        %2126 = vmatpush1.xpose.msra.mxu0 %v842
        %2127 = vmatprep.subr.mxu0 %v907
        %2128 = vmatpush1.xpose.msra.mxu0 %v906
        %2129 = vmatprep.subr.mxu0 %v971
        %2130 = vmatpush1.xpose.msra.mxu0 %v970
        %2131 = vmatprep.subr.mxu0 %v1035
        %2132 = vmatpush1.xpose.msra.mxu0 %v1034
        %2133 = vmatprep.subr.mxu0 %v1099
        %2134 = vmatpush1.xpose.msra.mxu0 %v1098
        %2135 = vmatprep.subr.mxu0 %v1163
        %2136 = vmatpush1.xpose.msra.mxu0 %v1162
        %2137 = vmatprep.subr.mxu0 %v1227
        %2138 = vmatpush1.xpose.msra.mxu0 %v1226
        %2139 = vmatprep.subr.mxu0 0.0
        %2140 = vmatpush1.xpose.msra.mxu0 0.0
        %2141 = vmatprep.subr.mxu0 0.0
        %2142 = vmatpush1.xpose.msra.mxu0 0.0
        %2143 = vmatprep.subr.mxu0 0.0
        %2144 = vmatpush1.xpose.msra.mxu0 0.0
        %2145 = vmatprep.subr.mxu0 0.0
        %2146 = vmatpush1.xpose.msra.mxu0 0.0
        %2147 = vmatprep.subr.mxu0 0.0
        %2148 = vmatpush1.xpose.msra.mxu0 0.0
        %2149 = vmatprep.subr.mxu0 0.0
        %2150 = vmatpush1.xpose.msra.mxu0 0.0
        %2151 = vmatprep.subr.mxu0 0.0
        %2152 = vmatpush1.xpose.msra.mxu0 0.0
        %2153 = vmatprep.subr.mxu0 0.0
        %2154 = vmatpush1.xpose.msra.mxu0 0.0
        %2155 = vmatprep.subr.mxu0 0.0
        %2156 = vmatpush1.xpose.msra.mxu0 0.0
        %2157 = vmatprep.subr.mxu0 0.0
        %2158 = vmatpush1.xpose.msra.mxu0 0.0
        %2159 = vmatprep.subr.mxu0 0.0
        %2160 = vmatpush1.xpose.msra.mxu0 0.0
        %2161 = vmatprep.subr.mxu0 0.0
        %2162 = vmatpush1.xpose.msra.mxu0 0.0
        %2163 = vmatprep.subr.mxu0 0.0
        %2164 = vmatpush1.xpose.msra.mxu0 0.0
        %2165 = vmatprep.subr.mxu0 0.0
        %2166 = vmatpush1.xpose.msra.mxu0 0.0
        %2167 = vmatprep.subr.mxu0 0.0
        %2168 = vmatpush1.xpose.msra.mxu0 0.0
        %2169 = vmatprep.subr.mxu0 0.0
        %2170 = vmatpush1.xpose.msra.mxu0 0.0
        %2171 = vmatprep.mubr.f32.mxu0 %v203
        %2172 = vmatmul.mubr.f32.gmra.mrb[0].mxu0 %v202
        %v2173 = vpop.f32.mrb[0].mxu0
        %v2174 = vadd.f32 %v2104, %v2173
        %v2175 = vpop.f32.mrb[0].mxu0
        %2176 = vdwg.mxu0
        %2177 = vmatprep.subr.mxu0 %v269
        %2178 = vmatpush1.xpose.msra.mxu0 %v268
        %2179 = vmatprep.subr.mxu0 %v333
        %2180 = vmatpush1.xpose.msra.mxu0 %v332
        %2181 = vmatprep.subr.mxu0 %v397
        %2182 = vmatpush1.xpose.msra.mxu0 %v396
        %2183 = vmatprep.subr.mxu0 %v461
        %2184 = vmatpush1.xpose.msra.mxu0 %v460
        %2185 = vmatprep.subr.mxu0 %v525
        %2186 = vmatpush1.xpose.msra.mxu0 %v524
        %2187 = vmatprep.subr.mxu0 %v589
        %2188 = vmatpush1.xpose.msra.mxu0 %v588
        %2189 = vmatprep.subr.mxu0 %v653
        %2190 = vmatpush1.xpose.msra.mxu0 %v652
        %2191 = vmatprep.subr.mxu0 %v717
        %2192 = vmatpush1.xpose.msra.mxu0 %v716
        %2193 = vmatprep.subr.mxu0 %v781
        %2194 = vmatpush1.xpose.msra.mxu0 %v780
        %2195 = vmatprep.subr.mxu0 %v845
        %2196 = vmatpush1.xpose.msra.mxu0 %v844
        %2197 = vmatprep.subr.mxu0 %v909
        %2198 = vmatpush1.xpose.msra.mxu0 %v908
        %2199 = vmatprep.subr.mxu0 %v973
        %2200 = vmatpush1.xpose.msra.mxu0 %v972
        %2201 = vmatprep.subr.mxu0 %v1037
        %2202 = vmatpush1.xpose.msra.mxu0 %v1036
        %2203 = vmatprep.subr.mxu0 %v1101
        %2204 = vmatpush1.xpose.msra.mxu0 %v1100
        %2205 = vmatprep.subr.mxu0 %v1165
        %2206 = vmatpush1.xpose.msra.mxu0 %v1164
        %2207 = vmatprep.subr.mxu0 %v1229
        %2208 = vmatpush1.xpose.msra.mxu0 %v1228
        %2209 = vmatprep.subr.mxu0 0.0
        %2210 = vmatpush1.xpose.msra.mxu0 0.0
        %2211 = vmatprep.subr.mxu0 0.0
        %2212 = vmatpush1.xpose.msra.mxu0 0.0
        %2213 = vmatprep.subr.mxu0 0.0
        %2214 = vmatpush1.xpose.msra.mxu0 0.0
        %2215 = vmatprep.subr.mxu0 0.0
        %2216 = vmatpush1.xpose.msra.mxu0 0.0
        %2217 = vmatprep.subr.mxu0 0.0
        %2218 = vmatpush1.xpose.msra.mxu0 0.0
        %2219 = vmatprep.subr.mxu0 0.0
        %2220 = vmatpush1.xpose.msra.mxu0 0.0
        %2221 = vmatprep.subr.mxu0 0.0
        %2222 = vmatpush1.xpose.msra.mxu0 0.0
        %2223 = vmatprep.subr.mxu0 0.0
        %2224 = vmatpush1.xpose.msra.mxu0 0.0
        %2225 = vmatprep.subr.mxu0 0.0
        %2226 = vmatpush1.xpose.msra.mxu0 0.0
        %2227 = vmatprep.subr.mxu0 0.0
        %2228 = vmatpush1.xpose.msra.mxu0 0.0
        %2229 = vmatprep.subr.mxu0 0.0
        %2230 = vmatpush1.xpose.msra.mxu0 0.0
        %2231 = vmatprep.subr.mxu0 0.0
        %2232 = vmatpush1.xpose.msra.mxu0 0.0
        %2233 = vmatprep.subr.mxu0 0.0
        %2234 = vmatpush1.xpose.msra.mxu0 0.0
        %2235 = vmatprep.subr.mxu0 0.0
        %2236 = vmatpush1.xpose.msra.mxu0 0.0
        %2237 = vmatprep.subr.mxu0 0.0
        %2238 = vmatpush1.xpose.msra.mxu0 0.0
        %2239 = vmatprep.subr.mxu0 0.0
        %2240 = vmatpush1.xpose.msra.mxu0 0.0
        %2241 = vmatprep.mubr.f32.mxu0 %v205
        %2242 = vmatmul.mubr.f32.gmra.mrb[0].mxu0 %v204
        %v2243 = vpop.f32.mrb[0].mxu0
        %v2244 = vadd.f32 %v2174, %v2243
        %v2245 = vpop.f32.mrb[0].mxu0
        %2246 = vdwg.mxu0
        %2247 = vmatprep.subr.mxu0 %v271
        %2248 = vmatpush1.xpose.msra.mxu0 %v270
        %2249 = vmatprep.subr.mxu0 %v335
        %2250 = vmatpush1.xpose.msra.mxu0 %v334
        %2251 = vmatprep.subr.mxu0 %v399
        %2252 = vmatpush1.xpose.msra.mxu0 %v398
        %2253 = vmatprep.subr.mxu0 %v463
        %2254 = vmatpush1.xpose.msra.mxu0 %v462
        %2255 = vmatprep.subr.mxu0 %v527
        %2256 = vmatpush1.xpose.msra.mxu0 %v526
        %2257 = vmatprep.subr.mxu0 %v591
        %2258 = vmatpush1.xpose.msra.mxu0 %v590
        %2259 = vmatprep.subr.mxu0 %v655
        %2260 = vmatpush1.xpose.msra.mxu0 %v654
        %2261 = vmatprep.subr.mxu0 %v719
        %2262 = vmatpush1.xpose.msra.mxu0 %v718
        %2263 = vmatprep.subr.mxu0 %v783
        %2264 = vmatpush1.xpose.msra.mxu0 %v782
        %2265 = vmatprep.subr.mxu0 %v847
        %2266 = vmatpush1.xpose.msra.mxu0 %v846
        %2267 = vmatprep.subr.mxu0 %v911
        %2268 = vmatpush1.xpose.msra.mxu0 %v910
        %2269 = vmatprep.subr.mxu0 %v975
        %2270 = vmatpush1.xpose.msra.mxu0 %v974
        %2271 = vmatprep.subr.mxu0 %v1039
        %2272 = vmatpush1.xpose.msra.mxu0 %v1038
        %2273 = vmatprep.subr.mxu0 %v1103
        %2274 = vmatpush1.xpose.msra.mxu0 %v1102
        %2275 = vmatprep.subr.mxu0 %v1167
        %2276 = vmatpush1.xpose.msra.mxu0 %v1166
        %2277 = vmatprep.subr.mxu0 %v1231
        %2278 = vmatpush1.xpose.msra.mxu0 %v1230
        %2279 = vmatprep.subr.mxu0 0.0
        %2280 = vmatpush1.xpose.msra.mxu0 0.0
        %2281 = vmatprep.subr.mxu0 0.0
        %2282 = vmatpush1.xpose.msra.mxu0 0.0
        %2283 = vmatprep.subr.mxu0 0.0
        %2284 = vmatpush1.xpose.msra.mxu0 0.0
        %2285 = vmatprep.subr.mxu0 0.0
        %2286 = vmatpush1.xpose.msra.mxu0 0.0
        %2287 = vmatprep.subr.mxu0 0.0
        %2288 = vmatpush1.xpose.msra.mxu0 0.0
        %2289 = vmatprep.subr.mxu0 0.0
        %2290 = vmatpush1.xpose.msra.mxu0 0.0
        %2291 = vmatprep.subr.mxu0 0.0
        %2292 = vmatpush1.xpose.msra.mxu0 0.0
        %2293 = vmatprep.subr.mxu0 0.0
        %2294 = vmatpush1.xpose.msra.mxu0 0.0
        %2295 = vmatprep.subr.mxu0 0.0
        %2296 = vmatpush1.xpose.msra.mxu0 0.0
        %2297 = vmatprep.subr.mxu0 0.0
        %2298 = vmatpush1.xpose.msra.mxu0 0.0
        %2299 = vmatprep.subr.mxu0 0.0
        %2300 = vmatpush1.xpose.msra.mxu0 0.0
        %2301 = vmatprep.subr.mxu0 0.0
        %2302 = vmatpush1.xpose.msra.mxu0 0.0
        %2303 = vmatprep.subr.mxu0 0.0
        %2304 = vmatpush1.xpose.msra.mxu0 0.0
        %2305 = vmatprep.subr.mxu0 0.0
        %2306 = vmatpush1.xpose.msra.mxu0 0.0
        %2307 = vmatprep.subr.mxu0 0.0
        %2308 = vmatpush1.xpose.msra.mxu0 0.0
        %2309 = vmatprep.subr.mxu0 0.0
        %2310 = vmatpush1.xpose.msra.mxu0 0.0
        %2311 = vmatprep.mubr.f32.mxu0 %v207
        %2312 = vmatmul.mubr.f32.gmra.mrb[0].mxu0 %v206
        %v2313 = vpop.f32.mrb[0].mxu0
        %v2314 = vadd.f32 %v2244, %v2313
        %v2315 = vpop.f32.mrb[0].mxu0
        %2316 = vdwg.mxu0
        %2317 = vmatprep.subr.mxu0 %v273
        %2318 = vmatpush1.xpose.msra.mxu0 %v272
        %2319 = vmatprep.subr.mxu0 %v337
        %2320 = vmatpush1.xpose.msra.mxu0 %v336
        %2321 = vmatprep.subr.mxu0 %v401
        %2322 = vmatpush1.xpose.msra.mxu0 %v400
        %2323 = vmatprep.subr.mxu0 %v465
        %2324 = vmatpush1.xpose.msra.mxu0 %v464
        %2325 = vmatprep.subr.mxu0 %v529
        %2326 = vmatpush1.xpose.msra.mxu0 %v528
        %2327 = vmatprep.subr.mxu0 %v593
        %2328 = vmatpush1.xpose.msra.mxu0 %v592
        %2329 = vmatprep.subr.mxu0 %v657
        %2330 = vmatpush1.xpose.msra.mxu0 %v656
        %2331 = vmatprep.subr.mxu0 %v721
        %2332 = vmatpush1.xpose.msra.mxu0 %v720
        %2333 = vmatprep.subr.mxu0 %v785
        %2334 = vmatpush1.xpose.msra.mxu0 %v784
        %2335 = vmatprep.subr.mxu0 %v849
        %2336 = vmatpush1.xpose.msra.mxu0 %v848
        %2337 = vmatprep.subr.mxu0 %v913
        %2338 = vmatpush1.xpose.msra.mxu0 %v912
        %2339 = vmatprep.subr.mxu0 %v977
        %2340 = vmatpush1.xpose.msra.mxu0 %v976
        %2341 = vmatprep.subr.mxu0 %v1041
        %2342 = vmatpush1.xpose.msra.mxu0 %v1040
        %2343 = vmatprep.subr.mxu0 %v1105
        %2344 = vmatpush1.xpose.msra.mxu0 %v1104
        %2345 = vmatprep.subr.mxu0 %v1169
        %2346 = vmatpush1.xpose.msra.mxu0 %v1168
        %2347 = vmatprep.subr.mxu0 %v1233
        %2348 = vmatpush1.xpose.msra.mxu0 %v1232
        %2349 = vmatprep.subr.mxu0 0.0
        %2350 = vmatpush1.xpose.msra.mxu0 0.0
        %2351 = vmatprep.subr.mxu0 0.0
        %2352 = vmatpush1.xpose.msra.mxu0 0.0
        %2353 = vmatprep.subr.mxu0 0.0
        %2354 = vmatpush1.xpose.msra.mxu0 0.0
        %2355 = vmatprep.subr.mxu0 0.0
        %2356 = vmatpush1.xpose.msra.mxu0 0.0
        %2357 = vmatprep.subr.mxu0 0.0
        %2358 = vmatpush1.xpose.msra.mxu0 0.0
        %2359 = vmatprep.subr.mxu0 0.0
        %2360 = vmatpush1.xpose.msra.mxu0 0.0
        %2361 = vmatprep.subr.mxu0 0.0
        %2362 = vmatpush1.xpose.msra.mxu0 0.0
        %2363 = vmatprep.subr.mxu0 0.0
        %2364 = vmatpush1.xpose.msra.mxu0 0.0
        %2365 = vmatprep.subr.mxu0 0.0
        %2366 = vmatpush1.xpose.msra.mxu0 0.0
        %2367 = vmatprep.subr.mxu0 0.0
        %2368 = vmatpush1.xpose.msra.mxu0 0.0
        %2369 = vmatprep.subr.mxu0 0.0
        %2370 = vmatpush1.xpose.msra.mxu0 0.0
        %2371 = vmatprep.subr.mxu0 0.0
        %2372 = vmatpush1.xpose.msra.mxu0 0.0
        %2373 = vmatprep.subr.mxu0 0.0
        %2374 = vmatpush1.xpose.msra.mxu0 0.0
        %2375 = vmatprep.subr.mxu0 0.0
        %2376 = vmatpush1.xpose.msra.mxu0 0.0
        %2377 = vmatprep.subr.mxu0 0.0
        %2378 = vmatpush1.xpose.msra.mxu0 0.0
        %2379 = vmatprep.subr.mxu0 0.0
        %2380 = vmatpush1.xpose.msra.mxu0 0.0
        %2381 = vmatprep.mubr.f32.mxu0 %v209
        %2382 = vmatmul.mubr.f32.gmra.mrb[0].mxu0 %v208
        %v2383 = vpop.f32.mrb[0].mxu0
        %v2384 = vadd.f32 %v2314, %v2383
        %v2385 = vpop.f32.mrb[0].mxu0
        %2386 = vdwg.mxu0
        %2387 = vmatprep.subr.mxu0 %v275
        %2388 = vmatpush1.xpose.msra.mxu0 %v274
        %2389 = vmatprep.subr.mxu0 %v339
        %2390 = vmatpush1.xpose.msra.mxu0 %v338
        %2391 = vmatprep.subr.mxu0 %v403
        %2392 = vmatpush1.xpose.msra.mxu0 %v402
        %2393 = vmatprep.subr.mxu0 %v467
        %2394 = vmatpush1.xpose.msra.mxu0 %v466
        %2395 = vmatprep.subr.mxu0 %v531
        %2396 = vmatpush1.xpose.msra.mxu0 %v530
        %2397 = vmatprep.subr.mxu0 %v595
        %2398 = vmatpush1.xpose.msra.mxu0 %v594
        %2399 = vmatprep.subr.mxu0 %v659
        %2400 = vmatpush1.xpose.msra.mxu0 %v658
        %2401 = vmatprep.subr.mxu0 %v723
        %2402 = vmatpush1.xpose.msra.mxu0 %v722
        %2403 = vmatprep.subr.mxu0 %v787
        %2404 = vmatpush1.xpose.msra.mxu0 %v786
        %2405 = vmatprep.subr.mxu0 %v851
        %2406 = vmatpush1.xpose.msra.mxu0 %v850
        %2407 = vmatprep.subr.mxu0 %v915
        %2408 = vmatpush1.xpose.msra.mxu0 %v914
        %2409 = vmatprep.subr.mxu0 %v979
        %2410 = vmatpush1.xpose.msra.mxu0 %v978
        %2411 = vmatprep.subr.mxu0 %v1043
        %2412 = vmatpush1.xpose.msra.mxu0 %v1042
        %2413 = vmatprep.subr.mxu0 %v1107
        %2414 = vmatpush1.xpose.msra.mxu0 %v1106
        %2415 = vmatprep.subr.mxu0 %v1171
        %2416 = vmatpush1.xpose.msra.mxu0 %v1170
        %2417 = vmatprep.subr.mxu0 %v1235
        %2418 = vmatpush1.xpose.msra.mxu0 %v1234
        %2419 = vmatprep.subr.mxu0 0.0
        %2420 = vmatpush1.xpose.msra.mxu0 0.0
        %2421 = vmatprep.subr.mxu0 0.0
        %2422 = vmatpush1.xpose.msra.mxu0 0.0
        %2423 = vmatprep.subr.mxu0 0.0
        %2424 = vmatpush1.xpose.msra.mxu0 0.0
        %2425 = vmatprep.subr.mxu0 0.0
        %2426 = vmatpush1.xpose.msra.mxu0 0.0
        %2427 = vmatprep.subr.mxu0 0.0
        %2428 = vmatpush1.xpose.msra.mxu0 0.0
        %2429 = vmatprep.subr.mxu0 0.0
        %2430 = vmatpush1.xpose.msra.mxu0 0.0
        %2431 = vmatprep.subr.mxu0 0.0
        %2432 = vmatpush1.xpose.msra.mxu0 0.0
        %2433 = vmatprep.subr.mxu0 0.0
        %2434 = vmatpush1.xpose.msra.mxu0 0.0
        %2435 = vmatprep.subr.mxu0 0.0
        %2436 = vmatpush1.xpose.msra.mxu0 0.0
        %2437 = vmatprep.subr.mxu0 0.0
        %2438 = vmatpush1.xpose.msra.mxu0 0.0
        %2439 = vmatprep.subr.mxu0 0.0
        %2440 = vmatpush1.xpose.msra.mxu0 0.0
        %2441 = vmatprep.subr.mxu0 0.0
        %2442 = vmatpush1.xpose.msra.mxu0 0.0
        %2443 = vmatprep.subr.mxu0 0.0
        %2444 = vmatpush1.xpose.msra.mxu0 0.0
        %2445 = vmatprep.subr.mxu0 0.0
        %2446 = vmatpush1.xpose.msra.mxu0 0.0
        %2447 = vmatprep.subr.mxu0 0.0
        %2448 = vmatpush1.xpose.msra.mxu0 0.0
        %2449 = vmatprep.subr.mxu0 0.0
        %2450 = vmatpush1.xpose.msra.mxu0 0.0
        %2451 = vmatprep.mubr.f32.mxu0 %v211
        %2452 = vmatmul.mubr.f32.gmra.mrb[0].mxu0 %v210
        %v2453 = vpop.f32.mrb[0].mxu0
        %v2454 = vadd.f32 %v2384, %v2453
        %v2455 = vpop.f32.mrb[0].mxu0
        %2456 = vdwg.mxu0
        %2457 = vmatprep.subr.mxu0 %v277
        %2458 = vmatpush1.xpose.msra.mxu0 %v276
        %2459 = vmatprep.subr.mxu0 %v341
        %2460 = vmatpush1.xpose.msra.mxu0 %v340
        %2461 = vmatprep.subr.mxu0 %v405
        %2462 = vmatpush1.xpose.msra.mxu0 %v404
        %2463 = vmatprep.subr.mxu0 %v469
        %2464 = vmatpush1.xpose.msra.mxu0 %v468
        %2465 = vmatprep.subr.mxu0 %v533
        %2466 = vmatpush1.xpose.msra.mxu0 %v532
        %2467 = vmatprep.subr.mxu0 %v597
        %2468 = vmatpush1.xpose.msra.mxu0 %v596
        %2469 = vmatprep.subr.mxu0 %v661
        %2470 = vmatpush1.xpose.msra.mxu0 %v660
        %2471 = vmatprep.subr.mxu0 %v725
        %2472 = vmatpush1.xpose.msra.mxu0 %v724
        %2473 = vmatprep.subr.mxu0 %v789
        %2474 = vmatpush1.xpose.msra.mxu0 %v788
        %2475 = vmatprep.subr.mxu0 %v853
        %2476 = vmatpush1.xpose.msra.mxu0 %v852
        %2477 = vmatprep.subr.mxu0 %v917
        %2478 = vmatpush1.xpose.msra.mxu0 %v916
        %2479 = vmatprep.subr.mxu0 %v981
        %2480 = vmatpush1.xpose.msra.mxu0 %v980
        %2481 = vmatprep.subr.mxu0 %v1045
        %2482 = vmatpush1.xpose.msra.mxu0 %v1044
        %2483 = vmatprep.subr.mxu0 %v1109
        %2484 = vmatpush1.xpose.msra.mxu0 %v1108
        %2485 = vmatprep.subr.mxu0 %v1173
        %2486 = vmatpush1.xpose.msra.mxu0 %v1172
        %2487 = vmatprep.subr.mxu0 %v1237
        %2488 = vmatpush1.xpose.msra.mxu0 %v1236
        %2489 = vmatprep.subr.mxu0 0.0
        %2490 = vmatpush1.xpose.msra.mxu0 0.0
        %2491 = vmatprep.subr.mxu0 0.0
        %2492 = vmatpush1.xpose.msra.mxu0 0.0
        %2493 = vmatprep.subr.mxu0 0.0
        %2494 = vmatpush1.xpose.msra.mxu0 0.0
        %2495 = vmatprep.subr.mxu0 0.0
        %2496 = vmatpush1.xpose.msra.mxu0 0.0
        %2497 = vmatprep.subr.mxu0 0.0
        %2498 = vmatpush1.xpose.msra.mxu0 0.0
        %2499 = vmatprep.subr.mxu0 0.0
        %2500 = vmatpush1.xpose.msra.mxu0 0.0
        %2501 = vmatprep.subr.mxu0 0.0
        %2502 = vmatpush1.xpose.msra.mxu0 0.0
        %2503 = vmatprep.subr.mxu0 0.0
        %2504 = vmatpush1.xpose.msra.mxu0 0.0
        %2505 = vmatprep.subr.mxu0 0.0
        %2506 = vmatpush1.xpose.msra.mxu0 0.0
        %2507 = vmatprep.subr.mxu0 0.0
        %2508 = vmatpush1.xpose.msra.mxu0 0.0
        %2509 = vmatprep.subr.mxu0 0.0
        %2510 = vmatpush1.xpose.msra.mxu0 0.0
        %2511 = vmatprep.subr.mxu0 0.0
        %2512 = vmatpush1.xpose.msra.mxu0 0.0
        %2513 = vmatprep.subr.mxu0 0.0
        %2514 = vmatpush1.xpose.msra.mxu0 0.0
        %2515 = vmatprep.subr.mxu0 0.0
        %2516 = vmatpush1.xpose.msra.mxu0 0.0
        %2517 = vmatprep.subr.mxu0 0.0
        %2518 = vmatpush1.xpose.msra.mxu0 0.0
        %2519 = vmatprep.subr.mxu0 0.0
        %2520 = vmatpush1.xpose.msra.mxu0 0.0
        %2521 = vmatprep.mubr.f32.mxu0 %v213
        %2522 = vmatmul.mubr.f32.gmra.mrb[0].mxu0 %v212
        %v2523 = vpop.f32.mrb[0].mxu0
        %v2524 = vadd.f32 %v2454, %v2523
        %v2525 = vpop.f32.mrb[0].mxu0
        %2526 = vdwg.mxu0
        %2527 = vmatprep.subr.mxu0 %v279
        %2528 = vmatpush1.xpose.msra.mxu0 %v278
        %2529 = vmatprep.subr.mxu0 %v343
        %2530 = vmatpush1.xpose.msra.mxu0 %v342
        %2531 = vmatprep.subr.mxu0 %v407
        %2532 = vmatpush1.xpose.msra.mxu0 %v406
        %2533 = vmatprep.subr.mxu0 %v471
        %2534 = vmatpush1.xpose.msra.mxu0 %v470
        %2535 = vmatprep.subr.mxu0 %v535
        %2536 = vmatpush1.xpose.msra.mxu0 %v534
        %2537 = vmatprep.subr.mxu0 %v599
        %2538 = vmatpush1.xpose.msra.mxu0 %v598
        %2539 = vmatprep.subr.mxu0 %v663
        %2540 = vmatpush1.xpose.msra.mxu0 %v662
        %2541 = vmatprep.subr.mxu0 %v727
        %2542 = vmatpush1.xpose.msra.mxu0 %v726
        %2543 = vmatprep.subr.mxu0 %v791
        %2544 = vmatpush1.xpose.msra.mxu0 %v790
        %2545 = vmatprep.subr.mxu0 %v855
        %2546 = vmatpush1.xpose.msra.mxu0 %v854
        %2547 = vmatprep.subr.mxu0 %v919
        %2548 = vmatpush1.xpose.msra.mxu0 %v918
        %2549 = vmatprep.subr.mxu0 %v983
        %2550 = vmatpush1.xpose.msra.mxu0 %v982
        %2551 = vmatprep.subr.mxu0 %v1047
        %2552 = vmatpush1.xpose.msra.mxu0 %v1046
        %2553 = vmatprep.subr.mxu0 %v1111
        %2554 = vmatpush1.xpose.msra.mxu0 %v1110
        %2555 = vmatprep.subr.mxu0 %v1175
        %2556 = vmatpush1.xpose.msra.mxu0 %v1174
        %2557 = vmatprep.subr.mxu0 %v1239
        %2558 = vmatpush1.xpose.msra.mxu0 %v1238
        %2559 = vmatprep.subr.mxu0 0.0
        %2560 = vmatpush1.xpose.msra.mxu0 0.0
        %2561 = vmatprep.subr.mxu0 0.0
        %2562 = vmatpush1.xpose.msra.mxu0 0.0
        %2563 = vmatprep.subr.mxu0 0.0
        %2564 = vmatpush1.xpose.msra.mxu0 0.0
        %2565 = vmatprep.subr.mxu0 0.0
        %2566 = vmatpush1.xpose.msra.mxu0 0.0
        %2567 = vmatprep.subr.mxu0 0.0
        %2568 = vmatpush1.xpose.msra.mxu0 0.0
        %2569 = vmatprep.subr.mxu0 0.0
        %2570 = vmatpush1.xpose.msra.mxu0 0.0
        %2571 = vmatprep.subr.mxu0 0.0
        %2572 = vmatpush1.xpose.msra.mxu0 0.0
        %2573 = vmatprep.subr.mxu0 0.0
        %2574 = vmatpush1.xpose.msra.mxu0 0.0
        %2575 = vmatprep.subr.mxu0 0.0
        %2576 = vmatpush1.xpose.msra.mxu0 0.0
        %2577 = vmatprep.subr.mxu0 0.0
        %2578 = vmatpush1.xpose.msra.mxu0 0.0
        %2579 = vmatprep.subr.mxu0 0.0
        %2580 = vmatpush1.xpose.msra.mxu0 0.0
        %2581 = vmatprep.subr.mxu0 0.0
        %2582 = vmatpush1.xpose.msra.mxu0 0.0
        %2583 = vmatprep.subr.mxu0 0.0
        %2584 = vmatpush1.xpose.msra.mxu0 0.0
        %2585 = vmatprep.subr.mxu0 0.0
        %2586 = vmatpush1.xpose.msra.mxu0 0.0
        %2587 = vmatprep.subr.mxu0 0.0
        %2588 = vmatpush1.xpose.msra.mxu0 0.0
        %2589 = vmatprep.subr.mxu0 0.0
        %2590 = vmatpush1.xpose.msra.mxu0 0.0
        %2591 = vmatprep.mubr.f32.mxu0 %v215
        %2592 = vmatmul.mubr.f32.gmra.mrb[0].mxu0 %v214
        %v2593 = vpop.f32.mrb[0].mxu0
        %v2594 = vadd.f32 %v2524, %v2593
        %v2595 = vpop.f32.mrb[0].mxu0
        %2596 = vdwg.mxu0
        %2597 = vmatprep.subr.mxu0 %v281
        %2598 = vmatpush1.xpose.msra.mxu0 %v280
        %2599 = vmatprep.subr.mxu0 %v345
        %2600 = vmatpush1.xpose.msra.mxu0 %v344
        %2601 = vmatprep.subr.mxu0 %v409
        %2602 = vmatpush1.xpose.msra.mxu0 %v408
        %2603 = vmatprep.subr.mxu0 %v473
        %2604 = vmatpush1.xpose.msra.mxu0 %v472
        %2605 = vmatprep.subr.mxu0 %v537
        %2606 = vmatpush1.xpose.msra.mxu0 %v536
        %2607 = vmatprep.subr.mxu0 %v601
        %2608 = vmatpush1.xpose.msra.mxu0 %v600
        %2609 = vmatprep.subr.mxu0 %v665
        %2610 = vmatpush1.xpose.msra.mxu0 %v664
        %2611 = vmatprep.subr.mxu0 %v729
        %2612 = vmatpush1.xpose.msra.mxu0 %v728
        %2613 = vmatprep.subr.mxu0 %v793
        %2614 = vmatpush1.xpose.msra.mxu0 %v792
        %2615 = vmatprep.subr.mxu0 %v857
        %2616 = vmatpush1.xpose.msra.mxu0 %v856
        %2617 = vmatprep.subr.mxu0 %v921
        %2618 = vmatpush1.xpose.msra.mxu0 %v920
        %2619 = vmatprep.subr.mxu0 %v985
        %2620 = vmatpush1.xpose.msra.mxu0 %v984
        %2621 = vmatprep.subr.mxu0 %v1049
        %2622 = vmatpush1.xpose.msra.mxu0 %v1048
        %2623 = vmatprep.subr.mxu0 %v1113
        %2624 = vmatpush1.xpose.msra.mxu0 %v1112
        %2625 = vmatprep.subr.mxu0 %v1177
        %2626 = vmatpush1.xpose.msra.mxu0 %v1176
        %2627 = vmatprep.subr.mxu0 %v1241
        %2628 = vmatpush1.xpose.msra.mxu0 %v1240
        %2629 = vmatprep.subr.mxu0 0.0
        %2630 = vmatpush1.xpose.msra.mxu0 0.0
        %2631 = vmatprep.subr.mxu0 0.0
        %2632 = vmatpush1.xpose.msra.mxu0 0.0
        %2633 = vmatprep.subr.mxu0 0.0
        %2634 = vmatpush1.xpose.msra.mxu0 0.0
        %2635 = vmatprep.subr.mxu0 0.0
        %2636 = vmatpush1.xpose.msra.mxu0 0.0
        %2637 = vmatprep.subr.mxu0 0.0
        %2638 = vmatpush1.xpose.msra.mxu0 0.0
        %2639 = vmatprep.subr.mxu0 0.0
        %2640 = vmatpush1.xpose.msra.mxu0 0.0
        %2641 = vmatprep.subr.mxu0 0.0
        %2642 = vmatpush1.xpose.msra.mxu0 0.0
        %2643 = vmatprep.subr.mxu0 0.0
        %2644 = vmatpush1.xpose.msra.mxu0 0.0
        %2645 = vmatprep.subr.mxu0 0.0
        %2646 = vmatpush1.xpose.msra.mxu0 0.0
        %2647 = vmatprep.subr.mxu0 0.0
        %2648 = vmatpush1.xpose.msra.mxu0 0.0
        %2649 = vmatprep.subr.mxu0 0.0
        %2650 = vmatpush1.xpose.msra.mxu0 0.0
        %2651 = vmatprep.subr.mxu0 0.0
        %2652 = vmatpush1.xpose.msra.mxu0 0.0
        %2653 = vmatprep.subr.mxu0 0.0
        %2654 = vmatpush1.xpose.msra.mxu0 0.0
        %2655 = vmatprep.subr.mxu0 0.0
        %2656 = vmatpush1.xpose.msra.mxu0 0.0
        %2657 = vmatprep.subr.mxu0 0.0
        %2658 = vmatpush1.xpose.msra.mxu0 0.0
        %2659 = vmatprep.subr.mxu0 0.0
        %2660 = vmatpush1.xpose.msra.mxu0 0.0
        %2661 = vmatprep.mubr.f32.mxu0 %v217
        %2662 = vmatmul.mubr.f32.gmra.mrb[0].mxu0 %v216
        %v2663 = vpop.f32.mrb[0].mxu0
        %v2664 = vadd.f32 %v2594, %v2663
        %v2665 = vpop.f32.mrb[0].mxu0
        %2666 = vdwg.mxu0
        %2667 = vmatprep.subr.mxu0 %v283
        %2668 = vmatpush1.xpose.msra.mxu0 %v282
        %2669 = vmatprep.subr.mxu0 %v347
        %2670 = vmatpush1.xpose.msra.mxu0 %v346
        %2671 = vmatprep.subr.mxu0 %v411
        %2672 = vmatpush1.xpose.msra.mxu0 %v410
        %2673 = vmatprep.subr.mxu0 %v475
        %2674 = vmatpush1.xpose.msra.mxu0 %v474
        %2675 = vmatprep.subr.mxu0 %v539
        %2676 = vmatpush1.xpose.msra.mxu0 %v538
        %2677 = vmatprep.subr.mxu0 %v603
        %2678 = vmatpush1.xpose.msra.mxu0 %v602
        %2679 = vmatprep.subr.mxu0 %v667
        %2680 = vmatpush1.xpose.msra.mxu0 %v666
        %2681 = vmatprep.subr.mxu0 %v731
        %2682 = vmatpush1.xpose.msra.mxu0 %v730
        %2683 = vmatprep.subr.mxu0 %v795
        %2684 = vmatpush1.xpose.msra.mxu0 %v794
        %2685 = vmatprep.subr.mxu0 %v859
        %2686 = vmatpush1.xpose.msra.mxu0 %v858
        %2687 = vmatprep.subr.mxu0 %v923
        %2688 = vmatpush1.xpose.msra.mxu0 %v922
        %2689 = vmatprep.subr.mxu0 %v987
        %2690 = vmatpush1.xpose.msra.mxu0 %v986
        %2691 = vmatprep.subr.mxu0 %v1051
        %2692 = vmatpush1.xpose.msra.mxu0 %v1050
        %2693 = vmatprep.subr.mxu0 %v1115
        %2694 = vmatpush1.xpose.msra.mxu0 %v1114
        %2695 = vmatprep.subr.mxu0 %v1179
        %2696 = vmatpush1.xpose.msra.mxu0 %v1178
        %2697 = vmatprep.subr.mxu0 %v1243
        %2698 = vmatpush1.xpose.msra.mxu0 %v1242
        %2699 = vmatprep.subr.mxu0 0.0
        %2700 = vmatpush1.xpose.msra.mxu0 0.0
        %2701 = vmatprep.subr.mxu0 0.0
        %2702 = vmatpush1.xpose.msra.mxu0 0.0
        %2703 = vmatprep.subr.mxu0 0.0
        %2704 = vmatpush1.xpose.msra.mxu0 0.0
        %2705 = vmatprep.subr.mxu0 0.0
        %2706 = vmatpush1.xpose.msra.mxu0 0.0
        %2707 = vmatprep.subr.mxu0 0.0
        %2708 = vmatpush1.xpose.msra.mxu0 0.0
        %2709 = vmatprep.subr.mxu0 0.0
        %2710 = vmatpush1.xpose.msra.mxu0 0.0
        %2711 = vmatprep.subr.mxu0 0.0
        %2712 = vmatpush1.xpose.msra.mxu0 0.0
        %2713 = vmatprep.subr.mxu0 0.0
        %2714 = vmatpush1.xpose.msra.mxu0 0.0
        %2715 = vmatprep.subr.mxu0 0.0
        %2716 = vmatpush1.xpose.msra.mxu0 0.0
        %2717 = vmatprep.subr.mxu0 0.0
        %2718 = vmatpush1.xpose.msra.mxu0 0.0
        %2719 = vmatprep.subr.mxu0 0.0
        %2720 = vmatpush1.xpose.msra.mxu0 0.0
        %2721 = vmatprep.subr.mxu0 0.0
        %2722 = vmatpush1.xpose.msra.mxu0 0.0
        %2723 = vmatprep.subr.mxu0 0.0
        %2724 = vmatpush1.xpose.msra.mxu0 0.0
        %2725 = vmatprep.subr.mxu0 0.0
        %2726 = vmatpush1.xpose.msra.mxu0 0.0
        %2727 = vmatprep.subr.mxu0 0.0
        %2728 = vmatpush1.xpose.msra.mxu0 0.0
        %2729 = vmatprep.subr.mxu0 0.0
        %2730 = vmatpush1.xpose.msra.mxu0 0.0
        %2731 = vmatprep.mubr.f32.mxu0 %v219
        %2732 = vmatmul.mubr.f32.gmra.mrb[0].mxu0 %v218
        %v2733 = vpop.f32.mrb[0].mxu0
        %v2734 = vadd.f32 %v2664, %v2733
        %v2735 = vpop.f32.mrb[0].mxu0
        %2736 = vdwg.mxu0
        %2737 = vmatprep.subr.mxu0 %v285
        %2738 = vmatpush1.xpose.msra.mxu0 %v284
        %2739 = vmatprep.subr.mxu0 %v349
        %2740 = vmatpush1.xpose.msra.mxu0 %v348
        %2741 = vmatprep.subr.mxu0 %v413
        %2742 = vmatpush1.xpose.msra.mxu0 %v412
        %2743 = vmatprep.subr.mxu0 %v477
        %2744 = vmatpush1.xpose.msra.mxu0 %v476
        %2745 = vmatprep.subr.mxu0 %v541
        %2746 = vmatpush1.xpose.msra.mxu0 %v540
        %2747 = vmatprep.subr.mxu0 %v605
        %2748 = vmatpush1.xpose.msra.mxu0 %v604
        %2749 = vmatprep.subr.mxu0 %v669
        %2750 = vmatpush1.xpose.msra.mxu0 %v668
        %2751 = vmatprep.subr.mxu0 %v733
        %2752 = vmatpush1.xpose.msra.mxu0 %v732
        %2753 = vmatprep.subr.mxu0 %v797
        %2754 = vmatpush1.xpose.msra.mxu0 %v796
        %2755 = vmatprep.subr.mxu0 %v861
        %2756 = vmatpush1.xpose.msra.mxu0 %v860
        %2757 = vmatprep.subr.mxu0 %v925
        %2758 = vmatpush1.xpose.msra.mxu0 %v924
        %2759 = vmatprep.subr.mxu0 %v989
        %2760 = vmatpush1.xpose.msra.mxu0 %v988
        %2761 = vmatprep.subr.mxu0 %v1053
        %2762 = vmatpush1.xpose.msra.mxu0 %v1052
        %2763 = vmatprep.subr.mxu0 %v1117
        %2764 = vmatpush1.xpose.msra.mxu0 %v1116
        %2765 = vmatprep.subr.mxu0 %v1181
        %2766 = vmatpush1.xpose.msra.mxu0 %v1180
        %2767 = vmatprep.subr.mxu0 %v1245
        %2768 = vmatpush1.xpose.msra.mxu0 %v1244
        %2769 = vmatprep.subr.mxu0 0.0
        %2770 = vmatpush1.xpose.msra.mxu0 0.0
        %2771 = vmatprep.subr.mxu0 0.0
        %2772 = vmatpush1.xpose.msra.mxu0 0.0
        %2773 = vmatprep.subr.mxu0 0.0
        %2774 = vmatpush1.xpose.msra.mxu0 0.0
        %2775 = vmatprep.subr.mxu0 0.0
        %2776 = vmatpush1.xpose.msra.mxu0 0.0
        %2777 = vmatprep.subr.mxu0 0.0
        %2778 = vmatpush1.xpose.msra.mxu0 0.0
        %2779 = vmatprep.subr.mxu0 0.0
        %2780 = vmatpush1.xpose.msra.mxu0 0.0
        %2781 = vmatprep.subr.mxu0 0.0
        %2782 = vmatpush1.xpose.msra.mxu0 0.0
        %2783 = vmatprep.subr.mxu0 0.0
        %2784 = vmatpush1.xpose.msra.mxu0 0.0
        %2785 = vmatprep.subr.mxu0 0.0
        %2786 = vmatpush1.xpose.msra.mxu0 0.0
        %2787 = vmatprep.subr.mxu0 0.0
        %2788 = vmatpush1.xpose.msra.mxu0 0.0
        %2789 = vmatprep.subr.mxu0 0.0
        %2790 = vmatpush1.xpose.msra.mxu0 0.0
        %2791 = vmatprep.subr.mxu0 0.0
        %2792 = vmatpush1.xpose.msra.mxu0 0.0
        %2793 = vmatprep.subr.mxu0 0.0
        %2794 = vmatpush1.xpose.msra.mxu0 0.0
        %2795 = vmatprep.subr.mxu0 0.0
        %2796 = vmatpush1.xpose.msra.mxu0 0.0
        %2797 = vmatprep.subr.mxu0 0.0
        %2798 = vmatpush1.xpose.msra.mxu0 0.0
        %2799 = vmatprep.subr.mxu0 0.0
        %2800 = vmatpush1.xpose.msra.mxu0 0.0
        %2801 = vmatprep.mubr.f32.mxu0 %v221
        %2802 = vmatmul.mubr.f32.gmra.mrb[0].mxu0 %v220
        %v2803 = vpop.f32.mrb[0].mxu0
        %v2804 = vadd.f32 %v2734, %v2803
        %v2805 = vpop.f32.mrb[0].mxu0
        %2806 = vdwg.mxu0
        %2807 = vmatprep.subr.mxu0 %v287
        %2808 = vmatpush1.xpose.msra.mxu0 %v286
        %2809 = vmatprep.subr.mxu0 %v351
        %2810 = vmatpush1.xpose.msra.mxu0 %v350
        %2811 = vmatprep.subr.mxu0 %v415
        %2812 = vmatpush1.xpose.msra.mxu0 %v414
        %2813 = vmatprep.subr.mxu0 %v479
        %2814 = vmatpush1.xpose.msra.mxu0 %v478
        %2815 = vmatprep.subr.mxu0 %v543
        %2816 = vmatpush1.xpose.msra.mxu0 %v542
        %2817 = vmatprep.subr.mxu0 %v607
        %2818 = vmatpush1.xpose.msra.mxu0 %v606
        %2819 = vmatprep.subr.mxu0 %v671
        %2820 = vmatpush1.xpose.msra.mxu0 %v670
        %2821 = vmatprep.subr.mxu0 %v735
        %2822 = vmatpush1.xpose.msra.mxu0 %v734
        %2823 = vmatprep.subr.mxu0 %v799
        %2824 = vmatpush1.xpose.msra.mxu0 %v798
        %2825 = vmatprep.subr.mxu0 %v863
        %2826 = vmatpush1.xpose.msra.mxu0 %v862
        %2827 = vmatprep.subr.mxu0 %v927
        %2828 = vmatpush1.xpose.msra.mxu0 %v926
        %2829 = vmatprep.subr.mxu0 %v991
        %2830 = vmatpush1.xpose.msra.mxu0 %v990
        %2831 = vmatprep.subr.mxu0 %v1055
        %2832 = vmatpush1.xpose.msra.mxu0 %v1054
        %2833 = vmatprep.subr.mxu0 %v1119
        %2834 = vmatpush1.xpose.msra.mxu0 %v1118
        %2835 = vmatprep.subr.mxu0 %v1183
        %2836 = vmatpush1.xpose.msra.mxu0 %v1182
        %2837 = vmatprep.subr.mxu0 %v1247
        %2838 = vmatpush1.xpose.msra.mxu0 %v1246
        %2839 = vmatprep.subr.mxu0 0.0
        %2840 = vmatpush1.xpose.msra.mxu0 0.0
        %2841 = vmatprep.subr.mxu0 0.0
        %2842 = vmatpush1.xpose.msra.mxu0 0.0
        %2843 = vmatprep.subr.mxu0 0.0
        %2844 = vmatpush1.xpose.msra.mxu0 0.0
        %2845 = vmatprep.subr.mxu0 0.0
        %2846 = vmatpush1.xpose.msra.mxu0 0.0
        %2847 = vmatprep.subr.mxu0 0.0
        %2848 = vmatpush1.xpose.msra.mxu0 0.0
        %2849 = vmatprep.subr.mxu0 0.0
        %2850 = vmatpush1.xpose.msra.mxu0 0.0
        %2851 = vmatprep.subr.mxu0 0.0
        %2852 = vmatpush1.xpose.msra.mxu0 0.0
        %2853 = vmatprep.subr.mxu0 0.0
        %2854 = vmatpush1.xpose.msra.mxu0 0.0
        %2855 = vmatprep.subr.mxu0 0.0
        %2856 = vmatpush1.xpose.msra.mxu0 0.0
        %2857 = vmatprep.subr.mxu0 0.0
        %2858 = vmatpush1.xpose.msra.mxu0 0.0
        %2859 = vmatprep.subr.mxu0 0.0
        %2860 = vmatpush1.xpose.msra.mxu0 0.0
        %2861 = vmatprep.subr.mxu0 0.0
        %2862 = vmatpush1.xpose.msra.mxu0 0.0
        %2863 = vmatprep.subr.mxu0 0.0
        %2864 = vmatpush1.xpose.msra.mxu0 0.0
        %2865 = vmatprep.subr.mxu0 0.0
        %2866 = vmatpush1.xpose.msra.mxu0 0.0
        %2867 = vmatprep.subr.mxu0 0.0
        %2868 = vmatpush1.xpose.msra.mxu0 0.0
        %2869 = vmatprep.subr.mxu0 0.0
        %2870 = vmatpush1.xpose.msra.mxu0 0.0
        %2871 = vmatprep.mubr.f32.mxu0 %v223
        %2872 = vmatmul.mubr.f32.gmra.mrb[0].mxu0 %v222
        %v2873 = vpop.f32.mrb[0].mxu0
        %v2874 = vadd.f32 %v2804, %v2873
        %v2875 = vpop.f32.mrb[0].mxu0
        %2876 = vdwg.mxu0
        %2877 = vmatprep.subr.mxu0 %v289
        %2878 = vmatpush1.xpose.msra.mxu0 %v288
        %2879 = vmatprep.subr.mxu0 %v353
        %2880 = vmatpush1.xpose.msra.mxu0 %v352
        %2881 = vmatprep.subr.mxu0 %v417
        %2882 = vmatpush1.xpose.msra.mxu0 %v416
        %2883 = vmatprep.subr.mxu0 %v481
        %2884 = vmatpush1.xpose.msra.mxu0 %v480
        %2885 = vmatprep.subr.mxu0 %v545
        %2886 = vmatpush1.xpose.msra.mxu0 %v544
        %2887 = vmatprep.subr.mxu0 %v609
        %2888 = vmatpush1.xpose.msra.mxu0 %v608
        %2889 = vmatprep.subr.mxu0 %v673
        %2890 = vmatpush1.xpose.msra.mxu0 %v672
        %2891 = vmatprep.subr.mxu0 %v737
        %2892 = vmatpush1.xpose.msra.mxu0 %v736
        %2893 = vmatprep.subr.mxu0 %v801
        %2894 = vmatpush1.xpose.msra.mxu0 %v800
        %2895 = vmatprep.subr.mxu0 %v865
        %2896 = vmatpush1.xpose.msra.mxu0 %v864
        %2897 = vmatprep.subr.mxu0 %v929
        %2898 = vmatpush1.xpose.msra.mxu0 %v928
        %2899 = vmatprep.subr.mxu0 %v993
        %2900 = vmatpush1.xpose.msra.mxu0 %v992
        %2901 = vmatprep.subr.mxu0 %v1057
        %2902 = vmatpush1.xpose.msra.mxu0 %v1056
        %2903 = vmatprep.subr.mxu0 %v1121
        %2904 = vmatpush1.xpose.msra.mxu0 %v1120
        %2905 = vmatprep.subr.mxu0 %v1185
        %2906 = vmatpush1.xpose.msra.mxu0 %v1184
        %2907 = vmatprep.subr.mxu0 %v1249
        %2908 = vmatpush1.xpose.msra.mxu0 %v1248
        %2909 = vmatprep.subr.mxu0 0.0
        %2910 = vmatpush1.xpose.msra.mxu0 0.0
        %2911 = vmatprep.subr.mxu0 0.0
        %2912 = vmatpush1.xpose.msra.mxu0 0.0
        %2913 = vmatprep.subr.mxu0 0.0
        %2914 = vmatpush1.xpose.msra.mxu0 0.0
        %2915 = vmatprep.subr.mxu0 0.0
        %2916 = vmatpush1.xpose.msra.mxu0 0.0
        %2917 = vmatprep.subr.mxu0 0.0
        %2918 = vmatpush1.xpose.msra.mxu0 0.0
        %2919 = vmatprep.subr.mxu0 0.0
        %2920 = vmatpush1.xpose.msra.mxu0 0.0
        %2921 = vmatprep.subr.mxu0 0.0
        %2922 = vmatpush1.xpose.msra.mxu0 0.0
        %2923 = vmatprep.subr.mxu0 0.0
        %2924 = vmatpush1.xpose.msra.mxu0 0.0
        %2925 = vmatprep.subr.mxu0 0.0
        %2926 = vmatpush1.xpose.msra.mxu0 0.0
        %2927 = vmatprep.subr.mxu0 0.0
        %2928 = vmatpush1.xpose.msra.mxu0 0.0
        %2929 = vmatprep.subr.mxu0 0.0
        %2930 = vmatpush1.xpose.msra.mxu0 0.0
        %2931 = vmatprep.subr.mxu0 0.0
        %2932 = vmatpush1.xpose.msra.mxu0 0.0
        %2933 = vmatprep.subr.mxu0 0.0
        %2934 = vmatpush1.xpose.msra.mxu0 0.0
        %2935 = vmatprep.subr.mxu0 0.0
        %2936 = vmatpush1.xpose.msra.mxu0 0.0
        %2937 = vmatprep.subr.mxu0 0.0
        %2938 = vmatpush1.xpose.msra.mxu0 0.0
        %2939 = vmatprep.subr.mxu0 0.0
        %2940 = vmatpush1.xpose.msra.mxu0 0.0
        %2941 = vmatprep.mubr.f32.mxu0 %v225
        %2942 = vmatmul.mubr.f32.gmra.mrb[0].mxu0 %v224
        %v2943 = vpop.f32.mrb[0].mxu0
        %v2944 = vadd.f32 %v2874, %v2943
        %v2945 = vpop.f32.mrb[0].mxu0
        %2946 = vdwg.mxu0
        %2947 = vmatprep.subr.mxu0 %v291
        %2948 = vmatpush1.xpose.msra.mxu0 %v290
        %2949 = vmatprep.subr.mxu0 %v355
        %2950 = vmatpush1.xpose.msra.mxu0 %v354
        %2951 = vmatprep.subr.mxu0 %v419
        %2952 = vmatpush1.xpose.msra.mxu0 %v418
        %2953 = vmatprep.subr.mxu0 %v483
        %2954 = vmatpush1.xpose.msra.mxu0 %v482
        %2955 = vmatprep.subr.mxu0 %v547
        %2956 = vmatpush1.xpose.msra.mxu0 %v546
        %2957 = vmatprep.subr.mxu0 %v611
        %2958 = vmatpush1.xpose.msra.mxu0 %v610
        %2959 = vmatprep.subr.mxu0 %v675
        %2960 = vmatpush1.xpose.msra.mxu0 %v674
        %2961 = vmatprep.subr.mxu0 %v739
        %2962 = vmatpush1.xpose.msra.mxu0 %v738
        %2963 = vmatprep.subr.mxu0 %v803
        %2964 = vmatpush1.xpose.msra.mxu0 %v802
        %2965 = vmatprep.subr.mxu0 %v867
        %2966 = vmatpush1.xpose.msra.mxu0 %v866
        %2967 = vmatprep.subr.mxu0 %v931
        %2968 = vmatpush1.xpose.msra.mxu0 %v930
        %2969 = vmatprep.subr.mxu0 %v995
        %2970 = vmatpush1.xpose.msra.mxu0 %v994
        %2971 = vmatprep.subr.mxu0 %v1059
        %2972 = vmatpush1.xpose.msra.mxu0 %v1058
        %2973 = vmatprep.subr.mxu0 %v1123
        %2974 = vmatpush1.xpose.msra.mxu0 %v1122
        %2975 = vmatprep.subr.mxu0 %v1187
        %2976 = vmatpush1.xpose.msra.mxu0 %v1186
        %2977 = vmatprep.subr.mxu0 %v1251
        %2978 = vmatpush1.xpose.msra.mxu0 %v1250
        %2979 = vmatprep.subr.mxu0 0.0
        %2980 = vmatpush1.xpose.msra.mxu0 0.0
        %2981 = vmatprep.subr.mxu0 0.0
        %2982 = vmatpush1.xpose.msra.mxu0 0.0
        %2983 = vmatprep.subr.mxu0 0.0
        %2984 = vmatpush1.xpose.msra.mxu0 0.0
        %2985 = vmatprep.subr.mxu0 0.0
        %2986 = vmatpush1.xpose.msra.mxu0 0.0
        %2987 = vmatprep.subr.mxu0 0.0
        %2988 = vmatpush1.xpose.msra.mxu0 0.0
        %2989 = vmatprep.subr.mxu0 0.0
        %2990 = vmatpush1.xpose.msra.mxu0 0.0
        %2991 = vmatprep.subr.mxu0 0.0
        %2992 = vmatpush1.xpose.msra.mxu0 0.0
        %2993 = vmatprep.subr.mxu0 0.0
        %2994 = vmatpush1.xpose.msra.mxu0 0.0
        %2995 = vmatprep.subr.mxu0 0.0
        %2996 = vmatpush1.xpose.msra.mxu0 0.0
        %2997 = vmatprep.subr.mxu0 0.0
        %2998 = vmatpush1.xpose.msra.mxu0 0.0
        %2999 = vmatprep.subr.mxu0 0.0
        %3000 = vmatpush1.xpose.msra.mxu0 0.0
        %3001 = vmatprep.subr.mxu0 0.0
        %3002 = vmatpush1.xpose.msra.mxu0 0.0
        %3003 = vmatprep.subr.mxu0 0.0
        %3004 = vmatpush1.xpose.msra.mxu0 0.0
        %3005 = vmatprep.subr.mxu0 0.0
        %3006 = vmatpush1.xpose.msra.mxu0 0.0
        %3007 = vmatprep.subr.mxu0 0.0
        %3008 = vmatpush1.xpose.msra.mxu0 0.0
        %3009 = vmatprep.subr.mxu0 0.0
        %3010 = vmatpush1.xpose.msra.mxu0 0.0
        %3011 = vmatprep.mubr.f32.mxu0 %v227
        %3012 = vmatmul.mubr.f32.gmra.mrb[0].mxu0 %v226
        %v3013 = vpop.f32.mrb[0].mxu0
        %v3014 = vadd.f32 %v2944, %v3013
        %v3015 = vpop.f32.mrb[0].mxu0
        %3016 = vdwg.mxu0
        %3017 = vmatprep.subr.mxu0 %v293
        %3018 = vmatpush1.xpose.msra.mxu0 %v292
        %3019 = vmatprep.subr.mxu0 %v357
        %3020 = vmatpush1.xpose.msra.mxu0 %v356
        %3021 = vmatprep.subr.mxu0 %v421
        %3022 = vmatpush1.xpose.msra.mxu0 %v420
        %3023 = vmatprep.subr.mxu0 %v485
        %3024 = vmatpush1.xpose.msra.mxu0 %v484
        %3025 = vmatprep.subr.mxu0 %v549
        %3026 = vmatpush1.xpose.msra.mxu0 %v548
        %3027 = vmatprep.subr.mxu0 %v613
        %3028 = vmatpush1.xpose.msra.mxu0 %v612
        %3029 = vmatprep.subr.mxu0 %v677
        %3030 = vmatpush1.xpose.msra.mxu0 %v676
        %3031 = vmatprep.subr.mxu0 %v741
        %3032 = vmatpush1.xpose.msra.mxu0 %v740
        %3033 = vmatprep.subr.mxu0 %v805
        %3034 = vmatpush1.xpose.msra.mxu0 %v804
        %3035 = vmatprep.subr.mxu0 %v869
        %3036 = vmatpush1.xpose.msra.mxu0 %v868
        %3037 = vmatprep.subr.mxu0 %v933
        %3038 = vmatpush1.xpose.msra.mxu0 %v932
        %3039 = vmatprep.subr.mxu0 %v997
        %3040 = vmatpush1.xpose.msra.mxu0 %v996
        %3041 = vmatprep.subr.mxu0 %v1061
        %3042 = vmatpush1.xpose.msra.mxu0 %v1060
        %3043 = vmatprep.subr.mxu0 %v1125
        %3044 = vmatpush1.xpose.msra.mxu0 %v1124
        %3045 = vmatprep.subr.mxu0 %v1189
        %3046 = vmatpush1.xpose.msra.mxu0 %v1188
        %3047 = vmatprep.subr.mxu0 %v1253
        %3048 = vmatpush1.xpose.msra.mxu0 %v1252
        %3049 = vmatprep.subr.mxu0 0.0
        %3050 = vmatpush1.xpose.msra.mxu0 0.0
        %3051 = vmatprep.subr.mxu0 0.0
        %3052 = vmatpush1.xpose.msra.mxu0 0.0
        %3053 = vmatprep.subr.mxu0 0.0
        %3054 = vmatpush1.xpose.msra.mxu0 0.0
        %3055 = vmatprep.subr.mxu0 0.0
        %3056 = vmatpush1.xpose.msra.mxu0 0.0
        %3057 = vmatprep.subr.mxu0 0.0
        %3058 = vmatpush1.xpose.msra.mxu0 0.0
        %3059 = vmatprep.subr.mxu0 0.0
        %3060 = vmatpush1.xpose.msra.mxu0 0.0
        %3061 = vmatprep.subr.mxu0 0.0
        %3062 = vmatpush1.xpose.msra.mxu0 0.0
        %3063 = vmatprep.subr.mxu0 0.0
        %3064 = vmatpush1.xpose.msra.mxu0 0.0
        %3065 = vmatprep.subr.mxu0 0.0
        %3066 = vmatpush1.xpose.msra.mxu0 0.0
        %3067 = vmatprep.subr.mxu0 0.0
        %3068 = vmatpush1.xpose.msra.mxu0 0.0
        %3069 = vmatprep.subr.mxu0 0.0
        %3070 = vmatpush1.xpose.msra.mxu0 0.0
        %3071 = vmatprep.subr.mxu0 0.0
        %3072 = vmatpush1.xpose.msra.mxu0 0.0
        %3073 = vmatprep.subr.mxu0 0.0
        %3074 = vmatpush1.xpose.msra.mxu0 0.0
        %3075 = vmatprep.subr.mxu0 0.0
        %3076 = vmatpush1.xpose.msra.mxu0 0.0
        %3077 = vmatprep.subr.mxu0 0.0
        %3078 = vmatpush1.xpose.msra.mxu0 0.0
        %3079 = vmatprep.subr.mxu0 0.0
        %3080 = vmatpush1.xpose.msra.mxu0 0.0
        %3081 = vmatprep.mubr.f32.mxu0 %v229
        %3082 = vmatmul.mubr.f32.gmra.mrb[0].mxu0 %v228
        %v3083 = vpop.f32.mrb[0].mxu0
        %v3084 = vadd.f32 %v3014, %v3083
        %v3085 = vpop.f32.mrb[0].mxu0
        %3086 = vdwg.mxu0
        %3087 = vmatprep.subr.mxu0 %v295
        %3088 = vmatpush1.xpose.msra.mxu0 %v294
        %3089 = vmatprep.subr.mxu0 %v359
        %3090 = vmatpush1.xpose.msra.mxu0 %v358
        %3091 = vmatprep.subr.mxu0 %v423
        %3092 = vmatpush1.xpose.msra.mxu0 %v422
        %3093 = vmatprep.subr.mxu0 %v487
        %3094 = vmatpush1.xpose.msra.mxu0 %v486
        %3095 = vmatprep.subr.mxu0 %v551
        %3096 = vmatpush1.xpose.msra.mxu0 %v550
        %3097 = vmatprep.subr.mxu0 %v615
        %3098 = vmatpush1.xpose.msra.mxu0 %v614
        %3099 = vmatprep.subr.mxu0 %v679
        %3100 = vmatpush1.xpose.msra.mxu0 %v678
        %3101 = vmatprep.subr.mxu0 %v743
        %3102 = vmatpush1.xpose.msra.mxu0 %v742
        %3103 = vmatprep.subr.mxu0 %v807
        %3104 = vmatpush1.xpose.msra.mxu0 %v806
        %3105 = vmatprep.subr.mxu0 %v871
        %3106 = vmatpush1.xpose.msra.mxu0 %v870
        %3107 = vmatprep.subr.mxu0 %v935
        %3108 = vmatpush1.xpose.msra.mxu0 %v934
        %3109 = vmatprep.subr.mxu0 %v999
        %3110 = vmatpush1.xpose.msra.mxu0 %v998
        %3111 = vmatprep.subr.mxu0 %v1063
        %3112 = vmatpush1.xpose.msra.mxu0 %v1062
        %3113 = vmatprep.subr.mxu0 %v1127
        %3114 = vmatpush1.xpose.msra.mxu0 %v1126
        %3115 = vmatprep.subr.mxu0 %v1191
        %3116 = vmatpush1.xpose.msra.mxu0 %v1190
        %3117 = vmatprep.subr.mxu0 %v1255
        %3118 = vmatpush1.xpose.msra.mxu0 %v1254
        %3119 = vmatprep.subr.mxu0 0.0
        %3120 = vmatpush1.xpose.msra.mxu0 0.0
        %3121 = vmatprep.subr.mxu0 0.0
        %3122 = vmatpush1.xpose.msra.mxu0 0.0
        %3123 = vmatprep.subr.mxu0 0.0
        %3124 = vmatpush1.xpose.msra.mxu0 0.0
        %3125 = vmatprep.subr.mxu0 0.0
        %3126 = vmatpush1.xpose.msra.mxu0 0.0
        %3127 = vmatprep.subr.mxu0 0.0
        %3128 = vmatpush1.xpose.msra.mxu0 0.0
        %3129 = vmatprep.subr.mxu0 0.0
        %3130 = vmatpush1.xpose.msra.mxu0 0.0
        %3131 = vmatprep.subr.mxu0 0.0
        %3132 = vmatpush1.xpose.msra.mxu0 0.0
        %3133 = vmatprep.subr.mxu0 0.0
        %3134 = vmatpush1.xpose.msra.mxu0 0.0
        %3135 = vmatprep.subr.mxu0 0.0
        %3136 = vmatpush1.xpose.msra.mxu0 0.0
        %3137 = vmatprep.subr.mxu0 0.0
        %3138 = vmatpush1.xpose.msra.mxu0 0.0
        %3139 = vmatprep.subr.mxu0 0.0
        %3140 = vmatpush1.xpose.msra.mxu0 0.0
        %3141 = vmatprep.subr.mxu0 0.0
        %3142 = vmatpush1.xpose.msra.mxu0 0.0
        %3143 = vmatprep.subr.mxu0 0.0
        %3144 = vmatpush1.xpose.msra.mxu0 0.0
        %3145 = vmatprep.subr.mxu0 0.0
        %3146 = vmatpush1.xpose.msra.mxu0 0.0
        %3147 = vmatprep.subr.mxu0 0.0
        %3148 = vmatpush1.xpose.msra.mxu0 0.0
        %3149 = vmatprep.subr.mxu0 0.0
        %3150 = vmatpush1.xpose.msra.mxu0 0.0
        %3151 = vmatprep.mubr.f32.mxu0 %v231
        %3152 = vmatmul.mubr.f32.gmra.mrb[0].mxu0 %v230
        %v3153 = vpop.f32.mrb[0].mxu0
        %v3154 = vadd.f32 %v3084, %v3153
        %v3155 = vpop.f32.mrb[0].mxu0
        %3156 = vdwg.mxu0
        %3157 = vmatprep.subr.mxu0 %v297
        %3158 = vmatpush1.xpose.msra.mxu0 %v296
        %3159 = vmatprep.subr.mxu0 %v361
        %3160 = vmatpush1.xpose.msra.mxu0 %v360
        %3161 = vmatprep.subr.mxu0 %v425
        %3162 = vmatpush1.xpose.msra.mxu0 %v424
        %3163 = vmatprep.subr.mxu0 %v489
        %3164 = vmatpush1.xpose.msra.mxu0 %v488
        %3165 = vmatprep.subr.mxu0 %v553
        %3166 = vmatpush1.xpose.msra.mxu0 %v552
        %3167 = vmatprep.subr.mxu0 %v617
        %3168 = vmatpush1.xpose.msra.mxu0 %v616
        %3169 = vmatprep.subr.mxu0 %v681
        %3170 = vmatpush1.xpose.msra.mxu0 %v680
        %3171 = vmatprep.subr.mxu0 %v745
        %3172 = vmatpush1.xpose.msra.mxu0 %v744
        %3173 = vmatprep.subr.mxu0 %v809
        %3174 = vmatpush1.xpose.msra.mxu0 %v808
        %3175 = vmatprep.subr.mxu0 %v873
        %3176 = vmatpush1.xpose.msra.mxu0 %v872
        %3177 = vmatprep.subr.mxu0 %v937
        %3178 = vmatpush1.xpose.msra.mxu0 %v936
        %3179 = vmatprep.subr.mxu0 %v1001
        %3180 = vmatpush1.xpose.msra.mxu0 %v1000
        %3181 = vmatprep.subr.mxu0 %v1065
        %3182 = vmatpush1.xpose.msra.mxu0 %v1064
        %3183 = vmatprep.subr.mxu0 %v1129
        %3184 = vmatpush1.xpose.msra.mxu0 %v1128
        %3185 = vmatprep.subr.mxu0 %v1193
        %3186 = vmatpush1.xpose.msra.mxu0 %v1192
        %3187 = vmatprep.subr.mxu0 %v1257
        %3188 = vmatpush1.xpose.msra.mxu0 %v1256
        %3189 = vmatprep.subr.mxu0 0.0
        %3190 = vmatpush1.xpose.msra.mxu0 0.0
        %3191 = vmatprep.subr.mxu0 0.0
        %3192 = vmatpush1.xpose.msra.mxu0 0.0
        %3193 = vmatprep.subr.mxu0 0.0
        %3194 = vmatpush1.xpose.msra.mxu0 0.0
        %3195 = vmatprep.subr.mxu0 0.0
        %3196 = vmatpush1.xpose.msra.mxu0 0.0
        %3197 = vmatprep.subr.mxu0 0.0
        %3198 = vmatpush1.xpose.msra.mxu0 0.0
        %3199 = vmatprep.subr.mxu0 0.0
        %3200 = vmatpush1.xpose.msra.mxu0 0.0
        %3201 = vmatprep.subr.mxu0 0.0
        %3202 = vmatpush1.xpose.msra.mxu0 0.0
        %3203 = vmatprep.subr.mxu0 0.0
        %3204 = vmatpush1.xpose.msra.mxu0 0.0
        %3205 = vmatprep.subr.mxu0 0.0
        %3206 = vmatpush1.xpose.msra.mxu0 0.0
        %3207 = vmatprep.subr.mxu0 0.0
        %3208 = vmatpush1.xpose.msra.mxu0 0.0
        %3209 = vmatprep.subr.mxu0 0.0
        %3210 = vmatpush1.xpose.msra.mxu0 0.0
        %3211 = vmatprep.subr.mxu0 0.0
        %3212 = vmatpush1.xpose.msra.mxu0 0.0
        %3213 = vmatprep.subr.mxu0 0.0
        %3214 = vmatpush1.xpose.msra.mxu0 0.0
        %3215 = vmatprep.subr.mxu0 0.0
        %3216 = vmatpush1.xpose.msra.mxu0 0.0
        %3217 = vmatprep.subr.mxu0 0.0
        %3218 = vmatpush1.xpose.msra.mxu0 0.0
        %3219 = vmatprep.subr.mxu0 0.0
        %3220 = vmatpush1.xpose.msra.mxu0 0.0
        %3221 = vmatprep.mubr.f32.mxu0 %v233
        %3222 = vmatmul.mubr.f32.gmra.mrb[0].mxu0 %v232
        %v3223 = vpop.f32.mrb[0].mxu0
        %v3224 = vadd.f32 %v3154, %v3223
        %v3225 = vpop.f32.mrb[0].mxu0
        %3226 = vdwg.mxu0
        %3227 = vmatprep.subr.mxu0 %v299
        %3228 = vmatpush1.xpose.msra.mxu0 %v298
        %3229 = vmatprep.subr.mxu0 %v363
        %3230 = vmatpush1.xpose.msra.mxu0 %v362
        %3231 = vmatprep.subr.mxu0 %v427
        %3232 = vmatpush1.xpose.msra.mxu0 %v426
        %3233 = vmatprep.subr.mxu0 %v491
        %3234 = vmatpush1.xpose.msra.mxu0 %v490
        %3235 = vmatprep.subr.mxu0 %v555
        %3236 = vmatpush1.xpose.msra.mxu0 %v554
        %3237 = vmatprep.subr.mxu0 %v619
        %3238 = vmatpush1.xpose.msra.mxu0 %v618
        %3239 = vmatprep.subr.mxu0 %v683
        %3240 = vmatpush1.xpose.msra.mxu0 %v682
        %3241 = vmatprep.subr.mxu0 %v747
        %3242 = vmatpush1.xpose.msra.mxu0 %v746
        %3243 = vmatprep.subr.mxu0 %v811
        %3244 = vmatpush1.xpose.msra.mxu0 %v810
        %3245 = vmatprep.subr.mxu0 %v875
        %3246 = vmatpush1.xpose.msra.mxu0 %v874
        %3247 = vmatprep.subr.mxu0 %v939
        %3248 = vmatpush1.xpose.msra.mxu0 %v938
        %3249 = vmatprep.subr.mxu0 %v1003
        %3250 = vmatpush1.xpose.msra.mxu0 %v1002
        %3251 = vmatprep.subr.mxu0 %v1067
        %3252 = vmatpush1.xpose.msra.mxu0 %v1066
        %3253 = vmatprep.subr.mxu0 %v1131
        %3254 = vmatpush1.xpose.msra.mxu0 %v1130
        %3255 = vmatprep.subr.mxu0 %v1195
        %3256 = vmatpush1.xpose.msra.mxu0 %v1194
        %3257 = vmatprep.subr.mxu0 %v1259
        %3258 = vmatpush1.xpose.msra.mxu0 %v1258
        %3259 = vmatprep.subr.mxu0 0.0
        %3260 = vmatpush1.xpose.msra.mxu0 0.0
        %3261 = vmatprep.subr.mxu0 0.0
        %3262 = vmatpush1.xpose.msra.mxu0 0.0
        %3263 = vmatprep.subr.mxu0 0.0
        %3264 = vmatpush1.xpose.msra.mxu0 0.0
        %3265 = vmatprep.subr.mxu0 0.0
        %3266 = vmatpush1.xpose.msra.mxu0 0.0
        %3267 = vmatprep.subr.mxu0 0.0
        %3268 = vmatpush1.xpose.msra.mxu0 0.0
        %3269 = vmatprep.subr.mxu0 0.0
        %3270 = vmatpush1.xpose.msra.mxu0 0.0
        %3271 = vmatprep.subr.mxu0 0.0
        %3272 = vmatpush1.xpose.msra.mxu0 0.0
        %3273 = vmatprep.subr.mxu0 0.0
        %3274 = vmatpush1.xpose.msra.mxu0 0.0
        %3275 = vmatprep.subr.mxu0 0.0
        %3276 = vmatpush1.xpose.msra.mxu0 0.0
        %3277 = vmatprep.subr.mxu0 0.0
        %3278 = vmatpush1.xpose.msra.mxu0 0.0
        %3279 = vmatprep.subr.mxu0 0.0
        %3280 = vmatpush1.xpose.msra.mxu0 0.0
        %3281 = vmatprep.subr.mxu0 0.0
        %3282 = vmatpush1.xpose.msra.mxu0 0.0
        %3283 = vmatprep.subr.mxu0 0.0
        %3284 = vmatpush1.xpose.msra.mxu0 0.0
        %3285 = vmatprep.subr.mxu0 0.0
        %3286 = vmatpush1.xpose.msra.mxu0 0.0
        %3287 = vmatprep.subr.mxu0 0.0
        %3288 = vmatpush1.xpose.msra.mxu0 0.0
        %3289 = vmatprep.subr.mxu0 0.0
        %3290 = vmatpush1.xpose.msra.mxu0 0.0
        %3291 = vmatprep.mubr.f32.mxu0 %v235
        %3292 = vmatmul.mubr.f32.gmra.mrb[0].mxu0 %v234
        %v3293 = vpop.f32.mrb[0].mxu0
        %v3294 = vadd.f32 %v3224, %v3293
        %v3295 = vpop.f32.mrb[0].mxu0
        %3296 = vdwg.mxu0
        %3297 = vmatprep.subr.mxu0 %v301
        %3298 = vmatpush1.xpose.msra.mxu0 %v300
        %3299 = vmatprep.subr.mxu0 %v365
        %3300 = vmatpush1.xpose.msra.mxu0 %v364
        %3301 = vmatprep.subr.mxu0 %v429
        %3302 = vmatpush1.xpose.msra.mxu0 %v428
        %3303 = vmatprep.subr.mxu0 %v493
        %3304 = vmatpush1.xpose.msra.mxu0 %v492
        %3305 = vmatprep.subr.mxu0 %v557
        %3306 = vmatpush1.xpose.msra.mxu0 %v556
        %3307 = vmatprep.subr.mxu0 %v621
        %3308 = vmatpush1.xpose.msra.mxu0 %v620
        %3309 = vmatprep.subr.mxu0 %v685
        %3310 = vmatpush1.xpose.msra.mxu0 %v684
        %3311 = vmatprep.subr.mxu0 %v749
        %3312 = vmatpush1.xpose.msra.mxu0 %v748
        %3313 = vmatprep.subr.mxu0 %v813
        %3314 = vmatpush1.xpose.msra.mxu0 %v812
        %3315 = vmatprep.subr.mxu0 %v877
        %3316 = vmatpush1.xpose.msra.mxu0 %v876
        %3317 = vmatprep.subr.mxu0 %v941
        %3318 = vmatpush1.xpose.msra.mxu0 %v940
        %3319 = vmatprep.subr.mxu0 %v1005
        %3320 = vmatpush1.xpose.msra.mxu0 %v1004
        %3321 = vmatprep.subr.mxu0 %v1069
        %3322 = vmatpush1.xpose.msra.mxu0 %v1068
        %3323 = vmatprep.subr.mxu0 %v1133
        %3324 = vmatpush1.xpose.msra.mxu0 %v1132
        %3325 = vmatprep.subr.mxu0 %v1197
        %3326 = vmatpush1.xpose.msra.mxu0 %v1196
        %3327 = vmatprep.subr.mxu0 %v1261
        %3328 = vmatpush1.xpose.msra.mxu0 %v1260
        %3329 = vmatprep.subr.mxu0 0.0
        %3330 = vmatpush1.xpose.msra.mxu0 0.0
        %3331 = vmatprep.subr.mxu0 0.0
        %3332 = vmatpush1.xpose.msra.mxu0 0.0
        %3333 = vmatprep.subr.mxu0 0.0
        %3334 = vmatpush1.xpose.msra.mxu0 0.0
        %3335 = vmatprep.subr.mxu0 0.0
        %3336 = vmatpush1.xpose.msra.mxu0 0.0
        %3337 = vmatprep.subr.mxu0 0.0
        %3338 = vmatpush1.xpose.msra.mxu0 0.0
        %3339 = vmatprep.subr.mxu0 0.0
        %3340 = vmatpush1.xpose.msra.mxu0 0.0
        %3341 = vmatprep.subr.mxu0 0.0
        %3342 = vmatpush1.xpose.msra.mxu0 0.0
        %3343 = vmatprep.subr.mxu0 0.0
        %3344 = vmatpush1.xpose.msra.mxu0 0.0
        %3345 = vmatprep.subr.mxu0 0.0
        %3346 = vmatpush1.xpose.msra.mxu0 0.0
        %3347 = vmatprep.subr.mxu0 0.0
        %3348 = vmatpush1.xpose.msra.mxu0 0.0
        %3349 = vmatprep.subr.mxu0 0.0
        %3350 = vmatpush1.xpose.msra.mxu0 0.0
        %3351 = vmatprep.subr.mxu0 0.0
        %3352 = vmatpush1.xpose.msra.mxu0 0.0
        %3353 = vmatprep.subr.mxu0 0.0
        %3354 = vmatpush1.xpose.msra.mxu0 0.0
        %3355 = vmatprep.subr.mxu0 0.0
        %3356 = vmatpush1.xpose.msra.mxu0 0.0
        %3357 = vmatprep.subr.mxu0 0.0
        %3358 = vmatpush1.xpose.msra.mxu0 0.0
        %3359 = vmatprep.subr.mxu0 0.0
        %3360 = vmatpush1.xpose.msra.mxu0 0.0
        %3361 = vmatprep.mubr.f32.mxu0 %v237
        %3362 = vmatmul.mubr.f32.gmra.mrb[0].mxu0 %v236
        %v3363 = vpop.f32.mrb[0].mxu0
        %v3364 = vadd.f32 %v3294, %v3363
        %v3365 = vpop.f32.mrb[0].mxu0
        %3366 = vdwg.mxu0
        %3367 = vmatprep.subr.mxu0 %v303
        %3368 = vmatpush1.xpose.msra.mxu0 %v302
        %3369 = vmatprep.subr.mxu0 %v367
        %3370 = vmatpush1.xpose.msra.mxu0 %v366
        %3371 = vmatprep.subr.mxu0 %v431
        %3372 = vmatpush1.xpose.msra.mxu0 %v430
        %3373 = vmatprep.subr.mxu0 %v495
        %3374 = vmatpush1.xpose.msra.mxu0 %v494
        %3375 = vmatprep.subr.mxu0 %v559
        %3376 = vmatpush1.xpose.msra.mxu0 %v558
        %3377 = vmatprep.subr.mxu0 %v623
        %3378 = vmatpush1.xpose.msra.mxu0 %v622
        %3379 = vmatprep.subr.mxu0 %v687
        %3380 = vmatpush1.xpose.msra.mxu0 %v686
        %3381 = vmatprep.subr.mxu0 %v751
        %3382 = vmatpush1.xpose.msra.mxu0 %v750
        %3383 = vmatprep.subr.mxu0 %v815
        %3384 = vmatpush1.xpose.msra.mxu0 %v814
        %3385 = vmatprep.subr.mxu0 %v879
        %3386 = vmatpush1.xpose.msra.mxu0 %v878
        %3387 = vmatprep.subr.mxu0 %v943
        %3388 = vmatpush1.xpose.msra.mxu0 %v942
        %3389 = vmatprep.subr.mxu0 %v1007
        %3390 = vmatpush1.xpose.msra.mxu0 %v1006
        %3391 = vmatprep.subr.mxu0 %v1071
        %3392 = vmatpush1.xpose.msra.mxu0 %v1070
        %3393 = vmatprep.subr.mxu0 %v1135
        %3394 = vmatpush1.xpose.msra.mxu0 %v1134
        %3395 = vmatprep.subr.mxu0 %v1199
        %3396 = vmatpush1.xpose.msra.mxu0 %v1198
        %3397 = vmatprep.subr.mxu0 %v1263
        %3398 = vmatpush1.xpose.msra.mxu0 %v1262
        %3399 = vmatprep.subr.mxu0 0.0
        %3400 = vmatpush1.xpose.msra.mxu0 0.0
        %3401 = vmatprep.subr.mxu0 0.0
        %3402 = vmatpush1.xpose.msra.mxu0 0.0
        %3403 = vmatprep.subr.mxu0 0.0
        %3404 = vmatpush1.xpose.msra.mxu0 0.0
        %3405 = vmatprep.subr.mxu0 0.0
        %3406 = vmatpush1.xpose.msra.mxu0 0.0
        %3407 = vmatprep.subr.mxu0 0.0
        %3408 = vmatpush1.xpose.msra.mxu0 0.0
        %3409 = vmatprep.subr.mxu0 0.0
        %3410 = vmatpush1.xpose.msra.mxu0 0.0
        %3411 = vmatprep.subr.mxu0 0.0
        %3412 = vmatpush1.xpose.msra.mxu0 0.0
        %3413 = vmatprep.subr.mxu0 0.0
        %3414 = vmatpush1.xpose.msra.mxu0 0.0
        %3415 = vmatprep.subr.mxu0 0.0
        %3416 = vmatpush1.xpose.msra.mxu0 0.0
        %3417 = vmatprep.subr.mxu0 0.0
        %3418 = vmatpush1.xpose.msra.mxu0 0.0
        %3419 = vmatprep.subr.mxu0 0.0
        %3420 = vmatpush1.xpose.msra.mxu0 0.0
        %3421 = vmatprep.subr.mxu0 0.0
        %3422 = vmatpush1.xpose.msra.mxu0 0.0
        %3423 = vmatprep.subr.mxu0 0.0
        %3424 = vmatpush1.xpose.msra.mxu0 0.0
        %3425 = vmatprep.subr.mxu0 0.0
        %3426 = vmatpush1.xpose.msra.mxu0 0.0
        %3427 = vmatprep.subr.mxu0 0.0
        %3428 = vmatpush1.xpose.msra.mxu0 0.0
        %3429 = vmatprep.subr.mxu0 0.0
        %3430 = vmatpush1.xpose.msra.mxu0 0.0
        %3431 = vmatprep.mubr.f32.mxu0 %v239
        %3432 = vmatmul.mubr.f32.gmra.mrb[0].mxu0 %v238
        %v3433 = vpop.f32.mrb[0].mxu0
        %v3434 = vadd.f32 %v3364, %v3433
        %v3435 = vpop.f32.mrb[0].mxu0
        %3436 = vdwg.mxu0
        %3437 = vmatprep.subr.mxu0 %v305
        %3438 = vmatpush1.xpose.msra.mxu0 %v304
        %3439 = vmatprep.subr.mxu0 %v369
        %3440 = vmatpush1.xpose.msra.mxu0 %v368
        %3441 = vmatprep.subr.mxu0 %v433
        %3442 = vmatpush1.xpose.msra.mxu0 %v432
        %3443 = vmatprep.subr.mxu0 %v497
        %3444 = vmatpush1.xpose.msra.mxu0 %v496
        %3445 = vmatprep.subr.mxu0 %v561
        %3446 = vmatpush1.xpose.msra.mxu0 %v560
        %3447 = vmatprep.subr.mxu0 %v625
        %3448 = vmatpush1.xpose.msra.mxu0 %v624
        %3449 = vmatprep.subr.mxu0 %v689
        %3450 = vmatpush1.xpose.msra.mxu0 %v688
        %3451 = vmatprep.subr.mxu0 %v753
        %3452 = vmatpush1.xpose.msra.mxu0 %v752
        %3453 = vmatprep.subr.mxu0 %v817
        %3454 = vmatpush1.xpose.msra.mxu0 %v816
        %3455 = vmatprep.subr.mxu0 %v881
        %3456 = vmatpush1.xpose.msra.mxu0 %v880
        %3457 = vmatprep.subr.mxu0 %v945
        %3458 = vmatpush1.xpose.msra.mxu0 %v944
        %3459 = vmatprep.subr.mxu0 %v1009
        %3460 = vmatpush1.xpose.msra.mxu0 %v1008
        %3461 = vmatprep.subr.mxu0 %v1073
        %3462 = vmatpush1.xpose.msra.mxu0 %v1072
        %3463 = vmatprep.subr.mxu0 %v1137
        %3464 = vmatpush1.xpose.msra.mxu0 %v1136
        %3465 = vmatprep.subr.mxu0 %v1201
        %3466 = vmatpush1.xpose.msra.mxu0 %v1200
        %3467 = vmatprep.subr.mxu0 %v1265
        %3468 = vmatpush1.xpose.msra.mxu0 %v1264
        %3469 = vmatprep.subr.mxu0 0.0
        %3470 = vmatpush1.xpose.msra.mxu0 0.0
        %3471 = vmatprep.subr.mxu0 0.0
        %3472 = vmatpush1.xpose.msra.mxu0 0.0
        %3473 = vmatprep.subr.mxu0 0.0
        %3474 = vmatpush1.xpose.msra.mxu0 0.0
        %3475 = vmatprep.subr.mxu0 0.0
        %3476 = vmatpush1.xpose.msra.mxu0 0.0
        %3477 = vmatprep.subr.mxu0 0.0
        %3478 = vmatpush1.xpose.msra.mxu0 0.0
        %3479 = vmatprep.subr.mxu0 0.0
        %3480 = vmatpush1.xpose.msra.mxu0 0.0
        %3481 = vmatprep.subr.mxu0 0.0
        %3482 = vmatpush1.xpose.msra.mxu0 0.0
        %3483 = vmatprep.subr.mxu0 0.0
        %3484 = vmatpush1.xpose.msra.mxu0 0.0
        %3485 = vmatprep.subr.mxu0 0.0
        %3486 = vmatpush1.xpose.msra.mxu0 0.0
        %3487 = vmatprep.subr.mxu0 0.0
        %3488 = vmatpush1.xpose.msra.mxu0 0.0
        %3489 = vmatprep.subr.mxu0 0.0
        %3490 = vmatpush1.xpose.msra.mxu0 0.0
        %3491 = vmatprep.subr.mxu0 0.0
        %3492 = vmatpush1.xpose.msra.mxu0 0.0
        %3493 = vmatprep.subr.mxu0 0.0
        %3494 = vmatpush1.xpose.msra.mxu0 0.0
        %3495 = vmatprep.subr.mxu0 0.0
        %3496 = vmatpush1.xpose.msra.mxu0 0.0
        %3497 = vmatprep.subr.mxu0 0.0
        %3498 = vmatpush1.xpose.msra.mxu0 0.0
        %3499 = vmatprep.subr.mxu0 0.0
        %3500 = vmatpush1.xpose.msra.mxu0 0.0
        %3501 = vmatprep.mubr.f32.mxu0 %v241
        %3502 = vmatmul.mubr.f32.gmra.mrb[0].mxu0 %v240
        %v3503 = vpop.f32.mrb[0].mxu0
        %v3504 = vadd.f32 %v3434, %v3503
        %v3505 = vpop.f32.mrb[0].mxu0
        %3506 = vdwg.mxu0
        %v3507 = vadd.f32 %v1266, %v3504
        %3508 = vst [vmem:[#allocation2] sm:$0xff] %v3507
        %v3509 = vld [vmem:[#allocation3] sm:$0x1]
        %v3510 = vmul.f32 %v242, %v242
        %v3511 = vmul.f32 %v243, %v243
        %v3512 = vmul.f32 %v244, %v244
        %v3513 = vmul.f32 %v245, %v245
        %v3514 = vmul.f32 %v246, %v246
        %v3515 = vmul.f32 %v247, %v247
        %v3516 = vmul.f32 %v248, %v248
        %v3517 = vmul.f32 %v249, %v249
        %v3518 = vmul.f32 %v250, %v250
        %v3519 = vmul.f32 %v251, %v251
        %v3520 = vmul.f32 %v252, %v252
        %v3521 = vmul.f32 %v253, %v253
        %v3522 = vmul.f32 %v254, %v254
        %v3523 = vmul.f32 %v255, %v255
        %v3524 = vmul.f32 %v256, %v256
        %v3525 = vmul.f32 %v257, %v257
        %v3526 = vmul.f32 %v258, %v258
        %v3527 = vmul.f32 %v259, %v259
        %v3528 = vmul.f32 %v260, %v260
        %v3529 = vmul.f32 %v261, %v261
        %v3530 = vmul.f32 %v262, %v262
        %v3531 = vmul.f32 %v263, %v263
        %v3532 = vmul.f32 %v264, %v264
        %v3533 = vmul.f32 %v265, %v265
        %v3534 = vmul.f32 %v266, %v266
        %v3535 = vmul.f32 %v267, %v267
        %v3536 = vmul.f32 %v268, %v268
        %v3537 = vmul.f32 %v269, %v269
        %v3538 = vmul.f32 %v270, %v270
        %v3539 = vmul.f32 %v271, %v271
        %v3540 = vmul.f32 %v272, %v272
        %v3541 = vmul.f32 %v273, %v273
        %v3542 = vmul.f32 %v274, %v274
        %v3543 = vmul.f32 %v275, %v275
        %v3544 = vmul.f32 %v276, %v276
        %v3545 = vmul.f32 %v277, %v277
        %v3546 = vmul.f32 %v278, %v278
        %v3547 = vmul.f32 %v279, %v279
        %v3548 = vmul.f32 %v280, %v280
        %v3549 = vmul.f32 %v281, %v281
        %v3550 = vmul.f32 %v282, %v282
        %v3551 = vmul.f32 %v283, %v283
        %v3552 = vmul.f32 %v284, %v284
        %v3553 = vmul.f32 %v285, %v285
        %v3554 = vmul.f32 %v286, %v286
        %v3555 = vmul.f32 %v287, %v287
        %v3556 = vmul.f32 %v288, %v288
        %v3557 = vmul.f32 %v289, %v289
        %v3558 = vmul.f32 %v290, %v290
        %v3559 = vmul.f32 %v291, %v291
        %v3560 = vmul.f32 %v292, %v292
        %v3561 = vmul.f32 %v293, %v293
        %v3562 = vmul.f32 %v294, %v294
        %v3563 = vmul.f32 %v295, %v295
        %v3564 = vmul.f32 %v296, %v296
        %v3565 = vmul.f32 %v297, %v297
        %v3566 = vmul.f32 %v298, %v298
        %v3567 = vmul.f32 %v299, %v299
        %v3568 = vmul.f32 %v300, %v300
        %v3569 = vmul.f32 %v301, %v301
        %v3570 = vmul.f32 %v302, %v302
        %v3571 = vmul.f32 %v303, %v303
        %v3572 = vmul.f32 %v304, %v304
        %v3573 = vmul.f32 %v305, %v305
        %v3574 = vmul.f32 %v306, %v306
        %v3575 = vmul.f32 %v307, %v307
        %v3576 = vmul.f32 %v308, %v308
        %v3577 = vmul.f32 %v309, %v309
        %v3578 = vmul.f32 %v310, %v310
        %v3579 = vmul.f32 %v311, %v311
        %v3580 = vmul.f32 %v312, %v312
        %v3581 = vmul.f32 %v313, %v313
        %v3582 = vmul.f32 %v314, %v314
        %v3583 = vmul.f32 %v315, %v315
        %v3584 = vmul.f32 %v316, %v316
        %v3585 = vmul.f32 %v317, %v317
        %v3586 = vmul.f32 %v318, %v318
        %v3587 = vmul.f32 %v319, %v319
        %v3588 = vmul.f32 %v320, %v320
        %v3589 = vmul.f32 %v321, %v321
        %v3590 = vmul.f32 %v322, %v322
        %v3591 = vmul.f32 %v323, %v323
        %v3592 = vmul.f32 %v324, %v324
        %v3593 = vmul.f32 %v325, %v325
        %v3594 = vmul.f32 %v326, %v326
        %v3595 = vmul.f32 %v327, %v327
        %v3596 = vmul.f32 %v328, %v328
        %v3597 = vmul.f32 %v329, %v329
        %v3598 = vmul.f32 %v330, %v330
        %v3599 = vmul.f32 %v331, %v331
        %v3600 = vmul.f32 %v332, %v332
        %v3601 = vmul.f32 %v333, %v333
        %v3602 = vmul.f32 %v334, %v334
        %v3603 = vmul.f32 %v335, %v335
        %v3604 = vmul.f32 %v336, %v336
        %v3605 = vmul.f32 %v337, %v337
        %v3606 = vmul.f32 %v338, %v338
        %v3607 = vmul.f32 %v339, %v339
        %v3608 = vmul.f32 %v340, %v340
        %v3609 = vmul.f32 %v341, %v341
        %v3610 = vmul.f32 %v342, %v342
        %v3611 = vmul.f32 %v343, %v343
        %v3612 = vmul.f32 %v344, %v344
        %v3613 = vmul.f32 %v345, %v345
        %v3614 = vmul.f32 %v346, %v346
        %v3615 = vmul.f32 %v347, %v347
        %v3616 = vmul.f32 %v348, %v348
        %v3617 = vmul.f32 %v349, %v349
        %v3618 = vmul.f32 %v350, %v350
        %v3619 = vmul.f32 %v351, %v351
        %v3620 = vmul.f32 %v352, %v352
        %v3621 = vmul.f32 %v353, %v353
        %v3622 = vmul.f32 %v354, %v354
        %v3623 = vmul.f32 %v355, %v355
        %v3624 = vmul.f32 %v356, %v356
        %v3625 = vmul.f32 %v357, %v357
        %v3626 = vmul.f32 %v358, %v358
        %v3627 = vmul.f32 %v359, %v359
        %v3628 = vmul.f32 %v360, %v360
        %v3629 = vmul.f32 %v361, %v361
        %v3630 = vmul.f32 %v362, %v362
        %v3631 = vmul.f32 %v363, %v363
        %v3632 = vmul.f32 %v364, %v364
        %v3633 = vmul.f32 %v365, %v365
        %v3634 = vmul.f32 %v366, %v366
        %v3635 = vmul.f32 %v367, %v367
        %v3636 = vmul.f32 %v368, %v368
        %v3637 = vmul.f32 %v369, %v369
        %v3638 = vmul.f32 %v370, %v370
        %v3639 = vmul.f32 %v371, %v371
        %v3640 = vmul.f32 %v372, %v372
        %v3641 = vmul.f32 %v373, %v373
        %v3642 = vmul.f32 %v374, %v374
        %v3643 = vmul.f32 %v375, %v375
        %v3644 = vmul.f32 %v376, %v376
        %v3645 = vmul.f32 %v377, %v377
        %v3646 = vmul.f32 %v378, %v378
        %v3647 = vmul.f32 %v379, %v379
        %v3648 = vmul.f32 %v380, %v380
        %v3649 = vmul.f32 %v381, %v381
        %v3650 = vmul.f32 %v382, %v382
        %v3651 = vmul.f32 %v383, %v383
        %v3652 = vmul.f32 %v384, %v384
        %v3653 = vmul.f32 %v385, %v385
        %v3654 = vmul.f32 %v386, %v386
        %v3655 = vmul.f32 %v387, %v387
        %v3656 = vmul.f32 %v388, %v388
        %v3657 = vmul.f32 %v389, %v389
        %v3658 = vmul.f32 %v390, %v390
        %v3659 = vmul.f32 %v391, %v391
        %v3660 = vmul.f32 %v392, %v392
        %v3661 = vmul.f32 %v393, %v393
        %v3662 = vmul.f32 %v394, %v394
        %v3663 = vmul.f32 %v395, %v395
        %v3664 = vmul.f32 %v396, %v396
        %v3665 = vmul.f32 %v397, %v397
        %v3666 = vmul.f32 %v398, %v398
        %v3667 = vmul.f32 %v399, %v399
        %v3668 = vmul.f32 %v400, %v400
        %v3669 = vmul.f32 %v401, %v401
        %v3670 = vmul.f32 %v402, %v402
        %v3671 = vmul.f32 %v403, %v403
        %v3672 = vmul.f32 %v404, %v404
        %v3673 = vmul.f32 %v405, %v405
        %v3674 = vmul.f32 %v406, %v406
        %v3675 = vmul.f32 %v407, %v407
        %v3676 = vmul.f32 %v408, %v408
        %v3677 = vmul.f32 %v409, %v409
        %v3678 = vmul.f32 %v410, %v410
        %v3679 = vmul.f32 %v411, %v411
        %v3680 = vmul.f32 %v412, %v412
        %v3681 = vmul.f32 %v413, %v413
        %v3682 = vmul.f32 %v414, %v414
        %v3683 = vmul.f32 %v415, %v415
        %v3684 = vmul.f32 %v416, %v416
        %v3685 = vmul.f32 %v417, %v417
        %v3686 = vmul.f32 %v418, %v418
        %v3687 = vmul.f32 %v419, %v419
        %v3688 = vmul.f32 %v420, %v420
        %v3689 = vmul.f32 %v421, %v421
        %v3690 = vmul.f32 %v422, %v422
        %v3691 = vmul.f32 %v423, %v423
        %v3692 = vmul.f32 %v424, %v424
        %v3693 = vmul.f32 %v425, %v425
        %v3694 = vmul.f32 %v426, %v426
        %v3695 = vmul.f32 %v427, %v427
        %v3696 = vmul.f32 %v428, %v428
        %v3697 = vmul.f32 %v429, %v429
        %v3698 = vmul.f32 %v430, %v430
        %v3699 = vmul.f32 %v431, %v431
        %v3700 = vmul.f32 %v432, %v432
        %v3701 = vmul.f32 %v433, %v433
        %v3702 = vmul.f32 %v434, %v434
        %v3703 = vmul.f32 %v435, %v435
        %v3704 = vmul.f32 %v436, %v436
        %v3705 = vmul.f32 %v437, %v437
        %v3706 = vmul.f32 %v438, %v438
        %v3707 = vmul.f32 %v439, %v439
        %v3708 = vmul.f32 %v440, %v440
        %v3709 = vmul.f32 %v441, %v441
        %v3710 = vmul.f32 %v442, %v442
        %v3711 = vmul.f32 %v443, %v443
        %v3712 = vmul.f32 %v444, %v444
        %v3713 = vmul.f32 %v445, %v445
        %v3714 = vmul.f32 %v446, %v446
        %v3715 = vmul.f32 %v447, %v447
        %v3716 = vmul.f32 %v448, %v448
        %v3717 = vmul.f32 %v449, %v449
        %v3718 = vmul.f32 %v450, %v450
        %v3719 = vmul.f32 %v451, %v451
        %v3720 = vmul.f32 %v452, %v452
        %v3721 = vmul.f32 %v453, %v453
        %v3722 = vmul.f32 %v454, %v454
        %v3723 = vmul.f32 %v455, %v455
        %v3724 = vmul.f32 %v456, %v456
        %v3725 = vmul.f32 %v457, %v457
        %v3726 = vmul.f32 %v458, %v458
        %v3727 = vmul.f32 %v459, %v459
        %v3728 = vmul.f32 %v460, %v460
        %v3729 = vmul.f32 %v461, %v461
        %v3730 = vmul.f32 %v462, %v462
        %v3731 = vmul.f32 %v463, %v463
        %v3732 = vmul.f32 %v464, %v464
        %v3733 = vmul.f32 %v465, %v465
        %v3734 = vmul.f32 %v466, %v466
        %v3735 = vmul.f32 %v467, %v467
        %v3736 = vmul.f32 %v468, %v468
        %v3737 = vmul.f32 %v469, %v469
        %v3738 = vmul.f32 %v470, %v470
        %v3739 = vmul.f32 %v471, %v471
        %v3740 = vmul.f32 %v472, %v472
        %v3741 = vmul.f32 %v473, %v473
        %v3742 = vmul.f32 %v474, %v474
        %v3743 = vmul.f32 %v475, %v475
        %v3744 = vmul.f32 %v476, %v476
        %v3745 = vmul.f32 %v477, %v477
        %v3746 = vmul.f32 %v478, %v478
        %v3747 = vmul.f32 %v479, %v479
        %v3748 = vmul.f32 %v480, %v480
        %v3749 = vmul.f32 %v481, %v481
        %v3750 = vmul.f32 %v482, %v482
        %v3751 = vmul.f32 %v483, %v483
        %v3752 = vmul.f32 %v484, %v484
        %v3753 = vmul.f32 %v485, %v485
        %v3754 = vmul.f32 %v486, %v486
        %v3755 = vmul.f32 %v487, %v487
        %v3756 = vmul.f32 %v488, %v488
        %v3757 = vmul.f32 %v489, %v489
        %v3758 = vmul.f32 %v490, %v490
        %v3759 = vmul.f32 %v491, %v491
        %v3760 = vmul.f32 %v492, %v492
        %v3761 = vmul.f32 %v493, %v493
        %v3762 = vmul.f32 %v494, %v494
        %v3763 = vmul.f32 %v495, %v495
        %v3764 = vmul.f32 %v496, %v496
        %v3765 = vmul.f32 %v497, %v497
        %v3766 = vmul.f32 %v498, %v498
        %v3767 = vmul.f32 %v499, %v499
        %v3768 = vmul.f32 %v500, %v500
        %v3769 = vmul.f32 %v501, %v501
        %v3770 = vmul.f32 %v502, %v502
        %v3771 = vmul.f32 %v503, %v503
        %v3772 = vmul.f32 %v504, %v504
        %v3773 = vmul.f32 %v505, %v505
        %v3774 = vmul.f32 %v506, %v506
        %v3775 = vmul.f32 %v507, %v507
        %v3776 = vmul.f32 %v508, %v508
        %v3777 = vmul.f32 %v509, %v509
        %v3778 = vmul.f32 %v510, %v510
        %v3779 = vmul.f32 %v511, %v511
        %v3780 = vmul.f32 %v512, %v512
        %v3781 = vmul.f32 %v513, %v513
        %v3782 = vmul.f32 %v514, %v514
        %v3783 = vmul.f32 %v515, %v515
        %v3784 = vmul.f32 %v516, %v516
        %v3785 = vmul.f32 %v517, %v517
        %v3786 = vmul.f32 %v518, %v518
        %v3787 = vmul.f32 %v519, %v519
        %v3788 = vmul.f32 %v520, %v520
        %v3789 = vmul.f32 %v521, %v521
        %v3790 = vmul.f32 %v522, %v522
        %v3791 = vmul.f32 %v523, %v523
        %v3792 = vmul.f32 %v524, %v524
        %v3793 = vmul.f32 %v525, %v525
        %v3794 = vmul.f32 %v526, %v526
        %v3795 = vmul.f32 %v527, %v527
        %v3796 = vmul.f32 %v528, %v528
        %v3797 = vmul.f32 %v529, %v529
        %v3798 = vmul.f32 %v530, %v530
        %v3799 = vmul.f32 %v531, %v531
        %v3800 = vmul.f32 %v532, %v532
        %v3801 = vmul.f32 %v533, %v533
        %v3802 = vmul.f32 %v534, %v534
        %v3803 = vmul.f32 %v535, %v535
        %v3804 = vmul.f32 %v536, %v536
        %v3805 = vmul.f32 %v537, %v537
        %v3806 = vmul.f32 %v538, %v538
        %v3807 = vmul.f32 %v539, %v539
        %v3808 = vmul.f32 %v540, %v540
        %v3809 = vmul.f32 %v541, %v541
        %v3810 = vmul.f32 %v542, %v542
        %v3811 = vmul.f32 %v543, %v543
        %v3812 = vmul.f32 %v544, %v544
        %v3813 = vmul.f32 %v545, %v545
        %v3814 = vmul.f32 %v546, %v546
        %v3815 = vmul.f32 %v547, %v547
        %v3816 = vmul.f32 %v548, %v548
        %v3817 = vmul.f32 %v549, %v549
        %v3818 = vmul.f32 %v550, %v550
        %v3819 = vmul.f32 %v551, %v551
        %v3820 = vmul.f32 %v552, %v552
        %v3821 = vmul.f32 %v553, %v553
        %v3822 = vmul.f32 %v554, %v554
        %v3823 = vmul.f32 %v555, %v555
        %v3824 = vmul.f32 %v556, %v556
        %v3825 = vmul.f32 %v557, %v557
        %v3826 = vmul.f32 %v558, %v558
        %v3827 = vmul.f32 %v559, %v559
        %v3828 = vmul.f32 %v560, %v560
        %v3829 = vmul.f32 %v561, %v561
        %v3830 = vmul.f32 %v562, %v562
        %v3831 = vmul.f32 %v563, %v563
        %v3832 = vmul.f32 %v564, %v564
        %v3833 = vmul.f32 %v565, %v565
        %v3834 = vmul.f32 %v566, %v566
        %v3835 = vmul.f32 %v567, %v567
        %v3836 = vmul.f32 %v568, %v568
        %v3837 = vmul.f32 %v569, %v569
        %v3838 = vmul.f32 %v570, %v570
        %v3839 = vmul.f32 %v571, %v571
        %v3840 = vmul.f32 %v572, %v572
        %v3841 = vmul.f32 %v573, %v573
        %v3842 = vmul.f32 %v574, %v574
        %v3843 = vmul.f32 %v575, %v575
        %v3844 = vmul.f32 %v576, %v576
        %v3845 = vmul.f32 %v577, %v577
        %v3846 = vmul.f32 %v578, %v578
        %v3847 = vmul.f32 %v579, %v579
        %v3848 = vmul.f32 %v580, %v580
        %v3849 = vmul.f32 %v581, %v581
        %v3850 = vmul.f32 %v582, %v582
        %v3851 = vmul.f32 %v583, %v583
        %v3852 = vmul.f32 %v584, %v584
        %v3853 = vmul.f32 %v585, %v585
        %v3854 = vmul.f32 %v586, %v586
        %v3855 = vmul.f32 %v587, %v587
        %v3856 = vmul.f32 %v588, %v588
        %v3857 = vmul.f32 %v589, %v589
        %v3858 = vmul.f32 %v590, %v590
        %v3859 = vmul.f32 %v591, %v591
        %v3860 = vmul.f32 %v592, %v592
        %v3861 = vmul.f32 %v593, %v593
        %v3862 = vmul.f32 %v594, %v594
        %v3863 = vmul.f32 %v595, %v595
        %v3864 = vmul.f32 %v596, %v596
        %v3865 = vmul.f32 %v597, %v597
        %v3866 = vmul.f32 %v598, %v598
        %v3867 = vmul.f32 %v599, %v599
        %v3868 = vmul.f32 %v600, %v600
        %v3869 = vmul.f32 %v601, %v601
        %v3870 = vmul.f32 %v602, %v602
        %v3871 = vmul.f32 %v603, %v603
        %v3872 = vmul.f32 %v604, %v604
        %v3873 = vmul.f32 %v605, %v605
        %v3874 = vmul.f32 %v606, %v606
        %v3875 = vmul.f32 %v607, %v607
        %v3876 = vmul.f32 %v608, %v608
        %v3877 = vmul.f32 %v609, %v609
        %v3878 = vmul.f32 %v610, %v610
        %v3879 = vmul.f32 %v611, %v611
        %v3880 = vmul.f32 %v612, %v612
        %v3881 = vmul.f32 %v613, %v613
        %v3882 = vmul.f32 %v614, %v614
        %v3883 = vmul.f32 %v615, %v615
        %v3884 = vmul.f32 %v616, %v616
        %v3885 = vmul.f32 %v617, %v617
        %v3886 = vmul.f32 %v618, %v618
        %v3887 = vmul.f32 %v619, %v619
        %v3888 = vmul.f32 %v620, %v620
        %v3889 = vmul.f32 %v621, %v621
        %v3890 = vmul.f32 %v622, %v622
        %v3891 = vmul.f32 %v623, %v623
        %v3892 = vmul.f32 %v624, %v624
        %v3893 = vmul.f32 %v625, %v625
        %v3894 = vmul.f32 %v626, %v626
        %v3895 = vmul.f32 %v627, %v627
        %v3896 = vmul.f32 %v628, %v628
        %v3897 = vmul.f32 %v629, %v629
        %v3898 = vmul.f32 %v630, %v630
        %v3899 = vmul.f32 %v631, %v631
        %v3900 = vmul.f32 %v632, %v632
        %v3901 = vmul.f32 %v633, %v633
        %v3902 = vmul.f32 %v634, %v634
        %v3903 = vmul.f32 %v635, %v635
        %v3904 = vmul.f32 %v636, %v636
        %v3905 = vmul.f32 %v637, %v637
        %v3906 = vmul.f32 %v638, %v638
        %v3907 = vmul.f32 %v639, %v639
        %v3908 = vmul.f32 %v640, %v640
        %v3909 = vmul.f32 %v641, %v641
        %v3910 = vmul.f32 %v642, %v642
        %v3911 = vmul.f32 %v643, %v643
        %v3912 = vmul.f32 %v644, %v644
        %v3913 = vmul.f32 %v645, %v645
        %v3914 = vmul.f32 %v646, %v646
        %v3915 = vmul.f32 %v647, %v647
        %v3916 = vmul.f32 %v648, %v648
        %v3917 = vmul.f32 %v649, %v649
        %v3918 = vmul.f32 %v650, %v650
        %v3919 = vmul.f32 %v651, %v651
        %v3920 = vmul.f32 %v652, %v652
        %v3921 = vmul.f32 %v653, %v653
        %v3922 = vmul.f32 %v654, %v654
        %v3923 = vmul.f32 %v655, %v655
        %v3924 = vmul.f32 %v656, %v656
        %v3925 = vmul.f32 %v657, %v657
        %v3926 = vmul.f32 %v658, %v658
        %v3927 = vmul.f32 %v659, %v659
        %v3928 = vmul.f32 %v660, %v660
        %v3929 = vmul.f32 %v661, %v661
        %v3930 = vmul.f32 %v662, %v662
        %v3931 = vmul.f32 %v663, %v663
        %v3932 = vmul.f32 %v664, %v664
        %v3933 = vmul.f32 %v665, %v665
        %v3934 = vmul.f32 %v666, %v666
        %v3935 = vmul.f32 %v667, %v667
        %v3936 = vmul.f32 %v668, %v668
        %v3937 = vmul.f32 %v669, %v669
        %v3938 = vmul.f32 %v670, %v670
        %v3939 = vmul.f32 %v671, %v671
        %v3940 = vmul.f32 %v672, %v672
        %v3941 = vmul.f32 %v673, %v673
        %v3942 = vmul.f32 %v674, %v674
        %v3943 = vmul.f32 %v675, %v675
        %v3944 = vmul.f32 %v676, %v676
        %v3945 = vmul.f32 %v677, %v677
        %v3946 = vmul.f32 %v678, %v678
        %v3947 = vmul.f32 %v679, %v679
        %v3948 = vmul.f32 %v680, %v680
        %v3949 = vmul.f32 %v681, %v681
        %v3950 = vmul.f32 %v682, %v682
        %v3951 = vmul.f32 %v683, %v683
        %v3952 = vmul.f32 %v684, %v684
        %v3953 = vmul.f32 %v685, %v685
        %v3954 = vmul.f32 %v686, %v686
        %v3955 = vmul.f32 %v687, %v687
        %v3956 = vmul.f32 %v688, %v688
        %v3957 = vmul.f32 %v689, %v689
        %v3958 = vmul.f32 %v690, %v690
        %v3959 = vmul.f32 %v691, %v691
        %v3960 = vmul.f32 %v692, %v692
        %v3961 = vmul.f32 %v693, %v693
        %v3962 = vmul.f32 %v694, %v694
        %v3963 = vmul.f32 %v695, %v695
        %v3964 = vmul.f32 %v696, %v696
        %v3965 = vmul.f32 %v697, %v697
        %v3966 = vmul.f32 %v698, %v698
        %v3967 = vmul.f32 %v699, %v699
        %v3968 = vmul.f32 %v700, %v700
        %v3969 = vmul.f32 %v701, %v701
        %v3970 = vmul.f32 %v702, %v702
        %v3971 = vmul.f32 %v703, %v703
        %v3972 = vmul.f32 %v704, %v704
        %v3973 = vmul.f32 %v705, %v705
        %v3974 = vmul.f32 %v706, %v706
        %v3975 = vmul.f32 %v707, %v707
        %v3976 = vmul.f32 %v708, %v708
        %v3977 = vmul.f32 %v709, %v709
        %v3978 = vmul.f32 %v710, %v710
        %v3979 = vmul.f32 %v711, %v711
        %v3980 = vmul.f32 %v712, %v712
        %v3981 = vmul.f32 %v713, %v713
        %v3982 = vmul.f32 %v714, %v714
        %v3983 = vmul.f32 %v715, %v715
        %v3984 = vmul.f32 %v716, %v716
        %v3985 = vmul.f32 %v717, %v717
        %v3986 = vmul.f32 %v718, %v718
        %v3987 = vmul.f32 %v719, %v719
        %v3988 = vmul.f32 %v720, %v720
        %v3989 = vmul.f32 %v721, %v721
        %v3990 = vmul.f32 %v722, %v722
        %v3991 = vmul.f32 %v723, %v723
        %v3992 = vmul.f32 %v724, %v724
        %v3993 = vmul.f32 %v725, %v725
        %v3994 = vmul.f32 %v726, %v726
        %v3995 = vmul.f32 %v727, %v727
        %v3996 = vmul.f32 %v728, %v728
        %v3997 = vmul.f32 %v729, %v729
        %v3998 = vmul.f32 %v730, %v730
        %v3999 = vmul.f32 %v731, %v731
        %v4000 = vmul.f32 %v732, %v732
        %v4001 = vmul.f32 %v733, %v733
        %v4002 = vmul.f32 %v734, %v734
        %v4003 = vmul.f32 %v735, %v735
        %v4004 = vmul.f32 %v736, %v736
        %v4005 = vmul.f32 %v737, %v737
        %v4006 = vmul.f32 %v738, %v738
        %v4007 = vmul.f32 %v739, %v739
        %v4008 = vmul.f32 %v740, %v740
        %v4009 = vmul.f32 %v741, %v741
        %v4010 = vmul.f32 %v742, %v742
        %v4011 = vmul.f32 %v743, %v743
        %v4012 = vmul.f32 %v744, %v744
        %v4013 = vmul.f32 %v745, %v745
        %v4014 = vmul.f32 %v746, %v746
        %v4015 = vmul.f32 %v747, %v747
        %v4016 = vmul.f32 %v748, %v748
        %v4017 = vmul.f32 %v749, %v749
        %v4018 = vmul.f32 %v750, %v750
        %v4019 = vmul.f32 %v751, %v751
        %v4020 = vmul.f32 %v752, %v752
        %v4021 = vmul.f32 %v753, %v753
        %v4022 = vmul.f32 %v754, %v754
        %v4023 = vmul.f32 %v755, %v755
        %v4024 = vmul.f32 %v756, %v756
        %v4025 = vmul.f32 %v757, %v757
        %v4026 = vmul.f32 %v758, %v758
        %v4027 = vmul.f32 %v759, %v759
        %v4028 = vmul.f32 %v760, %v760
        %v4029 = vmul.f32 %v761, %v761
        %v4030 = vmul.f32 %v762, %v762
        %v4031 = vmul.f32 %v763, %v763
        %v4032 = vmul.f32 %v764, %v764
        %v4033 = vmul.f32 %v765, %v765
        %v4034 = vmul.f32 %v766, %v766
        %v4035 = vmul.f32 %v767, %v767
        %v4036 = vmul.f32 %v768, %v768
        %v4037 = vmul.f32 %v769, %v769
        %v4038 = vmul.f32 %v770, %v770
        %v4039 = vmul.f32 %v771, %v771
        %v4040 = vmul.f32 %v772, %v772
        %v4041 = vmul.f32 %v773, %v773
        %v4042 = vmul.f32 %v774, %v774
        %v4043 = vmul.f32 %v775, %v775
        %v4044 = vmul.f32 %v776, %v776
        %v4045 = vmul.f32 %v777, %v777
        %v4046 = vmul.f32 %v778, %v778
        %v4047 = vmul.f32 %v779, %v779
        %v4048 = vmul.f32 %v780, %v780
        %v4049 = vmul.f32 %v781, %v781
        %v4050 = vmul.f32 %v782, %v782
        %v4051 = vmul.f32 %v783, %v783
        %v4052 = vmul.f32 %v784, %v784
        %v4053 = vmul.f32 %v785, %v785
        %v4054 = vmul.f32 %v786, %v786
        %v4055 = vmul.f32 %v787, %v787
        %v4056 = vmul.f32 %v788, %v788
        %v4057 = vmul.f32 %v789, %v789
        %v4058 = vmul.f32 %v790, %v790
        %v4059 = vmul.f32 %v791, %v791
        %v4060 = vmul.f32 %v792, %v792
        %v4061 = vmul.f32 %v793, %v793
        %v4062 = vmul.f32 %v794, %v794
        %v4063 = vmul.f32 %v795, %v795
        %v4064 = vmul.f32 %v796, %v796
        %v4065 = vmul.f32 %v797, %v797
        %v4066 = vmul.f32 %v798, %v798
        %v4067 = vmul.f32 %v799, %v799
        %v4068 = vmul.f32 %v800, %v800
        %v4069 = vmul.f32 %v801, %v801
        %v4070 = vmul.f32 %v802, %v802
        %v4071 = vmul.f32 %v803, %v803
        %v4072 = vmul.f32 %v804, %v804
        %v4073 = vmul.f32 %v805, %v805
        %v4074 = vmul.f32 %v806, %v806
        %v4075 = vmul.f32 %v807, %v807
        %v4076 = vmul.f32 %v808, %v808
        %v4077 = vmul.f32 %v809, %v809
        %v4078 = vmul.f32 %v810, %v810
        %v4079 = vmul.f32 %v811, %v811
        %v4080 = vmul.f32 %v812, %v812
        %v4081 = vmul.f32 %v813, %v813
        %v4082 = vmul.f32 %v814, %v814
        %v4083 = vmul.f32 %v815, %v815
        %v4084 = vmul.f32 %v816, %v816
        %v4085 = vmul.f32 %v817, %v817
        %v4086 = vmul.f32 %v818, %v818
        %v4087 = vmul.f32 %v819, %v819
        %v4088 = vmul.f32 %v820, %v820
        %v4089 = vmul.f32 %v821, %v821
        %v4090 = vmul.f32 %v822, %v822
        %v4091 = vmul.f32 %v823, %v823
        %v4092 = vmul.f32 %v824, %v824
        %v4093 = vmul.f32 %v825, %v825
        %v4094 = vmul.f32 %v826, %v826
        %v4095 = vmul.f32 %v827, %v827
        %v4096 = vmul.f32 %v828, %v828
        %v4097 = vmul.f32 %v829, %v829
        %v4098 = vmul.f32 %v830, %v830
        %v4099 = vmul.f32 %v831, %v831
        %v4100 = vmul.f32 %v832, %v832
        %v4101 = vmul.f32 %v833, %v833
        %v4102 = vmul.f32 %v834, %v834
        %v4103 = vmul.f32 %v835, %v835
        %v4104 = vmul.f32 %v836, %v836
        %v4105 = vmul.f32 %v837, %v837
        %v4106 = vmul.f32 %v838, %v838
        %v4107 = vmul.f32 %v839, %v839
        %v4108 = vmul.f32 %v840, %v840
        %v4109 = vmul.f32 %v841, %v841
        %v4110 = vmul.f32 %v842, %v842
        %v4111 = vmul.f32 %v843, %v843
        %v4112 = vmul.f32 %v844, %v844
        %v4113 = vmul.f32 %v845, %v845
        %v4114 = vmul.f32 %v846, %v846
        %v4115 = vmul.f32 %v847, %v847
        %v4116 = vmul.f32 %v848, %v848
        %v4117 = vmul.f32 %v849, %v849
        %v4118 = vmul.f32 %v850, %v850
        %v4119 = vmul.f32 %v851, %v851
        %v4120 = vmul.f32 %v852, %v852
        %v4121 = vmul.f32 %v853, %v853
        %v4122 = vmul.f32 %v854, %v854
        %v4123 = vmul.f32 %v855, %v855
        %v4124 = vmul.f32 %v856, %v856
        %v4125 = vmul.f32 %v857, %v857
        %v4126 = vmul.f32 %v858, %v858
        %v4127 = vmul.f32 %v859, %v859
        %v4128 = vmul.f32 %v860, %v860
        %v4129 = vmul.f32 %v861, %v861
        %v4130 = vmul.f32 %v862, %v862
        %v4131 = vmul.f32 %v863, %v863
        %v4132 = vmul.f32 %v864, %v864
        %v4133 = vmul.f32 %v865, %v865
        %v4134 = vmul.f32 %v866, %v866
        %v4135 = vmul.f32 %v867, %v867
        %v4136 = vmul.f32 %v868, %v868
        %v4137 = vmul.f32 %v869, %v869
        %v4138 = vmul.f32 %v870, %v870
        %v4139 = vmul.f32 %v871, %v871
        %v4140 = vmul.f32 %v872, %v872
        %v4141 = vmul.f32 %v873, %v873
        %v4142 = vmul.f32 %v874, %v874
        %v4143 = vmul.f32 %v875, %v875
        %v4144 = vmul.f32 %v876, %v876
        %v4145 = vmul.f32 %v877, %v877
        %v4146 = vmul.f32 %v878, %v878
        %v4147 = vmul.f32 %v879, %v879
        %v4148 = vmul.f32 %v880, %v880
        %v4149 = vmul.f32 %v881, %v881
        %v4150 = vmul.f32 %v882, %v882
        %v4151 = vmul.f32 %v883, %v883
        %v4152 = vmul.f32 %v884, %v884
        %v4153 = vmul.f32 %v885, %v885
        %v4154 = vmul.f32 %v886, %v886
        %v4155 = vmul.f32 %v887, %v887
        %v4156 = vmul.f32 %v888, %v888
        %v4157 = vmul.f32 %v889, %v889
        %v4158 = vmul.f32 %v890, %v890
        %v4159 = vmul.f32 %v891, %v891
        %v4160 = vmul.f32 %v892, %v892
        %v4161 = vmul.f32 %v893, %v893
        %v4162 = vmul.f32 %v894, %v894
        %v4163 = vmul.f32 %v895, %v895
        %v4164 = vmul.f32 %v896, %v896
        %v4165 = vmul.f32 %v897, %v897
        %v4166 = vmul.f32 %v898, %v898
        %v4167 = vmul.f32 %v899, %v899
        %v4168 = vmul.f32 %v900, %v900
        %v4169 = vmul.f32 %v901, %v901
        %v4170 = vmul.f32 %v902, %v902
        %v4171 = vmul.f32 %v903, %v903
        %v4172 = vmul.f32 %v904, %v904
        %v4173 = vmul.f32 %v905, %v905
        %v4174 = vmul.f32 %v906, %v906
        %v4175 = vmul.f32 %v907, %v907
        %v4176 = vmul.f32 %v908, %v908
        %v4177 = vmul.f32 %v909, %v909
        %v4178 = vmul.f32 %v910, %v910
        %v4179 = vmul.f32 %v911, %v911
        %v4180 = vmul.f32 %v912, %v912
        %v4181 = vmul.f32 %v913, %v913
        %v4182 = vmul.f32 %v914, %v914
        %v4183 = vmul.f32 %v915, %v915
        %v4184 = vmul.f32 %v916, %v916
        %v4185 = vmul.f32 %v917, %v917
        %v4186 = vmul.f32 %v918, %v918
        %v4187 = vmul.f32 %v919, %v919
        %v4188 = vmul.f32 %v920, %v920
        %v4189 = vmul.f32 %v921, %v921
        %v4190 = vmul.f32 %v922, %v922
        %v4191 = vmul.f32 %v923, %v923
        %v4192 = vmul.f32 %v924, %v924
        %v4193 = vmul.f32 %v925, %v925
        %v4194 = vmul.f32 %v926, %v926
        %v4195 = vmul.f32 %v927, %v927
        %v4196 = vmul.f32 %v928, %v928
        %v4197 = vmul.f32 %v929, %v929
        %v4198 = vmul.f32 %v930, %v930
        %v4199 = vmul.f32 %v931, %v931
        %v4200 = vmul.f32 %v932, %v932
        %v4201 = vmul.f32 %v933, %v933
        %v4202 = vmul.f32 %v934, %v934
        %v4203 = vmul.f32 %v935, %v935
        %v4204 = vmul.f32 %v936, %v936
        %v4205 = vmul.f32 %v937, %v937
        %v4206 = vmul.f32 %v938, %v938
        %v4207 = vmul.f32 %v939, %v939
        %v4208 = vmul.f32 %v940, %v940
        %v4209 = vmul.f32 %v941, %v941
        %v4210 = vmul.f32 %v942, %v942
        %v4211 = vmul.f32 %v943, %v943
        %v4212 = vmul.f32 %v944, %v944
        %v4213 = vmul.f32 %v945, %v945
        %v4214 = vmul.f32 %v946, %v946
        %v4215 = vmul.f32 %v947, %v947
        %v4216 = vmul.f32 %v948, %v948
        %v4217 = vmul.f32 %v949, %v949
        %v4218 = vmul.f32 %v950, %v950
        %v4219 = vmul.f32 %v951, %v951
        %v4220 = vmul.f32 %v952, %v952
        %v4221 = vmul.f32 %v953, %v953
        %v4222 = vmul.f32 %v954, %v954
        %v4223 = vmul.f32 %v955, %v955
        %v4224 = vmul.f32 %v956, %v956
        %v4225 = vmul.f32 %v957, %v957
        %v4226 = vmul.f32 %v958, %v958
        %v4227 = vmul.f32 %v959, %v959
        %v4228 = vmul.f32 %v960, %v960
        %v4229 = vmul.f32 %v961, %v961
        %v4230 = vmul.f32 %v962, %v962
        %v4231 = vmul.f32 %v963, %v963
        %v4232 = vmul.f32 %v964, %v964
        %v4233 = vmul.f32 %v965, %v965
        %v4234 = vmul.f32 %v966, %v966
        %v4235 = vmul.f32 %v967, %v967
        %v4236 = vmul.f32 %v968, %v968
        %v4237 = vmul.f32 %v969, %v969
        %v4238 = vmul.f32 %v970, %v970
        %v4239 = vmul.f32 %v971, %v971
        %v4240 = vmul.f32 %v972, %v972
        %v4241 = vmul.f32 %v973, %v973
        %v4242 = vmul.f32 %v974, %v974
        %v4243 = vmul.f32 %v975, %v975
        %v4244 = vmul.f32 %v976, %v976
        %v4245 = vmul.f32 %v977, %v977
        %v4246 = vmul.f32 %v978, %v978
        %v4247 = vmul.f32 %v979, %v979
        %v4248 = vmul.f32 %v980, %v980
        %v4249 = vmul.f32 %v981, %v981
        %v4250 = vmul.f32 %v982, %v982
        %v4251 = vmul.f32 %v983, %v983
        %v4252 = vmul.f32 %v984, %v984
        %v4253 = vmul.f32 %v985, %v985
        %v4254 = vmul.f32 %v986, %v986
        %v4255 = vmul.f32 %v987, %v987
        %v4256 = vmul.f32 %v988, %v988
        %v4257 = vmul.f32 %v989, %v989
        %v4258 = vmul.f32 %v990, %v990
        %v4259 = vmul.f32 %v991, %v991
        %v4260 = vmul.f32 %v992, %v992
        %v4261 = vmul.f32 %v993, %v993
        %v4262 = vmul.f32 %v994, %v994
        %v4263 = vmul.f32 %v995, %v995
        %v4264 = vmul.f32 %v996, %v996
        %v4265 = vmul.f32 %v997, %v997
        %v4266 = vmul.f32 %v998, %v998
        %v4267 = vmul.f32 %v999, %v999
        %v4268 = vmul.f32 %v1000, %v1000
        %v4269 = vmul.f32 %v1001, %v1001
        %v4270 = vmul.f32 %v1002, %v1002
        %v4271 = vmul.f32 %v1003, %v1003
        %v4272 = vmul.f32 %v1004, %v1004
        %v4273 = vmul.f32 %v1005, %v1005
        %v4274 = vmul.f32 %v1006, %v1006
        %v4275 = vmul.f32 %v1007, %v1007
        %v4276 = vmul.f32 %v1008, %v1008
        %v4277 = vmul.f32 %v1009, %v1009
        %v4278 = vmul.f32 %v1010, %v1010
        %v4279 = vmul.f32 %v1011, %v1011
        %v4280 = vmul.f32 %v1012, %v1012
        %v4281 = vmul.f32 %v1013, %v1013
        %v4282 = vmul.f32 %v1014, %v1014
        %v4283 = vmul.f32 %v1015, %v1015
        %v4284 = vmul.f32 %v1016, %v1016
        %v4285 = vmul.f32 %v1017, %v1017
        %v4286 = vmul.f32 %v1018, %v1018
        %v4287 = vmul.f32 %v1019, %v1019
        %v4288 = vmul.f32 %v1020, %v1020
        %v4289 = vmul.f32 %v1021, %v1021
        %v4290 = vmul.f32 %v1022, %v1022
        %v4291 = vmul.f32 %v1023, %v1023
        %v4292 = vmul.f32 %v1024, %v1024
        %v4293 = vmul.f32 %v1025, %v1025
        %v4294 = vmul.f32 %v1026, %v1026
        %v4295 = vmul.f32 %v1027, %v1027
        %v4296 = vmul.f32 %v1028, %v1028
        %v4297 = vmul.f32 %v1029, %v1029
        %v4298 = vmul.f32 %v1030, %v1030
        %v4299 = vmul.f32 %v1031, %v1031
        %v4300 = vmul.f32 %v1032, %v1032
        %v4301 = vmul.f32 %v1033, %v1033
        %v4302 = vmul.f32 %v1034, %v1034
        %v4303 = vmul.f32 %v1035, %v1035
        %v4304 = vmul.f32 %v1036, %v1036
        %v4305 = vmul.f32 %v1037, %v1037
        %v4306 = vmul.f32 %v1038, %v1038
        %v4307 = vmul.f32 %v1039, %v1039
        %v4308 = vmul.f32 %v1040, %v1040
        %v4309 = vmul.f32 %v1041, %v1041
        %v4310 = vmul.f32 %v1042, %v1042
        %v4311 = vmul.f32 %v1043, %v1043
        %v4312 = vmul.f32 %v1044, %v1044
        %v4313 = vmul.f32 %v1045, %v1045
        %v4314 = vmul.f32 %v1046, %v1046
        %v4315 = vmul.f32 %v1047, %v1047
        %v4316 = vmul.f32 %v1048, %v1048
        %v4317 = vmul.f32 %v1049, %v1049
        %v4318 = vmul.f32 %v1050, %v1050
        %v4319 = vmul.f32 %v1051, %v1051
        %v4320 = vmul.f32 %v1052, %v1052
        %v4321 = vmul.f32 %v1053, %v1053
        %v4322 = vmul.f32 %v1054, %v1054
        %v4323 = vmul.f32 %v1055, %v1055
        %v4324 = vmul.f32 %v1056, %v1056
        %v4325 = vmul.f32 %v1057, %v1057
        %v4326 = vmul.f32 %v1058, %v1058
        %v4327 = vmul.f32 %v1059, %v1059
        %v4328 = vmul.f32 %v1060, %v1060
        %v4329 = vmul.f32 %v1061, %v1061
        %v4330 = vmul.f32 %v1062, %v1062
        %v4331 = vmul.f32 %v1063, %v1063
        %v4332 = vmul.f32 %v1064, %v1064
        %v4333 = vmul.f32 %v1065, %v1065
        %v4334 = vmul.f32 %v1066, %v1066
        %v4335 = vmul.f32 %v1067, %v1067
        %v4336 = vmul.f32 %v1068, %v1068
        %v4337 = vmul.f32 %v1069, %v1069
        %v4338 = vmul.f32 %v1070, %v1070
        %v4339 = vmul.f32 %v1071, %v1071
        %v4340 = vmul.f32 %v1072, %v1072
        %v4341 = vmul.f32 %v1073, %v1073
        %v4342 = vmul.f32 %v1074, %v1074
        %v4343 = vmul.f32 %v1075, %v1075
        %v4344 = vmul.f32 %v1076, %v1076
        %v4345 = vmul.f32 %v1077, %v1077
        %v4346 = vmul.f32 %v1078, %v1078
        %v4347 = vmul.f32 %v1079, %v1079
        %v4348 = vmul.f32 %v1080, %v1080
        %v4349 = vmul.f32 %v1081, %v1081
        %v4350 = vmul.f32 %v1082, %v1082
        %v4351 = vmul.f32 %v1083, %v1083
        %v4352 = vmul.f32 %v1084, %v1084
        %v4353 = vmul.f32 %v1085, %v1085
        %v4354 = vmul.f32 %v1086, %v1086
        %v4355 = vmul.f32 %v1087, %v1087
        %v4356 = vmul.f32 %v1088, %v1088
        %v4357 = vmul.f32 %v1089, %v1089
        %v4358 = vmul.f32 %v1090, %v1090
        %v4359 = vmul.f32 %v1091, %v1091
        %v4360 = vmul.f32 %v1092, %v1092
        %v4361 = vmul.f32 %v1093, %v1093
        %v4362 = vmul.f32 %v1094, %v1094
        %v4363 = vmul.f32 %v1095, %v1095
        %v4364 = vmul.f32 %v1096, %v1096
        %v4365 = vmul.f32 %v1097, %v1097
        %v4366 = vmul.f32 %v1098, %v1098
        %v4367 = vmul.f32 %v1099, %v1099
        %v4368 = vmul.f32 %v1100, %v1100
        %v4369 = vmul.f32 %v1101, %v1101
        %v4370 = vmul.f32 %v1102, %v1102
        %v4371 = vmul.f32 %v1103, %v1103
        %v4372 = vmul.f32 %v1104, %v1104
        %v4373 = vmul.f32 %v1105, %v1105
        %v4374 = vmul.f32 %v1106, %v1106
        %v4375 = vmul.f32 %v1107, %v1107
        %v4376 = vmul.f32 %v1108, %v1108
        %v4377 = vmul.f32 %v1109, %v1109
        %v4378 = vmul.f32 %v1110, %v1110
        %v4379 = vmul.f32 %v1111, %v1111
        %v4380 = vmul.f32 %v1112, %v1112
        %v4381 = vmul.f32 %v1113, %v1113
        %v4382 = vmul.f32 %v1114, %v1114
        %v4383 = vmul.f32 %v1115, %v1115
        %v4384 = vmul.f32 %v1116, %v1116
        %v4385 = vmul.f32 %v1117, %v1117
        %v4386 = vmul.f32 %v1118, %v1118
        %v4387 = vmul.f32 %v1119, %v1119
        %v4388 = vmul.f32 %v1120, %v1120
        %v4389 = vmul.f32 %v1121, %v1121
        %v4390 = vmul.f32 %v1122, %v1122
        %v4391 = vmul.f32 %v1123, %v1123
        %v4392 = vmul.f32 %v1124, %v1124
        %v4393 = vmul.f32 %v1125, %v1125
        %v4394 = vmul.f32 %v1126, %v1126
        %v4395 = vmul.f32 %v1127, %v1127
        %v4396 = vmul.f32 %v1128, %v1128
        %v4397 = vmul.f32 %v1129, %v1129
        %v4398 = vmul.f32 %v1130, %v1130
        %v4399 = vmul.f32 %v1131, %v1131
        %v4400 = vmul.f32 %v1132, %v1132
        %v4401 = vmul.f32 %v1133, %v1133
        %v4402 = vmul.f32 %v1134, %v1134
        %v4403 = vmul.f32 %v1135, %v1135
        %v4404 = vmul.f32 %v1136, %v1136
        %v4405 = vmul.f32 %v1137, %v1137
        %v4406 = vmul.f32 %v1138, %v1138
        %v4407 = vmul.f32 %v1139, %v1139
        %v4408 = vmul.f32 %v1140, %v1140
        %v4409 = vmul.f32 %v1141, %v1141
        %v4410 = vmul.f32 %v1142, %v1142
        %v4411 = vmul.f32 %v1143, %v1143
        %v4412 = vmul.f32 %v1144, %v1144
        %v4413 = vmul.f32 %v1145, %v1145
        %v4414 = vmul.f32 %v1146, %v1146
        %v4415 = vmul.f32 %v1147, %v1147
        %v4416 = vmul.f32 %v1148, %v1148
        %v4417 = vmul.f32 %v1149, %v1149
        %v4418 = vmul.f32 %v1150, %v1150
        %v4419 = vmul.f32 %v1151, %v1151
        %v4420 = vmul.f32 %v1152, %v1152
        %v4421 = vmul.f32 %v1153, %v1153
        %v4422 = vmul.f32 %v1154, %v1154
        %v4423 = vmul.f32 %v1155, %v1155
        %v4424 = vmul.f32 %v1156, %v1156
        %v4425 = vmul.f32 %v1157, %v1157
        %v4426 = vmul.f32 %v1158, %v1158
        %v4427 = vmul.f32 %v1159, %v1159
        %v4428 = vmul.f32 %v1160, %v1160
        %v4429 = vmul.f32 %v1161, %v1161
        %v4430 = vmul.f32 %v1162, %v1162
        %v4431 = vmul.f32 %v1163, %v1163
        %v4432 = vmul.f32 %v1164, %v1164
        %v4433 = vmul.f32 %v1165, %v1165
        %v4434 = vmul.f32 %v1166, %v1166
        %v4435 = vmul.f32 %v1167, %v1167
        %v4436 = vmul.f32 %v1168, %v1168
        %v4437 = vmul.f32 %v1169, %v1169
        %v4438 = vmul.f32 %v1170, %v1170
        %v4439 = vmul.f32 %v1171, %v1171
        %v4440 = vmul.f32 %v1172, %v1172
        %v4441 = vmul.f32 %v1173, %v1173
        %v4442 = vmul.f32 %v1174, %v1174
        %v4443 = vmul.f32 %v1175, %v1175
        %v4444 = vmul.f32 %v1176, %v1176
        %v4445 = vmul.f32 %v1177, %v1177
        %v4446 = vmul.f32 %v1178, %v1178
        %v4447 = vmul.f32 %v1179, %v1179
        %v4448 = vmul.f32 %v1180, %v1180
        %v4449 = vmul.f32 %v1181, %v1181
        %v4450 = vmul.f32 %v1182, %v1182
        %v4451 = vmul.f32 %v1183, %v1183
        %v4452 = vmul.f32 %v1184, %v1184
        %v4453 = vmul.f32 %v1185, %v1185
        %v4454 = vmul.f32 %v1186, %v1186
        %v4455 = vmul.f32 %v1187, %v1187
        %v4456 = vmul.f32 %v1188, %v1188
        %v4457 = vmul.f32 %v1189, %v1189
        %v4458 = vmul.f32 %v1190, %v1190
        %v4459 = vmul.f32 %v1191, %v1191
        %v4460 = vmul.f32 %v1192, %v1192
        %v4461 = vmul.f32 %v1193, %v1193
        %v4462 = vmul.f32 %v1194, %v1194
        %v4463 = vmul.f32 %v1195, %v1195
        %v4464 = vmul.f32 %v1196, %v1196
        %v4465 = vmul.f32 %v1197, %v1197
        %v4466 = vmul.f32 %v1198, %v1198
        %v4467 = vmul.f32 %v1199, %v1199
        %v4468 = vmul.f32 %v1200, %v1200
        %v4469 = vmul.f32 %v1201, %v1201
        %v4470 = vmul.f32 %v1202, %v1202
        %v4471 = vmul.f32 %v1203, %v1203
        %v4472 = vmul.f32 %v1204, %v1204
        %v4473 = vmul.f32 %v1205, %v1205
        %v4474 = vmul.f32 %v1206, %v1206
        %v4475 = vmul.f32 %v1207, %v1207
        %v4476 = vmul.f32 %v1208, %v1208
        %v4477 = vmul.f32 %v1209, %v1209
        %v4478 = vmul.f32 %v1210, %v1210
        %v4479 = vmul.f32 %v1211, %v1211
        %v4480 = vmul.f32 %v1212, %v1212
        %v4481 = vmul.f32 %v1213, %v1213
        %v4482 = vmul.f32 %v1214, %v1214
        %v4483 = vmul.f32 %v1215, %v1215
        %v4484 = vmul.f32 %v1216, %v1216
        %v4485 = vmul.f32 %v1217, %v1217
        %v4486 = vmul.f32 %v1218, %v1218
        %v4487 = vmul.f32 %v1219, %v1219
        %v4488 = vmul.f32 %v1220, %v1220
        %v4489 = vmul.f32 %v1221, %v1221
        %v4490 = vmul.f32 %v1222, %v1222
        %v4491 = vmul.f32 %v1223, %v1223
        %v4492 = vmul.f32 %v1224, %v1224
        %v4493 = vmul.f32 %v1225, %v1225
        %v4494 = vmul.f32 %v1226, %v1226
        %v4495 = vmul.f32 %v1227, %v1227
        %v4496 = vmul.f32 %v1228, %v1228
        %v4497 = vmul.f32 %v1229, %v1229
        %v4498 = vmul.f32 %v1230, %v1230
        %v4499 = vmul.f32 %v1231, %v1231
        %v4500 = vmul.f32 %v1232, %v1232
        %v4501 = vmul.f32 %v1233, %v1233
        %v4502 = vmul.f32 %v1234, %v1234
        %v4503 = vmul.f32 %v1235, %v1235
        %v4504 = vmul.f32 %v1236, %v1236
        %v4505 = vmul.f32 %v1237, %v1237
        %v4506 = vmul.f32 %v1238, %v1238
        %v4507 = vmul.f32 %v1239, %v1239
        %v4508 = vmul.f32 %v1240, %v1240
        %v4509 = vmul.f32 %v1241, %v1241
        %v4510 = vmul.f32 %v1242, %v1242
        %v4511 = vmul.f32 %v1243, %v1243
        %v4512 = vmul.f32 %v1244, %v1244
        %v4513 = vmul.f32 %v1245, %v1245
        %v4514 = vmul.f32 %v1246, %v1246
        %v4515 = vmul.f32 %v1247, %v1247
        %v4516 = vmul.f32 %v1248, %v1248
        %v4517 = vmul.f32 %v1249, %v1249
        %v4518 = vmul.f32 %v1250, %v1250
        %v4519 = vmul.f32 %v1251, %v1251
        %v4520 = vmul.f32 %v1252, %v1252
        %v4521 = vmul.f32 %v1253, %v1253
        %v4522 = vmul.f32 %v1254, %v1254
        %v4523 = vmul.f32 %v1255, %v1255
        %v4524 = vmul.f32 %v1256, %v1256
        %v4525 = vmul.f32 %v1257, %v1257
        %v4526 = vmul.f32 %v1258, %v1258
        %v4527 = vmul.f32 %v1259, %v1259
        %v4528 = vmul.f32 %v1260, %v1260
        %v4529 = vmul.f32 %v1261, %v1261
        %v4530 = vmul.f32 %v1262, %v1262
        %v4531 = vmul.f32 %v1263, %v1263
        %v4532 = vmul.f32 %v1264, %v1264
        %v4533 = vmul.f32 %v1265, %v1265
        %4534 = vmatprep.subr.mxu0 %v3511
        %4535 = vmatpush1.xpose.msra.mxu0 %v3510
        %4536 = vmatprep.subr.mxu0 %v3575
        %4537 = vmatpush1.xpose.msra.mxu0 %v3574
        %4538 = vmatprep.subr.mxu0 %v3639
        %4539 = vmatpush1.xpose.msra.mxu0 %v3638
        %4540 = vmatprep.subr.mxu0 %v3703
        %4541 = vmatpush1.xpose.msra.mxu0 %v3702
        %4542 = vmatprep.subr.mxu0 %v3767
        %4543 = vmatpush1.xpose.msra.mxu0 %v3766
        %4544 = vmatprep.subr.mxu0 %v3831
        %4545 = vmatpush1.xpose.msra.mxu0 %v3830
        %4546 = vmatprep.subr.mxu0 %v3895
        %4547 = vmatpush1.xpose.msra.mxu0 %v3894
        %4548 = vmatprep.subr.mxu0 %v3959
        %4549 = vmatpush1.xpose.msra.mxu0 %v3958
        %4550 = vmatprep.subr.mxu0 %v4023
        %4551 = vmatpush1.xpose.msra.mxu0 %v4022
        %4552 = vmatprep.subr.mxu0 %v4087
        %4553 = vmatpush1.xpose.msra.mxu0 %v4086
        %4554 = vmatprep.subr.mxu0 %v4151
        %4555 = vmatpush1.xpose.msra.mxu0 %v4150
        %4556 = vmatprep.subr.mxu0 %v4215
        %4557 = vmatpush1.xpose.msra.mxu0 %v4214
        %4558 = vmatprep.subr.mxu0 %v4279
        %4559 = vmatpush1.xpose.msra.mxu0 %v4278
        %4560 = vmatprep.subr.mxu0 %v4343
        %4561 = vmatpush1.xpose.msra.mxu0 %v4342
        %4562 = vmatprep.subr.mxu0 %v4407
        %4563 = vmatpush1.xpose.msra.mxu0 %v4406
        %4564 = vmatprep.subr.mxu0 %v4471
        %4565 = vmatpush1.xpose.msra.mxu0 %v4470
        %4566 = vmatprep.subr.mxu0 0.0
        %4567 = vmatpush1.xpose.msra.mxu0 0.0
        %4568 = vmatprep.subr.mxu0 0.0
        %4569 = vmatpush1.xpose.msra.mxu0 0.0
        %4570 = vmatprep.subr.mxu0 0.0
        %4571 = vmatpush1.xpose.msra.mxu0 0.0
        %4572 = vmatprep.subr.mxu0 0.0
        %4573 = vmatpush1.xpose.msra.mxu0 0.0
        %4574 = vmatprep.subr.mxu0 0.0
        %4575 = vmatpush1.xpose.msra.mxu0 0.0
        %4576 = vmatprep.subr.mxu0 0.0
        %4577 = vmatpush1.xpose.msra.mxu0 0.0
        %4578 = vmatprep.subr.mxu0 0.0
        %4579 = vmatpush1.xpose.msra.mxu0 0.0
        %4580 = vmatprep.subr.mxu0 0.0
        %4581 = vmatpush1.xpose.msra.mxu0 0.0
        %4582 = vmatprep.subr.mxu0 0.0
        %4583 = vmatpush1.xpose.msra.mxu0 0.0
        %4584 = vmatprep.subr.mxu0 0.0
        %4585 = vmatpush1.xpose.msra.mxu0 0.0
        %4586 = vmatprep.subr.mxu0 0.0
        %4587 = vmatpush1.xpose.msra.mxu0 0.0
        %4588 = vmatprep.subr.mxu0 0.0
        %4589 = vmatpush1.xpose.msra.mxu0 0.0
        %4590 = vmatprep.subr.mxu0 0.0
        %4591 = vmatpush1.xpose.msra.mxu0 0.0
        %4592 = vmatprep.subr.mxu0 0.0
        %4593 = vmatpush1.xpose.msra.mxu0 0.0
        %4594 = vmatprep.subr.mxu0 0.0
        %4595 = vmatpush1.xpose.msra.mxu0 0.0
        %4596 = vmatprep.subr.mxu0 0.0
        %4597 = vmatpush1.xpose.msra.mxu0 0.0
        %4598 = vmatprep.mubr.f32.mxu0 1.0
        %4599 = vmatmul.mubr.f32.gmra.mrb[0].mxu0 1.0
        %v4600 = vpop.f32.mrb[0].mxu0
        %v4601 = vadd.f32 0.0, %v4600
        %v4602 = vpop.f32.mrb[0].mxu0
        %4603 = vdwg.mxu0
        %4604 = vmatprep.subr.mxu0 %v3513
        %4605 = vmatpush1.xpose.msra.mxu0 %v3512
        %4606 = vmatprep.subr.mxu0 %v3577
        %4607 = vmatpush1.xpose.msra.mxu0 %v3576
        %4608 = vmatprep.subr.mxu0 %v3641
        %4609 = vmatpush1.xpose.msra.mxu0 %v3640
        %4610 = vmatprep.subr.mxu0 %v3705
        %4611 = vmatpush1.xpose.msra.mxu0 %v3704
        %4612 = vmatprep.subr.mxu0 %v3769
        %4613 = vmatpush1.xpose.msra.mxu0 %v3768
        %4614 = vmatprep.subr.mxu0 %v3833
        %4615 = vmatpush1.xpose.msra.mxu0 %v3832
        %4616 = vmatprep.subr.mxu0 %v3897
        %4617 = vmatpush1.xpose.msra.mxu0 %v3896
        %4618 = vmatprep.subr.mxu0 %v3961
        %4619 = vmatpush1.xpose.msra.mxu0 %v3960
        %4620 = vmatprep.subr.mxu0 %v4025
        %4621 = vmatpush1.xpose.msra.mxu0 %v4024
        %4622 = vmatprep.subr.mxu0 %v4089
        %4623 = vmatpush1.xpose.msra.mxu0 %v4088
        %4624 = vmatprep.subr.mxu0 %v4153
        %4625 = vmatpush1.xpose.msra.mxu0 %v4152
        %4626 = vmatprep.subr.mxu0 %v4217
        %4627 = vmatpush1.xpose.msra.mxu0 %v4216
        %4628 = vmatprep.subr.mxu0 %v4281
        %4629 = vmatpush1.xpose.msra.mxu0 %v4280
        %4630 = vmatprep.subr.mxu0 %v4345
        %4631 = vmatpush1.xpose.msra.mxu0 %v4344
        %4632 = vmatprep.subr.mxu0 %v4409
        %4633 = vmatpush1.xpose.msra.mxu0 %v4408
        %4634 = vmatprep.subr.mxu0 %v4473
        %4635 = vmatpush1.xpose.msra.mxu0 %v4472
        %4636 = vmatprep.subr.mxu0 0.0
        %4637 = vmatpush1.xpose.msra.mxu0 0.0
        %4638 = vmatprep.subr.mxu0 0.0
        %4639 = vmatpush1.xpose.msra.mxu0 0.0
        %4640 = vmatprep.subr.mxu0 0.0
        %4641 = vmatpush1.xpose.msra.mxu0 0.0
        %4642 = vmatprep.subr.mxu0 0.0
        %4643 = vmatpush1.xpose.msra.mxu0 0.0
        %4644 = vmatprep.subr.mxu0 0.0
        %4645 = vmatpush1.xpose.msra.mxu0 0.0
        %4646 = vmatprep.subr.mxu0 0.0
        %4647 = vmatpush1.xpose.msra.mxu0 0.0
        %4648 = vmatprep.subr.mxu0 0.0
        %4649 = vmatpush1.xpose.msra.mxu0 0.0
        %4650 = vmatprep.subr.mxu0 0.0
        %4651 = vmatpush1.xpose.msra.mxu0 0.0
        %4652 = vmatprep.subr.mxu0 0.0
        %4653 = vmatpush1.xpose.msra.mxu0 0.0
        %4654 = vmatprep.subr.mxu0 0.0
        %4655 = vmatpush1.xpose.msra.mxu0 0.0
        %4656 = vmatprep.subr.mxu0 0.0
        %4657 = vmatpush1.xpose.msra.mxu0 0.0
        %4658 = vmatprep.subr.mxu0 0.0
        %4659 = vmatpush1.xpose.msra.mxu0 0.0
        %4660 = vmatprep.subr.mxu0 0.0
        %4661 = vmatpush1.xpose.msra.mxu0 0.0
        %4662 = vmatprep.subr.mxu0 0.0
        %4663 = vmatpush1.xpose.msra.mxu0 0.0
        %4664 = vmatprep.subr.mxu0 0.0
        %4665 = vmatpush1.xpose.msra.mxu0 0.0
        %4666 = vmatprep.subr.mxu0 0.0
        %4667 = vmatpush1.xpose.msra.mxu0 0.0
        %4668 = vmatprep.mubr.f32.mxu0 1.0
        %4669 = vmatmul.mubr.f32.gmra.mrb[0].mxu0 1.0
        %v4670 = vpop.f32.mrb[0].mxu0
        %v4671 = vadd.f32 %v4601, %v4670
        %v4672 = vpop.f32.mrb[0].mxu0
        %4673 = vdwg.mxu0
        %4674 = vmatprep.subr.mxu0 %v3515
        %4675 = vmatpush1.xpose.msra.mxu0 %v3514
        %4676 = vmatprep.subr.mxu0 %v3579
        %4677 = vmatpush1.xpose.msra.mxu0 %v3578
        %4678 = vmatprep.subr.mxu0 %v3643
        %4679 = vmatpush1.xpose.msra.mxu0 %v3642
        %4680 = vmatprep.subr.mxu0 %v3707
        %4681 = vmatpush1.xpose.msra.mxu0 %v3706
        %4682 = vmatprep.subr.mxu0 %v3771
        %4683 = vmatpush1.xpose.msra.mxu0 %v3770
        %4684 = vmatprep.subr.mxu0 %v3835
        %4685 = vmatpush1.xpose.msra.mxu0 %v3834
        %4686 = vmatprep.subr.mxu0 %v3899
        %4687 = vmatpush1.xpose.msra.mxu0 %v3898
        %4688 = vmatprep.subr.mxu0 %v3963
        %4689 = vmatpush1.xpose.msra.mxu0 %v3962
        %4690 = vmatprep.subr.mxu0 %v4027
        %4691 = vmatpush1.xpose.msra.mxu0 %v4026
        %4692 = vmatprep.subr.mxu0 %v4091
        %4693 = vmatpush1.xpose.msra.mxu0 %v4090
        %4694 = vmatprep.subr.mxu0 %v4155
        %4695 = vmatpush1.xpose.msra.mxu0 %v4154
        %4696 = vmatprep.subr.mxu0 %v4219
        %4697 = vmatpush1.xpose.msra.mxu0 %v4218
        %4698 = vmatprep.subr.mxu0 %v4283
        %4699 = vmatpush1.xpose.msra.mxu0 %v4282
        %4700 = vmatprep.subr.mxu0 %v4347
        %4701 = vmatpush1.xpose.msra.mxu0 %v4346
        %4702 = vmatprep.subr.mxu0 %v4411
        %4703 = vmatpush1.xpose.msra.mxu0 %v4410
        %4704 = vmatprep.subr.mxu0 %v4475
        %4705 = vmatpush1.xpose.msra.mxu0 %v4474
        %4706 = vmatprep.subr.mxu0 0.0
        %4707 = vmatpush1.xpose.msra.mxu0 0.0
        %4708 = vmatprep.subr.mxu0 0.0
        %4709 = vmatpush1.xpose.msra.mxu0 0.0
        %4710 = vmatprep.subr.mxu0 0.0
        %4711 = vmatpush1.xpose.msra.mxu0 0.0
        %4712 = vmatprep.subr.mxu0 0.0
        %4713 = vmatpush1.xpose.msra.mxu0 0.0
        %4714 = vmatprep.subr.mxu0 0.0
        %4715 = vmatpush1.xpose.msra.mxu0 0.0
        %4716 = vmatprep.subr.mxu0 0.0
        %4717 = vmatpush1.xpose.msra.mxu0 0.0
        %4718 = vmatprep.subr.mxu0 0.0
        %4719 = vmatpush1.xpose.msra.mxu0 0.0
        %4720 = vmatprep.subr.mxu0 0.0
        %4721 = vmatpush1.xpose.msra.mxu0 0.0
        %4722 = vmatprep.subr.mxu0 0.0
        %4723 = vmatpush1.xpose.msra.mxu0 0.0
        %4724 = vmatprep.subr.mxu0 0.0
        %4725 = vmatpush1.xpose.msra.mxu0 0.0
        %4726 = vmatprep.subr.mxu0 0.0
        %4727 = vmatpush1.xpose.msra.mxu0 0.0
        %4728 = vmatprep.subr.mxu0 0.0
        %4729 = vmatpush1.xpose.msra.mxu0 0.0
        %4730 = vmatprep.subr.mxu0 0.0
        %4731 = vmatpush1.xpose.msra.mxu0 0.0
        %4732 = vmatprep.subr.mxu0 0.0
        %4733 = vmatpush1.xpose.msra.mxu0 0.0
        %4734 = vmatprep.subr.mxu0 0.0
        %4735 = vmatpush1.xpose.msra.mxu0 0.0
        %4736 = vmatprep.subr.mxu0 0.0
        %4737 = vmatpush1.xpose.msra.mxu0 0.0
        %4738 = vmatprep.mubr.f32.mxu0 1.0
        %4739 = vmatmul.mubr.f32.gmra.mrb[0].mxu0 1.0
        %v4740 = vpop.f32.mrb[0].mxu0
        %v4741 = vadd.f32 %v4671, %v4740
        %v4742 = vpop.f32.mrb[0].mxu0
        %4743 = vdwg.mxu0
        %4744 = vmatprep.subr.mxu0 %v3517
        %4745 = vmatpush1.xpose.msra.mxu0 %v3516
        %4746 = vmatprep.subr.mxu0 %v3581
        %4747 = vmatpush1.xpose.msra.mxu0 %v3580
        %4748 = vmatprep.subr.mxu0 %v3645
        %4749 = vmatpush1.xpose.msra.mxu0 %v3644
        %4750 = vmatprep.subr.mxu0 %v3709
        %4751 = vmatpush1.xpose.msra.mxu0 %v3708
        %4752 = vmatprep.subr.mxu0 %v3773
        %4753 = vmatpush1.xpose.msra.mxu0 %v3772
        %4754 = vmatprep.subr.mxu0 %v3837
        %4755 = vmatpush1.xpose.msra.mxu0 %v3836
        %4756 = vmatprep.subr.mxu0 %v3901
        %4757 = vmatpush1.xpose.msra.mxu0 %v3900
        %4758 = vmatprep.subr.mxu0 %v3965
        %4759 = vmatpush1.xpose.msra.mxu0 %v3964
        %4760 = vmatprep.subr.mxu0 %v4029
        %4761 = vmatpush1.xpose.msra.mxu0 %v4028
        %4762 = vmatprep.subr.mxu0 %v4093
        %4763 = vmatpush1.xpose.msra.mxu0 %v4092
        %4764 = vmatprep.subr.mxu0 %v4157
        %4765 = vmatpush1.xpose.msra.mxu0 %v4156
        %4766 = vmatprep.subr.mxu0 %v4221
        %4767 = vmatpush1.xpose.msra.mxu0 %v4220
        %4768 = vmatprep.subr.mxu0 %v4285
        %4769 = vmatpush1.xpose.msra.mxu0 %v4284
        %4770 = vmatprep.subr.mxu0 %v4349
        %4771 = vmatpush1.xpose.msra.mxu0 %v4348
        %4772 = vmatprep.subr.mxu0 %v4413
        %4773 = vmatpush1.xpose.msra.mxu0 %v4412
        %4774 = vmatprep.subr.mxu0 %v4477
        %4775 = vmatpush1.xpose.msra.mxu0 %v4476
        %4776 = vmatprep.subr.mxu0 0.0
        %4777 = vmatpush1.xpose.msra.mxu0 0.0
        %4778 = vmatprep.subr.mxu0 0.0
        %4779 = vmatpush1.xpose.msra.mxu0 0.0
        %4780 = vmatprep.subr.mxu0 0.0
        %4781 = vmatpush1.xpose.msra.mxu0 0.0
        %4782 = vmatprep.subr.mxu0 0.0
        %4783 = vmatpush1.xpose.msra.mxu0 0.0
        %4784 = vmatprep.subr.mxu0 0.0
        %4785 = vmatpush1.xpose.msra.mxu0 0.0
        %4786 = vmatprep.subr.mxu0 0.0
        %4787 = vmatpush1.xpose.msra.mxu0 0.0
        %4788 = vmatprep.subr.mxu0 0.0
        %4789 = vmatpush1.xpose.msra.mxu0 0.0
        %4790 = vmatprep.subr.mxu0 0.0
        %4791 = vmatpush1.xpose.msra.mxu0 0.0
        %4792 = vmatprep.subr.mxu0 0.0
        %4793 = vmatpush1.xpose.msra.mxu0 0.0
        %4794 = vmatprep.subr.mxu0 0.0
        %4795 = vmatpush1.xpose.msra.mxu0 0.0
        %4796 = vmatprep.subr.mxu0 0.0
        %4797 = vmatpush1.xpose.msra.mxu0 0.0
        %4798 = vmatprep.subr.mxu0 0.0
        %4799 = vmatpush1.xpose.msra.mxu0 0.0
        %4800 = vmatprep.subr.mxu0 0.0
        %4801 = vmatpush1.xpose.msra.mxu0 0.0
        %4802 = vmatprep.subr.mxu0 0.0
        %4803 = vmatpush1.xpose.msra.mxu0 0.0
        %4804 = vmatprep.subr.mxu0 0.0
        %4805 = vmatpush1.xpose.msra.mxu0 0.0
        %4806 = vmatprep.subr.mxu0 0.0
        %4807 = vmatpush1.xpose.msra.mxu0 0.0
        %4808 = vmatprep.mubr.f32.mxu0 1.0
        %4809 = vmatmul.mubr.f32.gmra.mrb[0].mxu0 1.0
        %v4810 = vpop.f32.mrb[0].mxu0
        %v4811 = vadd.f32 %v4741, %v4810
        %v4812 = vpop.f32.mrb[0].mxu0
        %4813 = vdwg.mxu0
        %4814 = vmatprep.subr.mxu0 %v3519
        %4815 = vmatpush1.xpose.msra.mxu0 %v3518
        %4816 = vmatprep.subr.mxu0 %v3583
        %4817 = vmatpush1.xpose.msra.mxu0 %v3582
        %4818 = vmatprep.subr.mxu0 %v3647
        %4819 = vmatpush1.xpose.msra.mxu0 %v3646
        %4820 = vmatprep.subr.mxu0 %v3711
        %4821 = vmatpush1.xpose.msra.mxu0 %v3710
        %4822 = vmatprep.subr.mxu0 %v3775
        %4823 = vmatpush1.xpose.msra.mxu0 %v3774
        %4824 = vmatprep.subr.mxu0 %v3839
        %4825 = vmatpush1.xpose.msra.mxu0 %v3838
        %4826 = vmatprep.subr.mxu0 %v3903
        %4827 = vmatpush1.xpose.msra.mxu0 %v3902
        %4828 = vmatprep.subr.mxu0 %v3967
        %4829 = vmatpush1.xpose.msra.mxu0 %v3966
        %4830 = vmatprep.subr.mxu0 %v4031
        %4831 = vmatpush1.xpose.msra.mxu0 %v4030
        %4832 = vmatprep.subr.mxu0 %v4095
        %4833 = vmatpush1.xpose.msra.mxu0 %v4094
        %4834 = vmatprep.subr.mxu0 %v4159
        %4835 = vmatpush1.xpose.msra.mxu0 %v4158
        %4836 = vmatprep.subr.mxu0 %v4223
        %4837 = vmatpush1.xpose.msra.mxu0 %v4222
        %4838 = vmatprep.subr.mxu0 %v4287
        %4839 = vmatpush1.xpose.msra.mxu0 %v4286
        %4840 = vmatprep.subr.mxu0 %v4351
        %4841 = vmatpush1.xpose.msra.mxu0 %v4350
        %4842 = vmatprep.subr.mxu0 %v4415
        %4843 = vmatpush1.xpose.msra.mxu0 %v4414
        %4844 = vmatprep.subr.mxu0 %v4479
        %4845 = vmatpush1.xpose.msra.mxu0 %v4478
        %4846 = vmatprep.subr.mxu0 0.0
        %4847 = vmatpush1.xpose.msra.mxu0 0.0
        %4848 = vmatprep.subr.mxu0 0.0
        %4849 = vmatpush1.xpose.msra.mxu0 0.0
        %4850 = vmatprep.subr.mxu0 0.0
        %4851 = vmatpush1.xpose.msra.mxu0 0.0
        %4852 = vmatprep.subr.mxu0 0.0
        %4853 = vmatpush1.xpose.msra.mxu0 0.0
        %4854 = vmatprep.subr.mxu0 0.0
        %4855 = vmatpush1.xpose.msra.mxu0 0.0
        %4856 = vmatprep.subr.mxu0 0.0
        %4857 = vmatpush1.xpose.msra.mxu0 0.0
        %4858 = vmatprep.subr.mxu0 0.0
        %4859 = vmatpush1.xpose.msra.mxu0 0.0
        %4860 = vmatprep.subr.mxu0 0.0
        %4861 = vmatpush1.xpose.msra.mxu0 0.0
        %4862 = vmatprep.subr.mxu0 0.0
        %4863 = vmatpush1.xpose.msra.mxu0 0.0
        %4864 = vmatprep.subr.mxu0 0.0
        %4865 = vmatpush1.xpose.msra.mxu0 0.0
        %4866 = vmatprep.subr.mxu0 0.0
        %4867 = vmatpush1.xpose.msra.mxu0 0.0
        %4868 = vmatprep.subr.mxu0 0.0
        %4869 = vmatpush1.xpose.msra.mxu0 0.0
        %4870 = vmatprep.subr.mxu0 0.0
        %4871 = vmatpush1.xpose.msra.mxu0 0.0
        %4872 = vmatprep.subr.mxu0 0.0
        %4873 = vmatpush1.xpose.msra.mxu0 0.0
        %4874 = vmatprep.subr.mxu0 0.0
        %4875 = vmatpush1.xpose.msra.mxu0 0.0
        %4876 = vmatprep.subr.mxu0 0.0
        %4877 = vmatpush1.xpose.msra.mxu0 0.0
        %4878 = vmatprep.mubr.f32.mxu0 1.0
        %4879 = vmatmul.mubr.f32.gmra.mrb[0].mxu0 1.0
        %v4880 = vpop.f32.mrb[0].mxu0
        %v4881 = vadd.f32 %v4811, %v4880
        %v4882 = vpop.f32.mrb[0].mxu0
        %4883 = vdwg.mxu0
        %4884 = vmatprep.subr.mxu0 %v3521
        %4885 = vmatpush1.xpose.msra.mxu0 %v3520
        %4886 = vmatprep.subr.mxu0 %v3585
        %4887 = vmatpush1.xpose.msra.mxu0 %v3584
        %4888 = vmatprep.subr.mxu0 %v3649
        %4889 = vmatpush1.xpose.msra.mxu0 %v3648
        %4890 = vmatprep.subr.mxu0 %v3713
        %4891 = vmatpush1.xpose.msra.mxu0 %v3712
        %4892 = vmatprep.subr.mxu0 %v3777
        %4893 = vmatpush1.xpose.msra.mxu0 %v3776
        %4894 = vmatprep.subr.mxu0 %v3841
        %4895 = vmatpush1.xpose.msra.mxu0 %v3840
        %4896 = vmatprep.subr.mxu0 %v3905
        %4897 = vmatpush1.xpose.msra.mxu0 %v3904
        %4898 = vmatprep.subr.mxu0 %v3969
        %4899 = vmatpush1.xpose.msra.mxu0 %v3968
        %4900 = vmatprep.subr.mxu0 %v4033
        %4901 = vmatpush1.xpose.msra.mxu0 %v4032
        %4902 = vmatprep.subr.mxu0 %v4097
        %4903 = vmatpush1.xpose.msra.mxu0 %v4096
        %4904 = vmatprep.subr.mxu0 %v4161
        %4905 = vmatpush1.xpose.msra.mxu0 %v4160
        %4906 = vmatprep.subr.mxu0 %v4225
        %4907 = vmatpush1.xpose.msra.mxu0 %v4224
        %4908 = vmatprep.subr.mxu0 %v4289
        %4909 = vmatpush1.xpose.msra.mxu0 %v4288
        %4910 = vmatprep.subr.mxu0 %v4353
        %4911 = vmatpush1.xpose.msra.mxu0 %v4352
        %4912 = vmatprep.subr.mxu0 %v4417
        %4913 = vmatpush1.xpose.msra.mxu0 %v4416
        %4914 = vmatprep.subr.mxu0 %v4481
        %4915 = vmatpush1.xpose.msra.mxu0 %v4480
        %4916 = vmatprep.subr.mxu0 0.0
        %4917 = vmatpush1.xpose.msra.mxu0 0.0
        %4918 = vmatprep.subr.mxu0 0.0
        %4919 = vmatpush1.xpose.msra.mxu0 0.0
        %4920 = vmatprep.subr.mxu0 0.0
        %4921 = vmatpush1.xpose.msra.mxu0 0.0
        %4922 = vmatprep.subr.mxu0 0.0
        %4923 = vmatpush1.xpose.msra.mxu0 0.0
        %4924 = vmatprep.subr.mxu0 0.0
        %4925 = vmatpush1.xpose.msra.mxu0 0.0
        %4926 = vmatprep.subr.mxu0 0.0
        %4927 = vmatpush1.xpose.msra.mxu0 0.0
        %4928 = vmatprep.subr.mxu0 0.0
        %4929 = vmatpush1.xpose.msra.mxu0 0.0
        %4930 = vmatprep.subr.mxu0 0.0
        %4931 = vmatpush1.xpose.msra.mxu0 0.0
        %4932 = vmatprep.subr.mxu0 0.0
        %4933 = vmatpush1.xpose.msra.mxu0 0.0
        %4934 = vmatprep.subr.mxu0 0.0
        %4935 = vmatpush1.xpose.msra.mxu0 0.0
        %4936 = vmatprep.subr.mxu0 0.0
        %4937 = vmatpush1.xpose.msra.mxu0 0.0
        %4938 = vmatprep.subr.mxu0 0.0
        %4939 = vmatpush1.xpose.msra.mxu0 0.0
        %4940 = vmatprep.subr.mxu0 0.0
        %4941 = vmatpush1.xpose.msra.mxu0 0.0
        %4942 = vmatprep.subr.mxu0 0.0
        %4943 = vmatpush1.xpose.msra.mxu0 0.0
        %4944 = vmatprep.subr.mxu0 0.0
        %4945 = vmatpush1.xpose.msra.mxu0 0.0
        %4946 = vmatprep.subr.mxu0 0.0
        %4947 = vmatpush1.xpose.msra.mxu0 0.0
        %4948 = vmatprep.mubr.f32.mxu0 1.0
        %4949 = vmatmul.mubr.f32.gmra.mrb[0].mxu0 1.0
        %v4950 = vpop.f32.mrb[0].mxu0
        %v4951 = vadd.f32 %v4881, %v4950
        %v4952 = vpop.f32.mrb[0].mxu0
        %4953 = vdwg.mxu0
        %4954 = vmatprep.subr.mxu0 %v3523
        %4955 = vmatpush1.xpose.msra.mxu0 %v3522
        %4956 = vmatprep.subr.mxu0 %v3587
        %4957 = vmatpush1.xpose.msra.mxu0 %v3586
        %4958 = vmatprep.subr.mxu0 %v3651
        %4959 = vmatpush1.xpose.msra.mxu0 %v3650
        %4960 = vmatprep.subr.mxu0 %v3715
        %4961 = vmatpush1.xpose.msra.mxu0 %v3714
        %4962 = vmatprep.subr.mxu0 %v3779
        %4963 = vmatpush1.xpose.msra.mxu0 %v3778
        %4964 = vmatprep.subr.mxu0 %v3843
        %4965 = vmatpush1.xpose.msra.mxu0 %v3842
        %4966 = vmatprep.subr.mxu0 %v3907
        %4967 = vmatpush1.xpose.msra.mxu0 %v3906
        %4968 = vmatprep.subr.mxu0 %v3971
        %4969 = vmatpush1.xpose.msra.mxu0 %v3970
        %4970 = vmatprep.subr.mxu0 %v4035
        %4971 = vmatpush1.xpose.msra.mxu0 %v4034
        %4972 = vmatprep.subr.mxu0 %v4099
        %4973 = vmatpush1.xpose.msra.mxu0 %v4098
        %4974 = vmatprep.subr.mxu0 %v4163
        %4975 = vmatpush1.xpose.msra.mxu0 %v4162
        %4976 = vmatprep.subr.mxu0 %v4227
        %4977 = vmatpush1.xpose.msra.mxu0 %v4226
        %4978 = vmatprep.subr.mxu0 %v4291
        %4979 = vmatpush1.xpose.msra.mxu0 %v4290
        %4980 = vmatprep.subr.mxu0 %v4355
        %4981 = vmatpush1.xpose.msra.mxu0 %v4354
        %4982 = vmatprep.subr.mxu0 %v4419
        %4983 = vmatpush1.xpose.msra.mxu0 %v4418
        %4984 = vmatprep.subr.mxu0 %v4483
        %4985 = vmatpush1.xpose.msra.mxu0 %v4482
        %4986 = vmatprep.subr.mxu0 0.0
        %4987 = vmatpush1.xpose.msra.mxu0 0.0
        %4988 = vmatprep.subr.mxu0 0.0
        %4989 = vmatpush1.xpose.msra.mxu0 0.0
        %4990 = vmatprep.subr.mxu0 0.0
        %4991 = vmatpush1.xpose.msra.mxu0 0.0
        %4992 = vmatprep.subr.mxu0 0.0
        %4993 = vmatpush1.xpose.msra.mxu0 0.0
        %4994 = vmatprep.subr.mxu0 0.0
        %4995 = vmatpush1.xpose.msra.mxu0 0.0
        %4996 = vmatprep.subr.mxu0 0.0
        %4997 = vmatpush1.xpose.msra.mxu0 0.0
        %4998 = vmatprep.subr.mxu0 0.0
        %4999 = vmatpush1.xpose.msra.mxu0 0.0
        %5000 = vmatprep.subr.mxu0 0.0
        %5001 = vmatpush1.xpose.msra.mxu0 0.0
        %5002 = vmatprep.subr.mxu0 0.0
        %5003 = vmatpush1.xpose.msra.mxu0 0.0
        %5004 = vmatprep.subr.mxu0 0.0
        %5005 = vmatpush1.xpose.msra.mxu0 0.0
        %5006 = vmatprep.subr.mxu0 0.0
        %5007 = vmatpush1.xpose.msra.mxu0 0.0
        %5008 = vmatprep.subr.mxu0 0.0
        %5009 = vmatpush1.xpose.msra.mxu0 0.0
        %5010 = vmatprep.subr.mxu0 0.0
        %5011 = vmatpush1.xpose.msra.mxu0 0.0
        %5012 = vmatprep.subr.mxu0 0.0
        %5013 = vmatpush1.xpose.msra.mxu0 0.0
        %5014 = vmatprep.subr.mxu0 0.0
        %5015 = vmatpush1.xpose.msra.mxu0 0.0
        %5016 = vmatprep.subr.mxu0 0.0
        %5017 = vmatpush1.xpose.msra.mxu0 0.0
        %5018 = vmatprep.mubr.f32.mxu0 1.0
        %5019 = vmatmul.mubr.f32.gmra.mrb[0].mxu0 1.0
        %v5020 = vpop.f32.mrb[0].mxu0
        %v5021 = vadd.f32 %v4951, %v5020
        %v5022 = vpop.f32.mrb[0].mxu0
        %5023 = vdwg.mxu0
        %5024 = vmatprep.subr.mxu0 %v3525
        %5025 = vmatpush1.xpose.msra.mxu0 %v3524
        %5026 = vmatprep.subr.mxu0 %v3589
        %5027 = vmatpush1.xpose.msra.mxu0 %v3588
        %5028 = vmatprep.subr.mxu0 %v3653
        %5029 = vmatpush1.xpose.msra.mxu0 %v3652
        %5030 = vmatprep.subr.mxu0 %v3717
        %5031 = vmatpush1.xpose.msra.mxu0 %v3716
        %5032 = vmatprep.subr.mxu0 %v3781
        %5033 = vmatpush1.xpose.msra.mxu0 %v3780
        %5034 = vmatprep.subr.mxu0 %v3845
        %5035 = vmatpush1.xpose.msra.mxu0 %v3844
        %5036 = vmatprep.subr.mxu0 %v3909
        %5037 = vmatpush1.xpose.msra.mxu0 %v3908
        %5038 = vmatprep.subr.mxu0 %v3973
        %5039 = vmatpush1.xpose.msra.mxu0 %v3972
        %5040 = vmatprep.subr.mxu0 %v4037
        %5041 = vmatpush1.xpose.msra.mxu0 %v4036
        %5042 = vmatprep.subr.mxu0 %v4101
        %5043 = vmatpush1.xpose.msra.mxu0 %v4100
        %5044 = vmatprep.subr.mxu0 %v4165
        %5045 = vmatpush1.xpose.msra.mxu0 %v4164
        %5046 = vmatprep.subr.mxu0 %v4229
        %5047 = vmatpush1.xpose.msra.mxu0 %v4228
        %5048 = vmatprep.subr.mxu0 %v4293
        %5049 = vmatpush1.xpose.msra.mxu0 %v4292
        %5050 = vmatprep.subr.mxu0 %v4357
        %5051 = vmatpush1.xpose.msra.mxu0 %v4356
        %5052 = vmatprep.subr.mxu0 %v4421
        %5053 = vmatpush1.xpose.msra.mxu0 %v4420
        %5054 = vmatprep.subr.mxu0 %v4485
        %5055 = vmatpush1.xpose.msra.mxu0 %v4484
        %5056 = vmatprep.subr.mxu0 0.0
        %5057 = vmatpush1.xpose.msra.mxu0 0.0
        %5058 = vmatprep.subr.mxu0 0.0
        %5059 = vmatpush1.xpose.msra.mxu0 0.0
        %5060 = vmatprep.subr.mxu0 0.0
        %5061 = vmatpush1.xpose.msra.mxu0 0.0
        %5062 = vmatprep.subr.mxu0 0.0
        %5063 = vmatpush1.xpose.msra.mxu0 0.0
        %5064 = vmatprep.subr.mxu0 0.0
        %5065 = vmatpush1.xpose.msra.mxu0 0.0
        %5066 = vmatprep.subr.mxu0 0.0
        %5067 = vmatpush1.xpose.msra.mxu0 0.0
        %5068 = vmatprep.subr.mxu0 0.0
        %5069 = vmatpush1.xpose.msra.mxu0 0.0
        %5070 = vmatprep.subr.mxu0 0.0
        %5071 = vmatpush1.xpose.msra.mxu0 0.0
        %5072 = vmatprep.subr.mxu0 0.0
        %5073 = vmatpush1.xpose.msra.mxu0 0.0
        %5074 = vmatprep.subr.mxu0 0.0
        %5075 = vmatpush1.xpose.msra.mxu0 0.0
        %5076 = vmatprep.subr.mxu0 0.0
        %5077 = vmatpush1.xpose.msra.mxu0 0.0
        %5078 = vmatprep.subr.mxu0 0.0
        %5079 = vmatpush1.xpose.msra.mxu0 0.0
        %5080 = vmatprep.subr.mxu0 0.0
        %5081 = vmatpush1.xpose.msra.mxu0 0.0
        %5082 = vmatprep.subr.mxu0 0.0
        %5083 = vmatpush1.xpose.msra.mxu0 0.0
        %5084 = vmatprep.subr.mxu0 0.0
        %5085 = vmatpush1.xpose.msra.mxu0 0.0
        %5086 = vmatprep.subr.mxu0 0.0
        %5087 = vmatpush1.xpose.msra.mxu0 0.0
        %5088 = vmatprep.mubr.f32.mxu0 1.0
        %5089 = vmatmul.mubr.f32.gmra.mrb[0].mxu0 1.0
        %v5090 = vpop.f32.mrb[0].mxu0
        %v5091 = vadd.f32 %v5021, %v5090
        %v5092 = vpop.f32.mrb[0].mxu0
        %5093 = vdwg.mxu0
        %5094 = vmatprep.subr.mxu0 %v3527
        %5095 = vmatpush1.xpose.msra.mxu0 %v3526
        %5096 = vmatprep.subr.mxu0 %v3591
        %5097 = vmatpush1.xpose.msra.mxu0 %v3590
        %5098 = vmatprep.subr.mxu0 %v3655
        %5099 = vmatpush1.xpose.msra.mxu0 %v3654
        %5100 = vmatprep.subr.mxu0 %v3719
        %5101 = vmatpush1.xpose.msra.mxu0 %v3718
        %5102 = vmatprep.subr.mxu0 %v3783
        %5103 = vmatpush1.xpose.msra.mxu0 %v3782
        %5104 = vmatprep.subr.mxu0 %v3847
        %5105 = vmatpush1.xpose.msra.mxu0 %v3846
        %5106 = vmatprep.subr.mxu0 %v3911
        %5107 = vmatpush1.xpose.msra.mxu0 %v3910
        %5108 = vmatprep.subr.mxu0 %v3975
        %5109 = vmatpush1.xpose.msra.mxu0 %v3974
        %5110 = vmatprep.subr.mxu0 %v4039
        %5111 = vmatpush1.xpose.msra.mxu0 %v4038
        %5112 = vmatprep.subr.mxu0 %v4103
        %5113 = vmatpush1.xpose.msra.mxu0 %v4102
        %5114 = vmatprep.subr.mxu0 %v4167
        %5115 = vmatpush1.xpose.msra.mxu0 %v4166
        %5116 = vmatprep.subr.mxu0 %v4231
        %5117 = vmatpush1.xpose.msra.mxu0 %v4230
        %5118 = vmatprep.subr.mxu0 %v4295
        %5119 = vmatpush1.xpose.msra.mxu0 %v4294
        %5120 = vmatprep.subr.mxu0 %v4359
        %5121 = vmatpush1.xpose.msra.mxu0 %v4358
        %5122 = vmatprep.subr.mxu0 %v4423
        %5123 = vmatpush1.xpose.msra.mxu0 %v4422
        %5124 = vmatprep.subr.mxu0 %v4487
        %5125 = vmatpush1.xpose.msra.mxu0 %v4486
        %5126 = vmatprep.subr.mxu0 0.0
        %5127 = vmatpush1.xpose.msra.mxu0 0.0
        %5128 = vmatprep.subr.mxu0 0.0
        %5129 = vmatpush1.xpose.msra.mxu0 0.0
        %5130 = vmatprep.subr.mxu0 0.0
        %5131 = vmatpush1.xpose.msra.mxu0 0.0
        %5132 = vmatprep.subr.mxu0 0.0
        %5133 = vmatpush1.xpose.msra.mxu0 0.0
        %5134 = vmatprep.subr.mxu0 0.0
        %5135 = vmatpush1.xpose.msra.mxu0 0.0
        %5136 = vmatprep.subr.mxu0 0.0
        %5137 = vmatpush1.xpose.msra.mxu0 0.0
        %5138 = vmatprep.subr.mxu0 0.0
        %5139 = vmatpush1.xpose.msra.mxu0 0.0
        %5140 = vmatprep.subr.mxu0 0.0
        %5141 = vmatpush1.xpose.msra.mxu0 0.0
        %5142 = vmatprep.subr.mxu0 0.0
        %5143 = vmatpush1.xpose.msra.mxu0 0.0
        %5144 = vmatprep.subr.mxu0 0.0
        %5145 = vmatpush1.xpose.msra.mxu0 0.0
        %5146 = vmatprep.subr.mxu0 0.0
        %5147 = vmatpush1.xpose.msra.mxu0 0.0
        %5148 = vmatprep.subr.mxu0 0.0
        %5149 = vmatpush1.xpose.msra.mxu0 0.0
        %5150 = vmatprep.subr.mxu0 0.0
        %5151 = vmatpush1.xpose.msra.mxu0 0.0
        %5152 = vmatprep.subr.mxu0 0.0
        %5153 = vmatpush1.xpose.msra.mxu0 0.0
        %5154 = vmatprep.subr.mxu0 0.0
        %5155 = vmatpush1.xpose.msra.mxu0 0.0
        %5156 = vmatprep.subr.mxu0 0.0
        %5157 = vmatpush1.xpose.msra.mxu0 0.0
        %5158 = vmatprep.mubr.f32.mxu0 1.0
        %5159 = vmatmul.mubr.f32.gmra.mrb[0].mxu0 1.0
        %v5160 = vpop.f32.mrb[0].mxu0
        %v5161 = vadd.f32 %v5091, %v5160
        %v5162 = vpop.f32.mrb[0].mxu0
        %5163 = vdwg.mxu0
        %5164 = vmatprep.subr.mxu0 %v3529
        %5165 = vmatpush1.xpose.msra.mxu0 %v3528
        %5166 = vmatprep.subr.mxu0 %v3593
        %5167 = vmatpush1.xpose.msra.mxu0 %v3592
        %5168 = vmatprep.subr.mxu0 %v3657
        %5169 = vmatpush1.xpose.msra.mxu0 %v3656
        %5170 = vmatprep.subr.mxu0 %v3721
        %5171 = vmatpush1.xpose.msra.mxu0 %v3720
        %5172 = vmatprep.subr.mxu0 %v3785
        %5173 = vmatpush1.xpose.msra.mxu0 %v3784
        %5174 = vmatprep.subr.mxu0 %v3849
        %5175 = vmatpush1.xpose.msra.mxu0 %v3848
        %5176 = vmatprep.subr.mxu0 %v3913
        %5177 = vmatpush1.xpose.msra.mxu0 %v3912
        %5178 = vmatprep.subr.mxu0 %v3977
        %5179 = vmatpush1.xpose.msra.mxu0 %v3976
        %5180 = vmatprep.subr.mxu0 %v4041
        %5181 = vmatpush1.xpose.msra.mxu0 %v4040
        %5182 = vmatprep.subr.mxu0 %v4105
        %5183 = vmatpush1.xpose.msra.mxu0 %v4104
        %5184 = vmatprep.subr.mxu0 %v4169
        %5185 = vmatpush1.xpose.msra.mxu0 %v4168
        %5186 = vmatprep.subr.mxu0 %v4233
        %5187 = vmatpush1.xpose.msra.mxu0 %v4232
        %5188 = vmatprep.subr.mxu0 %v4297
        %5189 = vmatpush1.xpose.msra.mxu0 %v4296
        %5190 = vmatprep.subr.mxu0 %v4361
        %5191 = vmatpush1.xpose.msra.mxu0 %v4360
        %5192 = vmatprep.subr.mxu0 %v4425
        %5193 = vmatpush1.xpose.msra.mxu0 %v4424
        %5194 = vmatprep.subr.mxu0 %v4489
        %5195 = vmatpush1.xpose.msra.mxu0 %v4488
        %5196 = vmatprep.subr.mxu0 0.0
        %5197 = vmatpush1.xpose.msra.mxu0 0.0
        %5198 = vmatprep.subr.mxu0 0.0
        %5199 = vmatpush1.xpose.msra.mxu0 0.0
        %5200 = vmatprep.subr.mxu0 0.0
        %5201 = vmatpush1.xpose.msra.mxu0 0.0
        %5202 = vmatprep.subr.mxu0 0.0
        %5203 = vmatpush1.xpose.msra.mxu0 0.0
        %5204 = vmatprep.subr.mxu0 0.0
        %5205 = vmatpush1.xpose.msra.mxu0 0.0
        %5206 = vmatprep.subr.mxu0 0.0
        %5207 = vmatpush1.xpose.msra.mxu0 0.0
        %5208 = vmatprep.subr.mxu0 0.0
        %5209 = vmatpush1.xpose.msra.mxu0 0.0
        %5210 = vmatprep.subr.mxu0 0.0
        %5211 = vmatpush1.xpose.msra.mxu0 0.0
        %5212 = vmatprep.subr.mxu0 0.0
        %5213 = vmatpush1.xpose.msra.mxu0 0.0
        %5214 = vmatprep.subr.mxu0 0.0
        %5215 = vmatpush1.xpose.msra.mxu0 0.0
        %5216 = vmatprep.subr.mxu0 0.0
        %5217 = vmatpush1.xpose.msra.mxu0 0.0
        %5218 = vmatprep.subr.mxu0 0.0
        %5219 = vmatpush1.xpose.msra.mxu0 0.0
        %5220 = vmatprep.subr.mxu0 0.0
        %5221 = vmatpush1.xpose.msra.mxu0 0.0
        %5222 = vmatprep.subr.mxu0 0.0
        %5223 = vmatpush1.xpose.msra.mxu0 0.0
        %5224 = vmatprep.subr.mxu0 0.0
        %5225 = vmatpush1.xpose.msra.mxu0 0.0
        %5226 = vmatprep.subr.mxu0 0.0
        %5227 = vmatpush1.xpose.msra.mxu0 0.0
        %5228 = vmatprep.mubr.f32.mxu0 1.0
        %5229 = vmatmul.mubr.f32.gmra.mrb[0].mxu0 1.0
        %v5230 = vpop.f32.mrb[0].mxu0
        %v5231 = vadd.f32 %v5161, %v5230
        %v5232 = vpop.f32.mrb[0].mxu0
        %5233 = vdwg.mxu0
        %5234 = vmatprep.subr.mxu0 %v3531
        %5235 = vmatpush1.xpose.msra.mxu0 %v3530
        %5236 = vmatprep.subr.mxu0 %v3595
        %5237 = vmatpush1.xpose.msra.mxu0 %v3594
        %5238 = vmatprep.subr.mxu0 %v3659
        %5239 = vmatpush1.xpose.msra.mxu0 %v3658
        %5240 = vmatprep.subr.mxu0 %v3723
        %5241 = vmatpush1.xpose.msra.mxu0 %v3722
        %5242 = vmatprep.subr.mxu0 %v3787
        %5243 = vmatpush1.xpose.msra.mxu0 %v3786
        %5244 = vmatprep.subr.mxu0 %v3851
        %5245 = vmatpush1.xpose.msra.mxu0 %v3850
        %5246 = vmatprep.subr.mxu0 %v3915
        %5247 = vmatpush1.xpose.msra.mxu0 %v3914
        %5248 = vmatprep.subr.mxu0 %v3979
        %5249 = vmatpush1.xpose.msra.mxu0 %v3978
        %5250 = vmatprep.subr.mxu0 %v4043
        %5251 = vmatpush1.xpose.msra.mxu0 %v4042
        %5252 = vmatprep.subr.mxu0 %v4107
        %5253 = vmatpush1.xpose.msra.mxu0 %v4106
        %5254 = vmatprep.subr.mxu0 %v4171
        %5255 = vmatpush1.xpose.msra.mxu0 %v4170
        %5256 = vmatprep.subr.mxu0 %v4235
        %5257 = vmatpush1.xpose.msra.mxu0 %v4234
        %5258 = vmatprep.subr.mxu0 %v4299
        %5259 = vmatpush1.xpose.msra.mxu0 %v4298
        %5260 = vmatprep.subr.mxu0 %v4363
        %5261 = vmatpush1.xpose.msra.mxu0 %v4362
        %5262 = vmatprep.subr.mxu0 %v4427
        %5263 = vmatpush1.xpose.msra.mxu0 %v4426
        %5264 = vmatprep.subr.mxu0 %v4491
        %5265 = vmatpush1.xpose.msra.mxu0 %v4490
        %5266 = vmatprep.subr.mxu0 0.0
        %5267 = vmatpush1.xpose.msra.mxu0 0.0
        %5268 = vmatprep.subr.mxu0 0.0
        %5269 = vmatpush1.xpose.msra.mxu0 0.0
        %5270 = vmatprep.subr.mxu0 0.0
        %5271 = vmatpush1.xpose.msra.mxu0 0.0
        %5272 = vmatprep.subr.mxu0 0.0
        %5273 = vmatpush1.xpose.msra.mxu0 0.0
        %5274 = vmatprep.subr.mxu0 0.0
        %5275 = vmatpush1.xpose.msra.mxu0 0.0
        %5276 = vmatprep.subr.mxu0 0.0
        %5277 = vmatpush1.xpose.msra.mxu0 0.0
        %5278 = vmatprep.subr.mxu0 0.0
        %5279 = vmatpush1.xpose.msra.mxu0 0.0
        %5280 = vmatprep.subr.mxu0 0.0
        %5281 = vmatpush1.xpose.msra.mxu0 0.0
        %5282 = vmatprep.subr.mxu0 0.0
        %5283 = vmatpush1.xpose.msra.mxu0 0.0
        %5284 = vmatprep.subr.mxu0 0.0
        %5285 = vmatpush1.xpose.msra.mxu0 0.0
        %5286 = vmatprep.subr.mxu0 0.0
        %5287 = vmatpush1.xpose.msra.mxu0 0.0
        %5288 = vmatprep.subr.mxu0 0.0
        %5289 = vmatpush1.xpose.msra.mxu0 0.0
        %5290 = vmatprep.subr.mxu0 0.0
        %5291 = vmatpush1.xpose.msra.mxu0 0.0
        %5292 = vmatprep.subr.mxu0 0.0
        %5293 = vmatpush1.xpose.msra.mxu0 0.0
        %5294 = vmatprep.subr.mxu0 0.0
        %5295 = vmatpush1.xpose.msra.mxu0 0.0
        %5296 = vmatprep.subr.mxu0 0.0
        %5297 = vmatpush1.xpose.msra.mxu0 0.0
        %5298 = vmatprep.mubr.f32.mxu0 1.0
        %5299 = vmatmul.mubr.f32.gmra.mrb[0].mxu0 1.0
        %v5300 = vpop.f32.mrb[0].mxu0
        %v5301 = vadd.f32 %v5231, %v5300
        %v5302 = vpop.f32.mrb[0].mxu0
        %5303 = vdwg.mxu0
        %5304 = vmatprep.subr.mxu0 %v3533
        %5305 = vmatpush1.xpose.msra.mxu0 %v3532
        %5306 = vmatprep.subr.mxu0 %v3597
        %5307 = vmatpush1.xpose.msra.mxu0 %v3596
        %5308 = vmatprep.subr.mxu0 %v3661
        %5309 = vmatpush1.xpose.msra.mxu0 %v3660
        %5310 = vmatprep.subr.mxu0 %v3725
        %5311 = vmatpush1.xpose.msra.mxu0 %v3724
        %5312 = vmatprep.subr.mxu0 %v3789
        %5313 = vmatpush1.xpose.msra.mxu0 %v3788
        %5314 = vmatprep.subr.mxu0 %v3853
        %5315 = vmatpush1.xpose.msra.mxu0 %v3852
        %5316 = vmatprep.subr.mxu0 %v3917
        %5317 = vmatpush1.xpose.msra.mxu0 %v3916
        %5318 = vmatprep.subr.mxu0 %v3981
        %5319 = vmatpush1.xpose.msra.mxu0 %v3980
        %5320 = vmatprep.subr.mxu0 %v4045
        %5321 = vmatpush1.xpose.msra.mxu0 %v4044
        %5322 = vmatprep.subr.mxu0 %v4109
        %5323 = vmatpush1.xpose.msra.mxu0 %v4108
        %5324 = vmatprep.subr.mxu0 %v4173
        %5325 = vmatpush1.xpose.msra.mxu0 %v4172
        %5326 = vmatprep.subr.mxu0 %v4237
        %5327 = vmatpush1.xpose.msra.mxu0 %v4236
        %5328 = vmatprep.subr.mxu0 %v4301
        %5329 = vmatpush1.xpose.msra.mxu0 %v4300
        %5330 = vmatprep.subr.mxu0 %v4365
        %5331 = vmatpush1.xpose.msra.mxu0 %v4364
        %5332 = vmatprep.subr.mxu0 %v4429
        %5333 = vmatpush1.xpose.msra.mxu0 %v4428
        %5334 = vmatprep.subr.mxu0 %v4493
        %5335 = vmatpush1.xpose.msra.mxu0 %v4492
        %5336 = vmatprep.subr.mxu0 0.0
        %5337 = vmatpush1.xpose.msra.mxu0 0.0
        %5338 = vmatprep.subr.mxu0 0.0
        %5339 = vmatpush1.xpose.msra.mxu0 0.0
        %5340 = vmatprep.subr.mxu0 0.0
        %5341 = vmatpush1.xpose.msra.mxu0 0.0
        %5342 = vmatprep.subr.mxu0 0.0
        %5343 = vmatpush1.xpose.msra.mxu0 0.0
        %5344 = vmatprep.subr.mxu0 0.0
        %5345 = vmatpush1.xpose.msra.mxu0 0.0
        %5346 = vmatprep.subr.mxu0 0.0
        %5347 = vmatpush1.xpose.msra.mxu0 0.0
        %5348 = vmatprep.subr.mxu0 0.0
        %5349 = vmatpush1.xpose.msra.mxu0 0.0
        %5350 = vmatprep.subr.mxu0 0.0
        %5351 = vmatpush1.xpose.msra.mxu0 0.0
        %5352 = vmatprep.subr.mxu0 0.0
        %5353 = vmatpush1.xpose.msra.mxu0 0.0
        %5354 = vmatprep.subr.mxu0 0.0
        %5355 = vmatpush1.xpose.msra.mxu0 0.0
        %5356 = vmatprep.subr.mxu0 0.0
        %5357 = vmatpush1.xpose.msra.mxu0 0.0
        %5358 = vmatprep.subr.mxu0 0.0
        %5359 = vmatpush1.xpose.msra.mxu0 0.0
        %5360 = vmatprep.subr.mxu0 0.0
        %5361 = vmatpush1.xpose.msra.mxu0 0.0
        %5362 = vmatprep.subr.mxu0 0.0
        %5363 = vmatpush1.xpose.msra.mxu0 0.0
        %5364 = vmatprep.subr.mxu0 0.0
        %5365 = vmatpush1.xpose.msra.mxu0 0.0
        %5366 = vmatprep.subr.mxu0 0.0
        %5367 = vmatpush1.xpose.msra.mxu0 0.0
        %5368 = vmatprep.mubr.f32.mxu0 1.0
        %5369 = vmatmul.mubr.f32.gmra.mrb[0].mxu0 1.0
        %v5370 = vpop.f32.mrb[0].mxu0
        %v5371 = vadd.f32 %v5301, %v5370
        %v5372 = vpop.f32.mrb[0].mxu0
        %5373 = vdwg.mxu0
        %5374 = vmatprep.subr.mxu0 %v3535
        %5375 = vmatpush1.xpose.msra.mxu0 %v3534
        %5376 = vmatprep.subr.mxu0 %v3599
        %5377 = vmatpush1.xpose.msra.mxu0 %v3598
        %5378 = vmatprep.subr.mxu0 %v3663
        %5379 = vmatpush1.xpose.msra.mxu0 %v3662
        %5380 = vmatprep.subr.mxu0 %v3727
        %5381 = vmatpush1.xpose.msra.mxu0 %v3726
        %5382 = vmatprep.subr.mxu0 %v3791
        %5383 = vmatpush1.xpose.msra.mxu0 %v3790
        %5384 = vmatprep.subr.mxu0 %v3855
        %5385 = vmatpush1.xpose.msra.mxu0 %v3854
        %5386 = vmatprep.subr.mxu0 %v3919
        %5387 = vmatpush1.xpose.msra.mxu0 %v3918
        %5388 = vmatprep.subr.mxu0 %v3983
        %5389 = vmatpush1.xpose.msra.mxu0 %v3982
        %5390 = vmatprep.subr.mxu0 %v4047
        %5391 = vmatpush1.xpose.msra.mxu0 %v4046
        %5392 = vmatprep.subr.mxu0 %v4111
        %5393 = vmatpush1.xpose.msra.mxu0 %v4110
        %5394 = vmatprep.subr.mxu0 %v4175
        %5395 = vmatpush1.xpose.msra.mxu0 %v4174
        %5396 = vmatprep.subr.mxu0 %v4239
        %5397 = vmatpush1.xpose.msra.mxu0 %v4238
        %5398 = vmatprep.subr.mxu0 %v4303
        %5399 = vmatpush1.xpose.msra.mxu0 %v4302
        %5400 = vmatprep.subr.mxu0 %v4367
        %5401 = vmatpush1.xpose.msra.mxu0 %v4366
        %5402 = vmatprep.subr.mxu0 %v4431
        %5403 = vmatpush1.xpose.msra.mxu0 %v4430
        %5404 = vmatprep.subr.mxu0 %v4495
        %5405 = vmatpush1.xpose.msra.mxu0 %v4494
        %5406 = vmatprep.subr.mxu0 0.0
        %5407 = vmatpush1.xpose.msra.mxu0 0.0
        %5408 = vmatprep.subr.mxu0 0.0
        %5409 = vmatpush1.xpose.msra.mxu0 0.0
        %5410 = vmatprep.subr.mxu0 0.0
        %5411 = vmatpush1.xpose.msra.mxu0 0.0
        %5412 = vmatprep.subr.mxu0 0.0
        %5413 = vmatpush1.xpose.msra.mxu0 0.0
        %5414 = vmatprep.subr.mxu0 0.0
        %5415 = vmatpush1.xpose.msra.mxu0 0.0
        %5416 = vmatprep.subr.mxu0 0.0
        %5417 = vmatpush1.xpose.msra.mxu0 0.0
        %5418 = vmatprep.subr.mxu0 0.0
        %5419 = vmatpush1.xpose.msra.mxu0 0.0
        %5420 = vmatprep.subr.mxu0 0.0
        %5421 = vmatpush1.xpose.msra.mxu0 0.0
        %5422 = vmatprep.subr.mxu0 0.0
        %5423 = vmatpush1.xpose.msra.mxu0 0.0
        %5424 = vmatprep.subr.mxu0 0.0
        %5425 = vmatpush1.xpose.msra.mxu0 0.0
        %5426 = vmatprep.subr.mxu0 0.0
        %5427 = vmatpush1.xpose.msra.mxu0 0.0
        %5428 = vmatprep.subr.mxu0 0.0
        %5429 = vmatpush1.xpose.msra.mxu0 0.0
        %5430 = vmatprep.subr.mxu0 0.0
        %5431 = vmatpush1.xpose.msra.mxu0 0.0
        %5432 = vmatprep.subr.mxu0 0.0
        %5433 = vmatpush1.xpose.msra.mxu0 0.0
        %5434 = vmatprep.subr.mxu0 0.0
        %5435 = vmatpush1.xpose.msra.mxu0 0.0
        %5436 = vmatprep.subr.mxu0 0.0
        %5437 = vmatpush1.xpose.msra.mxu0 0.0
        %5438 = vmatprep.mubr.f32.mxu0 1.0
        %5439 = vmatmul.mubr.f32.gmra.mrb[0].mxu0 1.0
        %v5440 = vpop.f32.mrb[0].mxu0
        %v5441 = vadd.f32 %v5371, %v5440
        %v5442 = vpop.f32.mrb[0].mxu0
        %5443 = vdwg.mxu0
        %5444 = vmatprep.subr.mxu0 %v3537
        %5445 = vmatpush1.xpose.msra.mxu0 %v3536
        %5446 = vmatprep.subr.mxu0 %v3601
        %5447 = vmatpush1.xpose.msra.mxu0 %v3600
        %5448 = vmatprep.subr.mxu0 %v3665
        %5449 = vmatpush1.xpose.msra.mxu0 %v3664
        %5450 = vmatprep.subr.mxu0 %v3729
        %5451 = vmatpush1.xpose.msra.mxu0 %v3728
        %5452 = vmatprep.subr.mxu0 %v3793
        %5453 = vmatpush1.xpose.msra.mxu0 %v3792
        %5454 = vmatprep.subr.mxu0 %v3857
        %5455 = vmatpush1.xpose.msra.mxu0 %v3856
        %5456 = vmatprep.subr.mxu0 %v3921
        %5457 = vmatpush1.xpose.msra.mxu0 %v3920
        %5458 = vmatprep.subr.mxu0 %v3985
        %5459 = vmatpush1.xpose.msra.mxu0 %v3984
        %5460 = vmatprep.subr.mxu0 %v4049
        %5461 = vmatpush1.xpose.msra.mxu0 %v4048
        %5462 = vmatprep.subr.mxu0 %v4113
        %5463 = vmatpush1.xpose.msra.mxu0 %v4112
        %5464 = vmatprep.subr.mxu0 %v4177
        %5465 = vmatpush1.xpose.msra.mxu0 %v4176
        %5466 = vmatprep.subr.mxu0 %v4241
        %5467 = vmatpush1.xpose.msra.mxu0 %v4240
        %5468 = vmatprep.subr.mxu0 %v4305
        %5469 = vmatpush1.xpose.msra.mxu0 %v4304
        %5470 = vmatprep.subr.mxu0 %v4369
        %5471 = vmatpush1.xpose.msra.mxu0 %v4368
        %5472 = vmatprep.subr.mxu0 %v4433
        %5473 = vmatpush1.xpose.msra.mxu0 %v4432
        %5474 = vmatprep.subr.mxu0 %v4497
        %5475 = vmatpush1.xpose.msra.mxu0 %v4496
        %5476 = vmatprep.subr.mxu0 0.0
        %5477 = vmatpush1.xpose.msra.mxu0 0.0
        %5478 = vmatprep.subr.mxu0 0.0
        %5479 = vmatpush1.xpose.msra.mxu0 0.0
        %5480 = vmatprep.subr.mxu0 0.0
        %5481 = vmatpush1.xpose.msra.mxu0 0.0
        %5482 = vmatprep.subr.mxu0 0.0
        %5483 = vmatpush1.xpose.msra.mxu0 0.0
        %5484 = vmatprep.subr.mxu0 0.0
        %5485 = vmatpush1.xpose.msra.mxu0 0.0
        %5486 = vmatprep.subr.mxu0 0.0
        %5487 = vmatpush1.xpose.msra.mxu0 0.0
        %5488 = vmatprep.subr.mxu0 0.0
        %5489 = vmatpush1.xpose.msra.mxu0 0.0
        %5490 = vmatprep.subr.mxu0 0.0
        %5491 = vmatpush1.xpose.msra.mxu0 0.0
        %5492 = vmatprep.subr.mxu0 0.0
        %5493 = vmatpush1.xpose.msra.mxu0 0.0
        %5494 = vmatprep.subr.mxu0 0.0
        %5495 = vmatpush1.xpose.msra.mxu0 0.0
        %5496 = vmatprep.subr.mxu0 0.0
        %5497 = vmatpush1.xpose.msra.mxu0 0.0
        %5498 = vmatprep.subr.mxu0 0.0
        %5499 = vmatpush1.xpose.msra.mxu0 0.0
        %5500 = vmatprep.subr.mxu0 0.0
        %5501 = vmatpush1.xpose.msra.mxu0 0.0
        %5502 = vmatprep.subr.mxu0 0.0
        %5503 = vmatpush1.xpose.msra.mxu0 0.0
        %5504 = vmatprep.subr.mxu0 0.0
        %5505 = vmatpush1.xpose.msra.mxu0 0.0
        %5506 = vmatprep.subr.mxu0 0.0
        %5507 = vmatpush1.xpose.msra.mxu0 0.0
        %5508 = vmatprep.mubr.f32.mxu0 1.0
        %5509 = vmatmul.mubr.f32.gmra.mrb[0].mxu0 1.0
        %v5510 = vpop.f32.mrb[0].mxu0
        %v5511 = vadd.f32 %v5441, %v5510
        %v5512 = vpop.f32.mrb[0].mxu0
        %5513 = vdwg.mxu0
        %5514 = vmatprep.subr.mxu0 %v3539
        %5515 = vmatpush1.xpose.msra.mxu0 %v3538
        %5516 = vmatprep.subr.mxu0 %v3603
        %5517 = vmatpush1.xpose.msra.mxu0 %v3602
        %5518 = vmatprep.subr.mxu0 %v3667
        %5519 = vmatpush1.xpose.msra.mxu0 %v3666
        %5520 = vmatprep.subr.mxu0 %v3731
        %5521 = vmatpush1.xpose.msra.mxu0 %v3730
        %5522 = vmatprep.subr.mxu0 %v3795
        %5523 = vmatpush1.xpose.msra.mxu0 %v3794
        %5524 = vmatprep.subr.mxu0 %v3859
        %5525 = vmatpush1.xpose.msra.mxu0 %v3858
        %5526 = vmatprep.subr.mxu0 %v3923
        %5527 = vmatpush1.xpose.msra.mxu0 %v3922
        %5528 = vmatprep.subr.mxu0 %v3987
        %5529 = vmatpush1.xpose.msra.mxu0 %v3986
        %5530 = vmatprep.subr.mxu0 %v4051
        %5531 = vmatpush1.xpose.msra.mxu0 %v4050
        %5532 = vmatprep.subr.mxu0 %v4115
        %5533 = vmatpush1.xpose.msra.mxu0 %v4114
        %5534 = vmatprep.subr.mxu0 %v4179
        %5535 = vmatpush1.xpose.msra.mxu0 %v4178
        %5536 = vmatprep.subr.mxu0 %v4243
        %5537 = vmatpush1.xpose.msra.mxu0 %v4242
        %5538 = vmatprep.subr.mxu0 %v4307
        %5539 = vmatpush1.xpose.msra.mxu0 %v4306
        %5540 = vmatprep.subr.mxu0 %v4371
        %5541 = vmatpush1.xpose.msra.mxu0 %v4370
        %5542 = vmatprep.subr.mxu0 %v4435
        %5543 = vmatpush1.xpose.msra.mxu0 %v4434
        %5544 = vmatprep.subr.mxu0 %v4499
        %5545 = vmatpush1.xpose.msra.mxu0 %v4498
        %5546 = vmatprep.subr.mxu0 0.0
        %5547 = vmatpush1.xpose.msra.mxu0 0.0
        %5548 = vmatprep.subr.mxu0 0.0
        %5549 = vmatpush1.xpose.msra.mxu0 0.0
        %5550 = vmatprep.subr.mxu0 0.0
        %5551 = vmatpush1.xpose.msra.mxu0 0.0
        %5552 = vmatprep.subr.mxu0 0.0
        %5553 = vmatpush1.xpose.msra.mxu0 0.0
        %5554 = vmatprep.subr.mxu0 0.0
        %5555 = vmatpush1.xpose.msra.mxu0 0.0
        %5556 = vmatprep.subr.mxu0 0.0
        %5557 = vmatpush1.xpose.msra.mxu0 0.0
        %5558 = vmatprep.subr.mxu0 0.0
        %5559 = vmatpush1.xpose.msra.mxu0 0.0
        %5560 = vmatprep.subr.mxu0 0.0
        %5561 = vmatpush1.xpose.msra.mxu0 0.0
        %5562 = vmatprep.subr.mxu0 0.0
        %5563 = vmatpush1.xpose.msra.mxu0 0.0
        %5564 = vmatprep.subr.mxu0 0.0
        %5565 = vmatpush1.xpose.msra.mxu0 0.0
        %5566 = vmatprep.subr.mxu0 0.0
        %5567 = vmatpush1.xpose.msra.mxu0 0.0
        %5568 = vmatprep.subr.mxu0 0.0
        %5569 = vmatpush1.xpose.msra.mxu0 0.0
        %5570 = vmatprep.subr.mxu0 0.0
        %5571 = vmatpush1.xpose.msra.mxu0 0.0
        %5572 = vmatprep.subr.mxu0 0.0
        %5573 = vmatpush1.xpose.msra.mxu0 0.0
        %5574 = vmatprep.subr.mxu0 0.0
        %5575 = vmatpush1.xpose.msra.mxu0 0.0
        %5576 = vmatprep.subr.mxu0 0.0
        %5577 = vmatpush1.xpose.msra.mxu0 0.0
        %5578 = vmatprep.mubr.f32.mxu0 1.0
        %5579 = vmatmul.mubr.f32.gmra.mrb[0].mxu0 1.0
        %v5580 = vpop.f32.mrb[0].mxu0
        %v5581 = vadd.f32 %v5511, %v5580
        %v5582 = vpop.f32.mrb[0].mxu0
        %5583 = vdwg.mxu0
        %5584 = vmatprep.subr.mxu0 %v3541
        %5585 = vmatpush1.xpose.msra.mxu0 %v3540
        %5586 = vmatprep.subr.mxu0 %v3605
        %5587 = vmatpush1.xpose.msra.mxu0 %v3604
        %5588 = vmatprep.subr.mxu0 %v3669
        %5589 = vmatpush1.xpose.msra.mxu0 %v3668
        %5590 = vmatprep.subr.mxu0 %v3733
        %5591 = vmatpush1.xpose.msra.mxu0 %v3732
        %5592 = vmatprep.subr.mxu0 %v3797
        %5593 = vmatpush1.xpose.msra.mxu0 %v3796
        %5594 = vmatprep.subr.mxu0 %v3861
        %5595 = vmatpush1.xpose.msra.mxu0 %v3860
        %5596 = vmatprep.subr.mxu0 %v3925
        %5597 = vmatpush1.xpose.msra.mxu0 %v3924
        %5598 = vmatprep.subr.mxu0 %v3989
        %5599 = vmatpush1.xpose.msra.mxu0 %v3988
        %5600 = vmatprep.subr.mxu0 %v4053
        %5601 = vmatpush1.xpose.msra.mxu0 %v4052
        %5602 = vmatprep.subr.mxu0 %v4117
        %5603 = vmatpush1.xpose.msra.mxu0 %v4116
        %5604 = vmatprep.subr.mxu0 %v4181
        %5605 = vmatpush1.xpose.msra.mxu0 %v4180
        %5606 = vmatprep.subr.mxu0 %v4245
        %5607 = vmatpush1.xpose.msra.mxu0 %v4244
        %5608 = vmatprep.subr.mxu0 %v4309
        %5609 = vmatpush1.xpose.msra.mxu0 %v4308
        %5610 = vmatprep.subr.mxu0 %v4373
        %5611 = vmatpush1.xpose.msra.mxu0 %v4372
        %5612 = vmatprep.subr.mxu0 %v4437
        %5613 = vmatpush1.xpose.msra.mxu0 %v4436
        %5614 = vmatprep.subr.mxu0 %v4501
        %5615 = vmatpush1.xpose.msra.mxu0 %v4500
        %5616 = vmatprep.subr.mxu0 0.0
        %5617 = vmatpush1.xpose.msra.mxu0 0.0
        %5618 = vmatprep.subr.mxu0 0.0
        %5619 = vmatpush1.xpose.msra.mxu0 0.0
        %5620 = vmatprep.subr.mxu0 0.0
        %5621 = vmatpush1.xpose.msra.mxu0 0.0
        %5622 = vmatprep.subr.mxu0 0.0
        %5623 = vmatpush1.xpose.msra.mxu0 0.0
        %5624 = vmatprep.subr.mxu0 0.0
        %5625 = vmatpush1.xpose.msra.mxu0 0.0
        %5626 = vmatprep.subr.mxu0 0.0
        %5627 = vmatpush1.xpose.msra.mxu0 0.0
        %5628 = vmatprep.subr.mxu0 0.0
        %5629 = vmatpush1.xpose.msra.mxu0 0.0
        %5630 = vmatprep.subr.mxu0 0.0
        %5631 = vmatpush1.xpose.msra.mxu0 0.0
        %5632 = vmatprep.subr.mxu0 0.0
        %5633 = vmatpush1.xpose.msra.mxu0 0.0
        %5634 = vmatprep.subr.mxu0 0.0
        %5635 = vmatpush1.xpose.msra.mxu0 0.0
        %5636 = vmatprep.subr.mxu0 0.0
        %5637 = vmatpush1.xpose.msra.mxu0 0.0
        %5638 = vmatprep.subr.mxu0 0.0
        %5639 = vmatpush1.xpose.msra.mxu0 0.0
        %5640 = vmatprep.subr.mxu0 0.0
        %5641 = vmatpush1.xpose.msra.mxu0 0.0
        %5642 = vmatprep.subr.mxu0 0.0
        %5643 = vmatpush1.xpose.msra.mxu0 0.0
        %5644 = vmatprep.subr.mxu0 0.0
        %5645 = vmatpush1.xpose.msra.mxu0 0.0
        %5646 = vmatprep.subr.mxu0 0.0
        %5647 = vmatpush1.xpose.msra.mxu0 0.0
        %5648 = vmatprep.mubr.f32.mxu0 1.0
        %5649 = vmatmul.mubr.f32.gmra.mrb[0].mxu0 1.0
        %v5650 = vpop.f32.mrb[0].mxu0
        %v5651 = vadd.f32 %v5581, %v5650
        %v5652 = vpop.f32.mrb[0].mxu0
        %5653 = vdwg.mxu0
        %5654 = vmatprep.subr.mxu0 %v3543
        %5655 = vmatpush1.xpose.msra.mxu0 %v3542
        %5656 = vmatprep.subr.mxu0 %v3607
        %5657 = vmatpush1.xpose.msra.mxu0 %v3606
        %5658 = vmatprep.subr.mxu0 %v3671
        %5659 = vmatpush1.xpose.msra.mxu0 %v3670
        %5660 = vmatprep.subr.mxu0 %v3735
        %5661 = vmatpush1.xpose.msra.mxu0 %v3734
        %5662 = vmatprep.subr.mxu0 %v3799
        %5663 = vmatpush1.xpose.msra.mxu0 %v3798
        %5664 = vmatprep.subr.mxu0 %v3863
        %5665 = vmatpush1.xpose.msra.mxu0 %v3862
        %5666 = vmatprep.subr.mxu0 %v3927
        %5667 = vmatpush1.xpose.msra.mxu0 %v3926
        %5668 = vmatprep.subr.mxu0 %v3991
        %5669 = vmatpush1.xpose.msra.mxu0 %v3990
        %5670 = vmatprep.subr.mxu0 %v4055
        %5671 = vmatpush1.xpose.msra.mxu0 %v4054
        %5672 = vmatprep.subr.mxu0 %v4119
        %5673 = vmatpush1.xpose.msra.mxu0 %v4118
        %5674 = vmatprep.subr.mxu0 %v4183
        %5675 = vmatpush1.xpose.msra.mxu0 %v4182
        %5676 = vmatprep.subr.mxu0 %v4247
        %5677 = vmatpush1.xpose.msra.mxu0 %v4246
        %5678 = vmatprep.subr.mxu0 %v4311
        %5679 = vmatpush1.xpose.msra.mxu0 %v4310
        %5680 = vmatprep.subr.mxu0 %v4375
        %5681 = vmatpush1.xpose.msra.mxu0 %v4374
        %5682 = vmatprep.subr.mxu0 %v4439
        %5683 = vmatpush1.xpose.msra.mxu0 %v4438
        %5684 = vmatprep.subr.mxu0 %v4503
        %5685 = vmatpush1.xpose.msra.mxu0 %v4502
        %5686 = vmatprep.subr.mxu0 0.0
        %5687 = vmatpush1.xpose.msra.mxu0 0.0
        %5688 = vmatprep.subr.mxu0 0.0
        %5689 = vmatpush1.xpose.msra.mxu0 0.0
        %5690 = vmatprep.subr.mxu0 0.0
        %5691 = vmatpush1.xpose.msra.mxu0 0.0
        %5692 = vmatprep.subr.mxu0 0.0
        %5693 = vmatpush1.xpose.msra.mxu0 0.0
        %5694 = vmatprep.subr.mxu0 0.0
        %5695 = vmatpush1.xpose.msra.mxu0 0.0
        %5696 = vmatprep.subr.mxu0 0.0
        %5697 = vmatpush1.xpose.msra.mxu0 0.0
        %5698 = vmatprep.subr.mxu0 0.0
        %5699 = vmatpush1.xpose.msra.mxu0 0.0
        %5700 = vmatprep.subr.mxu0 0.0
        %5701 = vmatpush1.xpose.msra.mxu0 0.0
        %5702 = vmatprep.subr.mxu0 0.0
        %5703 = vmatpush1.xpose.msra.mxu0 0.0
        %5704 = vmatprep.subr.mxu0 0.0
        %5705 = vmatpush1.xpose.msra.mxu0 0.0
        %5706 = vmatprep.subr.mxu0 0.0
        %5707 = vmatpush1.xpose.msra.mxu0 0.0
        %5708 = vmatprep.subr.mxu0 0.0
        %5709 = vmatpush1.xpose.msra.mxu0 0.0
        %5710 = vmatprep.subr.mxu0 0.0
        %5711 = vmatpush1.xpose.msra.mxu0 0.0
        %5712 = vmatprep.subr.mxu0 0.0
        %5713 = vmatpush1.xpose.msra.mxu0 0.0
        %5714 = vmatprep.subr.mxu0 0.0
        %5715 = vmatpush1.xpose.msra.mxu0 0.0
        %5716 = vmatprep.subr.mxu0 0.0
        %5717 = vmatpush1.xpose.msra.mxu0 0.0
        %5718 = vmatprep.mubr.f32.mxu0 1.0
        %5719 = vmatmul.mubr.f32.gmra.mrb[0].mxu0 1.0
        %v5720 = vpop.f32.mrb[0].mxu0
        %v5721 = vadd.f32 %v5651, %v5720
        %v5722 = vpop.f32.mrb[0].mxu0
        %5723 = vdwg.mxu0
        %5724 = vmatprep.subr.mxu0 %v3545
        %5725 = vmatpush1.xpose.msra.mxu0 %v3544
        %5726 = vmatprep.subr.mxu0 %v3609
        %5727 = vmatpush1.xpose.msra.mxu0 %v3608
        %5728 = vmatprep.subr.mxu0 %v3673
        %5729 = vmatpush1.xpose.msra.mxu0 %v3672
        %5730 = vmatprep.subr.mxu0 %v3737
        %5731 = vmatpush1.xpose.msra.mxu0 %v3736
        %5732 = vmatprep.subr.mxu0 %v3801
        %5733 = vmatpush1.xpose.msra.mxu0 %v3800
        %5734 = vmatprep.subr.mxu0 %v3865
        %5735 = vmatpush1.xpose.msra.mxu0 %v3864
        %5736 = vmatprep.subr.mxu0 %v3929
        %5737 = vmatpush1.xpose.msra.mxu0 %v3928
        %5738 = vmatprep.subr.mxu0 %v3993
        %5739 = vmatpush1.xpose.msra.mxu0 %v3992
        %5740 = vmatprep.subr.mxu0 %v4057
        %5741 = vmatpush1.xpose.msra.mxu0 %v4056
        %5742 = vmatprep.subr.mxu0 %v4121
        %5743 = vmatpush1.xpose.msra.mxu0 %v4120
        %5744 = vmatprep.subr.mxu0 %v4185
        %5745 = vmatpush1.xpose.msra.mxu0 %v4184
        %5746 = vmatprep.subr.mxu0 %v4249
        %5747 = vmatpush1.xpose.msra.mxu0 %v4248
        %5748 = vmatprep.subr.mxu0 %v4313
        %5749 = vmatpush1.xpose.msra.mxu0 %v4312
        %5750 = vmatprep.subr.mxu0 %v4377
        %5751 = vmatpush1.xpose.msra.mxu0 %v4376
        %5752 = vmatprep.subr.mxu0 %v4441
        %5753 = vmatpush1.xpose.msra.mxu0 %v4440
        %5754 = vmatprep.subr.mxu0 %v4505
        %5755 = vmatpush1.xpose.msra.mxu0 %v4504
        %5756 = vmatprep.subr.mxu0 0.0
        %5757 = vmatpush1.xpose.msra.mxu0 0.0
        %5758 = vmatprep.subr.mxu0 0.0
        %5759 = vmatpush1.xpose.msra.mxu0 0.0
        %5760 = vmatprep.subr.mxu0 0.0
        %5761 = vmatpush1.xpose.msra.mxu0 0.0
        %5762 = vmatprep.subr.mxu0 0.0
        %5763 = vmatpush1.xpose.msra.mxu0 0.0
        %5764 = vmatprep.subr.mxu0 0.0
        %5765 = vmatpush1.xpose.msra.mxu0 0.0
        %5766 = vmatprep.subr.mxu0 0.0
        %5767 = vmatpush1.xpose.msra.mxu0 0.0
        %5768 = vmatprep.subr.mxu0 0.0
        %5769 = vmatpush1.xpose.msra.mxu0 0.0
        %5770 = vmatprep.subr.mxu0 0.0
        %5771 = vmatpush1.xpose.msra.mxu0 0.0
        %5772 = vmatprep.subr.mxu0 0.0
        %5773 = vmatpush1.xpose.msra.mxu0 0.0
        %5774 = vmatprep.subr.mxu0 0.0
        %5775 = vmatpush1.xpose.msra.mxu0 0.0
        %5776 = vmatprep.subr.mxu0 0.0
        %5777 = vmatpush1.xpose.msra.mxu0 0.0
        %5778 = vmatprep.subr.mxu0 0.0
        %5779 = vmatpush1.xpose.msra.mxu0 0.0
        %5780 = vmatprep.subr.mxu0 0.0
        %5781 = vmatpush1.xpose.msra.mxu0 0.0
        %5782 = vmatprep.subr.mxu0 0.0
        %5783 = vmatpush1.xpose.msra.mxu0 0.0
        %5784 = vmatprep.subr.mxu0 0.0
        %5785 = vmatpush1.xpose.msra.mxu0 0.0
        %5786 = vmatprep.subr.mxu0 0.0
        %5787 = vmatpush1.xpose.msra.mxu0 0.0
        %5788 = vmatprep.mubr.f32.mxu0 1.0
        %5789 = vmatmul.mubr.f32.gmra.mrb[0].mxu0 1.0
        %v5790 = vpop.f32.mrb[0].mxu0
        %v5791 = vadd.f32 %v5721, %v5790
        %v5792 = vpop.f32.mrb[0].mxu0
        %5793 = vdwg.mxu0
        %5794 = vmatprep.subr.mxu0 %v3547
        %5795 = vmatpush1.xpose.msra.mxu0 %v3546
        %5796 = vmatprep.subr.mxu0 %v3611
        %5797 = vmatpush1.xpose.msra.mxu0 %v3610
        %5798 = vmatprep.subr.mxu0 %v3675
        %5799 = vmatpush1.xpose.msra.mxu0 %v3674
        %5800 = vmatprep.subr.mxu0 %v3739
        %5801 = vmatpush1.xpose.msra.mxu0 %v3738
        %5802 = vmatprep.subr.mxu0 %v3803
        %5803 = vmatpush1.xpose.msra.mxu0 %v3802
        %5804 = vmatprep.subr.mxu0 %v3867
        %5805 = vmatpush1.xpose.msra.mxu0 %v3866
        %5806 = vmatprep.subr.mxu0 %v3931
        %5807 = vmatpush1.xpose.msra.mxu0 %v3930
        %5808 = vmatprep.subr.mxu0 %v3995
        %5809 = vmatpush1.xpose.msra.mxu0 %v3994
        %5810 = vmatprep.subr.mxu0 %v4059
        %5811 = vmatpush1.xpose.msra.mxu0 %v4058
        %5812 = vmatprep.subr.mxu0 %v4123
        %5813 = vmatpush1.xpose.msra.mxu0 %v4122
        %5814 = vmatprep.subr.mxu0 %v4187
        %5815 = vmatpush1.xpose.msra.mxu0 %v4186
        %5816 = vmatprep.subr.mxu0 %v4251
        %5817 = vmatpush1.xpose.msra.mxu0 %v4250
        %5818 = vmatprep.subr.mxu0 %v4315
        %5819 = vmatpush1.xpose.msra.mxu0 %v4314
        %5820 = vmatprep.subr.mxu0 %v4379
        %5821 = vmatpush1.xpose.msra.mxu0 %v4378
        %5822 = vmatprep.subr.mxu0 %v4443
        %5823 = vmatpush1.xpose.msra.mxu0 %v4442
        %5824 = vmatprep.subr.mxu0 %v4507
        %5825 = vmatpush1.xpose.msra.mxu0 %v4506
        %5826 = vmatprep.subr.mxu0 0.0
        %5827 = vmatpush1.xpose.msra.mxu0 0.0
        %5828 = vmatprep.subr.mxu0 0.0
        %5829 = vmatpush1.xpose.msra.mxu0 0.0
        %5830 = vmatprep.subr.mxu0 0.0
        %5831 = vmatpush1.xpose.msra.mxu0 0.0
        %5832 = vmatprep.subr.mxu0 0.0
        %5833 = vmatpush1.xpose.msra.mxu0 0.0
        %5834 = vmatprep.subr.mxu0 0.0
        %5835 = vmatpush1.xpose.msra.mxu0 0.0
        %5836 = vmatprep.subr.mxu0 0.0
        %5837 = vmatpush1.xpose.msra.mxu0 0.0
        %5838 = vmatprep.subr.mxu0 0.0
        %5839 = vmatpush1.xpose.msra.mxu0 0.0
        %5840 = vmatprep.subr.mxu0 0.0
        %5841 = vmatpush1.xpose.msra.mxu0 0.0
        %5842 = vmatprep.subr.mxu0 0.0
        %5843 = vmatpush1.xpose.msra.mxu0 0.0
        %5844 = vmatprep.subr.mxu0 0.0
        %5845 = vmatpush1.xpose.msra.mxu0 0.0
        %5846 = vmatprep.subr.mxu0 0.0
        %5847 = vmatpush1.xpose.msra.mxu0 0.0
        %5848 = vmatprep.subr.mxu0 0.0
        %5849 = vmatpush1.xpose.msra.mxu0 0.0
        %5850 = vmatprep.subr.mxu0 0.0
        %5851 = vmatpush1.xpose.msra.mxu0 0.0
        %5852 = vmatprep.subr.mxu0 0.0
        %5853 = vmatpush1.xpose.msra.mxu0 0.0
        %5854 = vmatprep.subr.mxu0 0.0
        %5855 = vmatpush1.xpose.msra.mxu0 0.0
        %5856 = vmatprep.subr.mxu0 0.0
        %5857 = vmatpush1.xpose.msra.mxu0 0.0
        %5858 = vmatprep.mubr.f32.mxu0 1.0
        %5859 = vmatmul.mubr.f32.gmra.mrb[0].mxu0 1.0
        %v5860 = vpop.f32.mrb[0].mxu0
        %v5861 = vadd.f32 %v5791, %v5860
        %v5862 = vpop.f32.mrb[0].mxu0
        %5863 = vdwg.mxu0
        %5864 = vmatprep.subr.mxu0 %v3549
        %5865 = vmatpush1.xpose.msra.mxu0 %v3548
        %5866 = vmatprep.subr.mxu0 %v3613
        %5867 = vmatpush1.xpose.msra.mxu0 %v3612
        %5868 = vmatprep.subr.mxu0 %v3677
        %5869 = vmatpush1.xpose.msra.mxu0 %v3676
        %5870 = vmatprep.subr.mxu0 %v3741
        %5871 = vmatpush1.xpose.msra.mxu0 %v3740
        %5872 = vmatprep.subr.mxu0 %v3805
        %5873 = vmatpush1.xpose.msra.mxu0 %v3804
        %5874 = vmatprep.subr.mxu0 %v3869
        %5875 = vmatpush1.xpose.msra.mxu0 %v3868
        %5876 = vmatprep.subr.mxu0 %v3933
        %5877 = vmatpush1.xpose.msra.mxu0 %v3932
        %5878 = vmatprep.subr.mxu0 %v3997
        %5879 = vmatpush1.xpose.msra.mxu0 %v3996
        %5880 = vmatprep.subr.mxu0 %v4061
        %5881 = vmatpush1.xpose.msra.mxu0 %v4060
        %5882 = vmatprep.subr.mxu0 %v4125
        %5883 = vmatpush1.xpose.msra.mxu0 %v4124
        %5884 = vmatprep.subr.mxu0 %v4189
        %5885 = vmatpush1.xpose.msra.mxu0 %v4188
        %5886 = vmatprep.subr.mxu0 %v4253
        %5887 = vmatpush1.xpose.msra.mxu0 %v4252
        %5888 = vmatprep.subr.mxu0 %v4317
        %5889 = vmatpush1.xpose.msra.mxu0 %v4316
        %5890 = vmatprep.subr.mxu0 %v4381
        %5891 = vmatpush1.xpose.msra.mxu0 %v4380
        %5892 = vmatprep.subr.mxu0 %v4445
        %5893 = vmatpush1.xpose.msra.mxu0 %v4444
        %5894 = vmatprep.subr.mxu0 %v4509
        %5895 = vmatpush1.xpose.msra.mxu0 %v4508
        %5896 = vmatprep.subr.mxu0 0.0
        %5897 = vmatpush1.xpose.msra.mxu0 0.0
        %5898 = vmatprep.subr.mxu0 0.0
        %5899 = vmatpush1.xpose.msra.mxu0 0.0
        %5900 = vmatprep.subr.mxu0 0.0
        %5901 = vmatpush1.xpose.msra.mxu0 0.0
        %5902 = vmatprep.subr.mxu0 0.0
        %5903 = vmatpush1.xpose.msra.mxu0 0.0
        %5904 = vmatprep.subr.mxu0 0.0
        %5905 = vmatpush1.xpose.msra.mxu0 0.0
        %5906 = vmatprep.subr.mxu0 0.0
        %5907 = vmatpush1.xpose.msra.mxu0 0.0
        %5908 = vmatprep.subr.mxu0 0.0
        %5909 = vmatpush1.xpose.msra.mxu0 0.0
        %5910 = vmatprep.subr.mxu0 0.0
        %5911 = vmatpush1.xpose.msra.mxu0 0.0
        %5912 = vmatprep.subr.mxu0 0.0
        %5913 = vmatpush1.xpose.msra.mxu0 0.0
        %5914 = vmatprep.subr.mxu0 0.0
        %5915 = vmatpush1.xpose.msra.mxu0 0.0
        %5916 = vmatprep.subr.mxu0 0.0
        %5917 = vmatpush1.xpose.msra.mxu0 0.0
        %5918 = vmatprep.subr.mxu0 0.0
        %5919 = vmatpush1.xpose.msra.mxu0 0.0
        %5920 = vmatprep.subr.mxu0 0.0
        %5921 = vmatpush1.xpose.msra.mxu0 0.0
        %5922 = vmatprep.subr.mxu0 0.0
        %5923 = vmatpush1.xpose.msra.mxu0 0.0
        %5924 = vmatprep.subr.mxu0 0.0
        %5925 = vmatpush1.xpose.msra.mxu0 0.0
        %5926 = vmatprep.subr.mxu0 0.0
        %5927 = vmatpush1.xpose.msra.mxu0 0.0
        %5928 = vmatprep.mubr.f32.mxu0 1.0
        %5929 = vmatmul.mubr.f32.gmra.mrb[0].mxu0 1.0
        %v5930 = vpop.f32.mrb[0].mxu0
        %v5931 = vadd.f32 %v5861, %v5930
        %v5932 = vpop.f32.mrb[0].mxu0
        %5933 = vdwg.mxu0
        %5934 = vmatprep.subr.mxu0 %v3551
        %5935 = vmatpush1.xpose.msra.mxu0 %v3550
        %5936 = vmatprep.subr.mxu0 %v3615
        %5937 = vmatpush1.xpose.msra.mxu0 %v3614
        %5938 = vmatprep.subr.mxu0 %v3679
        %5939 = vmatpush1.xpose.msra.mxu0 %v3678
        %5940 = vmatprep.subr.mxu0 %v3743
        %5941 = vmatpush1.xpose.msra.mxu0 %v3742
        %5942 = vmatprep.subr.mxu0 %v3807
        %5943 = vmatpush1.xpose.msra.mxu0 %v3806
        %5944 = vmatprep.subr.mxu0 %v3871
        %5945 = vmatpush1.xpose.msra.mxu0 %v3870
        %5946 = vmatprep.subr.mxu0 %v3935
        %5947 = vmatpush1.xpose.msra.mxu0 %v3934
        %5948 = vmatprep.subr.mxu0 %v3999
        %5949 = vmatpush1.xpose.msra.mxu0 %v3998
        %5950 = vmatprep.subr.mxu0 %v4063
        %5951 = vmatpush1.xpose.msra.mxu0 %v4062
        %5952 = vmatprep.subr.mxu0 %v4127
        %5953 = vmatpush1.xpose.msra.mxu0 %v4126
        %5954 = vmatprep.subr.mxu0 %v4191
        %5955 = vmatpush1.xpose.msra.mxu0 %v4190
        %5956 = vmatprep.subr.mxu0 %v4255
        %5957 = vmatpush1.xpose.msra.mxu0 %v4254
        %5958 = vmatprep.subr.mxu0 %v4319
        %5959 = vmatpush1.xpose.msra.mxu0 %v4318
        %5960 = vmatprep.subr.mxu0 %v4383
        %5961 = vmatpush1.xpose.msra.mxu0 %v4382
        %5962 = vmatprep.subr.mxu0 %v4447
        %5963 = vmatpush1.xpose.msra.mxu0 %v4446
        %5964 = vmatprep.subr.mxu0 %v4511
        %5965 = vmatpush1.xpose.msra.mxu0 %v4510
        %5966 = vmatprep.subr.mxu0 0.0
        %5967 = vmatpush1.xpose.msra.mxu0 0.0
        %5968 = vmatprep.subr.mxu0 0.0
        %5969 = vmatpush1.xpose.msra.mxu0 0.0
        %5970 = vmatprep.subr.mxu0 0.0
        %5971 = vmatpush1.xpose.msra.mxu0 0.0
        %5972 = vmatprep.subr.mxu0 0.0
        %5973 = vmatpush1.xpose.msra.mxu0 0.0
        %5974 = vmatprep.subr.mxu0 0.0
        %5975 = vmatpush1.xpose.msra.mxu0 0.0
        %5976 = vmatprep.subr.mxu0 0.0
        %5977 = vmatpush1.xpose.msra.mxu0 0.0
        %5978 = vmatprep.subr.mxu0 0.0
        %5979 = vmatpush1.xpose.msra.mxu0 0.0
        %5980 = vmatprep.subr.mxu0 0.0
        %5981 = vmatpush1.xpose.msra.mxu0 0.0
        %5982 = vmatprep.subr.mxu0 0.0
        %5983 = vmatpush1.xpose.msra.mxu0 0.0
        %5984 = vmatprep.subr.mxu0 0.0
        %5985 = vmatpush1.xpose.msra.mxu0 0.0
        %5986 = vmatprep.subr.mxu0 0.0
        %5987 = vmatpush1.xpose.msra.mxu0 0.0
        %5988 = vmatprep.subr.mxu0 0.0
        %5989 = vmatpush1.xpose.msra.mxu0 0.0
        %5990 = vmatprep.subr.mxu0 0.0
        %5991 = vmatpush1.xpose.msra.mxu0 0.0
        %5992 = vmatprep.subr.mxu0 0.0
        %5993 = vmatpush1.xpose.msra.mxu0 0.0
        %5994 = vmatprep.subr.mxu0 0.0
        %5995 = vmatpush1.xpose.msra.mxu0 0.0
        %5996 = vmatprep.subr.mxu0 0.0
        %5997 = vmatpush1.xpose.msra.mxu0 0.0
        %5998 = vmatprep.mubr.f32.mxu0 1.0
        %5999 = vmatmul.mubr.f32.gmra.mrb[0].mxu0 1.0
        %v6000 = vpop.f32.mrb[0].mxu0
        %v6001 = vadd.f32 %v5931, %v6000
        %v6002 = vpop.f32.mrb[0].mxu0
        %6003 = vdwg.mxu0
        %6004 = vmatprep.subr.mxu0 %v3553
        %6005 = vmatpush1.xpose.msra.mxu0 %v3552
        %6006 = vmatprep.subr.mxu0 %v3617
        %6007 = vmatpush1.xpose.msra.mxu0 %v3616
        %6008 = vmatprep.subr.mxu0 %v3681
        %6009 = vmatpush1.xpose.msra.mxu0 %v3680
        %6010 = vmatprep.subr.mxu0 %v3745
        %6011 = vmatpush1.xpose.msra.mxu0 %v3744
        %6012 = vmatprep.subr.mxu0 %v3809
        %6013 = vmatpush1.xpose.msra.mxu0 %v3808
        %6014 = vmatprep.subr.mxu0 %v3873
        %6015 = vmatpush1.xpose.msra.mxu0 %v3872
        %6016 = vmatprep.subr.mxu0 %v3937
        %6017 = vmatpush1.xpose.msra.mxu0 %v3936
        %6018 = vmatprep.subr.mxu0 %v4001
        %6019 = vmatpush1.xpose.msra.mxu0 %v4000
        %6020 = vmatprep.subr.mxu0 %v4065
        %6021 = vmatpush1.xpose.msra.mxu0 %v4064
        %6022 = vmatprep.subr.mxu0 %v4129
        %6023 = vmatpush1.xpose.msra.mxu0 %v4128
        %6024 = vmatprep.subr.mxu0 %v4193
        %6025 = vmatpush1.xpose.msra.mxu0 %v4192
        %6026 = vmatprep.subr.mxu0 %v4257
        %6027 = vmatpush1.xpose.msra.mxu0 %v4256
        %6028 = vmatprep.subr.mxu0 %v4321
        %6029 = vmatpush1.xpose.msra.mxu0 %v4320
        %6030 = vmatprep.subr.mxu0 %v4385
        %6031 = vmatpush1.xpose.msra.mxu0 %v4384
        %6032 = vmatprep.subr.mxu0 %v4449
        %6033 = vmatpush1.xpose.msra.mxu0 %v4448
        %6034 = vmatprep.subr.mxu0 %v4513
        %6035 = vmatpush1.xpose.msra.mxu0 %v4512
        %6036 = vmatprep.subr.mxu0 0.0
        %6037 = vmatpush1.xpose.msra.mxu0 0.0
        %6038 = vmatprep.subr.mxu0 0.0
        %6039 = vmatpush1.xpose.msra.mxu0 0.0
        %6040 = vmatprep.subr.mxu0 0.0
        %6041 = vmatpush1.xpose.msra.mxu0 0.0
        %6042 = vmatprep.subr.mxu0 0.0
        %6043 = vmatpush1.xpose.msra.mxu0 0.0
        %6044 = vmatprep.subr.mxu0 0.0
        %6045 = vmatpush1.xpose.msra.mxu0 0.0
        %6046 = vmatprep.subr.mxu0 0.0
        %6047 = vmatpush1.xpose.msra.mxu0 0.0
        %6048 = vmatprep.subr.mxu0 0.0
        %6049 = vmatpush1.xpose.msra.mxu0 0.0
        %6050 = vmatprep.subr.mxu0 0.0
        %6051 = vmatpush1.xpose.msra.mxu0 0.0
        %6052 = vmatprep.subr.mxu0 0.0
        %6053 = vmatpush1.xpose.msra.mxu0 0.0
        %6054 = vmatprep.subr.mxu0 0.0
        %6055 = vmatpush1.xpose.msra.mxu0 0.0
        %6056 = vmatprep.subr.mxu0 0.0
        %6057 = vmatpush1.xpose.msra.mxu0 0.0
        %6058 = vmatprep.subr.mxu0 0.0
        %6059 = vmatpush1.xpose.msra.mxu0 0.0
        %6060 = vmatprep.subr.mxu0 0.0
        %6061 = vmatpush1.xpose.msra.mxu0 0.0
        %6062 = vmatprep.subr.mxu0 0.0
        %6063 = vmatpush1.xpose.msra.mxu0 0.0
        %6064 = vmatprep.subr.mxu0 0.0
        %6065 = vmatpush1.xpose.msra.mxu0 0.0
        %6066 = vmatprep.subr.mxu0 0.0
        %6067 = vmatpush1.xpose.msra.mxu0 0.0
        %6068 = vmatprep.mubr.f32.mxu0 1.0
        %6069 = vmatmul.mubr.f32.gmra.mrb[0].mxu0 1.0
        %v6070 = vpop.f32.mrb[0].mxu0
        %v6071 = vadd.f32 %v6001, %v6070
        %v6072 = vpop.f32.mrb[0].mxu0
        %6073 = vdwg.mxu0
        %6074 = vmatprep.subr.mxu0 %v3555
        %6075 = vmatpush1.xpose.msra.mxu0 %v3554
        %6076 = vmatprep.subr.mxu0 %v3619
        %6077 = vmatpush1.xpose.msra.mxu0 %v3618
        %6078 = vmatprep.subr.mxu0 %v3683
        %6079 = vmatpush1.xpose.msra.mxu0 %v3682
        %6080 = vmatprep.subr.mxu0 %v3747
        %6081 = vmatpush1.xpose.msra.mxu0 %v3746
        %6082 = vmatprep.subr.mxu0 %v3811
        %6083 = vmatpush1.xpose.msra.mxu0 %v3810
        %6084 = vmatprep.subr.mxu0 %v3875
        %6085 = vmatpush1.xpose.msra.mxu0 %v3874
        %6086 = vmatprep.subr.mxu0 %v3939
        %6087 = vmatpush1.xpose.msra.mxu0 %v3938
        %6088 = vmatprep.subr.mxu0 %v4003
        %6089 = vmatpush1.xpose.msra.mxu0 %v4002
        %6090 = vmatprep.subr.mxu0 %v4067
        %6091 = vmatpush1.xpose.msra.mxu0 %v4066
        %6092 = vmatprep.subr.mxu0 %v4131
        %6093 = vmatpush1.xpose.msra.mxu0 %v4130
        %6094 = vmatprep.subr.mxu0 %v4195
        %6095 = vmatpush1.xpose.msra.mxu0 %v4194
        %6096 = vmatprep.subr.mxu0 %v4259
        %6097 = vmatpush1.xpose.msra.mxu0 %v4258
        %6098 = vmatprep.subr.mxu0 %v4323
        %6099 = vmatpush1.xpose.msra.mxu0 %v4322
        %6100 = vmatprep.subr.mxu0 %v4387
        %6101 = vmatpush1.xpose.msra.mxu0 %v4386
        %6102 = vmatprep.subr.mxu0 %v4451
        %6103 = vmatpush1.xpose.msra.mxu0 %v4450
        %6104 = vmatprep.subr.mxu0 %v4515
        %6105 = vmatpush1.xpose.msra.mxu0 %v4514
        %6106 = vmatprep.subr.mxu0 0.0
        %6107 = vmatpush1.xpose.msra.mxu0 0.0
        %6108 = vmatprep.subr.mxu0 0.0
        %6109 = vmatpush1.xpose.msra.mxu0 0.0
        %6110 = vmatprep.subr.mxu0 0.0
        %6111 = vmatpush1.xpose.msra.mxu0 0.0
        %6112 = vmatprep.subr.mxu0 0.0
        %6113 = vmatpush1.xpose.msra.mxu0 0.0
        %6114 = vmatprep.subr.mxu0 0.0
        %6115 = vmatpush1.xpose.msra.mxu0 0.0
        %6116 = vmatprep.subr.mxu0 0.0
        %6117 = vmatpush1.xpose.msra.mxu0 0.0
        %6118 = vmatprep.subr.mxu0 0.0
        %6119 = vmatpush1.xpose.msra.mxu0 0.0
        %6120 = vmatprep.subr.mxu0 0.0
        %6121 = vmatpush1.xpose.msra.mxu0 0.0
        %6122 = vmatprep.subr.mxu0 0.0
        %6123 = vmatpush1.xpose.msra.mxu0 0.0
        %6124 = vmatprep.subr.mxu0 0.0
        %6125 = vmatpush1.xpose.msra.mxu0 0.0
        %6126 = vmatprep.subr.mxu0 0.0
        %6127 = vmatpush1.xpose.msra.mxu0 0.0
        %6128 = vmatprep.subr.mxu0 0.0
        %6129 = vmatpush1.xpose.msra.mxu0 0.0
        %6130 = vmatprep.subr.mxu0 0.0
        %6131 = vmatpush1.xpose.msra.mxu0 0.0
        %6132 = vmatprep.subr.mxu0 0.0
        %6133 = vmatpush1.xpose.msra.mxu0 0.0
        %6134 = vmatprep.subr.mxu0 0.0
        %6135 = vmatpush1.xpose.msra.mxu0 0.0
        %6136 = vmatprep.subr.mxu0 0.0
        %6137 = vmatpush1.xpose.msra.mxu0 0.0
        %6138 = vmatprep.mubr.f32.mxu0 1.0
        %6139 = vmatmul.mubr.f32.gmra.mrb[0].mxu0 1.0
        %v6140 = vpop.f32.mrb[0].mxu0
        %v6141 = vadd.f32 %v6071, %v6140
        %v6142 = vpop.f32.mrb[0].mxu0
        %6143 = vdwg.mxu0
        %6144 = vmatprep.subr.mxu0 %v3557
        %6145 = vmatpush1.xpose.msra.mxu0 %v3556
        %6146 = vmatprep.subr.mxu0 %v3621
        %6147 = vmatpush1.xpose.msra.mxu0 %v3620
        %6148 = vmatprep.subr.mxu0 %v3685
        %6149 = vmatpush1.xpose.msra.mxu0 %v3684
        %6150 = vmatprep.subr.mxu0 %v3749
        %6151 = vmatpush1.xpose.msra.mxu0 %v3748
        %6152 = vmatprep.subr.mxu0 %v3813
        %6153 = vmatpush1.xpose.msra.mxu0 %v3812
        %6154 = vmatprep.subr.mxu0 %v3877
        %6155 = vmatpush1.xpose.msra.mxu0 %v3876
        %6156 = vmatprep.subr.mxu0 %v3941
        %6157 = vmatpush1.xpose.msra.mxu0 %v3940
        %6158 = vmatprep.subr.mxu0 %v4005
        %6159 = vmatpush1.xpose.msra.mxu0 %v4004
        %6160 = vmatprep.subr.mxu0 %v4069
        %6161 = vmatpush1.xpose.msra.mxu0 %v4068
        %6162 = vmatprep.subr.mxu0 %v4133
        %6163 = vmatpush1.xpose.msra.mxu0 %v4132
        %6164 = vmatprep.subr.mxu0 %v4197
        %6165 = vmatpush1.xpose.msra.mxu0 %v4196
        %6166 = vmatprep.subr.mxu0 %v4261
        %6167 = vmatpush1.xpose.msra.mxu0 %v4260
        %6168 = vmatprep.subr.mxu0 %v4325
        %6169 = vmatpush1.xpose.msra.mxu0 %v4324
        %6170 = vmatprep.subr.mxu0 %v4389
        %6171 = vmatpush1.xpose.msra.mxu0 %v4388
        %6172 = vmatprep.subr.mxu0 %v4453
        %6173 = vmatpush1.xpose.msra.mxu0 %v4452
        %6174 = vmatprep.subr.mxu0 %v4517
        %6175 = vmatpush1.xpose.msra.mxu0 %v4516
        %6176 = vmatprep.subr.mxu0 0.0
        %6177 = vmatpush1.xpose.msra.mxu0 0.0
        %6178 = vmatprep.subr.mxu0 0.0
        %6179 = vmatpush1.xpose.msra.mxu0 0.0
        %6180 = vmatprep.subr.mxu0 0.0
        %6181 = vmatpush1.xpose.msra.mxu0 0.0
        %6182 = vmatprep.subr.mxu0 0.0
        %6183 = vmatpush1.xpose.msra.mxu0 0.0
        %6184 = vmatprep.subr.mxu0 0.0
        %6185 = vmatpush1.xpose.msra.mxu0 0.0
        %6186 = vmatprep.subr.mxu0 0.0
        %6187 = vmatpush1.xpose.msra.mxu0 0.0
        %6188 = vmatprep.subr.mxu0 0.0
        %6189 = vmatpush1.xpose.msra.mxu0 0.0
        %6190 = vmatprep.subr.mxu0 0.0
        %6191 = vmatpush1.xpose.msra.mxu0 0.0
        %6192 = vmatprep.subr.mxu0 0.0
        %6193 = vmatpush1.xpose.msra.mxu0 0.0
        %6194 = vmatprep.subr.mxu0 0.0
        %6195 = vmatpush1.xpose.msra.mxu0 0.0
        %6196 = vmatprep.subr.mxu0 0.0
        %6197 = vmatpush1.xpose.msra.mxu0 0.0
        %6198 = vmatprep.subr.mxu0 0.0
        %6199 = vmatpush1.xpose.msra.mxu0 0.0
        %6200 = vmatprep.subr.mxu0 0.0
        %6201 = vmatpush1.xpose.msra.mxu0 0.0
        %6202 = vmatprep.subr.mxu0 0.0
        %6203 = vmatpush1.xpose.msra.mxu0 0.0
        %6204 = vmatprep.subr.mxu0 0.0
        %6205 = vmatpush1.xpose.msra.mxu0 0.0
        %6206 = vmatprep.subr.mxu0 0.0
        %6207 = vmatpush1.xpose.msra.mxu0 0.0
        %6208 = vmatprep.mubr.f32.mxu0 1.0
        %6209 = vmatmul.mubr.f32.gmra.mrb[0].mxu0 1.0
        %v6210 = vpop.f32.mrb[0].mxu0
        %v6211 = vadd.f32 %v6141, %v6210
        %v6212 = vpop.f32.mrb[0].mxu0
        %6213 = vdwg.mxu0
        %6214 = vmatprep.subr.mxu0 %v3559
        %6215 = vmatpush1.xpose.msra.mxu0 %v3558
        %6216 = vmatprep.subr.mxu0 %v3623
        %6217 = vmatpush1.xpose.msra.mxu0 %v3622
        %6218 = vmatprep.subr.mxu0 %v3687
        %6219 = vmatpush1.xpose.msra.mxu0 %v3686
        %6220 = vmatprep.subr.mxu0 %v3751
        %6221 = vmatpush1.xpose.msra.mxu0 %v3750
        %6222 = vmatprep.subr.mxu0 %v3815
        %6223 = vmatpush1.xpose.msra.mxu0 %v3814
        %6224 = vmatprep.subr.mxu0 %v3879
        %6225 = vmatpush1.xpose.msra.mxu0 %v3878
        %6226 = vmatprep.subr.mxu0 %v3943
        %6227 = vmatpush1.xpose.msra.mxu0 %v3942
        %6228 = vmatprep.subr.mxu0 %v4007
        %6229 = vmatpush1.xpose.msra.mxu0 %v4006
        %6230 = vmatprep.subr.mxu0 %v4071
        %6231 = vmatpush1.xpose.msra.mxu0 %v4070
        %6232 = vmatprep.subr.mxu0 %v4135
        %6233 = vmatpush1.xpose.msra.mxu0 %v4134
        %6234 = vmatprep.subr.mxu0 %v4199
        %6235 = vmatpush1.xpose.msra.mxu0 %v4198
        %6236 = vmatprep.subr.mxu0 %v4263
        %6237 = vmatpush1.xpose.msra.mxu0 %v4262
        %6238 = vmatprep.subr.mxu0 %v4327
        %6239 = vmatpush1.xpose.msra.mxu0 %v4326
        %6240 = vmatprep.subr.mxu0 %v4391
        %6241 = vmatpush1.xpose.msra.mxu0 %v4390
        %6242 = vmatprep.subr.mxu0 %v4455
        %6243 = vmatpush1.xpose.msra.mxu0 %v4454
        %6244 = vmatprep.subr.mxu0 %v4519
        %6245 = vmatpush1.xpose.msra.mxu0 %v4518
        %6246 = vmatprep.subr.mxu0 0.0
        %6247 = vmatpush1.xpose.msra.mxu0 0.0
        %6248 = vmatprep.subr.mxu0 0.0
        %6249 = vmatpush1.xpose.msra.mxu0 0.0
        %6250 = vmatprep.subr.mxu0 0.0
        %6251 = vmatpush1.xpose.msra.mxu0 0.0
        %6252 = vmatprep.subr.mxu0 0.0
        %6253 = vmatpush1.xpose.msra.mxu0 0.0
        %6254 = vmatprep.subr.mxu0 0.0
        %6255 = vmatpush1.xpose.msra.mxu0 0.0
        %6256 = vmatprep.subr.mxu0 0.0
        %6257 = vmatpush1.xpose.msra.mxu0 0.0
        %6258 = vmatprep.subr.mxu0 0.0
        %6259 = vmatpush1.xpose.msra.mxu0 0.0
        %6260 = vmatprep.subr.mxu0 0.0
        %6261 = vmatpush1.xpose.msra.mxu0 0.0
        %6262 = vmatprep.subr.mxu0 0.0
        %6263 = vmatpush1.xpose.msra.mxu0 0.0
        %6264 = vmatprep.subr.mxu0 0.0
        %6265 = vmatpush1.xpose.msra.mxu0 0.0
        %6266 = vmatprep.subr.mxu0 0.0
        %6267 = vmatpush1.xpose.msra.mxu0 0.0
        %6268 = vmatprep.subr.mxu0 0.0
        %6269 = vmatpush1.xpose.msra.mxu0 0.0
        %6270 = vmatprep.subr.mxu0 0.0
        %6271 = vmatpush1.xpose.msra.mxu0 0.0
        %6272 = vmatprep.subr.mxu0 0.0
        %6273 = vmatpush1.xpose.msra.mxu0 0.0
        %6274 = vmatprep.subr.mxu0 0.0
        %6275 = vmatpush1.xpose.msra.mxu0 0.0
        %6276 = vmatprep.subr.mxu0 0.0
        %6277 = vmatpush1.xpose.msra.mxu0 0.0
        %6278 = vmatprep.mubr.f32.mxu0 1.0
        %6279 = vmatmul.mubr.f32.gmra.mrb[0].mxu0 1.0
        %v6280 = vpop.f32.mrb[0].mxu0
        %v6281 = vadd.f32 %v6211, %v6280
        %v6282 = vpop.f32.mrb[0].mxu0
        %6283 = vdwg.mxu0
        %6284 = vmatprep.subr.mxu0 %v3561
        %6285 = vmatpush1.xpose.msra.mxu0 %v3560
        %6286 = vmatprep.subr.mxu0 %v3625
        %6287 = vmatpush1.xpose.msra.mxu0 %v3624
        %6288 = vmatprep.subr.mxu0 %v3689
        %6289 = vmatpush1.xpose.msra.mxu0 %v3688
        %6290 = vmatprep.subr.mxu0 %v3753
        %6291 = vmatpush1.xpose.msra.mxu0 %v3752
        %6292 = vmatprep.subr.mxu0 %v3817
        %6293 = vmatpush1.xpose.msra.mxu0 %v3816
        %6294 = vmatprep.subr.mxu0 %v3881
        %6295 = vmatpush1.xpose.msra.mxu0 %v3880
        %6296 = vmatprep.subr.mxu0 %v3945
        %6297 = vmatpush1.xpose.msra.mxu0 %v3944
        %6298 = vmatprep.subr.mxu0 %v4009
        %6299 = vmatpush1.xpose.msra.mxu0 %v4008
        %6300 = vmatprep.subr.mxu0 %v4073
        %6301 = vmatpush1.xpose.msra.mxu0 %v4072
        %6302 = vmatprep.subr.mxu0 %v4137
        %6303 = vmatpush1.xpose.msra.mxu0 %v4136
        %6304 = vmatprep.subr.mxu0 %v4201
        %6305 = vmatpush1.xpose.msra.mxu0 %v4200
        %6306 = vmatprep.subr.mxu0 %v4265
        %6307 = vmatpush1.xpose.msra.mxu0 %v4264
        %6308 = vmatprep.subr.mxu0 %v4329
        %6309 = vmatpush1.xpose.msra.mxu0 %v4328
        %6310 = vmatprep.subr.mxu0 %v4393
        %6311 = vmatpush1.xpose.msra.mxu0 %v4392
        %6312 = vmatprep.subr.mxu0 %v4457
        %6313 = vmatpush1.xpose.msra.mxu0 %v4456
        %6314 = vmatprep.subr.mxu0 %v4521
        %6315 = vmatpush1.xpose.msra.mxu0 %v4520
        %6316 = vmatprep.subr.mxu0 0.0
        %6317 = vmatpush1.xpose.msra.mxu0 0.0
        %6318 = vmatprep.subr.mxu0 0.0
        %6319 = vmatpush1.xpose.msra.mxu0 0.0
        %6320 = vmatprep.subr.mxu0 0.0
        %6321 = vmatpush1.xpose.msra.mxu0 0.0
        %6322 = vmatprep.subr.mxu0 0.0
        %6323 = vmatpush1.xpose.msra.mxu0 0.0
        %6324 = vmatprep.subr.mxu0 0.0
        %6325 = vmatpush1.xpose.msra.mxu0 0.0
        %6326 = vmatprep.subr.mxu0 0.0
        %6327 = vmatpush1.xpose.msra.mxu0 0.0
        %6328 = vmatprep.subr.mxu0 0.0
        %6329 = vmatpush1.xpose.msra.mxu0 0.0
        %6330 = vmatprep.subr.mxu0 0.0
        %6331 = vmatpush1.xpose.msra.mxu0 0.0
        %6332 = vmatprep.subr.mxu0 0.0
        %6333 = vmatpush1.xpose.msra.mxu0 0.0
        %6334 = vmatprep.subr.mxu0 0.0
        %6335 = vmatpush1.xpose.msra.mxu0 0.0
        %6336 = vmatprep.subr.mxu0 0.0
        %6337 = vmatpush1.xpose.msra.mxu0 0.0
        %6338 = vmatprep.subr.mxu0 0.0
        %6339 = vmatpush1.xpose.msra.mxu0 0.0
        %6340 = vmatprep.subr.mxu0 0.0
        %6341 = vmatpush1.xpose.msra.mxu0 0.0
        %6342 = vmatprep.subr.mxu0 0.0
        %6343 = vmatpush1.xpose.msra.mxu0 0.0
        %6344 = vmatprep.subr.mxu0 0.0
        %6345 = vmatpush1.xpose.msra.mxu0 0.0
        %6346 = vmatprep.subr.mxu0 0.0
        %6347 = vmatpush1.xpose.msra.mxu0 0.0
        %6348 = vmatprep.mubr.f32.mxu0 1.0
        %6349 = vmatmul.mubr.f32.gmra.mrb[0].mxu0 1.0
        %v6350 = vpop.f32.mrb[0].mxu0
        %v6351 = vadd.f32 %v6281, %v6350
        %v6352 = vpop.f32.mrb[0].mxu0
        %6353 = vdwg.mxu0
        %6354 = vmatprep.subr.mxu0 %v3563
        %6355 = vmatpush1.xpose.msra.mxu0 %v3562
        %6356 = vmatprep.subr.mxu0 %v3627
        %6357 = vmatpush1.xpose.msra.mxu0 %v3626
        %6358 = vmatprep.subr.mxu0 %v3691
        %6359 = vmatpush1.xpose.msra.mxu0 %v3690
        %6360 = vmatprep.subr.mxu0 %v3755
        %6361 = vmatpush1.xpose.msra.mxu0 %v3754
        %6362 = vmatprep.subr.mxu0 %v3819
        %6363 = vmatpush1.xpose.msra.mxu0 %v3818
        %6364 = vmatprep.subr.mxu0 %v3883
        %6365 = vmatpush1.xpose.msra.mxu0 %v3882
        %6366 = vmatprep.subr.mxu0 %v3947
        %6367 = vmatpush1.xpose.msra.mxu0 %v3946
        %6368 = vmatprep.subr.mxu0 %v4011
        %6369 = vmatpush1.xpose.msra.mxu0 %v4010
        %6370 = vmatprep.subr.mxu0 %v4075
        %6371 = vmatpush1.xpose.msra.mxu0 %v4074
        %6372 = vmatprep.subr.mxu0 %v4139
        %6373 = vmatpush1.xpose.msra.mxu0 %v4138
        %6374 = vmatprep.subr.mxu0 %v4203
        %6375 = vmatpush1.xpose.msra.mxu0 %v4202
        %6376 = vmatprep.subr.mxu0 %v4267
        %6377 = vmatpush1.xpose.msra.mxu0 %v4266
        %6378 = vmatprep.subr.mxu0 %v4331
        %6379 = vmatpush1.xpose.msra.mxu0 %v4330
        %6380 = vmatprep.subr.mxu0 %v4395
        %6381 = vmatpush1.xpose.msra.mxu0 %v4394
        %6382 = vmatprep.subr.mxu0 %v4459
        %6383 = vmatpush1.xpose.msra.mxu0 %v4458
        %6384 = vmatprep.subr.mxu0 %v4523
        %6385 = vmatpush1.xpose.msra.mxu0 %v4522
        %6386 = vmatprep.subr.mxu0 0.0
        %6387 = vmatpush1.xpose.msra.mxu0 0.0
        %6388 = vmatprep.subr.mxu0 0.0
        %6389 = vmatpush1.xpose.msra.mxu0 0.0
        %6390 = vmatprep.subr.mxu0 0.0
        %6391 = vmatpush1.xpose.msra.mxu0 0.0
        %6392 = vmatprep.subr.mxu0 0.0
        %6393 = vmatpush1.xpose.msra.mxu0 0.0
        %6394 = vmatprep.subr.mxu0 0.0
        %6395 = vmatpush1.xpose.msra.mxu0 0.0
        %6396 = vmatprep.subr.mxu0 0.0
        %6397 = vmatpush1.xpose.msra.mxu0 0.0
        %6398 = vmatprep.subr.mxu0 0.0
        %6399 = vmatpush1.xpose.msra.mxu0 0.0
        %6400 = vmatprep.subr.mxu0 0.0
        %6401 = vmatpush1.xpose.msra.mxu0 0.0
        %6402 = vmatprep.subr.mxu0 0.0
        %6403 = vmatpush1.xpose.msra.mxu0 0.0
        %6404 = vmatprep.subr.mxu0 0.0
        %6405 = vmatpush1.xpose.msra.mxu0 0.0
        %6406 = vmatprep.subr.mxu0 0.0
        %6407 = vmatpush1.xpose.msra.mxu0 0.0
        %6408 = vmatprep.subr.mxu0 0.0
        %6409 = vmatpush1.xpose.msra.mxu0 0.0
        %6410 = vmatprep.subr.mxu0 0.0
        %6411 = vmatpush1.xpose.msra.mxu0 0.0
        %6412 = vmatprep.subr.mxu0 0.0
        %6413 = vmatpush1.xpose.msra.mxu0 0.0
        %6414 = vmatprep.subr.mxu0 0.0
        %6415 = vmatpush1.xpose.msra.mxu0 0.0
        %6416 = vmatprep.subr.mxu0 0.0
        %6417 = vmatpush1.xpose.msra.mxu0 0.0
        %6418 = vmatprep.mubr.f32.mxu0 1.0
        %6419 = vmatmul.mubr.f32.gmra.mrb[0].mxu0 1.0
        %v6420 = vpop.f32.mrb[0].mxu0
        %v6421 = vadd.f32 %v6351, %v6420
        %v6422 = vpop.f32.mrb[0].mxu0
        %6423 = vdwg.mxu0
        %6424 = vmatprep.subr.mxu0 %v3565
        %6425 = vmatpush1.xpose.msra.mxu0 %v3564
        %6426 = vmatprep.subr.mxu0 %v3629
        %6427 = vmatpush1.xpose.msra.mxu0 %v3628
        %6428 = vmatprep.subr.mxu0 %v3693
        %6429 = vmatpush1.xpose.msra.mxu0 %v3692
        %6430 = vmatprep.subr.mxu0 %v3757
        %6431 = vmatpush1.xpose.msra.mxu0 %v3756
        %6432 = vmatprep.subr.mxu0 %v3821
        %6433 = vmatpush1.xpose.msra.mxu0 %v3820
        %6434 = vmatprep.subr.mxu0 %v3885
        %6435 = vmatpush1.xpose.msra.mxu0 %v3884
        %6436 = vmatprep.subr.mxu0 %v3949
        %6437 = vmatpush1.xpose.msra.mxu0 %v3948
        %6438 = vmatprep.subr.mxu0 %v4013
        %6439 = vmatpush1.xpose.msra.mxu0 %v4012
        %6440 = vmatprep.subr.mxu0 %v4077
        %6441 = vmatpush1.xpose.msra.mxu0 %v4076
        %6442 = vmatprep.subr.mxu0 %v4141
        %6443 = vmatpush1.xpose.msra.mxu0 %v4140
        %6444 = vmatprep.subr.mxu0 %v4205
        %6445 = vmatpush1.xpose.msra.mxu0 %v4204
        %6446 = vmatprep.subr.mxu0 %v4269
        %6447 = vmatpush1.xpose.msra.mxu0 %v4268
        %6448 = vmatprep.subr.mxu0 %v4333
        %6449 = vmatpush1.xpose.msra.mxu0 %v4332
        %6450 = vmatprep.subr.mxu0 %v4397
        %6451 = vmatpush1.xpose.msra.mxu0 %v4396
        %6452 = vmatprep.subr.mxu0 %v4461
        %6453 = vmatpush1.xpose.msra.mxu0 %v4460
        %6454 = vmatprep.subr.mxu0 %v4525
        %6455 = vmatpush1.xpose.msra.mxu0 %v4524
        %6456 = vmatprep.subr.mxu0 0.0
        %6457 = vmatpush1.xpose.msra.mxu0 0.0
        %6458 = vmatprep.subr.mxu0 0.0
        %6459 = vmatpush1.xpose.msra.mxu0 0.0
        %6460 = vmatprep.subr.mxu0 0.0
        %6461 = vmatpush1.xpose.msra.mxu0 0.0
        %6462 = vmatprep.subr.mxu0 0.0
        %6463 = vmatpush1.xpose.msra.mxu0 0.0
        %6464 = vmatprep.subr.mxu0 0.0
        %6465 = vmatpush1.xpose.msra.mxu0 0.0
        %6466 = vmatprep.subr.mxu0 0.0
        %6467 = vmatpush1.xpose.msra.mxu0 0.0
        %6468 = vmatprep.subr.mxu0 0.0
        %6469 = vmatpush1.xpose.msra.mxu0 0.0
        %6470 = vmatprep.subr.mxu0 0.0
        %6471 = vmatpush1.xpose.msra.mxu0 0.0
        %6472 = vmatprep.subr.mxu0 0.0
        %6473 = vmatpush1.xpose.msra.mxu0 0.0
        %6474 = vmatprep.subr.mxu0 0.0
        %6475 = vmatpush1.xpose.msra.mxu0 0.0
        %6476 = vmatprep.subr.mxu0 0.0
        %6477 = vmatpush1.xpose.msra.mxu0 0.0
        %6478 = vmatprep.subr.mxu0 0.0
        %6479 = vmatpush1.xpose.msra.mxu0 0.0
        %6480 = vmatprep.subr.mxu0 0.0
        %6481 = vmatpush1.xpose.msra.mxu0 0.0
        %6482 = vmatprep.subr.mxu0 0.0
        %6483 = vmatpush1.xpose.msra.mxu0 0.0
        %6484 = vmatprep.subr.mxu0 0.0
        %6485 = vmatpush1.xpose.msra.mxu0 0.0
        %6486 = vmatprep.subr.mxu0 0.0
        %6487 = vmatpush1.xpose.msra.mxu0 0.0
        %6488 = vmatprep.mubr.f32.mxu0 1.0
        %6489 = vmatmul.mubr.f32.gmra.mrb[0].mxu0 1.0
        %v6490 = vpop.f32.mrb[0].mxu0
        %v6491 = vadd.f32 %v6421, %v6490
        %v6492 = vpop.f32.mrb[0].mxu0
        %6493 = vdwg.mxu0
        %6494 = vmatprep.subr.mxu0 %v3567
        %6495 = vmatpush1.xpose.msra.mxu0 %v3566
        %6496 = vmatprep.subr.mxu0 %v3631
        %6497 = vmatpush1.xpose.msra.mxu0 %v3630
        %6498 = vmatprep.subr.mxu0 %v3695
        %6499 = vmatpush1.xpose.msra.mxu0 %v3694
        %6500 = vmatprep.subr.mxu0 %v3759
        %6501 = vmatpush1.xpose.msra.mxu0 %v3758
        %6502 = vmatprep.subr.mxu0 %v3823
        %6503 = vmatpush1.xpose.msra.mxu0 %v3822
        %6504 = vmatprep.subr.mxu0 %v3887
        %6505 = vmatpush1.xpose.msra.mxu0 %v3886
        %6506 = vmatprep.subr.mxu0 %v3951
        %6507 = vmatpush1.xpose.msra.mxu0 %v3950
        %6508 = vmatprep.subr.mxu0 %v4015
        %6509 = vmatpush1.xpose.msra.mxu0 %v4014
        %6510 = vmatprep.subr.mxu0 %v4079
        %6511 = vmatpush1.xpose.msra.mxu0 %v4078
        %6512 = vmatprep.subr.mxu0 %v4143
        %6513 = vmatpush1.xpose.msra.mxu0 %v4142
        %6514 = vmatprep.subr.mxu0 %v4207
        %6515 = vmatpush1.xpose.msra.mxu0 %v4206
        %6516 = vmatprep.subr.mxu0 %v4271
        %6517 = vmatpush1.xpose.msra.mxu0 %v4270
        %6518 = vmatprep.subr.mxu0 %v4335
        %6519 = vmatpush1.xpose.msra.mxu0 %v4334
        %6520 = vmatprep.subr.mxu0 %v4399
        %6521 = vmatpush1.xpose.msra.mxu0 %v4398
        %6522 = vmatprep.subr.mxu0 %v4463
        %6523 = vmatpush1.xpose.msra.mxu0 %v4462
        %6524 = vmatprep.subr.mxu0 %v4527
        %6525 = vmatpush1.xpose.msra.mxu0 %v4526
        %6526 = vmatprep.subr.mxu0 0.0
        %6527 = vmatpush1.xpose.msra.mxu0 0.0
        %6528 = vmatprep.subr.mxu0 0.0
        %6529 = vmatpush1.xpose.msra.mxu0 0.0
        %6530 = vmatprep.subr.mxu0 0.0
        %6531 = vmatpush1.xpose.msra.mxu0 0.0
        %6532 = vmatprep.subr.mxu0 0.0
        %6533 = vmatpush1.xpose.msra.mxu0 0.0
        %6534 = vmatprep.subr.mxu0 0.0
        %6535 = vmatpush1.xpose.msra.mxu0 0.0
        %6536 = vmatprep.subr.mxu0 0.0
        %6537 = vmatpush1.xpose.msra.mxu0 0.0
        %6538 = vmatprep.subr.mxu0 0.0
        %6539 = vmatpush1.xpose.msra.mxu0 0.0
        %6540 = vmatprep.subr.mxu0 0.0
        %6541 = vmatpush1.xpose.msra.mxu0 0.0
        %6542 = vmatprep.subr.mxu0 0.0
        %6543 = vmatpush1.xpose.msra.mxu0 0.0
        %6544 = vmatprep.subr.mxu0 0.0
        %6545 = vmatpush1.xpose.msra.mxu0 0.0
        %6546 = vmatprep.subr.mxu0 0.0
        %6547 = vmatpush1.xpose.msra.mxu0 0.0
        %6548 = vmatprep.subr.mxu0 0.0
        %6549 = vmatpush1.xpose.msra.mxu0 0.0
        %6550 = vmatprep.subr.mxu0 0.0
        %6551 = vmatpush1.xpose.msra.mxu0 0.0
        %6552 = vmatprep.subr.mxu0 0.0
        %6553 = vmatpush1.xpose.msra.mxu0 0.0
        %6554 = vmatprep.subr.mxu0 0.0
        %6555 = vmatpush1.xpose.msra.mxu0 0.0
        %6556 = vmatprep.subr.mxu0 0.0
        %6557 = vmatpush1.xpose.msra.mxu0 0.0
        %6558 = vmatprep.mubr.f32.mxu0 1.0
        %6559 = vmatmul.mubr.f32.gmra.mrb[0].mxu0 1.0
        %v6560 = vpop.f32.mrb[0].mxu0
        %v6561 = vadd.f32 %v6491, %v6560
        %v6562 = vpop.f32.mrb[0].mxu0
        %6563 = vdwg.mxu0
        %6564 = vmatprep.subr.mxu0 %v3569
        %6565 = vmatpush1.xpose.msra.mxu0 %v3568
        %6566 = vmatprep.subr.mxu0 %v3633
        %6567 = vmatpush1.xpose.msra.mxu0 %v3632
        %6568 = vmatprep.subr.mxu0 %v3697
        %6569 = vmatpush1.xpose.msra.mxu0 %v3696
        %6570 = vmatprep.subr.mxu0 %v3761
        %6571 = vmatpush1.xpose.msra.mxu0 %v3760
        %6572 = vmatprep.subr.mxu0 %v3825
        %6573 = vmatpush1.xpose.msra.mxu0 %v3824
        %6574 = vmatprep.subr.mxu0 %v3889
        %6575 = vmatpush1.xpose.msra.mxu0 %v3888
        %6576 = vmatprep.subr.mxu0 %v3953
        %6577 = vmatpush1.xpose.msra.mxu0 %v3952
        %6578 = vmatprep.subr.mxu0 %v4017
        %6579 = vmatpush1.xpose.msra.mxu0 %v4016
        %6580 = vmatprep.subr.mxu0 %v4081
        %6581 = vmatpush1.xpose.msra.mxu0 %v4080
        %6582 = vmatprep.subr.mxu0 %v4145
        %6583 = vmatpush1.xpose.msra.mxu0 %v4144
        %6584 = vmatprep.subr.mxu0 %v4209
        %6585 = vmatpush1.xpose.msra.mxu0 %v4208
        %6586 = vmatprep.subr.mxu0 %v4273
        %6587 = vmatpush1.xpose.msra.mxu0 %v4272
        %6588 = vmatprep.subr.mxu0 %v4337
        %6589 = vmatpush1.xpose.msra.mxu0 %v4336
        %6590 = vmatprep.subr.mxu0 %v4401
        %6591 = vmatpush1.xpose.msra.mxu0 %v4400
        %6592 = vmatprep.subr.mxu0 %v4465
        %6593 = vmatpush1.xpose.msra.mxu0 %v4464
        %6594 = vmatprep.subr.mxu0 %v4529
        %6595 = vmatpush1.xpose.msra.mxu0 %v4528
        %6596 = vmatprep.subr.mxu0 0.0
        %6597 = vmatpush1.xpose.msra.mxu0 0.0
        %6598 = vmatprep.subr.mxu0 0.0
        %6599 = vmatpush1.xpose.msra.mxu0 0.0
        %6600 = vmatprep.subr.mxu0 0.0
        %6601 = vmatpush1.xpose.msra.mxu0 0.0
        %6602 = vmatprep.subr.mxu0 0.0
        %6603 = vmatpush1.xpose.msra.mxu0 0.0
        %6604 = vmatprep.subr.mxu0 0.0
        %6605 = vmatpush1.xpose.msra.mxu0 0.0
        %6606 = vmatprep.subr.mxu0 0.0
        %6607 = vmatpush1.xpose.msra.mxu0 0.0
        %6608 = vmatprep.subr.mxu0 0.0
        %6609 = vmatpush1.xpose.msra.mxu0 0.0
        %6610 = vmatprep.subr.mxu0 0.0
        %6611 = vmatpush1.xpose.msra.mxu0 0.0
        %6612 = vmatprep.subr.mxu0 0.0
        %6613 = vmatpush1.xpose.msra.mxu0 0.0
        %6614 = vmatprep.subr.mxu0 0.0
        %6615 = vmatpush1.xpose.msra.mxu0 0.0
        %6616 = vmatprep.subr.mxu0 0.0
        %6617 = vmatpush1.xpose.msra.mxu0 0.0
        %6618 = vmatprep.subr.mxu0 0.0
        %6619 = vmatpush1.xpose.msra.mxu0 0.0
        %6620 = vmatprep.subr.mxu0 0.0
        %6621 = vmatpush1.xpose.msra.mxu0 0.0
        %6622 = vmatprep.subr.mxu0 0.0
        %6623 = vmatpush1.xpose.msra.mxu0 0.0
        %6624 = vmatprep.subr.mxu0 0.0
        %6625 = vmatpush1.xpose.msra.mxu0 0.0
        %6626 = vmatprep.subr.mxu0 0.0
        %6627 = vmatpush1.xpose.msra.mxu0 0.0
        %6628 = vmatprep.mubr.f32.mxu0 1.0
        %6629 = vmatmul.mubr.f32.gmra.mrb[0].mxu0 1.0
        %v6630 = vpop.f32.mrb[0].mxu0
        %v6631 = vadd.f32 %v6561, %v6630
        %v6632 = vpop.f32.mrb[0].mxu0
        %6633 = vdwg.mxu0
        %6634 = vmatprep.subr.mxu0 %v3571
        %6635 = vmatpush1.xpose.msra.mxu0 %v3570
        %6636 = vmatprep.subr.mxu0 %v3635
        %6637 = vmatpush1.xpose.msra.mxu0 %v3634
        %6638 = vmatprep.subr.mxu0 %v3699
        %6639 = vmatpush1.xpose.msra.mxu0 %v3698
        %6640 = vmatprep.subr.mxu0 %v3763
        %6641 = vmatpush1.xpose.msra.mxu0 %v3762
        %6642 = vmatprep.subr.mxu0 %v3827
        %6643 = vmatpush1.xpose.msra.mxu0 %v3826
        %6644 = vmatprep.subr.mxu0 %v3891
        %6645 = vmatpush1.xpose.msra.mxu0 %v3890
        %6646 = vmatprep.subr.mxu0 %v3955
        %6647 = vmatpush1.xpose.msra.mxu0 %v3954
        %6648 = vmatprep.subr.mxu0 %v4019
        %6649 = vmatpush1.xpose.msra.mxu0 %v4018
        %6650 = vmatprep.subr.mxu0 %v4083
        %6651 = vmatpush1.xpose.msra.mxu0 %v4082
        %6652 = vmatprep.subr.mxu0 %v4147
        %6653 = vmatpush1.xpose.msra.mxu0 %v4146
        %6654 = vmatprep.subr.mxu0 %v4211
        %6655 = vmatpush1.xpose.msra.mxu0 %v4210
        %6656 = vmatprep.subr.mxu0 %v4275
        %6657 = vmatpush1.xpose.msra.mxu0 %v4274
        %6658 = vmatprep.subr.mxu0 %v4339
        %6659 = vmatpush1.xpose.msra.mxu0 %v4338
        %6660 = vmatprep.subr.mxu0 %v4403
        %6661 = vmatpush1.xpose.msra.mxu0 %v4402
        %6662 = vmatprep.subr.mxu0 %v4467
        %6663 = vmatpush1.xpose.msra.mxu0 %v4466
        %6664 = vmatprep.subr.mxu0 %v4531
        %6665 = vmatpush1.xpose.msra.mxu0 %v4530
        %6666 = vmatprep.subr.mxu0 0.0
        %6667 = vmatpush1.xpose.msra.mxu0 0.0
        %6668 = vmatprep.subr.mxu0 0.0
        %6669 = vmatpush1.xpose.msra.mxu0 0.0
        %6670 = vmatprep.subr.mxu0 0.0
        %6671 = vmatpush1.xpose.msra.mxu0 0.0
        %6672 = vmatprep.subr.mxu0 0.0
        %6673 = vmatpush1.xpose.msra.mxu0 0.0
        %6674 = vmatprep.subr.mxu0 0.0
        %6675 = vmatpush1.xpose.msra.mxu0 0.0
        %6676 = vmatprep.subr.mxu0 0.0
        %6677 = vmatpush1.xpose.msra.mxu0 0.0
        %6678 = vmatprep.subr.mxu0 0.0
        %6679 = vmatpush1.xpose.msra.mxu0 0.0
        %6680 = vmatprep.subr.mxu0 0.0
        %6681 = vmatpush1.xpose.msra.mxu0 0.0
        %6682 = vmatprep.subr.mxu0 0.0
        %6683 = vmatpush1.xpose.msra.mxu0 0.0
        %6684 = vmatprep.subr.mxu0 0.0
        %6685 = vmatpush1.xpose.msra.mxu0 0.0
        %6686 = vmatprep.subr.mxu0 0.0
        %6687 = vmatpush1.xpose.msra.mxu0 0.0
        %6688 = vmatprep.subr.mxu0 0.0
        %6689 = vmatpush1.xpose.msra.mxu0 0.0
        %6690 = vmatprep.subr.mxu0 0.0
        %6691 = vmatpush1.xpose.msra.mxu0 0.0
        %6692 = vmatprep.subr.mxu0 0.0
        %6693 = vmatpush1.xpose.msra.mxu0 0.0
        %6694 = vmatprep.subr.mxu0 0.0
        %6695 = vmatpush1.xpose.msra.mxu0 0.0
        %6696 = vmatprep.subr.mxu0 0.0
        %6697 = vmatpush1.xpose.msra.mxu0 0.0
        %6698 = vmatprep.mubr.f32.mxu0 1.0
        %6699 = vmatmul.mubr.f32.gmra.mrb[0].mxu0 1.0
        %v6700 = vpop.f32.mrb[0].mxu0
        %v6701 = vadd.f32 %v6631, %v6700
        %v6702 = vpop.f32.mrb[0].mxu0
        %6703 = vdwg.mxu0
        %6704 = vmatprep.subr.mxu0 %v3573
        %6705 = vmatpush1.xpose.msra.mxu0 %v3572
        %6706 = vmatprep.subr.mxu0 %v3637
        %6707 = vmatpush1.xpose.msra.mxu0 %v3636
        %6708 = vmatprep.subr.mxu0 %v3701
        %6709 = vmatpush1.xpose.msra.mxu0 %v3700
        %6710 = vmatprep.subr.mxu0 %v3765
        %6711 = vmatpush1.xpose.msra.mxu0 %v3764
        %6712 = vmatprep.subr.mxu0 %v3829
        %6713 = vmatpush1.xpose.msra.mxu0 %v3828
        %6714 = vmatprep.subr.mxu0 %v3893
        %6715 = vmatpush1.xpose.msra.mxu0 %v3892
        %6716 = vmatprep.subr.mxu0 %v3957
        %6717 = vmatpush1.xpose.msra.mxu0 %v3956
        %6718 = vmatprep.subr.mxu0 %v4021
        %6719 = vmatpush1.xpose.msra.mxu0 %v4020
        %6720 = vmatprep.subr.mxu0 %v4085
        %6721 = vmatpush1.xpose.msra.mxu0 %v4084
        %6722 = vmatprep.subr.mxu0 %v4149
        %6723 = vmatpush1.xpose.msra.mxu0 %v4148
        %6724 = vmatprep.subr.mxu0 %v4213
        %6725 = vmatpush1.xpose.msra.mxu0 %v4212
        %6726 = vmatprep.subr.mxu0 %v4277
        %6727 = vmatpush1.xpose.msra.mxu0 %v4276
        %6728 = vmatprep.subr.mxu0 %v4341
        %6729 = vmatpush1.xpose.msra.mxu0 %v4340
        %6730 = vmatprep.subr.mxu0 %v4405
        %6731 = vmatpush1.xpose.msra.mxu0 %v4404
        %6732 = vmatprep.subr.mxu0 %v4469
        %6733 = vmatpush1.xpose.msra.mxu0 %v4468
        %6734 = vmatprep.subr.mxu0 %v4533
        %6735 = vmatpush1.xpose.msra.mxu0 %v4532
        %6736 = vmatprep.subr.mxu0 0.0
        %6737 = vmatpush1.xpose.msra.mxu0 0.0
        %6738 = vmatprep.subr.mxu0 0.0
        %6739 = vmatpush1.xpose.msra.mxu0 0.0
        %6740 = vmatprep.subr.mxu0 0.0
        %6741 = vmatpush1.xpose.msra.mxu0 0.0
        %6742 = vmatprep.subr.mxu0 0.0
        %6743 = vmatpush1.xpose.msra.mxu0 0.0
        %6744 = vmatprep.subr.mxu0 0.0
        %6745 = vmatpush1.xpose.msra.mxu0 0.0
        %6746 = vmatprep.subr.mxu0 0.0
        %6747 = vmatpush1.xpose.msra.mxu0 0.0
        %6748 = vmatprep.subr.mxu0 0.0
        %6749 = vmatpush1.xpose.msra.mxu0 0.0
        %6750 = vmatprep.subr.mxu0 0.0
        %6751 = vmatpush1.xpose.msra.mxu0 0.0
        %6752 = vmatprep.subr.mxu0 0.0
        %6753 = vmatpush1.xpose.msra.mxu0 0.0
        %6754 = vmatprep.subr.mxu0 0.0
        %6755 = vmatpush1.xpose.msra.mxu0 0.0
        %6756 = vmatprep.subr.mxu0 0.0
        %6757 = vmatpush1.xpose.msra.mxu0 0.0
        %6758 = vmatprep.subr.mxu0 0.0
        %6759 = vmatpush1.xpose.msra.mxu0 0.0
        %6760 = vmatprep.subr.mxu0 0.0
        %6761 = vmatpush1.xpose.msra.mxu0 0.0
        %6762 = vmatprep.subr.mxu0 0.0
        %6763 = vmatpush1.xpose.msra.mxu0 0.0
        %6764 = vmatprep.subr.mxu0 0.0
        %6765 = vmatpush1.xpose.msra.mxu0 0.0
        %6766 = vmatprep.subr.mxu0 0.0
        %6767 = vmatpush1.xpose.msra.mxu0 0.0
        %6768 = vmatprep.mubr.f32.mxu0 1.0
        %6769 = vmatmul.mubr.f32.gmra.mrb[0].mxu0 1.0
        %v6770 = vpop.f32.mrb[0].mxu0
        %v6771 = vadd.f32 %v6701, %v6770
        %v6772 = vpop.f32.mrb[0].mxu0
        %6773 = vdwg.mxu0
        %v6774 = vadd.f32 %v3509, %v6771
        %6775 = vst [vmem:[#allocation3] sm:$0x1] %v6774
        %p6776 = scmp.eq.s32.totalorder %s16, 1
        // Predicated region
        $region37: #{vector_quantizer_gt.2} parent=27 // pred_check
          %p6777 = pneg %p6776
        $region38: #{vector_quantizer_gt.2} parent=27 // pred_check_branch
          %6779 = sbr.rel (%p6777) target = $region40
        $region39: #{vector_quantizer_gt.2} parent=27 // pred_region
          %v6780 = vld [vmem:[#allocation3] sm:$0x1]
          %v6781 = vld [vmem:[#allocation2] sm:$0xff]
          %v6782 = vmul.f32 %v6781, 2.0
          %v6784 = vlaneseq
          %v6785 = vshrl.u32 %v6784, 7
          %v6786 = vsub.s32 0, %v6785
          %v6787 = vrot.slane %v6780, %v6786
          %v6789 = vsub.f32 %v6787, %v6782
          %v6790 = vlaneseq
          %v6791 = vand.u32 %v6790, 127
          %6792 = vmin.xlane.f32.xlu0 %v6789
          %v6793 = vpop.xlane.xlu0 %6792
          %vm6794 = vcmp.eq.f32.partialorder %v6789, %v6793
          %v6795 = vsel %vm6794, %v6791, 128
          %v6796 = vand.u32 %v6795, 65535
          %v6797 = vshra.s32 %v6795, 16
          %v6798 = vcvt.s32.f32 %v6796
          %v6799 = vcvt.s32.f32 %v6797
          %6800 = vmin.xlane.f32.xlu0 %v6799
          %v6801 = vpop.xlane.xlu0 %6800
          %vm6802 = vcmp.eq.f32.partialorder %v6799, %v6801
          %v6803 = vsel %vm6802, %v6798, inf
          %6804 = vmin.xlane.f32.xlu0 %v6803
          %v6805 = vpop.xlane.xlu0 %6804
          %v6806 = vcvt.f32.s32 %v6805
          %v6807 = vcvt.f32.s32 %v6801
          %v6808 = vshll.u32 %v6807, 16
          %v6809 = vadd.s32 %v6808, %v6806
          %vm6810 = vcmask 7168
          %6811 = vst.msk [vmem:[%s2] sm:$0xff] %vm6810, %v6809
        $region40: #{vector_quantizer_gt.2} parent=27 // pred_fallthru
          _
        // Predicated region
        $region41: #{vector_quantizer_gt.2} parent=27 // pred_check
          %p6812 = pneg %p81
        $region42: #{vector_quantizer_gt.2} parent=27 // pred_check_branch
          %6814 = sbr.rel (%p6812) target = $region44
        $region43: #{vector_quantizer_gt.2} parent=27 // pred_region
          _
        $region44: #{vector_quantizer_gt.2} parent=27 // pred_fallthru
          _
        // Predicated region
        $region45: #{vector_quantizer_gt.2} parent=27 // pred_check
          %p6815 = pneg %p81
        $region46: #{vector_quantizer_gt.2} parent=27 // pred_check_branch
          %6817 = sbr.rel (%p6815) target = $region48
        $region47: #{vector_quantizer_gt.2} parent=27 // pred_region
          _
        $region48: #{vector_quantizer_gt.2} parent=27 // pred_fallthru
          _
      $region28: #{vector_quantizer_gt.2} parent=5 // pred_fallthru
        _
      %p6818 = scmp.le.s32.totalorder 2, %s11
      // Predicated region
      $region49: #{vector_quantizer_gt.2} parent=5 // pred_check
        %p6819 = pneg %p6818
      $region50: #{vector_quantizer_gt.2} parent=5 // pred_check_branch
        %6821 = sbr.rel (%p6819) target = $region52
      $region51: #{vector_quantizer_gt.2} parent=5 // pred_region
        %s6822 = ssub.s32 %s11, 2
      $region52: #{vector_quantizer_gt.2} parent=5 // pred_fallthru
        _
    $region6: #{vector_quantizer_gt.2} parent=1 // loop_footer
      %s15 = sadd.s32 1, %s11
    $region7: #{vector_quantizer_gt.2} parent=1 // loop_footer_branch
      %10 = sbr.rel target = $region3
    $region8: #{vector_quantizer_gt.2} parent=1 // loop_exit
      _
    %6823 = vsyncpa [#allocation5], 1
    %s6824 = scalar_lea.sflag [#allocation5], 1
    %6825 = vsyncpa %s6824, 1

// kernel: vector_quantizer_gt.3
$region0: #{vector_quantizer_gt.3}
  #allocation0 [shape = 'u32[]', space=smem, size = 0x4, offset = 0x4, fixed_abs, tag = 'smem constant byte address 0x4 - core index']
  #allocation1 [shape = 'u32[144,128]{1,0:T(1,128)}', space=vmem, size = 0x12000, scoped, tag = 'internal scratch']
  #allocation2 [shape = 'f32[1,1]{1,0:T(1,128)}', space=vmem, size = 0x200, scoped, tag = 'scratch operand']
  #allocation3 [shape = 's32[1]{0}', space=sflag, size = 0x4, scoped, tag = 'scoped memory for vector_quantizer_gt.3']
  #allocation4 [shape = 'u8[512]{0}', space=smem, size = 0x200, scoped, tag = 'prefetched SMEM operand 0']
  %s0 = inlined_call_operand.vmem [shape: s32[2], index: 0, kind: input, shape index: {}]
  %s1 = inlined_call_operand.vmem [shape: f32[2,128,128], index: 1, kind: input, shape index: {}]
  %s2 = inlined_call_operand.vmem [shape: f32[128,128,128], index: 2, kind: input, shape index: {}]
  %s3 = inlined_call_operand.vmem [shape: f32[2,128,128], index: 3, kind: output, shape index: {0}]
  %s4 = inlined_call_operand.hbm [shape: f32[1,1], index: 4, kind: output, shape index: {1}]
  %5 = xla_tuple %s3, %s4
  %s6 = sld [smem:[#allocation0]]
  $region57: #{vector_quantizer_gt.3} parent=0
    _
  %s8 = ssub.s32 1, %s6
  %s9 = scalar_select 0, %s8, %s6
  %s10 = sshll.u32 %s0, 4
  %s11 = int_to_ptr.vmem [resolvable:$true] %s10
  %13 = dma.vmem_to_smem %s11, 16, [#allocation4], [#allocation3]
  %14 = dma.done [#allocation3], 16
  %15 = sfence
  $region1: #{vector_quantizer_gt.3} parent=0
    #allocation5 [shape = 'u8[512]{0}', space=vmem, size = 0x400, scoped, tag = 'output window, operand 1, single buffered']
    #allocation6 [shape = 's32[2]{0}', space=sflag, size = 0x8, scoped, tag = 'scoped memory for vector_quantizer_gt.3']
    %16 = vsyncpa [#allocation6], 0
    loop: start=0, step=1, limit=4
    $region2: #{vector_quantizer_gt.3} parent=1 // loop_pre_header
      _
    $region3: #{vector_quantizer_gt.3} parent=1 // loop_header
      %s18 = sphi 0, %s22
      %p19 = scmp.ge.s32.totalorder %s18, 4
      %s28 = sphi 0, %s30
      %s31 = sphi 0, %s28
      %s32 = sphi 0, %s31
      %s48 = sphi 0, %s32
      %s56 = sphi 0, %s58
      %s59 = sphi 0, %s56
      %s60 = sphi 0, %s59
      %s76 = sphi 0, %s60
      %s82 = sphi 0, %s84
      %s85 = sphi 0, %s82
      %s86 = sphi 0, %s85
      %s102 = sphi 0, %s86
      %s106 = sphi 0, %s106
      %s108 = sphi 0, %s106
      %s109 = sphi 0, %s108
      %s123 = sphi 0, %s109
    $region4: #{vector_quantizer_gt.3} parent=1 // loop_header_branch
      %21 = sbr.rel (%p19) target = $region8
    $region5: #{vector_quantizer_gt.3} parent=1 // loop_body
      %s23 = ssub.s32 %s18, 1
      %s24 = ssub.s32 %s18, 2
      %s25 = sadd.s32 %s18, 1
      %s26 = ssub.s32 %s18, %s25
      %p27 = scmp.eq.s32.totalorder %s26, 0
      %s29 = sadd.s32 %s28, 1
      %s30 = scalar_select %p27, %s28, %s29
      %p33 = pneg %p27
      %p34 = scmp.eq.s32.totalorder %s18, 1
      %p35 = por %p33, %p34
      %p36 = scmp.ne.s32.totalorder %s28, %s31
      %p37 = scmp.eq.s32.totalorder %s18, 0
      %p38 = por %p36, %p37
      %p39 = scmp.ne.s32.totalorder %s28, %s31
      %p40 = scmp.eq.s32.totalorder %s23, 1
      %p41 = por %p39, %p40
      %p42 = scmp.ne.s32.totalorder %s31, %s32
      %p43 = scmp.eq.s32.totalorder %s23, 0
      %p44 = por %p42, %p43
      %p45 = scmp.ne.s32.totalorder %s31, %s32
      %p46 = scmp.eq.s32.totalorder %s24, 1
      %p47 = por %p45, %p46
      %p49 = scmp.ne.s32.totalorder %s32, %s48
      %p50 = scmp.eq.s32.totalorder %s24, 0
      %p51 = por %p49, %p50
      %s52 = sld [smem:[#allocation4 + %s18]]
      %s53 = sld [smem:[#allocation4 + %s25]]
      %s54 = ssub.s32 %s52, %s53
      %p55 = scmp.eq.s32.totalorder %s54, 0
      %s57 = sadd.s32 %s56, 1
      %s58 = scalar_select %p55, %s56, %s57
      %p61 = pneg %p55
      %p62 = scmp.eq.s32.totalorder %s18, 1
      %p63 = por %p61, %p62
      %p64 = scmp.ne.s32.totalorder %s56, %s59
      %p65 = scmp.eq.s32.totalorder %s18, 0
      %p66 = por %p64, %p65
      %p67 = scmp.ne.s32.totalorder %s56, %s59
      %p68 = scmp.eq.s32.totalorder %s23, 1
      %p69 = por %p67, %p68
      %p70 = scmp.ne.s32.totalorder %s59, %s60
      %p71 = scmp.eq.s32.totalorder %s23, 0
      %p72 = por %p70, %p71
      %p73 = scmp.ne.s32.totalorder %s59, %s60
      %p74 = scmp.eq.s32.totalorder %s24, 1
      %p75 = por %p73, %p74
      %p77 = scmp.ne.s32.totalorder %s60, %s76
      %p78 = scmp.eq.s32.totalorder %s24, 0
      %p79 = por %p77, %p78
      %s80 = ssub.s32 %s18, %s25
      %p81 = scmp.eq.s32.totalorder %s80, 0
      %s83 = sadd.s32 %s82, 1
      %s84 = scalar_select %p81, %s82, %s83
      %p87 = pneg %p81
      %p88 = scmp.eq.s32.totalorder %s18, 1
      %p89 = por %p87, %p88
      %p90 = scmp.ne.s32.totalorder %s82, %s85
      %p91 = scmp.eq.s32.totalorder %s18, 0
      %p92 = por %p90, %p91
      %p93 = scmp.ne.s32.totalorder %s82, %s85
      %p94 = scmp.eq.s32.totalorder %s23, 1
      %p95 = por %p93, %p94
      %p96 = scmp.ne.s32.totalorder %s85, %s86
      %p97 = scmp.eq.s32.totalorder %s23, 0
      %p98 = por %p96, %p97
      %p99 = scmp.ne.s32.totalorder %s85, %s86
      %p100 = scmp.eq.s32.totalorder %s24, 1
      %p101 = por %p99, %p100
      %p103 = scmp.ne.s32.totalorder %s86, %s102
      %p104 = scmp.eq.s32.totalorder %s24, 0
      %p105 = por %p103, %p104
      %s107 = sadd.s32 %s106, 1
      %p110 = scmp.eq.s32.totalorder %s18, 1
      %p111 = scmp.ne.s32.totalorder %s106, %s108
      %p112 = scmp.eq.s32.totalorder %s18, 0
      %p113 = por %p111, %p112
      %p114 = scmp.ne.s32.totalorder %s106, %s108
      %p115 = scmp.eq.s32.totalorder %s23, 1
      %p116 = por %p114, %p115
      %p117 = scmp.ne.s32.totalorder %s108, %s109
      %p118 = scmp.eq.s32.totalorder %s23, 0
      %p119 = por %p117, %p118
      %p120 = scmp.ne.s32.totalorder %s108, %s109
      %p121 = scmp.eq.s32.totalorder %s24, 1
      %p122 = por %p120, %p121
      %p124 = scmp.ne.s32.totalorder %s109, %s123
      %p125 = scmp.eq.s32.totalorder %s24, 0
      %p126 = por %p124, %p125
      %p127 = scmp.le.s32.totalorder 1, %s18
      %p128 = scmp.lt.s32.totalorder %s18, 3
      %p129 = pnand %p127, %p128
      %p130 = pneg %p129
      // Predicated region
      $region9: #{vector_quantizer_gt.3} parent=5 // pred_check
        _
      $region10: #{vector_quantizer_gt.3} parent=5 // pred_check_branch
        %132 = sbr.rel (%p129) target = $region12
      $region11: #{vector_quantizer_gt.3} parent=5 // pred_region
        %s133 = ssub.s32 %s18, 1
      $region12: #{vector_quantizer_gt.3} parent=5 // pred_fallthru
        _
      %p134 = scmp.lt.s32.totalorder %s18, 2
      // Predicated region
      $region13: #{vector_quantizer_gt.3} parent=5 // pred_check
        %p135 = pneg %p134
      $region14: #{vector_quantizer_gt.3} parent=5 // pred_check_branch
        %137 = sbr.rel (%p135) target = $region16
      $region15: #{vector_quantizer_gt.3} parent=5 // pred_region
        // Predicated region
        $region17: #{vector_quantizer_gt.3} parent=15 // pred_check
          %p138 = pneg %p38
        $region18: #{vector_quantizer_gt.3} parent=15 // pred_check_branch
          %140 = sbr.rel (%p138) target = $region20
        $region19: #{vector_quantizer_gt.3} parent=15 // pred_region
          %p141 = scmp.lt.s32.totalorder %s18, 1
          %s142 = scalar_select %p141, %s18, 1
          %s143 = smul.addr %s142, 16
          %s144 = smul.addr %s143, 8
          %s145 = scalar_lea.vmem %s1, %s144
        $region20: #{vector_quantizer_gt.3} parent=15 // pred_fallthru
          _
        // Predicated region
        $region21: #{vector_quantizer_gt.3} parent=15 // pred_check
          %p146 = pneg %p66
        $region22: #{vector_quantizer_gt.3} parent=15 // pred_check_branch
          %148 = sbr.rel (%p146) target = $region24
        $region23: #{vector_quantizer_gt.3} parent=15 // pred_region
          %s149 = sld [smem:[#allocation4 + %s18]]
          %p150 = scmp.lt.s32.totalorder %s149, 127
          %s151 = scalar_select %p150, %s149, 127
          %s152 = smul.addr %s151, 16
          %s153 = smul.addr %s152, 8
          %s154 = scalar_lea.vmem %s2, %s153
          %s155 = sld [smem:[#allocation4 + %s18]]
        $region24: #{vector_quantizer_gt.3} parent=15 // pred_fallthru
          _
      $region16: #{vector_quantizer_gt.3} parent=5 // pred_fallthru
        _
      %p156 = scmp.le.s32.totalorder 1, %s18
      %p157 = scmp.lt.s32.totalorder %s18, 3
      %p158 = pnand %p156, %p157
      %p159 = pneg %p158
      // Predicated region
      $region25: #{vector_quantizer_gt.3} parent=5 // pred_check
        _
      $region26: #{vector_quantizer_gt.3} parent=5 // pred_check_branch
        %161 = sbr.rel (%p158) target = $region28
      $region27: #{vector_quantizer_gt.3} parent=5 // pred_region
        %s162 = ssub.s32 %s18, 1
        %p163 = scmp.lt.s32.totalorder %s23, 1
        %s164 = scalar_select %p163, %s23, 1
        %s165 = smul.addr %s164, 16
        %s166 = smul.addr %s165, 8
        %s167 = scalar_lea.vmem %s1, %s166
        %p168 = pneg %p44
        %p169 = pneg %p41
        %s170 = sld [smem:[#allocation4 + %s23]]
        %p171 = scmp.lt.s32.totalorder %s170, 127
        %s172 = scalar_select %p171, %s170, 127
        %s173 = smul.addr %s172, 16
        %s174 = smul.addr %s173, 8
        %s175 = scalar_lea.vmem %s2, %s174
        %p176 = pneg %p72
        %p177 = pneg %p69
        %p178 = pneg %p98
        %p179 = pneg %p95
        %p180 = scmp.lt.s32.totalorder %s23, 1
        %s181 = scalar_select %p180, %s23, 1
        %s182 = smul.addr %s181, 16
        %s183 = smul.addr %s182, 8
        %s184 = scalar_lea.vmem %s3, %s183
        %p185 = pneg %p119
        %p186 = pneg %p116
        %p187 = scmp.lt.s32.totalorder %s23, 1
        %s188 = scalar_select %p187, %s23, 1
        %s189 = smul.addr %s188, 16
        %s190 = smul.addr %s189, 8
        %s191 = scalar_lea.vmem %s1, %s190
        %s192 = sld [smem:[#allocation4 + %s23]]
        %p193 = scmp.lt.s32.totalorder %s192, 127
        %s194 = scalar_select %p193, %s192, 127
        %s195 = smul.addr %s194, 16
        %s196 = smul.addr %s195, 8
        %s197 = scalar_lea.vmem %s2, %s196
        %s198 = sld [smem:[#allocation4 + %s23]]
        %p199 = scmp.lt.s32.totalorder %s23, 1
        %s200 = scalar_select %p199, %s23, 1
        %s201 = smul.addr %s200, 16
        %s202 = smul.addr %s201, 8
        %s203 = scalar_lea.vmem %s3, %s202
        %p204 = scmp.eq.s32.totalorder %s23, 0
        // Predicated region
        $region29: #{vector_quantizer_gt.3} parent=27 // pred_check
          %p205 = pneg %p204
        $region30: #{vector_quantizer_gt.3} parent=27 // pred_check_branch
          %207 = sbr.rel (%p205) target = $region32
        $region31: #{vector_quantizer_gt.3} parent=27 // pred_region
          %vm208 = vcmask 0
          %209 = vst.msk [vmem:[#allocation2] sm:$0x1] %vm208, 0.0
        $region32: #{vector_quantizer_gt.3} parent=27 // pred_fallthru
          _
        %v210 = vld [vmem:[%s197] sm:$0xff]
        %v211 = vld [vmem:[%s197 + $0x8] sm:$0xff]
        %v212 = vld [vmem:[%s197 + $0x10] sm:$0xff]
        %v213 = vld [vmem:[%s197 + $0x18] sm:$0xff]
        %v214 = vld [vmem:[%s197 + $0x20] sm:$0xff]
        %v215 = vld [vmem:[%s197 + $0x28] sm:$0xff]
        %v216 = vld [vmem:[%s197 + $0x30] sm:$0xff]
        %v217 = vld [vmem:[%s197 + $0x38] sm:$0xff]
        %v218 = vld [vmem:[%s197 + $0x40] sm:$0xff]
        %v219 = vld [vmem:[%s197 + $0x48] sm:$0xff]
        %v220 = vld [vmem:[%s197 + $0x50] sm:$0xff]
        %v221 = vld [vmem:[%s197 + $0x58] sm:$0xff]
        %v222 = vld [vmem:[%s197 + $0x60] sm:$0xff]
        %v223 = vld [vmem:[%s197 + $0x68] sm:$0xff]
        %v224 = vld [vmem:[%s197 + $0x70] sm:$0xff]
        %v225 = vld [vmem:[%s197 + $0x78] sm:$0xff]
        %226 = vst [vmem:[%s203] sm:$0xff] %v210
        %227 = vst [vmem:[%s203 + $0x8] sm:$0xff] %v211
        %228 = vst [vmem:[%s203 + $0x10] sm:$0xff] %v212
        %229 = vst [vmem:[%s203 + $0x18] sm:$0xff] %v213
        %230 = vst [vmem:[%s203 + $0x20] sm:$0xff] %v214
        %231 = vst [vmem:[%s203 + $0x28] sm:$0xff] %v215
        %232 = vst [vmem:[%s203 + $0x30] sm:$0xff] %v216
        %233 = vst [vmem:[%s203 + $0x38] sm:$0xff] %v217
        %234 = vst [vmem:[%s203 + $0x40] sm:$0xff] %v218
        %235 = vst [vmem:[%s203 + $0x48] sm:$0xff] %v219
        %236 = vst [vmem:[%s203 + $0x50] sm:$0xff] %v220
        %237 = vst [vmem:[%s203 + $0x58] sm:$0xff] %v221
        %238 = vst [vmem:[%s203 + $0x60] sm:$0xff] %v222
        %239 = vst [vmem:[%s203 + $0x68] sm:$0xff] %v223
        %240 = vst [vmem:[%s203 + $0x70] sm:$0xff] %v224
        %241 = vst [vmem:[%s203 + $0x78] sm:$0xff] %v225
        %v242 = vld [vmem:[%s191] sm:$0xff]
        %v243 = vld [vmem:[%s191 + $0x8] sm:$0xff]
        %v244 = vld [vmem:[%s191 + $0x10] sm:$0xff]
        %v245 = vld [vmem:[%s191 + $0x18] sm:$0xff]
        %v246 = vld [vmem:[%s191 + $0x20] sm:$0xff]
        %v247 = vld [vmem:[%s191 + $0x28] sm:$0xff]
        %v248 = vld [vmem:[%s191 + $0x30] sm:$0xff]
        %v249 = vld [vmem:[%s191 + $0x38] sm:$0xff]
        %v250 = vld [vmem:[%s191 + $0x40] sm:$0xff]
        %v251 = vld [vmem:[%s191 + $0x48] sm:$0xff]
        %v252 = vld [vmem:[%s191 + $0x50] sm:$0xff]
        %v253 = vld [vmem:[%s191 + $0x58] sm:$0xff]
        %v254 = vld [vmem:[%s191 + $0x60] sm:$0xff]
        %v255 = vld [vmem:[%s191 + $0x68] sm:$0xff]
        %v256 = vld [vmem:[%s191 + $0x70] sm:$0xff]
        %v257 = vld [vmem:[%s191 + $0x78] sm:$0xff]
        %v258 = vsub.f32 %v210, %v242
        %v259 = vsub.f32 %v211, %v243
        %v260 = vsub.f32 %v212, %v244
        %v261 = vsub.f32 %v213, %v245
        %v262 = vsub.f32 %v214, %v246
        %v263 = vsub.f32 %v215, %v247
        %v264 = vsub.f32 %v216, %v248
        %v265 = vsub.f32 %v217, %v249
        %v266 = vsub.f32 %v218, %v250
        %v267 = vsub.f32 %v219, %v251
        %v268 = vsub.f32 %v220, %v252
        %v269 = vsub.f32 %v221, %v253
        %v270 = vsub.f32 %v222, %v254
        %v271 = vsub.f32 %v223, %v255
        %v272 = vsub.f32 %v224, %v256
        %v273 = vsub.f32 %v225, %v257
        %v274 = vmul.f32 %v258, %v258
        %v275 = vmul.f32 %v259, %v259
        %v276 = vmul.f32 %v260, %v260
        %v277 = vmul.f32 %v261, %v261
        %v278 = vmul.f32 %v262, %v262
        %v279 = vmul.f32 %v263, %v263
        %v280 = vmul.f32 %v264, %v264
        %v281 = vmul.f32 %v265, %v265
        %v282 = vmul.f32 %v266, %v266
        %v283 = vmul.f32 %v267, %v267
        %v284 = vmul.f32 %v268, %v268
        %v285 = vmul.f32 %v269, %v269
        %v286 = vmul.f32 %v270, %v270
        %v287 = vmul.f32 %v271, %v271
        %v288 = vmul.f32 %v272, %v272
        %v289 = vmul.f32 %v273, %v273
        %v290 = vld [vmem:[#allocation2] sm:$0x1]
        %v291 = vadd.f32 %v274, %v275
        %v292 = vadd.f32 %v291, %v276
        %v293 = vadd.f32 %v292, %v277
        %v294 = vadd.f32 %v293, %v278
        %v295 = vadd.f32 %v294, %v279
        %v296 = vadd.f32 %v295, %v280
        %v297 = vadd.f32 %v296, %v281
        %v298 = vadd.f32 %v297, %v282
        %v299 = vadd.f32 %v298, %v283
        %v300 = vadd.f32 %v299, %v284
        %v301 = vadd.f32 %v300, %v285
        %v302 = vadd.f32 %v301, %v286
        %v303 = vadd.f32 %v302, %v287
        %v304 = vadd.f32 %v303, %v288
        %v305 = vadd.f32 %v304, %v289
        %v306 = vrot.slane %v305, 4
        %v307 = vadd.f32 %v305, %v306
        %v308 = vrot.slane %v307, 2
        %v309 = vadd.f32 %v307, %v308
        %v310 = vrot.slane %v309, 1
        %v311 = vadd.f32 %v309, %v310
        %312 = vadd.xlane.f32.xlu0 %v311
        %v313 = vpop.xlane.xlu0 %312
        %v314 = vadd.f32 %v290, %v313
        %vm315 = vcmask 0
        %316 = vst.msk [vmem:[#allocation2] sm:$0x1] %vm315, %v314
        %p317 = scmp.eq.s32.totalorder %s23, 1
        // Predicated region
        $region33: #{vector_quantizer_gt.3} parent=27 // pred_check
          %p318 = pneg %p317
        $region34: #{vector_quantizer_gt.3} parent=27 // pred_check_branch
          %320 = sbr.rel (%p318) target = $region36
        $region35: #{vector_quantizer_gt.3} parent=27 // pred_region
          %v321 = vld [vmem:[#allocation2] sm:$0x1]
          %v322 = vmul.f32 %v321, 3.8146973e-05
          %323 = vst.msk [vmem:[#allocation5] sm:$0x1] %vm315, %v322
        $region36: #{vector_quantizer_gt.3} parent=27 // pred_fallthru
          _
        %p324 = scmp.lt.s32.totalorder %s23, 1
        %s325 = scalar_select %p324, %s23, 1
        %s326 = smul.addr %s325, 16
        %s327 = smul.addr %s326, 8
        %s328 = scalar_lea.vmem %s3, %s327
        // Predicated region
        $region37: #{vector_quantizer_gt.3} parent=27 // pred_check
          %p329 = pneg %p95
        $region38: #{vector_quantizer_gt.3} parent=27 // pred_check_branch
          %331 = sbr.rel (%p329) target = $region40
        $region39: #{vector_quantizer_gt.3} parent=27 // pred_region
          _
        $region40: #{vector_quantizer_gt.3} parent=27 // pred_fallthru
          _
        // Predicated region
        $region41: #{vector_quantizer_gt.3} parent=27 // pred_check
          %p332 = pneg %p116
        $region42: #{vector_quantizer_gt.3} parent=27 // pred_check_branch
          %334 = sbr.rel (%p332) target = $region44
        $region43: #{vector_quantizer_gt.3} parent=27 // pred_region
          %s336 = ssub.s32 16, 16
          %337 = vsyncadd [#allocation6], %s336
          %s339 = sshll.u32 [#allocation5], 4
          %s340 = int_to_ptr.vmem [resolvable:$true] %s339
          %342 = dma.vmem_to_hbm [thread:$0]  %s340, 16, %s4, [#allocation6]
        $region44: #{vector_quantizer_gt.3} parent=27 // pred_fallthru
          _
        // Predicated region
        $region45: #{vector_quantizer_gt.3} parent=27 // pred_check
          %p343 = pneg %p116
        $region46: #{vector_quantizer_gt.3} parent=27 // pred_check_branch
          %345 = sbr.rel (%p343) target = $region48
        $region47: #{vector_quantizer_gt.3} parent=27 // pred_region
          %346 = dma.done [#allocation6], 16
        $region48: #{vector_quantizer_gt.3} parent=27 // pred_fallthru
          _
      $region28: #{vector_quantizer_gt.3} parent=5 // pred_fallthru
        _
      %p347 = scmp.le.s32.totalorder 2, %s18
      // Predicated region
      $region49: #{vector_quantizer_gt.3} parent=5 // pred_check
        %p348 = pneg %p347
      $region50: #{vector_quantizer_gt.3} parent=5 // pred_check_branch
        %350 = sbr.rel (%p348) target = $region52
      $region51: #{vector_quantizer_gt.3} parent=5 // pred_region
        %s351 = ssub.s32 %s18, 2
        // Predicated region
        $region53: #{vector_quantizer_gt.3} parent=51 // pred_check
          %p352 = pneg %p101
        $region54: #{vector_quantizer_gt.3} parent=51 // pred_check_branch
          %354 = sbr.rel (%p352) target = $region56
        $region55: #{vector_quantizer_gt.3} parent=51 // pred_region
          %p355 = scmp.lt.s32.totalorder %s24, 1
          %s356 = scalar_select %p355, %s24, 1
          %s357 = smul.addr %s356, 16
          %s358 = smul.addr %s357, 8
          %s359 = scalar_lea.vmem %s3, %s358
        $region56: #{vector_quantizer_gt.3} parent=51 // pred_fallthru
          _
      $region52: #{vector_quantizer_gt.3} parent=5 // pred_fallthru
        _
    $region6: #{vector_quantizer_gt.3} parent=1 // loop_footer
      %s22 = sadd.s32 1, %s18
    $region7: #{vector_quantizer_gt.3} parent=1 // loop_footer_branch
      %17 = sbr.rel target = $region3
    $region8: #{vector_quantizer_gt.3} parent=1 // loop_exit
      _
    %360 = vsyncpa [#allocation6], 1
    %s361 = scalar_lea.sflag [#allocation6], 1
    %362 = vsyncpa %s361, 1

</llo_original>
